<compile_context>
chip_gen: v7x
topology: tpu7x:2x2x1
jax: 0.10.0
libtpu: 0.0.40
codegen_flags: <defaults>
</compile_context>

<pallas_src>
import jax
import jax.numpy as jnp
from jax import lax
from jax.experimental import pallas as pl
from jax.experimental.pallas import tpu as pltpu

_MXU_DTYPE = jnp.bfloat16   # MXU operand / intermediate-HBM dtype (f32 accum + statistics)
_TOP_PAD = 8                # slack rows above the halo in the ext scratch (>= 1)
_BOT_PAD = 8                # slack rows below the halo in the ext scratch (>= 1)

_VMEM_LIMIT = None


def _vmem_limit_bytes():
    """Generation-aware scoped-VMEM budget (v7x: 64 MiB phys -> 48 MiB; v5e/v6e: 128 -> 96)."""
    global _VMEM_LIMIT
    if _VMEM_LIMIT is None:
        try:
            cap = int(pltpu.get_tpu_info().vmem_capacity_bytes)
        except Exception:
            cap = 64 * 1024 * 1024
        _VMEM_LIMIT = max(32 * 1024 * 1024, min(cap * 3 // 4, 96 * 1024 * 1024))
    return _VMEM_LIMIT


def _cparams(ndims):
    return pltpu.CompilerParams(
        dimension_semantics=("parallel",) * ndims,
        vmem_limit_bytes=_vmem_limit_bytes(),
    )


def _row_tile(total, target, multiple=1):
    """Largest divisor of `total` that is <= target and a multiple of `multiple`;
    prefers leaving >= 2 grid steps.  Falls back to `total` (full-array block)."""
    divs = [d for d in range(1, total + 1) if total % d == 0]
    ok = [d for d in divs if d <= target and d % multiple == 0]
    if not ok:
        return total
    t = max(ok)
    if t == total and total > 1:
        smaller = [d for d in ok if d < total]
        if smaller:
            t = max(smaller)
    return t


def _pick_band(Hc, Wc, row_bytes, budget):
    """Band height (in conv rows): largest divisor of Hc under the VMEM budget,
    preferring >= 2 bands per image so the pipeline / both TensorCores are used."""
    divs = [d for d in range(1, Hc + 1) if Hc % d == 0]
    fit = [d for d in divs if d * row_bytes <= budget] or [1]
    hb = max(fit)
    if hb == Hc and Hc > 1:
        pref = [d for d in fit if d < Hc and d * Wc >= 1024]
        if pref:
            hb = max(pref)
        else:
            smaller = [d for d in fit if d < Hc]
            if smaller:
                hb = max(smaller)
    return hb


def _conv_row_bytes(streams, Wc, cout):
    """Rough per-conv-row VMEM footprint of the banded conv kernel (for band sizing)."""
    b = 0
    for st in streams:
        cin = st['cin']
        pool = st['kind'] == 'bnpool'
        src_elems = (4 if pool else 1) * Wc * cin
        b += 2 * src_elems * 2       # double-buffered bf16 input block
        b += Wc * cin * 2            # ext scratch rows (bf16)
        b += Wc * 9 * cin * 2        # stacked-operand scratch rows (bf16)
    b += 2 * Wc * cout * 2           # double-buffered bf16 output block
    b += Wc * cout * 4               # f32 accumulator
    return b


# -----------------------------------------------------------------------------------------
# Banded, fused 3x3 "same" convolution with per-channel batch statistics.
# Each input stream may apply BatchNorm+ReLU (and optionally a 2x2 max-pool) on the fly,
# so normalized activations (e1, e2, p1) are never written to HBM.
# -----------------------------------------------------------------------------------------

def conv3x3_fused(streams, bias, N, Hc, Wc, cout):
    """streams: list of dicts with keys
         kind : 'plain' | 'bn' | 'bnpool'
           'plain'  - source already in conv-input form      src (N*Hc,   Wc, cin)   bf16
           'bn'     - BatchNorm+ReLU applied on the fly      src (N*Hc,   Wc, cin)   bf16
           'bnpool' - BN+ReLU+2x2 max-pool on the fly        src (N*2*Hc, Wc, 2*cin) bf16
                      (lane-packed full-res view: lane = (w%2)*cin + c)
         w    : (9*cin, cout) bf16 tap-major (ky, kx, cin) weights
         cin  : channels seen by the conv
         scale, shift : (1, lanes) f32 for 'bn'/'bnpool'
       Returns y (N*Hc, Wc, cout) bf16 and stats (N*bands, 2, cout) f32 = (sum, sum_sq)."""
    n_streams = len(streams)
    cins = [st['cin'] for st in streams]
    kinds = tuple(st['kind'] for st in streams)
    ktot = 9 * sum(cins)
    kpad = -(-ktot // 8) * 8                       # pad contraction dim to a multiple of 8

    for st in streams:
        if st['kind'] == 'bnpool':
            assert st['src'].shape == (N * 2 * Hc, Wc, 2 * st['cin'])
        else:
            assert st['src'].shape == (N * Hc, Wc, st['cin'])

    row_bytes = _conv_row_bytes(streams, Wc, cout)
    budget = _vmem_limit_bytes() // 2 - 4 * kpad * cout
    Hb = _pick_band(Hc, Wc, row_bytes, max(budget, row_bytes))
    bands = Hc // Hb
    Rb = Hb * Wc
    off = _TOP_PAD + Wc
    ext_rows = _TOP_PAD + 2 * Wc + Rb + _BOT_PAD

    # host-side (grid-invariant) weight / bias packing, pre-cast to bf16
    w_all = jnp.concatenate([st['w'].astype(_MXU_DTYPE) for st in streams], axis=0)
    if kpad != ktot:
        w_all = jnp.concatenate([w_all, jnp.zeros((kpad - ktot, cout), _MXU_DTYPE)], axis=0)
    bias2d = jnp.asarray(bias, jnp.float32).reshape(1, cout)

    def kernel(*refs):
        pos = 0
        srefs = []
        for kind in kinds:
            main, top, bot = refs[pos], refs[pos + 1], refs[pos + 2]
            pos += 3
            if kind == 'plain':
                s_ref = t_ref = None
            else:
                s_ref, t_ref = refs[pos], refs[pos + 1]
                pos += 2
            srefs.append((main, top, bot, s_ref, t_ref))
        w_ref, b_ref = refs[pos], refs[pos + 1]
        y_ref, stats_ref = refs[pos + 2], refs[pos + 3]
        ext_refs = refs[pos + 4:pos + 4 + n_streams]
        stk_ref = refs[pos + 4 + n_streams]

        b = pl.program_id(1)
        nb = pl.num_programs(1)

        # left/right border masks for the horizontal taps, built once per step
        col = lax.broadcasted_iota(jnp.int32, (Rb, 1), 0) % Wc
        ok_r = col != (Wc - 1)
        ok_l = col != 0

        kcol = 0
        for k, kind in enumerate(kinds):
            main, top, bot, s_ref, t_ref = srefs[k]
            ext = ext_refs[k]
            cin = cins[k]

            if kind == 'plain':
                band = main[...].reshape(Rb, cin)
                topv = top[...].reshape(Wc, cin)
                botv = bot[...].reshape(Wc, cin)
            elif kind == 'bn':
                s = s_ref[...]
                t = t_ref[...]

                def bn(v, s=s, t=t, cin=cin):
                    vf = v.reshape(-1, cin).astype(jnp.float32)
                    return jnp.maximum(vf * s + t, 0.0).astype(_MXU_DTYPE)

                band, topv, botv = bn(main[...]), bn(top[...]), bn(bot[...])
            else:  # 'bnpool': BN+ReLU then 2x2/stride-2 max pool of the lane-packed view
                s = s_ref[...].reshape(1, 1, 2 * cin)
                t = t_ref[...].reshape(1, 1, 2 * cin)

                def bnpool(v, s=s, t=t, cin=cin):
                    vf = jnp.maximum(v.astype(jnp.float32) * s + t, 0.0)
                    vw = jnp.maximum(vf[:, :, :cin], vf[:, :, cin:])      # pool along W
                    vh = vw.reshape(vw.shape[0] // 2, 2, Wc, cin)
                    vp = jnp.maximum(vh[:, 0], vh[:, 1])                   # pool along H
                    return vp.reshape(-1, cin).astype(_MXU_DTYPE)

                band, topv, botv = bnpool(main[...]), bnpool(top[...]), bnpool(bot[...])

            # image-border halos become the conv's zero padding
            topv = jnp.where(b == 0, jnp.zeros_like(topv), topv)
            botv = jnp.where(b == nb - 1, jnp.zeros_like(botv), botv)

            # fill the halo'd band buffer (tiny slack rows zeroed defensively)
            ext[0:_TOP_PAD, :] = jnp.zeros((_TOP_PAD, cin), _MXU_DTYPE)
            ext[_TOP_PAD:_TOP_PAD + Wc, :] = topv
            ext[off:off + Rb, :] = band
            ext[off + Rb:off + Rb + Wc, :] = botv
            ext[off + Rb + Wc:ext_rows, :] = jnp.zeros((_BOT_PAD, cin), _MXU_DTYPE)

            # 9 shifted views stacked along the contraction dim (masking fused here)
            for ky in range(3):
                for kx in range(3):
                    dy, dx = ky - 1, kx - 1
                    start = off + dy * Wc + dx
                    xt = ext[start:start + Rb, :]
                    if dx == 1:
                        xt = jnp.where(ok_r, xt, jnp.zeros_like(xt))
                    elif dx == -1:
                        xt = jnp.where(ok_l, xt, jnp.zeros_like(xt))
                    stk_ref[:, kcol:kcol + cin] = xt
                    kcol += cin

        if kpad != ktot:
            stk_ref[:, ktot:kpad] = jnp.zeros((Rb, kpad - ktot), _MXU_DTYPE)

        # single MXU contraction over all taps (and, for dec1, both concat halves)
        acc = jnp.dot(stk_ref[...], w_ref[...], preferred_element_type=jnp.float32)
        acc = acc + b_ref[...]

        y_ref[...] = acc.reshape(Hb, Wc, cout).astype(y_ref.dtype)
        # training-mode BatchNorm statistics, reduced on the host afterwards
        stats_ref[:, 0:1, :] = jnp.sum(acc, axis=0, keepdims=True).reshape(1, 1, cout)
        stats_ref[:, 1:2, :] = jnp.sum(acc * acc, axis=0, keepdims=True).reshape(1, 1, cout)

    # BlockSpecs
    inputs, in_specs = [], []
    for st in streams:
        cin = st['cin']
        if st['kind'] == 'bnpool':
            rows_m, rows_h, lanes = 2 * Hb, 2, 2 * cin
        else:
            rows_m, rows_h, lanes = Hb, 1, cin
        inputs.append(st['src'])
        in_specs.append(pl.BlockSpec((rows_m, Wc, lanes),
                                     lambda n, b: (n * bands + b, 0, 0)))
        inputs.append(st['src'])   # top halo (one conv row, clamped at the image border)
        in_specs.append(pl.BlockSpec(
            (rows_h, Wc, lanes),
            lambda n, b: (n * Hc + jnp.maximum(b * Hb - 1, 0), 0, 0)))
        inputs.append(st['src'])   # bottom halo
        in_specs.append(pl.BlockSpec(
            (rows_h, Wc, lanes),
            lambda n, b: (n * Hc + jnp.minimum((b + 1) * Hb, Hc - 1), 0, 0)))
        if st['kind'] != 'plain':
            inputs += [st['scale'], st['shift']]
            in_specs += [pl.BlockSpec((1, lanes), lambda n, b: (0, 0))] * 2
    inputs += [w_all, bias2d]
    in_specs += [pl.BlockSpec((kpad, cout), lambda n, b: (0, 0)),
                 pl.BlockSpec((1, cout), lambda n, b: (0, 0))]

    scratch = [pltpu.VMEM((ext_rows, cin), _MXU_DTYPE) for cin in cins]
    scratch.append(pltpu.VMEM((Rb, kpad), _MXU_DTYPE))

    y, stats = pl.pallas_call(
        kernel,
        grid=(N, bands),
        in_specs=in_specs,
        out_specs=(pl.BlockSpec((Hb, Wc, cout), lambda n, b: (n * bands + b, 0, 0)),
                   pl.BlockSpec((1, 2, cout), lambda n, b: (n * bands + b, 0, 0))),
        out_shape=(jax.ShapeDtypeStruct((N * Hc, Wc, cout), _MXU_DTYPE),
                   jax.ShapeDtypeStruct((N * bands, 2, cout), jnp.float32)),
        scratch_shapes=scratch,
        compiler_params=_cparams(2),
    )(*inputs)
    return y, stats


def _bn_scale_shift(stats, count, gamma, beta, eps=1e-5):
    """Reduce per-block (sum, sum_sq) into per-channel scale/shift (tiny host math, f32)."""
    s = jnp.sum(stats[:, 0, :], axis=0)
    q = jnp.sum(stats[:, 1, :], axis=0)
    mean = s / count
    var = jnp.maximum(q / count - mean * mean, 0.0)     # biased variance (PyTorch train mode)
    scale = gamma * lax.rsqrt(var + eps)
    shift = beta - mean * scale
    C = gamma.shape[0]
    return (scale.reshape(1, C).astype(jnp.float32),
            shift.reshape(1, C).astype(jnp.float32))


# -----------------------------------------------------------------------------------------
# Fused BN2 + ReLU + ConvTranspose2d(kernel=2, stride=2).  The 2x2 pixel-shuffle is folded
# into the output addressing: (N*Hh, 2, Wh, 128) is memory-identical to (N*H*W, 64).
# -----------------------------------------------------------------------------------------

def convt_bn_relu_shuffle(y2, w_up, b_up, scale, shift, N, Hh, Wh):
    cin = y2.shape[-1]            # 128
    cout4 = w_up.shape[-1]        # 256 = (dy, dx, cout)
    half = cout4 // 2
    total = N * Hh
    bq = _row_tile(total, max(1, 2048 // max(Wh, 1)))
    grid = (total // bq,)

    w_bf = w_up.astype(_MXU_DTYPE)
    b2d = jnp.asarray(b_up, jnp.float32).reshape(1, cout4)

    def kernel(x_ref, w_ref, b_ref, s_ref, t_ref, o_ref):
        v = x_ref[...].reshape(-1, cin).astype(jnp.float32)
        e = jnp.maximum(v * s_ref[...] + t_ref[...], 0.0).astype(_MXU_DTYPE)
        y = jnp.dot(e, w_ref[...], preferred_element_type=jnp.float32) + b_ref[...]
        y = y.astype(o_ref.dtype)
        o_ref[:, 0:1, :, :] = y[:, :half].reshape(bq, 1, Wh, half)   # dy = 0 rows
        o_ref[:, 1:2, :, :] = y[:, half:].reshape(bq, 1, Wh, half)   # dy = 1 rows

    return pl.pallas_call(
        kernel,
        grid=grid,
        in_specs=[pl.BlockSpec((bq, Wh, cin), lambda i: (i, 0, 0)),
                  pl.BlockSpec((cin, cout4), lambda i: (0, 0)),
                  pl.BlockSpec((1, cout4), lambda i: (0, 0)),
                  pl.BlockSpec((1, cin), lambda i: (0, 0)),
                  pl.BlockSpec((1, cin), lambda i: (0, 0))],
        out_specs=pl.BlockSpec((bq, 2, Wh, half), lambda i: (i, 0, 0, 0)),
        out_shape=jax.ShapeDtypeStruct((total, 2, Wh, half), _MXU_DTYPE),
        compiler_params=_cparams(1),
    )(y2, w_bf, b2d, scale, shift)


# -----------------------------------------------------------------------------------------
# Final BN3 + ReLU (the network output).
# -----------------------------------------------------------------------------------------

def bn_relu_out(x2d, scale, shift):
    M, C = x2d.shape
    tm = _row_tile(M, 2048, multiple=16)

    def kernel(x_ref, s_ref, t_ref, o_ref):
        o_ref[...] = jnp.maximum(
            x_ref[...].astype(jnp.float32) * s_ref[...] + t_ref[...], 0.0)

    return pl.pallas_call(
        kernel,
        grid=(M // tm,),
        in_specs=[pl.BlockSpec((tm, C), lambda i: (i, 0)),
                  pl.BlockSpec((1, C), lambda i: (0, 0)),
                  pl.BlockSpec((1, C), lambda i: (0, 0))],
        out_specs=pl.BlockSpec((tm, C), lambda i: (i, 0)),
        out_shape=jax.ShapeDtypeStruct((M, C), jnp.float32),
        compiler_params=_cparams(1),
    )(x2d, scale, shift)


# -----------------------------------------------------------------------------------------
# Weight re-layout (host, tiny, pre-cast to bf16).
# -----------------------------------------------------------------------------------------

def _w_to_taps(w_oihw):
    """(Cout, Cin, 3, 3) -> (9*Cin, Cout) with rows ordered (ky, kx, cin), bf16."""
    cout, cin = w_oihw.shape[0], w_oihw.shape[1]
    return jnp.transpose(w_oihw, (2, 3, 1, 0)).reshape(9 * cin, cout).astype(_MXU_DTYPE)


# -----------------------------------------------------------------------------------------
# Forward pass.
# -----------------------------------------------------------------------------------------

def shallow_unet_forward(x_nchw, params):
    N, Cin, H, W = x_nchw.shape
    assert H % 2 == 0 and W % 2 == 0
    Hh, Wh = H // 2, W // 2

    x3d = jnp.transpose(x_nchw, (0, 2, 3, 1)).astype(_MXU_DTYPE).reshape(N * H, W, Cin)

    # enc1: conv3x3(Cin -> 64) + bias; batch statistics produced in-kernel
    y1, st1 = conv3x3_fused(
        [dict(kind='plain', src=x3d, cin=Cin, w=_w_to_taps(params['enc1_w']))],
        params['enc1_b'], N, H, W, 64)
    s1, t1 = _bn_scale_shift(st1, N * H * W, params['bn1_g'], params['bn1_b'])

    # enc2: BN1 + ReLU + 2x2 max-pool fused into the conv input stream (p1 never hits HBM)
    y1_packed = y1.reshape(N * H, Wh, 128)                # lane = (w % 2)*64 + c; free view
    y2, st2 = conv3x3_fused(
        [dict(kind='bnpool', src=y1_packed, cin=64, w=_w_to_taps(params['enc2_w']),
              scale=jnp.tile(s1, (1, 2)), shift=jnp.tile(t1, (1, 2)))],
        params['enc2_b'], N, Hh, Wh, 128)
    s2, t2 = _bn_scale_shift(st2, N * Hh * Wh, params['bn2_g'], params['bn2_b'])

    # up1: BN2 + ReLU + ConvTranspose2d(2, stride=2); pixel-shuffle folded into the output
    wu = jnp.transpose(params['up1_w'], (0, 2, 3, 1)).reshape(128, 4 * 64)   # (cin, dy*dx*cout)
    bu = jnp.tile(params['up1_b'], 4)
    d1s = convt_bn_relu_shuffle(y2, wu, bu, s2, t2, N, Hh, Wh)    # (N*Hh, 2, Wh, 128)
    d1 = d1s.reshape(N * H, W, 64)                                # free view: full-res d1

    # dec1: conv3x3 over concat([d1, e1]); e1 = BN1+ReLU(y1) computed on the fly,
    #       the concat fused by stacking both streams into one MXU contraction.
    wd = _w_to_taps(params['dec1_w']).reshape(9, 128, 64)
    w_d = wd[:, :64, :].reshape(9 * 64, 64)    # d1 channels (0..63 of the concat)
    w_e = wd[:, 64:, :].reshape(9 * 64, 64)    # e1 channels (64..127)
    y3, st3 = conv3x3_fused(
        [dict(kind='plain', src=d1, cin=64, w=w_d),
         dict(kind='bn', src=y1, cin=64, w=w_e, scale=s1, shift=t1)],
        params['dec1_b'], N, H, W, 64)
    s3, t3 = _bn_scale_shift(st3, N * H * W, params['bn3_g'], params['bn3_b'])

    # TODO(synk): BatchNorm running_mean/var buffer updates (training bookkeeping) are not
    # modeled; the forward matches PyTorch's train-mode batch-statistic normalization.
    out = bn_relu_out(y3.reshape(N * H * W, 64), s3, t3)          # (N*H*W, 64) f32
    return jnp.transpose(out.reshape(N, H, W, 64), (0, 3, 1, 2))  # NHWC -> NCHW


# -----------------------------------------------------------------------------------------
# Deterministic parameter init (mirrors __init__ shapes; kaiming fan_out std).
# -----------------------------------------------------------------------------------------

def init_params(key, in_channels=3):
    ks = jax.random.split(key, 4)

    def kaiming_out(k, shape):   # shape = (Cout, Cin, kh, kw)
        fan_out = shape[0] * shape[2] * shape[3]
        return jax.random.normal(k, shape, jnp.float32) * jnp.sqrt(2.0 / fan_out)

    return {
        'enc1_w': kaiming_out(ks[0], (64, in_channels, 3, 3)),
        'enc1_b': jnp.zeros((64,), jnp.float32),
        'bn1_g': jnp.ones((64,), jnp.float32),
        'bn1_b': jnp.zeros((64,), jnp.float32),
        'enc2_w': kaiming_out(ks[1], (128, 64, 3, 3)),
        'enc2_b': jnp.zeros((128,), jnp.float32),
        'bn2_g': jnp.ones((128,), jnp.float32),
        'bn2_b': jnp.zeros((128,), jnp.float32),
        # ConvTranspose2d default init is uniform; any deterministic init is fine here.
        'up1_w': jax.random.normal(ks[2], (128, 64, 2, 2), jnp.float32) * 0.05,
        'up1_b': jnp.zeros((64,), jnp.float32),
        'dec1_w': kaiming_out(ks[3], (64, 128, 3, 3)),
        'dec1_b': jnp.zeros((64,), jnp.float32),
        'bn3_g': jnp.ones((64,), jnp.float32),
        'bn3_b': jnp.zeros((64,), jnp.float32),
    }


if __name__ == "__main__":
    key = jax.random.PRNGKey(0)
    k_x, k_p = jax.random.split(key)
    x = jax.random.normal(k_x, (2, 3, 16, 16), jnp.float32)    # NCHW, like PyTorch
    params = init_params(k_p, in_channels=3)

    fwd = jax.jit(shallow_unet_forward)
    out = jax.block_until_ready(fwd(x, params))

    assert out.shape == (2, 64, 16, 16), out.shape
    assert bool(jnp.all(jnp.isfinite(out)))
    assert bool(jnp.all(out >= 0.0))   # final ReLU
    print("KERNEL_OK")
</pallas_src>

<mosaic_0001>
module attributes {stable_mosaic.version = 11 : i64} {
  func.func @kernel(%arg0: i32, %arg1: i32, %arg2: memref<8x16x3xbf16, #tpu.memory_space<vmem>>, %arg3: memref<1x16x3xbf16, #tpu.memory_space<vmem>>, %arg4: memref<1x16x3xbf16, #tpu.memory_space<vmem>>, %arg5: memref<32x64xbf16, #tpu.memory_space<vmem>>, %arg6: memref<1x64xf32, #tpu.memory_space<vmem>>, %arg7: memref<8x16x64xbf16, #tpu.memory_space<vmem>>, %arg8: memref<1x2x64xf32, #tpu.memory_space<vmem>>, %arg9: memref<176x3xbf16, #tpu.memory_space<vmem>>, %arg10: memref<128x32xbf16, #tpu.memory_space<vmem>>) attributes {dimension_semantics = [#tpu.dimension_semantics<parallel>, #tpu.dimension_semantics<parallel>], iteration_bounds = array<i64: 2, 2>, scalar_prefetch = 0 : i64, scratch_operands = 2 : i64, tpu.core_type = #tpu.core_type<tc>, window_params = [{transform_indices = @transform_0, window_bounds = array<i64: 8, 16, 3>}, {transform_indices = @transform_1, window_bounds = array<i64: 1, 16, 3>}, {transform_indices = @transform_2, window_bounds = array<i64: 1, 16, 3>}, {pipeline_mode = #tpu.pipeline_mode<synchronous>, transform_indices = @transform_3, window_bounds = array<i64: 32, 64>}, {pipeline_mode = #tpu.pipeline_mode<synchronous>, transform_indices = @transform_4, window_bounds = array<i64: 1, 64>}, {transform_indices = @transform_5, window_bounds = array<i64: 8, 16, 64>}, {transform_indices = @transform_6, window_bounds = array<i64: 1, 2, 64>}]} {
    %0 = tpu.iota {dimensions = array<i32: 0>} : vector<128x1xi32>
    %c16_i32 = arith.constant 16 : i32
    %c0_i32 = arith.constant 0 : i32
    %1 = arith.cmpi eq, %c16_i32, %c0_i32 : i32
    %c1_i32 = arith.constant 1 : i32
    %2 = arith.select %1, %c1_i32, %c16_i32 : i32
    %3 = vector.broadcast %2 : i32 to vector<128x1xi32>
    %4 = arith.remsi %0, %3 : vector<128x1xi32>
    %c0_i32_0 = arith.constant 0 : i32
    %5 = vector.broadcast %c0_i32_0 : i32 to vector<128x1xi32>
    %6 = arith.cmpi ne, %4, %5 : vector<128x1xi32>
    %c0_i32_1 = arith.constant 0 : i32
    %7 = vector.broadcast %c0_i32_1 : i32 to vector<128x1xi32>
    %8 = arith.cmpi slt, %4, %7 : vector<128x1xi32>
    %c0_i32_2 = arith.constant 0 : i32
    %9 = arith.cmpi slt, %2, %c0_i32_2 : i32
    %10 = vector.broadcast %9 : i1 to vector<128x1xi1>
    %11 = vector.broadcast %10 : vector<128x1xi1> to vector<128x1xi1>
    %12 = arith.xori %8, %11 : vector<128x1xi1>
    %13 = arith.andi %12, %6 : vector<128x1xi1>
    %14 = vector.broadcast %2 : i32 to vector<128x1xi32>
    %15 = arith.addi %4, %14 : vector<128x1xi32>
    %16 = arith.select %13, %15, %4 : vector<128x1xi1>, vector<128x1xi32>
    %c15_i32 = arith.constant 15 : i32
    %17 = vector.broadcast %c15_i32 : i32 to vector<128x1xi32>
    %18 = arith.cmpi ne, %16, %17 : vector<128x1xi32>
    %c0_i32_3 = arith.constant 0 : i32
    %19 = vector.broadcast %c0_i32_3 : i32 to vector<128x1xi32>
    %20 = arith.cmpi ne, %16, %19 : vector<128x1xi32>
    %c0 = arith.constant 0 : index
    %c0_4 = arith.constant 0 : index
    %c0_5 = arith.constant 0 : index
    %21 = vector.load %arg2[%c0, %c0_4, %c0_5] : memref<8x16x3xbf16, #tpu.memory_space<vmem>>, vector<8x16x3xbf16>
    %22 = vector.shape_cast %21 : vector<8x16x3xbf16> to vector<128x3xbf16>
    %c0_6 = arith.constant 0 : index
    %c0_7 = arith.constant 0 : index
    %c0_8 = arith.constant 0 : index
    %23 = vector.load %arg3[%c0_6, %c0_7, %c0_8] : memref<1x16x3xbf16, #tpu.memory_space<vmem>>, vector<1x16x3xbf16>
    %24 = vector.shape_cast %23 : vector<1x16x3xbf16> to vector<16x3xbf16>
    %c0_9 = arith.constant 0 : index
    %c0_10 = arith.constant 0 : index
    %c0_11 = arith.constant 0 : index
    %25 = vector.load %arg4[%c0_9, %c0_10, %c0_11] : memref<1x16x3xbf16, #tpu.memory_space<vmem>>, vector<1x16x3xbf16>
    %26 = vector.shape_cast %25 : vector<1x16x3xbf16> to vector<16x3xbf16>
    %c0_i32_12 = arith.constant 0 : i32
    %27 = arith.cmpi eq, %arg1, %c0_i32_12 : i32
    %cst = arith.constant 0.000000e+00 : bf16
    %28 = vector.broadcast %cst : bf16 to vector<16x3xbf16>
    %29 = arith.select %27, %28, %24 : vector<16x3xbf16>
    %c1_i32_13 = arith.constant 1 : i32
    %30 = arith.cmpi eq, %arg1, %c1_i32_13 : i32
    %cst_14 = arith.constant 0.000000e+00 : bf16
    %31 = vector.broadcast %cst_14 : bf16 to vector<16x3xbf16>
    %32 = arith.select %30, %31, %26 : vector<16x3xbf16>
    %cst_15 = arith.constant 0.000000e+00 : bf16
    %33 = vector.broadcast %cst_15 : bf16 to vector<8x3xbf16>
    %c0_16 = arith.constant 0 : index
    %c0_17 = arith.constant 0 : index
    %34 = vector.load %arg9[%c0_16, %c0_17] : memref<176x3xbf16, #tpu.memory_space<vmem>>, vector<8x3xbf16>
    tpu.vector_store %arg9[%c0_16, %c0_17], %33 {strides = array<i32>} : memref<176x3xbf16, #tpu.memory_space<vmem>>, vector<8x3xbf16>,
    %c8 = arith.constant 8 : index
    %c0_18 = arith.constant 0 : index
    %35 = vector.load %arg9[%c8, %c0_18] : memref<176x3xbf16, #tpu.memory_space<vmem>>, vector<16x3xbf16>
    tpu.vector_store %arg9[%c8, %c0_18], %29 {strides = array<i32>} : memref<176x3xbf16, #tpu.memory_space<vmem>>, vector<16x3xbf16>,
    %c24 = arith.constant 24 : index
    %c0_19 = arith.constant 0 : index
    %36 = vector.load %arg9[%c24, %c0_19] : memref<176x3xbf16, #tpu.memory_space<vmem>>, vector<128x3xbf16>
    tpu.vector_store %arg9[%c24, %c0_19], %22 {strides = array<i32>} : memref<176x3xbf16, #tpu.memory_space<vmem>>, vector<128x3xbf16>,
    %c152 = arith.constant 152 : index
    %c0_20 = arith.constant 0 : index
    %37 = vector.load %arg9[%c152, %c0_20] : memref<176x3xbf16, #tpu.memory_space<vmem>>, vector<16x3xbf16>
    tpu.vector_store %arg9[%c152, %c0_20], %32 {strides = array<i32>} : memref<176x3xbf16, #tpu.memory_space<vmem>>, vector<16x3xbf16>,
    %cst_21 = arith.constant 0.000000e+00 : bf16
    %38 = vector.broadcast %cst_21 : bf16 to vector<8x3xbf16>
    %c168 = arith.constant 168 : index
    %c0_22 = arith.constant 0 : index
    %39 = vector.load %arg9[%c168, %c0_22] : memref<176x3xbf16, #tpu.memory_space<vmem>>, vector<8x3xbf16>
    tpu.vector_store %arg9[%c168, %c0_22], %38 {strides = array<i32>} : memref<176x3xbf16, #tpu.memory_space<vmem>>, vector<8x3xbf16>,
    %c7 = arith.constant 7 : index
    %c0_23 = arith.constant 0 : index
    %40 = vector.load %arg9[%c7, %c0_23] : memref<176x3xbf16, #tpu.memory_space<vmem>>, vector<128x3xbf16>
    %cst_24 = arith.constant 0.000000e+00 : bf16
    %41 = vector.broadcast %cst_24 : bf16 to vector<128x3xbf16>
    %42 = vector.shape_cast %20 : vector<128x1xi1> to vector<128x1xi1>
    %43 = vector.broadcast %42 : vector<128x1xi1> to vector<128x3xi1>
    %44 = arith.select %43, %40, %41 : vector<128x3xi1>, vector<128x3xbf16>
    %c0_25 = arith.constant 0 : index
    %c0_26 = arith.constant 0 : index
    %45 = vector.load %arg10[%c0_25, %c0_26] : memref<128x32xbf16, #tpu.memory_space<vmem>>, vector<128x3xbf16>
    tpu.vector_store %arg10[%c0_25, %c0_26], %44 {strides = array<i32>} : memref<128x32xbf16, #tpu.memory_space<vmem>>, vector<128x3xbf16>,
    %c8_27 = arith.constant 8 : index
    %c0_28 = arith.constant 0 : index
    %46 = vector.load %arg9[%c8_27, %c0_28] : memref<176x3xbf16, #tpu.memory_space<vmem>>, vector<128x3xbf16>
    %c0_29 = arith.constant 0 : index
    %c3 = arith.constant 3 : index
    %47 = vector.load %arg10[%c0_29, %c3] : memref<128x32xbf16, #tpu.memory_space<vmem>>, vector<128x3xbf16>
    tpu.vector_store %arg10[%c0_29, %c3], %46 {strides = array<i32>} : memref<128x32xbf16, #tpu.memory_space<vmem>>, vector<128x3xbf16>,
    %c9 = arith.constant 9 : index
    %c0_30 = arith.constant 0 : index
    %48 = vector.load %arg9[%c9, %c0_30] : memref<176x3xbf16, #tpu.memory_space<vmem>>, vector<128x3xbf16>
    %cst_31 = arith.constant 0.000000e+00 : bf16
    %49 = vector.broadcast %cst_31 : bf16 to vector<128x3xbf16>
    %50 = vector.shape_cast %18 : vector<128x1xi1> to vector<128x1xi1>
    %51 = vector.broadcast %50 : vector<128x1xi1> to vector<128x3xi1>
    %52 = arith.select %51, %48, %49 : vector<128x3xi1>, vector<128x3xbf16>
    %c0_32 = arith.constant 0 : index
    %c6 = arith.constant 6 : index
    %53 = vector.load %arg10[%c0_32, %c6] : memref<128x32xbf16, #tpu.memory_space<vmem>>, vector<128x3xbf16>
    tpu.vector_store %arg10[%c0_32, %c6], %52 {strides = array<i32>} : memref<128x32xbf16, #tpu.memory_space<vmem>>, vector<128x3xbf16>,
    %c23 = arith.constant 23 : index
    %c0_33 = arith.constant 0 : index
    %54 = vector.load %arg9[%c23, %c0_33] : memref<176x3xbf16, #tpu.memory_space<vmem>>, vector<128x3xbf16>
    %cst_34 = arith.constant 0.000000e+00 : bf16
    %55 = vector.broadcast %cst_34 : bf16 to vector<128x3xbf16>
    %56 = vector.shape_cast %20 : vector<128x1xi1> to vector<128x1xi1>
    %57 = vector.broadcast %56 : vector<128x1xi1> to vector<128x3xi1>
    %58 = arith.select %57, %54, %55 : vector<128x3xi1>, vector<128x3xbf16>
    %c0_35 = arith.constant 0 : index
    %c9_36 = arith.constant 9 : index
    %59 = vector.load %arg10[%c0_35, %c9_36] : memref<128x32xbf16, #tpu.memory_space<vmem>>, vector<128x3xbf16>
    tpu.vector_store %arg10[%c0_35, %c9_36], %58 {strides = array<i32>} : memref<128x32xbf16, #tpu.memory_space<vmem>>, vector<128x3xbf16>,
    %c24_37 = arith.constant 24 : index
    %c0_38 = arith.constant 0 : index
    %60 = vector.load %arg9[%c24_37, %c0_38] : memref<176x3xbf16, #tpu.memory_space<vmem>>, vector<128x3xbf16>
    %c0_39 = arith.constant 0 : index
    %c12 = arith.constant 12 : index
    %61 = vector.load %arg10[%c0_39, %c12] : memref<128x32xbf16, #tpu.memory_space<vmem>>, vector<128x3xbf16>
    tpu.vector_store %arg10[%c0_39, %c12], %60 {strides = array<i32>} : memref<128x32xbf16, #tpu.memory_space<vmem>>, vector<128x3xbf16>,
    %c25 = arith.constant 25 : index
    %c0_40 = arith.constant 0 : index
    %62 = vector.load %arg9[%c25, %c0_40] : memref<176x3xbf16, #tpu.memory_space<vmem>>, vector<128x3xbf16>
    %cst_41 = arith.constant 0.000000e+00 : bf16
    %63 = vector.broadcast %cst_41 : bf16 to vector<128x3xbf16>
    %64 = vector.shape_cast %18 : vector<128x1xi1> to vector<128x1xi1>
    %65 = vector.broadcast %64 : vector<128x1xi1> to vector<128x3xi1>
    %66 = arith.select %65, %62, %63 : vector<128x3xi1>, vector<128x3xbf16>
    %c0_42 = arith.constant 0 : index
    %c15 = arith.constant 15 : index
    %67 = vector.load %arg10[%c0_42, %c15] : memref<128x32xbf16, #tpu.memory_space<vmem>>, vector<128x3xbf16>
    tpu.vector_store %arg10[%c0_42, %c15], %66 {strides = array<i32>} : memref<128x32xbf16, #tpu.memory_space<vmem>>, vector<128x3xbf16>,
    %c39 = arith.constant 39 : index
    %c0_43 = arith.constant 0 : index
    %68 = vector.load %arg9[%c39, %c0_43] : memref<176x3xbf16, #tpu.memory_space<vmem>>, vector<128x3xbf16>
    %cst_44 = arith.constant 0.000000e+00 : bf16
    %69 = vector.broadcast %cst_44 : bf16 to vector<128x3xbf16>
    %70 = vector.shape_cast %20 : vector<128x1xi1> to vector<128x1xi1>
    %71 = vector.broadcast %70 : vector<128x1xi1> to vector<128x3xi1>
    %72 = arith.select %71, %68, %69 : vector<128x3xi1>, vector<128x3xbf16>
    %c0_45 = arith.constant 0 : index
    %c18 = arith.constant 18 : index
    %73 = vector.load %arg10[%c0_45, %c18] : memref<128x32xbf16, #tpu.memory_space<vmem>>, vector<128x3xbf16>
    tpu.vector_store %arg10[%c0_45, %c18], %72 {strides = array<i32>} : memref<128x32xbf16, #tpu.memory_space<vmem>>, vector<128x3xbf16>,
    %c40 = arith.constant 40 : index
    %c0_46 = arith.constant 0 : index
    %74 = vector.load %arg9[%c40, %c0_46] : memref<176x3xbf16, #tpu.memory_space<vmem>>, vector<128x3xbf16>
    %c0_47 = arith.constant 0 : index
    %c21 = arith.constant 21 : index
    %75 = vector.load %arg10[%c0_47, %c21] : memref<128x32xbf16, #tpu.memory_space<vmem>>, vector<128x3xbf16>
    tpu.vector_store %arg10[%c0_47, %c21], %74 {strides = array<i32>} : memref<128x32xbf16, #tpu.memory_space<vmem>>, vector<128x3xbf16>,
    %c41 = arith.constant 41 : index
    %c0_48 = arith.constant 0 : index
    %76 = vector.load %arg9[%c41, %c0_48] : memref<176x3xbf16, #tpu.memory_space<vmem>>, vector<128x3xbf16>
    %cst_49 = arith.constant 0.000000e+00 : bf16
    %77 = vector.broadcast %cst_49 : bf16 to vector<128x3xbf16>
    %78 = vector.shape_cast %18 : vector<128x1xi1> to vector<128x1xi1>
    %79 = vector.broadcast %78 : vector<128x1xi1> to vector<128x3xi1>
    %80 = arith.select %79, %76, %77 : vector<128x3xi1>, vector<128x3xbf16>
    %c0_50 = arith.constant 0 : index
    %c24_51 = arith.constant 24 : index
    %81 = vector.load %arg10[%c0_50, %c24_51] : memref<128x32xbf16, #tpu.memory_space<vmem>>, vector<128x3xbf16>
    tpu.vector_store %arg10[%c0_50, %c24_51], %80 {strides = array<i32>} : memref<128x32xbf16, #tpu.memory_space<vmem>>, vector<128x3xbf16>,
    %cst_52 = arith.constant 0.000000e+00 : bf16
    %82 = vector.broadcast %cst_52 : bf16 to vector<128x5xbf16>
    %c0_53 = arith.constant 0 : index
    %c27 = arith.constant 27 : index
    %83 = vector.load %arg10[%c0_53, %c27] : memref<128x32xbf16, #tpu.memory_space<vmem>>, vector<128x5xbf16>
    tpu.vector_store %arg10[%c0_53, %c27], %82 {strides = array<i32>} : memref<128x32xbf16, #tpu.memory_space<vmem>>, vector<128x5xbf16>,
    %c0_54 = arith.constant 0 : index
    %c0_55 = arith.constant 0 : index
    %84 = vector.load %arg10[%c0_54, %c0_55] : memref<128x32xbf16, #tpu.memory_space<vmem>>, vector<128x32xbf16>
    %c0_56 = arith.constant 0 : index
    %c0_57 = arith.constant 0 : index
    %85 = vector.load %arg5[%c0_56, %c0_57] : memref<32x64xbf16, #tpu.memory_space<vmem>>, vector<32x64xbf16>
    %cst_58 = arith.constant dense<0.000000e+00> : vector<128x64xf32>
    %86 = tpu.matmul %84, %85, %cst_58 {dimension_numbers = #tpu.dot_dimension_numbers<[1], [0], [0], [1], [0, 0, 1, 1], [], []>} : vector<128x32xbf16>, vector<32x64xbf16>, vector<128x64xf32> -> vector<128x64xf32>
    %c0_59 = arith.constant 0 : index
    %c0_60 = arith.constant 0 : index
    %87 = vector.load %arg6[%c0_59, %c0_60] : memref<1x64xf32, #tpu.memory_space<vmem>>, vector<1x64xf32>
    %88 = vector.broadcast %87 : vector<1x64xf32> to vector<128x64xf32>
    %89 = arith.addf %86, %88 : vector<128x64xf32>
    %90 = vector.shape_cast %89 : vector<128x64xf32> to vector<8x16x64xf32>
    %91 = arith.truncf %90 : vector<8x16x64xf32> to vector<8x16x64xbf16>
    %c0_61 = arith.constant 0 : index
    %c0_62 = arith.constant 0 : index
    %c0_63 = arith.constant 0 : index
    %92 = vector.load %arg7[%c0_61, %c0_62, %c0_63] : memref<8x16x64xbf16, #tpu.memory_space<vmem>>, vector<8x16x64xbf16>
    tpu.vector_store %arg7[%c0_61, %c0_62, %c0_63], %91 {strides = array<i32>} : memref<8x16x64xbf16, #tpu.memory_space<vmem>>, vector<8x16x64xbf16>,
    %cst_64 = arith.constant dense<0.000000e+00> : vector<64xf32>
    %93 = vector.multi_reduction <add>, %89, %cst_64 [0] : vector<128x64xf32> to vector<64xf32>
    %94 = vector.shape_cast %93 : vector<64xf32> to vector<1x64xf32>
    %95 = vector.shape_cast %94 : vector<1x64xf32> to vector<1x1x64xf32>
    %c0_65 = arith.constant 0 : index
    %c0_66 = arith.constant 0 : index
    %c0_67 = arith.constant 0 : index
    %96 = vector.load %arg8[%c0_65, %c0_66, %c0_67] : memref<1x2x64xf32, #tpu.memory_space<vmem>>, vector<1x1x64xf32>
    tpu.vector_store %arg8[%c0_65, %c0_66, %c0_67], %95 {strides = array<i32>} : memref<1x2x64xf32, #tpu.memory_space<vmem>>, vector<1x1x64xf32>,
    %97 = arith.mulf %89, %89 : vector<128x64xf32>
    %cst_68 = arith.constant dense<0.000000e+00> : vector<64xf32>
    %98 = vector.multi_reduction <add>, %97, %cst_68 [0] : vector<128x64xf32> to vector<64xf32>
    %99 = vector.shape_cast %98 : vector<64xf32> to vector<1x64xf32>
    %100 = vector.shape_cast %99 : vector<1x64xf32> to vector<1x1x64xf32>
    %c0_69 = arith.constant 0 : index
    %c1 = arith.constant 1 : index
    %c0_70 = arith.constant 0 : index
    %101 = vector.load %arg8[%c0_69, %c1, %c0_70] : memref<1x2x64xf32, #tpu.memory_space<vmem>>, vector<1x1x64xf32>
    tpu.vector_store %arg8[%c0_69, %c1, %c0_70], %100 {strides = array<i32>} : memref<1x2x64xf32, #tpu.memory_space<vmem>>, vector<1x1x64xf32>,
    return
  }
  func.func @transform_0(%arg0: i32, %arg1: i32) -> (i32, i32, i32) {
    %c2_i32 = arith.constant 2 : i32
    %0 = arith.muli %arg0, %c2_i32 : i32
    %1 = arith.addi %0, %arg1 : i32
    %c0_i32 = arith.constant 0 : i32
    %c0_i32_0 = arith.constant 0 : i32
    %c0_i32_1 = arith.constant 0 : i32
    return %1, %c0_i32, %c0_i32_0 : i32, i32, i32
  }
  func.func @transform_1(%arg0: i32, %arg1: i32) -> (i32, i32, i32) {
    %c16_i32 = arith.constant 16 : i32
    %0 = arith.muli %arg0, %c16_i32 : i32
    %c8_i32 = arith.constant 8 : i32
    %1 = arith.muli %arg1, %c8_i32 : i32
    %c1_i32 = arith.constant 1 : i32
    %2 = arith.subi %1, %c1_i32 : i32
    %c0_i32 = arith.constant 0 : i32
    %3 = arith.maxsi %2, %c0_i32 : i32
    %4 = arith.addi %0, %3 : i32
    %c0_i32_0 = arith.constant 0 : i32
    %c0_i32_1 = arith.constant 0 : i32
    %c0_i32_2 = arith.constant 0 : i32
    return %4, %c0_i32_0, %c0_i32_1 : i32, i32, i32
  }
  func.func @transform_2(%arg0: i32, %arg1: i32) -> (i32, i32, i32) {
    %c16_i32 = arith.constant 16 : i32
    %0 = arith.muli %arg0, %c16_i32 : i32
    %c1_i32 = arith.constant 1 : i32
    %1 = arith.addi %arg1, %c1_i32 : i32
    %c8_i32 = arith.constant 8 : i32
    %2 = arith.muli %1, %c8_i32 : i32
    %c15_i32 = arith.constant 15 : i32
    %3 = arith.minsi %2, %c15_i32 : i32
    %4 = arith.addi %0, %3 : i32
    %c0_i32 = arith.constant 0 : i32
    %c0_i32_0 = arith.constant 0 : i32
    %c0_i32_1 = arith.constant 0 : i32
    return %4, %c0_i32, %c0_i32_0 : i32, i32, i32
  }
  func.func @transform_3(%arg0: i32, %arg1: i32) -> (i32, i32) {
    %c0_i32 = arith.constant 0 : i32
    %c0_i32_0 = arith.constant 0 : i32
    %c0_i32_1 = arith.constant 0 : i32
    return %c0_i32, %c0_i32_0 : i32, i32
  }
  func.func @transform_4(%arg0: i32, %arg1: i32) -> (i32, i32) {
    %c0_i32 = arith.constant 0 : i32
    %c0_i32_0 = arith.constant 0 : i32
    %c0_i32_1 = arith.constant 0 : i32
    return %c0_i32, %c0_i32_0 : i32, i32
  }
  func.func @transform_5(%arg0: i32, %arg1: i32) -> (i32, i32, i32) {
    %c2_i32 = arith.constant 2 : i32
    %0 = arith.muli %arg0, %c2_i32 : i32
    %1 = arith.addi %0, %arg1 : i32
    %c0_i32 = arith.constant 0 : i32
    %c0_i32_0 = arith.constant 0 : i32
    %c0_i32_1 = arith.constant 0 : i32
    return %1, %c0_i32, %c0_i32_0 : i32, i32, i32
  }
  func.func @transform_6(%arg0: i32, %arg1: i32) -> (i32, i32, i32) {
    %c2_i32 = arith.constant 2 : i32
    %0 = arith.muli %arg0, %c2_i32 : i32
    %1 = arith.addi %0, %arg1 : i32
    %c0_i32 = arith.constant 0 : i32
    %c0_i32_0 = arith.constant 0 : i32
    %c0_i32_1 = arith.constant 0 : i32
    return %1, %c0_i32, %c0_i32_0 : i32, i32, i32
  }
}

module attributes {stable_mosaic.version = 11 : i64} {
  func.func @kernel(%arg0: i32, %arg1: i32, %arg2: memref<8x8x128xbf16, #tpu.memory_space<vmem>>, %arg3: memref<2x8x128xbf16, #tpu.memory_space<vmem>>, %arg4: memref<2x8x128xbf16, #tpu.memory_space<vmem>>, %arg5: memref<1x128xf32, #tpu.memory_space<vmem>>, %arg6: memref<1x128xf32, #tpu.memory_space<vmem>>, %arg7: memref<576x128xbf16, #tpu.memory_space<vmem>>, %arg8: memref<1x128xf32, #tpu.memory_space<vmem>>, %arg9: memref<4x8x128xbf16, #tpu.memory_space<vmem>>, %arg10: memref<1x2x128xf32, #tpu.memory_space<vmem>>, %arg11: memref<64x64xbf16, #tpu.memory_space<vmem>>, %arg12: memref<32x576xbf16, #tpu.memory_space<vmem>>) attributes {dimension_semantics = [#tpu.dimension_semantics<parallel>, #tpu.dimension_semantics<parallel>], iteration_bounds = array<i64: 2, 2>, scalar_prefetch = 0 : i64, scratch_operands = 2 : i64, tpu.core_type = #tpu.core_type<tc>, window_params = [{transform_indices = @transform_0, window_bounds = array<i64: 8, 8, 128>}, {transform_indices = @transform_1, window_bounds = array<i64: 2, 8, 128>}, {transform_indices = @transform_2, window_bounds = array<i64: 2, 8, 128>}, {pipeline_mode = #tpu.pipeline_mode<synchronous>, transform_indices = @transform_3, window_bounds = array<i64: 1, 128>}, {pipeline_mode = #tpu.pipeline_mode<synchronous>, transform_indices = @transform_4, window_bounds = array<i64: 1, 128>}, {pipeline_mode = #tpu.pipeline_mode<synchronous>, transform_indices = @transform_5, window_bounds = array<i64: 576, 128>}, {pipeline_mode = #tpu.pipeline_mode<synchronous>, transform_indices = @transform_6, window_bounds = array<i64: 1, 128>}, {transform_indices = @transform_7, window_bounds = array<i64: 4, 8, 128>}, {transform_indices = @transform_8, window_bounds = array<i64: 1, 2, 128>}]} {
    %0 = tpu.iota {dimensions = array<i32: 0>} : vector<32x1xi32>
    %c8_i32 = arith.constant 8 : i32
    %c0_i32 = arith.constant 0 : i32
    %1 = arith.cmpi eq, %c8_i32, %c0_i32 : i32
    %c1_i32 = arith.constant 1 : i32
    %2 = arith.select %1, %c1_i32, %c8_i32 : i32
    %3 = vector.broadcast %2 : i32 to vector<32x1xi32>
    %4 = arith.remsi %0, %3 : vector<32x1xi32>
    %c0_i32_0 = arith.constant 0 : i32
    %5 = vector.broadcast %c0_i32_0 : i32 to vector<32x1xi32>
    %6 = arith.cmpi ne, %4, %5 : vector<32x1xi32>
    %c0_i32_1 = arith.constant 0 : i32
    %7 = vector.broadcast %c0_i32_1 : i32 to vector<32x1xi32>
    %8 = arith.cmpi slt, %4, %7 : vector<32x1xi32>
    %c0_i32_2 = arith.constant 0 : i32
    %9 = arith.cmpi slt, %2, %c0_i32_2 : i32
    %10 = vector.broadcast %9 : i1 to vector<32x1xi1>
    %11 = vector.broadcast %10 : vector<32x1xi1> to vector<32x1xi1>
    %12 = arith.xori %8, %11 : vector<32x1xi1>
    %13 = arith.andi %12, %6 : vector<32x1xi1>
    %14 = vector.broadcast %2 : i32 to vector<32x1xi32>
    %15 = arith.addi %4, %14 : vector<32x1xi32>
    %16 = arith.select %13, %15, %4 : vector<32x1xi1>, vector<32x1xi32>
    %c7_i32 = arith.constant 7 : i32
    %17 = vector.broadcast %c7_i32 : i32 to vector<32x1xi32>
    %18 = arith.cmpi ne, %16, %17 : vector<32x1xi32>
    %c0_i32_3 = arith.constant 0 : i32
    %19 = vector.broadcast %c0_i32_3 : i32 to vector<32x1xi32>
    %20 = arith.cmpi ne, %16, %19 : vector<32x1xi32>
    %c0 = arith.constant 0 : index
    %c0_4 = arith.constant 0 : index
    %21 = vector.load %arg5[%c0, %c0_4] : memref<1x128xf32, #tpu.memory_space<vmem>>, vector<1x128xf32>
    %22 = vector.shape_cast %21 : vector<1x128xf32> to vector<1x1x128xf32>
    %c0_5 = arith.constant 0 : index
    %c0_6 = arith.constant 0 : index
    %23 = vector.load %arg6[%c0_5, %c0_6] : memref<1x128xf32, #tpu.memory_space<vmem>>, vector<1x128xf32>
    %24 = vector.shape_cast %23 : vector<1x128xf32> to vector<1x1x128xf32>
    %c0_7 = arith.constant 0 : index
    %c0_8 = arith.constant 0 : index
    %c0_9 = arith.constant 0 : index
    %25 = vector.load %arg2[%c0_7, %c0_8, %c0_9] : memref<8x8x128xbf16, #tpu.memory_space<vmem>>, vector<8x8x128xbf16>
    %26 = arith.extf %25 : vector<8x8x128xbf16> to vector<8x8x128xf32>
    %27 = vector.broadcast %22 : vector<1x1x128xf32> to vector<8x8x128xf32>
    %28 = arith.mulf %26, %27 : vector<8x8x128xf32>
    %29 = vector.broadcast %24 : vector<1x1x128xf32> to vector<8x8x128xf32>
    %30 = arith.addf %28, %29 : vector<8x8x128xf32>
    %cst = arith.constant 0.000000e+00 : f32
    %31 = vector.broadcast %cst : f32 to vector<8x8x128xf32>
    %32 = arith.maximumf %30, %31 : vector<8x8x128xf32>
    %33 = vector.extract_strided_slice %32 {offsets = [0, 0, 0], sizes = [8, 8, 64], strides = [1, 1, 1]} : vector<8x8x128xf32> to vector<8x8x64xf32>
    %34 = vector.extract_strided_slice %32 {offsets = [0, 0, 64], sizes = [8, 8, 64], strides = [1, 1, 1]} : vector<8x8x128xf32> to vector<8x8x64xf32>
    %35 = arith.maximumf %33, %34 : vector<8x8x64xf32>
    %36 = vector.shape_cast %35 : vector<8x8x64xf32> to vector<4x2x8x64xf32>
    %37 = vector.extract_strided_slice %36 {offsets = [0, 0, 0, 0], sizes = [4, 1, 8, 64], strides = [1, 1, 1, 1]} : vector<4x2x8x64xf32> to vector<4x1x8x64xf32>
    %38 = vector.shape_cast %37 : vector<4x1x8x64xf32> to vector<4x8x64xf32>
    %39 = vector.extract_strided_slice %36 {offsets = [0, 1, 0, 0], sizes = [4, 1, 8, 64], strides = [1, 1, 1, 1]} : vector<4x2x8x64xf32> to vector<4x1x8x64xf32>
    %40 = vector.shape_cast %39 : vector<4x1x8x64xf32> to vector<4x8x64xf32>
    %41 = arith.maximumf %38, %40 : vector<4x8x64xf32>
    %42 = vector.shape_cast %41 : vector<4x8x64xf32> to vector<32x64xf32>
    %43 = arith.truncf %42 : vector<32x64xf32> to vector<32x64xbf16>
    %c0_10 = arith.constant 0 : index
    %c0_11 = arith.constant 0 : index
    %c0_12 = arith.constant 0 : index
    %44 = vector.load %arg3[%c0_10, %c0_11, %c0_12] : memref<2x8x128xbf16, #tpu.memory_space<vmem>>, vector<2x8x128xbf16>
    %45 = arith.extf %44 : vector<2x8x128xbf16> to vector<2x8x128xf32>
    %46 = vector.broadcast %22 : vector<1x1x128xf32> to vector<2x8x128xf32>
    %47 = arith.mulf %45, %46 : vector<2x8x128xf32>
    %48 = vector.broadcast %24 : vector<1x1x128xf32> to vector<2x8x128xf32>
    %49 = arith.addf %47, %48 : vector<2x8x128xf32>
    %cst_13 = arith.constant 0.000000e+00 : f32
    %50 = vector.broadcast %cst_13 : f32 to vector<2x8x128xf32>
    %51 = arith.maximumf %49, %50 : vector<2x8x128xf32>
    %52 = vector.extract_strided_slice %51 {offsets = [0, 0, 0], sizes = [2, 8, 64], strides = [1, 1, 1]} : vector<2x8x128xf32> to vector<2x8x64xf32>
    %53 = vector.extract_strided_slice %51 {offsets = [0, 0, 64], sizes = [2, 8, 64], strides = [1, 1, 1]} : vector<2x8x128xf32> to vector<2x8x64xf32>
    %54 = arith.maximumf %52, %53 : vector<2x8x64xf32>
    %55 = vector.shape_cast %54 : vector<2x8x64xf32> to vector<1x2x8x64xf32>
    %56 = vector.extract_strided_slice %55 {offsets = [0, 0, 0, 0], sizes = [1, 1, 8, 64], strides = [1, 1, 1, 1]} : vector<1x2x8x64xf32> to vector<1x1x8x64xf32>
    %57 = vector.shape_cast %56 : vector<1x1x8x64xf32> to vector<1x8x64xf32>
    %58 = vector.extract_strided_slice %55 {offsets = [0, 1, 0, 0], sizes = [1, 1, 8, 64], strides = [1, 1, 1, 1]} : vector<1x2x8x64xf32> to vector<1x1x8x64xf32>
    %59 = vector.shape_cast %58 : vector<1x1x8x64xf32> to vector<1x8x64xf32>
    %60 = arith.maximumf %57, %59 : vector<1x8x64xf32>
    %61 = vector.shape_cast %60 : vector<1x8x64xf32> to vector<8x64xf32>
    %62 = arith.truncf %61 : vector<8x64xf32> to vector<8x64xbf16>
    %c0_14 = arith.constant 0 : index
    %c0_15 = arith.constant 0 : index
    %c0_16 = arith.constant 0 : index
    %63 = vector.load %arg4[%c0_14, %c0_15, %c0_16] : memref<2x8x128xbf16, #tpu.memory_space<vmem>>, vector<2x8x128xbf16>
    %64 = arith.extf %63 : vector<2x8x128xbf16> to vector<2x8x128xf32>
    %65 = vector.broadcast %22 : vector<1x1x128xf32> to vector<2x8x128xf32>
    %66 = arith.mulf %64, %65 : vector<2x8x128xf32>
    %67 = vector.broadcast %24 : vector<1x1x128xf32> to vector<2x8x128xf32>
    %68 = arith.addf %66, %67 : vector<2x8x128xf32>
    %cst_17 = arith.constant 0.000000e+00 : f32
    %69 = vector.broadcast %cst_17 : f32 to vector<2x8x128xf32>
    %70 = arith.maximumf %68, %69 : vector<2x8x128xf32>
    %71 = vector.extract_strided_slice %70 {offsets = [0, 0, 0], sizes = [2, 8, 64], strides = [1, 1, 1]} : vector<2x8x128xf32> to vector<2x8x64xf32>
    %72 = vector.extract_strided_slice %70 {offsets = [0, 0, 64], sizes = [2, 8, 64], strides = [1, 1, 1]} : vector<2x8x128xf32> to vector<2x8x64xf32>
    %73 = arith.maximumf %71, %72 : vector<2x8x64xf32>
    %74 = vector.shape_cast %73 : vector<2x8x64xf32> to vector<1x2x8x64xf32>
    %75 = vector.extract_strided_slice %74 {offsets = [0, 0, 0, 0], sizes = [1, 1, 8, 64], strides = [1, 1, 1, 1]} : vector<1x2x8x64xf32> to vector<1x1x8x64xf32>
    %76 = vector.shape_cast %75 : vector<1x1x8x64xf32> to vector<1x8x64xf32>
    %77 = vector.extract_strided_slice %74 {offsets = [0, 1, 0, 0], sizes = [1, 1, 8, 64], strides = [1, 1, 1, 1]} : vector<1x2x8x64xf32> to vector<1x1x8x64xf32>
    %78 = vector.shape_cast %77 : vector<1x1x8x64xf32> to vector<1x8x64xf32>
    %79 = arith.maximumf %76, %78 : vector<1x8x64xf32>
    %80 = vector.shape_cast %79 : vector<1x8x64xf32> to vector<8x64xf32>
    %81 = arith.truncf %80 : vector<8x64xf32> to vector<8x64xbf16>
    %c0_i32_18 = arith.constant 0 : i32
    %82 = arith.cmpi eq, %arg1, %c0_i32_18 : i32
    %cst_19 = arith.constant 0.000000e+00 : bf16
    %83 = vector.broadcast %cst_19 : bf16 to vector<8x64xbf16>
    %84 = arith.select %82, %83, %62 : vector<8x64xbf16>
    %c1_i32_20 = arith.constant 1 : i32
    %85 = arith.cmpi eq, %arg1, %c1_i32_20 : i32
    %cst_21 = arith.constant 0.000000e+00 : bf16
    %86 = vector.broadcast %cst_21 : bf16 to vector<8x64xbf16>
    %87 = arith.select %85, %86, %81 : vector<8x64xbf16>
    %cst_22 = arith.constant 0.000000e+00 : bf16
    %88 = vector.broadcast %cst_22 : bf16 to vector<8x64xbf16>
    %c0_23 = arith.constant 0 : index
    %c0_24 = arith.constant 0 : index
    %89 = vector.load %arg11[%c0_23, %c0_24] : memref<64x64xbf16, #tpu.memory_space<vmem>>, vector<8x64xbf16>
    tpu.vector_store %arg11[%c0_23, %c0_24], %88 {strides = array<i32>} : memref<64x64xbf16, #tpu.memory_space<vmem>>, vector<8x64xbf16>,
    %c8 = arith.constant 8 : index
    %c0_25 = arith.constant 0 : index
    %90 = vector.load %arg11[%c8, %c0_25] : memref<64x64xbf16, #tpu.memory_space<vmem>>, vector<8x64xbf16>
    tpu.vector_store %arg11[%c8, %c0_25], %84 {strides = array<i32>} : memref<64x64xbf16, #tpu.memory_space<vmem>>, vector<8x64xbf16>,
    %c16 = arith.constant 16 : index
    %c0_26 = arith.constant 0 : index
    %91 = vector.load %arg11[%c16, %c0_26] : memref<64x64xbf16, #tpu.memory_space<vmem>>, vector<32x64xbf16>
    tpu.vector_store %arg11[%c16, %c0_26], %43 {strides = array<i32>} : memref<64x64xbf16, #tpu.memory_space<vmem>>, vector<32x64xbf16>,
    %c48 = arith.constant 48 : index
    %c0_27 = arith.constant 0 : index
    %92 = vector.load %arg11[%c48, %c0_27] : memref<64x64xbf16, #tpu.memory_space<vmem>>, vector<8x64xbf16>
    tpu.vector_store %arg11[%c48, %c0_27], %87 {strides = array<i32>} : memref<64x64xbf16, #tpu.memory_space<vmem>>, vector<8x64xbf16>,
    %cst_28 = arith.constant 0.000000e+00 : bf16
    %93 = vector.broadcast %cst_28 : bf16 to vector<8x64xbf16>
    %c56 = arith.constant 56 : index
    %c0_29 = arith.constant 0 : index
    %94 = vector.load %arg11[%c56, %c0_29] : memref<64x64xbf16, #tpu.memory_space<vmem>>, vector<8x64xbf16>
    tpu.vector_store %arg11[%c56, %c0_29], %93 {strides = array<i32>} : memref<64x64xbf16, #tpu.memory_space<vmem>>, vector<8x64xbf16>,
    %c7 = arith.constant 7 : index
    %c0_30 = arith.constant 0 : index
    %95 = vector.load %arg11[%c7, %c0_30] : memref<64x64xbf16, #tpu.memory_space<vmem>>, vector<32x64xbf16>
    %cst_31 = arith.constant 0.000000e+00 : bf16
    %96 = vector.broadcast %cst_31 : bf16 to vector<32x64xbf16>
    %97 = vector.shape_cast %20 : vector<32x1xi1> to vector<32x1xi1>
    %98 = vector.broadcast %97 : vector<32x1xi1> to vector<32x64xi1>
    %99 = arith.select %98, %95, %96 : vector<32x64xi1>, vector<32x64xbf16>
    %c0_32 = arith.constant 0 : index
    %c0_33 = arith.constant 0 : index
    %100 = vector.load %arg12[%c0_32, %c0_33] : memref<32x576xbf16, #tpu.memory_space<vmem>>, vector<32x64xbf16>
    tpu.vector_store %arg12[%c0_32, %c0_33], %99 {strides = array<i32>} : memref<32x576xbf16, #tpu.memory_space<vmem>>, vector<32x64xbf16>,
    %c8_34 = arith.constant 8 : index
    %c0_35 = arith.constant 0 : index
    %101 = vector.load %arg11[%c8_34, %c0_35] : memref<64x64xbf16, #tpu.memory_space<vmem>>, vector<32x64xbf16>
    %c0_36 = arith.constant 0 : index
    %c64 = arith.constant 64 : index
    %102 = vector.load %arg12[%c0_36, %c64] : memref<32x576xbf16, #tpu.memory_space<vmem>>, vector<32x64xbf16>
    tpu.vector_store %arg12[%c0_36, %c64], %101 {strides = array<i32>} : memref<32x576xbf16, #tpu.memory_space<vmem>>, vector<32x64xbf16>,
    %c9 = arith.constant 9 : index
    %c0_37 = arith.constant 0 : index
    %103 = vector.load %arg11[%c9, %c0_37] : memref<64x64xbf16, #tpu.memory_space<vmem>>, vector<32x64xbf16>
    %cst_38 = arith.constant 0.000000e+00 : bf16
    %104 = vector.broadcast %cst_38 : bf16 to vector<32x64xbf16>
    %105 = vector.shape_cast %18 : vector<32x1xi1> to vector<32x1xi1>
    %106 = vector.broadcast %105 : vector<32x1xi1> to vector<32x64xi1>
    %107 = arith.select %106, %103, %104 : vector<32x64xi1>, vector<32x64xbf16>
    %c0_39 = arith.constant 0 : index
    %c128 = arith.constant 128 : index
    %108 = vector.load %arg12[%c0_39, %c128] : memref<32x576xbf16, #tpu.memory_space<vmem>>, vector<32x64xbf16>
    tpu.vector_store %arg12[%c0_39, %c128], %107 {strides = array<i32>} : memref<32x576xbf16, #tpu.memory_space<vmem>>, vector<32x64xbf16>,
    %c15 = arith.constant 15 : index
    %c0_40 = arith.constant 0 : index
    %109 = vector.load %arg11[%c15, %c0_40] : memref<64x64xbf16, #tpu.memory_space<vmem>>, vector<32x64xbf16>
    %cst_41 = arith.constant 0.000000e+00 : bf16
    %110 = vector.broadcast %cst_41 : bf16 to vector<32x64xbf16>
    %111 = vector.shape_cast %20 : vector<32x1xi1> to vector<32x1xi1>
    %112 = vector.broadcast %111 : vector<32x1xi1> to vector<32x64xi1>
    %113 = arith.select %112, %109, %110 : vector<32x64xi1>, vector<32x64xbf16>
    %c0_42 = arith.constant 0 : index
    %c192 = arith.constant 192 : index
    %114 = vector.load %arg12[%c0_42, %c192] : memref<32x576xbf16, #tpu.memory_space<vmem>>, vector<32x64xbf16>
    tpu.vector_store %arg12[%c0_42, %c192], %113 {strides = array<i32>} : memref<32x576xbf16, #tpu.memory_space<vmem>>, vector<32x64xbf16>,
    %c16_43 = arith.constant 16 : index
    %c0_44 = arith.constant 0 : index
    %115 = vector.load %arg11[%c16_43, %c0_44] : memref<64x64xbf16, #tpu.memory_space<vmem>>, vector<32x64xbf16>
    %c0_45 = arith.constant 0 : index
    %c256 = arith.constant 256 : index
    %116 = vector.load %arg12[%c0_45, %c256] : memref<32x576xbf16, #tpu.memory_space<vmem>>, vector<32x64xbf16>
    tpu.vector_store %arg12[%c0_45, %c256], %115 {strides = array<i32>} : memref<32x576xbf16, #tpu.memory_space<vmem>>, vector<32x64xbf16>,
    %c17 = arith.constant 17 : index
    %c0_46 = arith.constant 0 : index
    %117 = vector.load %arg11[%c17, %c0_46] : memref<64x64xbf16, #tpu.memory_space<vmem>>, vector<32x64xbf16>
    %cst_47 = arith.constant 0.000000e+00 : bf16
    %118 = vector.broadcast %cst_47 : bf16 to vector<32x64xbf16>
    %119 = vector.shape_cast %18 : vector<32x1xi1> to vector<32x1xi1>
    %120 = vector.broadcast %119 : vector<32x1xi1> to vector<32x64xi1>
    %121 = arith.select %120, %117, %118 : vector<32x64xi1>, vector<32x64xbf16>
    %c0_48 = arith.constant 0 : index
    %c320 = arith.constant 320 : index
    %122 = vector.load %arg12[%c0_48, %c320] : memref<32x576xbf16, #tpu.memory_space<vmem>>, vector<32x64xbf16>
    tpu.vector_store %arg12[%c0_48, %c320], %121 {strides = array<i32>} : memref<32x576xbf16, #tpu.memory_space<vmem>>, vector<32x64xbf16>,
    %c23 = arith.constant 23 : index
    %c0_49 = arith.constant 0 : index
    %123 = vector.load %arg11[%c23, %c0_49] : memref<64x64xbf16, #tpu.memory_space<vmem>>, vector<32x64xbf16>
    %cst_50 = arith.constant 0.000000e+00 : bf16
    %124 = vector.broadcast %cst_50 : bf16 to vector<32x64xbf16>
    %125 = vector.shape_cast %20 : vector<32x1xi1> to vector<32x1xi1>
    %126 = vector.broadcast %125 : vector<32x1xi1> to vector<32x64xi1>
    %127 = arith.select %126, %123, %124 : vector<32x64xi1>, vector<32x64xbf16>
    %c0_51 = arith.constant 0 : index
    %c384 = arith.constant 384 : index
    %128 = vector.load %arg12[%c0_51, %c384] : memref<32x576xbf16, #tpu.memory_space<vmem>>, vector<32x64xbf16>
    tpu.vector_store %arg12[%c0_51, %c384], %127 {strides = array<i32>} : memref<32x576xbf16, #tpu.memory_space<vmem>>, vector<32x64xbf16>,
    %c24 = arith.constant 24 : index
    %c0_52 = arith.constant 0 : index
    %129 = vector.load %arg11[%c24, %c0_52] : memref<64x64xbf16, #tpu.memory_space<vmem>>, vector<32x64xbf16>
    %c0_53 = arith.constant 0 : index
    %c448 = arith.constant 448 : index
    %130 = vector.load %arg12[%c0_53, %c448] : memref<32x576xbf16, #tpu.memory_space<vmem>>, vector<32x64xbf16>
    tpu.vector_store %arg12[%c0_53, %c448], %129 {strides = array<i32>} : memref<32x576xbf16, #tpu.memory_space<vmem>>, vector<32x64xbf16>,
    %c25 = arith.constant 25 : index
    %c0_54 = arith.constant 0 : index
    %131 = vector.load %arg11[%c25, %c0_54] : memref<64x64xbf16, #tpu.memory_space<vmem>>, vector<32x64xbf16>
    %cst_55 = arith.constant 0.000000e+00 : bf16
    %132 = vector.broadcast %cst_55 : bf16 to vector<32x64xbf16>
    %133 = vector.shape_cast %18 : vector<32x1xi1> to vector<32x1xi1>
    %134 = vector.broadcast %133 : vector<32x1xi1> to vector<32x64xi1>
    %135 = arith.select %134, %131, %132 : vector<32x64xi1>, vector<32x64xbf16>
    %c0_56 = arith.constant 0 : index
    %c512 = arith.constant 512 : index
    %136 = vector.load %arg12[%c0_56, %c512] : memref<32x576xbf16, #tpu.memory_space<vmem>>, vector<32x64xbf16>
    tpu.vector_store %arg12[%c0_56, %c512], %135 {strides = array<i32>} : memref<32x576xbf16, #tpu.memory_space<vmem>>, vector<32x64xbf16>,
    %c0_57 = arith.constant 0 : index
    %c0_58 = arith.constant 0 : index
    %137 = vector.load %arg12[%c0_57, %c0_58] : memref<32x576xbf16, #tpu.memory_space<vmem>>, vector<32x576xbf16>
    %c0_59 = arith.constant 0 : index
    %c0_60 = arith.constant 0 : index
    %138 = vector.load %arg7[%c0_59, %c0_60] : memref<576x128xbf16, #tpu.memory_space<vmem>>, vector<576x128xbf16>
    %cst_61 = arith.constant dense<0.000000e+00> : vector<32x128xf32>
    %139 = tpu.matmul %137, %138, %cst_61 {dimension_numbers = #tpu.dot_dimension_numbers<[1], [0], [0], [1], [0, 0, 1, 1], [], []>} : vector<32x576xbf16>, vector<576x128xbf16>, vector<32x128xf32> -> vector<32x128xf32>
    %c0_62 = arith.constant 0 : index
    %c0_63 = arith.constant 0 : index
    %140 = vector.load %arg8[%c0_62, %c0_63] : memref<1x128xf32, #tpu.memory_space<vmem>>, vector<1x128xf32>
    %141 = vector.broadcast %140 : vector<1x128xf32> to vector<32x128xf32>
    %142 = arith.addf %139, %141 : vector<32x128xf32>
    %143 = vector.shape_cast %142 : vector<32x128xf32> to vector<4x8x128xf32>
    %144 = arith.truncf %143 : vector<4x8x128xf32> to vector<4x8x128xbf16>
    %c0_64 = arith.constant 0 : index
    %c0_65 = arith.constant 0 : index
    %c0_66 = arith.constant 0 : index
    %145 = vector.load %arg9[%c0_64, %c0_65, %c0_66] : memref<4x8x128xbf16, #tpu.memory_space<vmem>>, vector<4x8x128xbf16>
    tpu.vector_store %arg9[%c0_64, %c0_65, %c0_66], %144 {strides = array<i32>} : memref<4x8x128xbf16, #tpu.memory_space<vmem>>, vector<4x8x128xbf16>,
    %cst_67 = arith.constant dense<0.000000e+00> : vector<128xf32>
    %146 = vector.multi_reduction <add>, %142, %cst_67 [0] : vector<32x128xf32> to vector<128xf32>
    %147 = vector.shape_cast %146 : vector<128xf32> to vector<1x128xf32>
    %148 = vector.shape_cast %147 : vector<1x128xf32> to vector<1x1x128xf32>
    %c0_68 = arith.constant 0 : index
    %c0_69 = arith.constant 0 : index
    %c0_70 = arith.constant 0 : index
    %149 = vector.load %arg10[%c0_68, %c0_69, %c0_70] : memref<1x2x128xf32, #tpu.memory_space<vmem>>, vector<1x1x128xf32>
    tpu.vector_store %arg10[%c0_68, %c0_69, %c0_70], %148 {strides = array<i32>} : memref<1x2x128xf32, #tpu.memory_space<vmem>>, vector<1x1x128xf32>,
    %150 = arith.mulf %142, %142 : vector<32x128xf32>
    %cst_71 = arith.constant dense<0.000000e+00> : vector<128xf32>
    %151 = vector.multi_reduction <add>, %150, %cst_71 [0] : vector<32x128xf32> to vector<128xf32>
    %152 = vector.shape_cast %151 : vector<128xf32> to vector<1x128xf32>
    %153 = vector.shape_cast %152 : vector<1x128xf32> to vector<1x1x128xf32>
    %c0_72 = arith.constant 0 : index
    %c1 = arith.constant 1 : index
    %c0_73 = arith.constant 0 : index
    %154 = vector.load %arg10[%c0_72, %c1, %c0_73] : memref<1x2x128xf32, #tpu.memory_space<vmem>>, vector<1x1x128xf32>
    tpu.vector_store %arg10[%c0_72, %c1, %c0_73], %153 {strides = array<i32>} : memref<1x2x128xf32, #tpu.memory_space<vmem>>, vector<1x1x128xf32>,
    return
  }
  func.func @transform_0(%arg0: i32, %arg1: i32) -> (i32, i32, i32) {
    %c2_i32 = arith.constant 2 : i32
    %0 = arith.muli %arg0, %c2_i32 : i32
    %1 = arith.addi %0, %arg1 : i32
    %c0_i32 = arith.constant 0 : i32
    %c0_i32_0 = arith.constant 0 : i32
    %c0_i32_1 = arith.constant 0 : i32
    return %1, %c0_i32, %c0_i32_0 : i32, i32, i32
  }
  func.func @transform_1(%arg0: i32, %arg1: i32) -> (i32, i32, i32) {
    %c8_i32 = arith.constant 8 : i32
    %0 = arith.muli %arg0, %c8_i32 : i32
    %c4_i32 = arith.constant 4 : i32
    %1 = arith.muli %arg1, %c4_i32 : i32
    %c1_i32 = arith.constant 1 : i32
    %2 = arith.subi %1, %c1_i32 : i32
    %c0_i32 = arith.constant 0 : i32
    %3 = arith.maxsi %2, %c0_i32 : i32
    %4 = arith.addi %0, %3 : i32
    %c0_i32_0 = arith.constant 0 : i32
    %c0_i32_1 = arith.constant 0 : i32
    %c0_i32_2 = arith.constant 0 : i32
    return %4, %c0_i32_0, %c0_i32_1 : i32, i32, i32
  }
  func.func @transform_2(%arg0: i32, %arg1: i32) -> (i32, i32, i32) {
    %c8_i32 = arith.constant 8 : i32
    %0 = arith.muli %arg0, %c8_i32 : i32
    %c1_i32 = arith.constant 1 : i32
    %1 = arith.addi %arg1, %c1_i32 : i32
    %c4_i32 = arith.constant 4 : i32
    %2 = arith.muli %1, %c4_i32 : i32
    %c7_i32 = arith.constant 7 : i32
    %3 = arith.minsi %2, %c7_i32 : i32
    %4 = arith.addi %0, %3 : i32
    %c0_i32 = arith.constant 0 : i32
    %c0_i32_0 = arith.constant 0 : i32
    %c0_i32_1 = arith.constant 0 : i32
    return %4, %c0_i32, %c0_i32_0 : i32, i32, i32
  }
  func.func @transform_3(%arg0: i32, %arg1: i32) -> (i32, i32) {
    %c0_i32 = arith.constant 0 : i32
    %c0_i32_0 = arith.constant 0 : i32
    %c0_i32_1 = arith.constant 0 : i32
    return %c0_i32, %c0_i32_0 : i32, i32
  }
  func.func @transform_4(%arg0: i32, %arg1: i32) -> (i32, i32) {
    %c0_i32 = arith.constant 0 : i32
    %c0_i32_0 = arith.constant 0 : i32
    %c0_i32_1 = arith.constant 0 : i32
    return %c0_i32, %c0_i32_0 : i32, i32
  }
  func.func @transform_5(%arg0: i32, %arg1: i32) -> (i32, i32) {
    %c0_i32 = arith.constant 0 : i32
    %c0_i32_0 = arith.constant 0 : i32
    %c0_i32_1 = arith.constant 0 : i32
    return %c0_i32, %c0_i32_0 : i32, i32
  }
  func.func @transform_6(%arg0: i32, %arg1: i32) -> (i32, i32) {
    %c0_i32 = arith.constant 0 : i32
    %c0_i32_0 = arith.constant 0 : i32
    %c0_i32_1 = arith.constant 0 : i32
    return %c0_i32, %c0_i32_0 : i32, i32
  }
  func.func @transform_7(%arg0: i32, %arg1: i32) -> (i32, i32, i32) {
    %c2_i32 = arith.constant 2 : i32
    %0 = arith.muli %arg0, %c2_i32 : i32
    %1 = arith.addi %0, %arg1 : i32
    %c0_i32 = arith.constant 0 : i32
    %c0_i32_0 = arith.constant 0 : i32
    %c0_i32_1 = arith.constant 0 : i32
    return %1, %c0_i32, %c0_i32_0 : i32, i32, i32
  }
  func.func @transform_8(%arg0: i32, %arg1: i32) -> (i32, i32, i32) {
    %c2_i32 = arith.constant 2 : i32
    %0 = arith.muli %arg0, %c2_i32 : i32
    %1 = arith.addi %0, %arg1 : i32
    %c0_i32 = arith.constant 0 : i32
    %c0_i32_0 = arith.constant 0 : i32
    %c0_i32_1 = arith.constant 0 : i32
    return %1, %c0_i32, %c0_i32_0 : i32, i32, i32
  }
}

module attributes {stable_mosaic.version = 11 : i64} {
  func.func @kernel(%arg0: i32, %arg1: memref<8x8x128xbf16, #tpu.memory_space<vmem>>, %arg2: memref<128x256xbf16, #tpu.memory_space<vmem>>, %arg3: memref<1x256xf32, #tpu.memory_space<vmem>>, %arg4: memref<1x128xf32, #tpu.memory_space<vmem>>, %arg5: memref<1x128xf32, #tpu.memory_space<vmem>>, %arg6: memref<8x2x8x128xbf16, #tpu.memory_space<vmem>>) attributes {dimension_semantics = [#tpu.dimension_semantics<parallel>], iteration_bounds = array<i64: 2>, scalar_prefetch = 0 : i64, scratch_operands = 0 : i64, tpu.core_type = #tpu.core_type<tc>, window_params = [{transform_indices = @transform_0, window_bounds = array<i64: 8, 8, 128>}, {pipeline_mode = #tpu.pipeline_mode<synchronous>, transform_indices = @transform_1, window_bounds = array<i64: 128, 256>}, {pipeline_mode = #tpu.pipeline_mode<synchronous>, transform_indices = @transform_2, window_bounds = array<i64: 1, 256>}, {pipeline_mode = #tpu.pipeline_mode<synchronous>, transform_indices = @transform_3, window_bounds = array<i64: 1, 128>}, {pipeline_mode = #tpu.pipeline_mode<synchronous>, transform_indices = @transform_4, window_bounds = array<i64: 1, 128>}, {transform_indices = @transform_5, window_bounds = array<i64: 8, 2, 8, 128>}]} {
    %c0 = arith.constant 0 : index
    %c0_0 = arith.constant 0 : index
    %c0_1 = arith.constant 0 : index
    %0 = vector.load %arg1[%c0, %c0_0, %c0_1] : memref<8x8x128xbf16, #tpu.memory_space<vmem>>, vector<8x8x128xbf16>
    %1 = vector.shape_cast %0 : vector<8x8x128xbf16> to vector<64x128xbf16>
    %2 = arith.extf %1 : vector<64x128xbf16> to vector<64x128xf32>
    %c0_2 = arith.constant 0 : index
    %c0_3 = arith.constant 0 : index
    %3 = vector.load %arg4[%c0_2, %c0_3] : memref<1x128xf32, #tpu.memory_space<vmem>>, vector<1x128xf32>
    %4 = vector.broadcast %3 : vector<1x128xf32> to vector<64x128xf32>
    %5 = arith.mulf %2, %4 : vector<64x128xf32>
    %c0_4 = arith.constant 0 : index
    %c0_5 = arith.constant 0 : index
    %6 = vector.load %arg5[%c0_4, %c0_5] : memref<1x128xf32, #tpu.memory_space<vmem>>, vector<1x128xf32>
    %7 = vector.broadcast %6 : vector<1x128xf32> to vector<64x128xf32>
    %8 = arith.addf %5, %7 : vector<64x128xf32>
    %cst = arith.constant 0.000000e+00 : f32
    %9 = vector.broadcast %cst : f32 to vector<64x128xf32>
    %10 = arith.maximumf %8, %9 : vector<64x128xf32>
    %11 = arith.truncf %10 : vector<64x128xf32> to vector<64x128xbf16>
    %c0_6 = arith.constant 0 : index
    %c0_7 = arith.constant 0 : index
    %12 = vector.load %arg2[%c0_6, %c0_7] : memref<128x256xbf16, #tpu.memory_space<vmem>>, vector<128x256xbf16>
    %cst_8 = arith.constant dense<0.000000e+00> : vector<64x256xf32>
    %13 = tpu.matmul %11, %12, %cst_8 {dimension_numbers = #tpu.dot_dimension_numbers<[1], [0], [0], [1], [0, 0, 1, 1], [], []>} : vector<64x128xbf16>, vector<128x256xbf16>, vector<64x256xf32> -> vector<64x256xf32>
    %c0_9 = arith.constant 0 : index
    %c0_10 = arith.constant 0 : index
    %14 = vector.load %arg3[%c0_9, %c0_10] : memref<1x256xf32, #tpu.memory_space<vmem>>, vector<1x256xf32>
    %15 = vector.broadcast %14 : vector<1x256xf32> to vector<64x256xf32>
    %16 = arith.addf %13, %15 : vector<64x256xf32>
    %17 = arith.truncf %16 : vector<64x256xf32> to vector<64x256xbf16>
    %18 = vector.extract_strided_slice %17 {offsets = [0, 0], sizes = [64, 128], strides = [1, 1]} : vector<64x256xbf16> to vector<64x128xbf16>
    %19 = vector.shape_cast %18 : vector<64x128xbf16> to vector<8x1x8x128xbf16>
    %c0_11 = arith.constant 0 : index
    %c0_12 = arith.constant 0 : index
    %c0_13 = arith.constant 0 : index
    %c0_14 = arith.constant 0 : index
    %20 = vector.load %arg6[%c0_11, %c0_12, %c0_13, %c0_14] : memref<8x2x8x128xbf16, #tpu.memory_space<vmem>>, vector<8x1x8x128xbf16>
    tpu.vector_store %arg6[%c0_11, %c0_12, %c0_13, %c0_14], %19 {strides = array<i32>} : memref<8x2x8x128xbf16, #tpu.memory_space<vmem>>, vector<8x1x8x128xbf16>,
    %21 = vector.extract_strided_slice %17 {offsets = [0, 128], sizes = [64, 128], strides = [1, 1]} : vector<64x256xbf16> to vector<64x128xbf16>
    %22 = vector.shape_cast %21 : vector<64x128xbf16> to vector<8x1x8x128xbf16>
    %c0_15 = arith.constant 0 : index
    %c1 = arith.constant 1 : index
    %c0_16 = arith.constant 0 : index
    %c0_17 = arith.constant 0 : index
    %23 = vector.load %arg6[%c0_15, %c1, %c0_16, %c0_17] : memref<8x2x8x128xbf16, #tpu.memory_space<vmem>>, vector<8x1x8x128xbf16>
    tpu.vector_store %arg6[%c0_15, %c1, %c0_16, %c0_17], %22 {strides = array<i32>} : memref<8x2x8x128xbf16, #tpu.memory_space<vmem>>, vector<8x1x8x128xbf16>,
    return
  }
  func.func @transform_0(%arg0: i32) -> (i32, i32, i32) {
    %c0_i32 = arith.constant 0 : i32
    %c0_i32_0 = arith.constant 0 : i32
    %c0_i32_1 = arith.constant 0 : i32
    return %arg0, %c0_i32, %c0_i32_0 : i32, i32, i32
  }
  func.func @transform_1(%arg0: i32) -> (i32, i32) {
    %c0_i32 = arith.constant 0 : i32
    %c0_i32_0 = arith.constant 0 : i32
    %c0_i32_1 = arith.constant 0 : i32
    return %c0_i32, %c0_i32_0 : i32, i32
  }
  func.func @transform_2(%arg0: i32) -> (i32, i32) {
    %c0_i32 = arith.constant 0 : i32
    %c0_i32_0 = arith.constant 0 : i32
    %c0_i32_1 = arith.constant 0 : i32
    return %c0_i32, %c0_i32_0 : i32, i32
  }
  func.func @transform_3(%arg0: i32) -> (i32, i32) {
    %c0_i32 = arith.constant 0 : i32
    %c0_i32_0 = arith.constant 0 : i32
    %c0_i32_1 = arith.constant 0 : i32
    return %c0_i32, %c0_i32_0 : i32, i32
  }
  func.func @transform_4(%arg0: i32) -> (i32, i32) {
    %c0_i32 = arith.constant 0 : i32
    %c0_i32_0 = arith.constant 0 : i32
    %c0_i32_1 = arith.constant 0 : i32
    return %c0_i32, %c0_i32_0 : i32, i32
  }
  func.func @transform_5(%arg0: i32) -> (i32, i32, i32, i32) {
    %c0_i32 = arith.constant 0 : i32
    %c0_i32_0 = arith.constant 0 : i32
    %c0_i32_1 = arith.constant 0 : i32
    %c0_i32_2 = arith.constant 0 : i32
    return %arg0, %c0_i32, %c0_i32_0, %c0_i32_1 : i32, i32, i32, i32
  }
}

module attributes {stable_mosaic.version = 11 : i64} {
  func.func @kernel(%arg0: i32, %arg1: i32, %arg2: memref<8x16x64xbf16, #tpu.memory_space<vmem>>, %arg3: memref<1x16x64xbf16, #tpu.memory_space<vmem>>, %arg4: memref<1x16x64xbf16, #tpu.memory_space<vmem>>, %arg5: memref<8x16x64xbf16, #tpu.memory_space<vmem>>, %arg6: memref<1x16x64xbf16, #tpu.memory_space<vmem>>, %arg7: memref<1x16x64xbf16, #tpu.memory_space<vmem>>, %arg8: memref<1x64xf32, #tpu.memory_space<vmem>>, %arg9: memref<1x64xf32, #tpu.memory_space<vmem>>, %arg10: memref<1152x64xbf16, #tpu.memory_space<vmem>>, %arg11: memref<1x64xf32, #tpu.memory_space<vmem>>, %arg12: memref<8x16x64xbf16, #tpu.memory_space<vmem>>, %arg13: memref<1x2x64xf32, #tpu.memory_space<vmem>>, %arg14: memref<176x64xbf16, #tpu.memory_space<vmem>>, %arg15: memref<176x64xbf16, #tpu.memory_space<vmem>>, %arg16: memref<128x1152xbf16, #tpu.memory_space<vmem>>) attributes {dimension_semantics = [#tpu.dimension_semantics<parallel>, #tpu.dimension_semantics<parallel>], iteration_bounds = array<i64: 2, 2>, scalar_prefetch = 0 : i64, scratch_operands = 3 : i64, tpu.core_type = #tpu.core_type<tc>, window_params = [{transform_indices = @transform_0, window_bounds = array<i64: 8, 16, 64>}, {transform_indices = @transform_1, window_bounds = array<i64: 1, 16, 64>}, {transform_indices = @transform_2, window_bounds = array<i64: 1, 16, 64>}, {transform_indices = @transform_3, window_bounds = array<i64: 8, 16, 64>}, {transform_indices = @transform_4, window_bounds = array<i64: 1, 16, 64>}, {transform_indices = @transform_5, window_bounds = array<i64: 1, 16, 64>}, {pipeline_mode = #tpu.pipeline_mode<synchronous>, transform_indices = @transform_6, window_bounds = array<i64: 1, 64>}, {pipeline_mode = #tpu.pipeline_mode<synchronous>, transform_indices = @transform_7, window_bounds = array<i64: 1, 64>}, {pipeline_mode = #tpu.pipeline_mode<synchronous>, transform_indices = @transform_8, window_bounds = array<i64: 1152, 64>}, {pipeline_mode = #tpu.pipeline_mode<synchronous>, transform_indices = @transform_9, window_bounds = array<i64: 1, 64>}, {transform_indices = @transform_10, window_bounds = array<i64: 8, 16, 64>}, {transform_indices = @transform_11, window_bounds = array<i64: 1, 2, 64>}]} {
    %0 = tpu.iota {dimensions = array<i32: 0>} : vector<128x1xi32>
    %c16_i32 = arith.constant 16 : i32
    %c0_i32 = arith.constant 0 : i32
    %1 = arith.cmpi eq, %c16_i32, %c0_i32 : i32
    %c1_i32 = arith.constant 1 : i32
    %2 = arith.select %1, %c1_i32, %c16_i32 : i32
    %3 = vector.broadcast %2 : i32 to vector<128x1xi32>
    %4 = arith.remsi %0, %3 : vector<128x1xi32>
    %c0_i32_0 = arith.constant 0 : i32
    %5 = vector.broadcast %c0_i32_0 : i32 to vector<128x1xi32>
    %6 = arith.cmpi ne, %4, %5 : vector<128x1xi32>
    %c0_i32_1 = arith.constant 0 : i32
    %7 = vector.broadcast %c0_i32_1 : i32 to vector<128x1xi32>
    %8 = arith.cmpi slt, %4, %7 : vector<128x1xi32>
    %c0_i32_2 = arith.constant 0 : i32
    %9 = arith.cmpi slt, %2, %c0_i32_2 : i32
    %10 = vector.broadcast %9 : i1 to vector<128x1xi1>
    %11 = vector.broadcast %10 : vector<128x1xi1> to vector<128x1xi1>
    %12 = arith.xori %8, %11 : vector<128x1xi1>
    %13 = arith.andi %12, %6 : vector<128x1xi1>
    %14 = vector.broadcast %2 : i32 to vector<128x1xi32>
    %15 = arith.addi %4, %14 : vector<128x1xi32>
    %16 = arith.select %13, %15, %4 : vector<128x1xi1>, vector<128x1xi32>
    %c15_i32 = arith.constant 15 : i32
    %17 = vector.broadcast %c15_i32 : i32 to vector<128x1xi32>
    %18 = arith.cmpi ne, %16, %17 : vector<128x1xi32>
    %c0_i32_3 = arith.constant 0 : i32
    %19 = vector.broadcast %c0_i32_3 : i32 to vector<128x1xi32>
    %20 = arith.cmpi ne, %16, %19 : vector<128x1xi32>
    %c0 = arith.constant 0 : index
    %c0_4 = arith.constant 0 : index
    %c0_5 = arith.constant 0 : index
    %21 = vector.load %arg2[%c0, %c0_4, %c0_5] : memref<8x16x64xbf16, #tpu.memory_space<vmem>>, vector<8x16x64xbf16>
    %22 = vector.shape_cast %21 : vector<8x16x64xbf16> to vector<128x64xbf16>
    %c0_6 = arith.constant 0 : index
    %c0_7 = arith.constant 0 : index
    %c0_8 = arith.constant 0 : index
    %23 = vector.load %arg3[%c0_6, %c0_7, %c0_8] : memref<1x16x64xbf16, #tpu.memory_space<vmem>>, vector<1x16x64xbf16>
    %24 = vector.shape_cast %23 : vector<1x16x64xbf16> to vector<16x64xbf16>
    %c0_9 = arith.constant 0 : index
    %c0_10 = arith.constant 0 : index
    %c0_11 = arith.constant 0 : index
    %25 = vector.load %arg4[%c0_9, %c0_10, %c0_11] : memref<1x16x64xbf16, #tpu.memory_space<vmem>>, vector<1x16x64xbf16>
    %26 = vector.shape_cast %25 : vector<1x16x64xbf16> to vector<16x64xbf16>
    %c0_i32_12 = arith.constant 0 : i32
    %27 = arith.cmpi eq, %arg1, %c0_i32_12 : i32
    %cst = arith.constant 0.000000e+00 : bf16
    %28 = vector.broadcast %cst : bf16 to vector<16x64xbf16>
    %29 = arith.select %27, %28, %24 : vector<16x64xbf16>
    %c1_i32_13 = arith.constant 1 : i32
    %30 = arith.cmpi eq, %arg1, %c1_i32_13 : i32
    %cst_14 = arith.constant 0.000000e+00 : bf16
    %31 = vector.broadcast %cst_14 : bf16 to vector<16x64xbf16>
    %32 = arith.select %30, %31, %26 : vector<16x64xbf16>
    %cst_15 = arith.constant 0.000000e+00 : bf16
    %33 = vector.broadcast %cst_15 : bf16 to vector<8x64xbf16>
    %c0_16 = arith.constant 0 : index
    %c0_17 = arith.constant 0 : index
    %34 = vector.load %arg14[%c0_16, %c0_17] : memref<176x64xbf16, #tpu.memory_space<vmem>>, vector<8x64xbf16>
    tpu.vector_store %arg14[%c0_16, %c0_17], %33 {strides = array<i32>} : memref<176x64xbf16, #tpu.memory_space<vmem>>, vector<8x64xbf16>,
    %c8 = arith.constant 8 : index
    %c0_18 = arith.constant 0 : index
    %35 = vector.load %arg14[%c8, %c0_18] : memref<176x64xbf16, #tpu.memory_space<vmem>>, vector<16x64xbf16>
    tpu.vector_store %arg14[%c8, %c0_18], %29 {strides = array<i32>} : memref<176x64xbf16, #tpu.memory_space<vmem>>, vector<16x64xbf16>,
    %c24 = arith.constant 24 : index
    %c0_19 = arith.constant 0 : index
    %36 = vector.load %arg14[%c24, %c0_19] : memref<176x64xbf16, #tpu.memory_space<vmem>>, vector<128x64xbf16>
    tpu.vector_store %arg14[%c24, %c0_19], %22 {strides = array<i32>} : memref<176x64xbf16, #tpu.memory_space<vmem>>, vector<128x64xbf16>,
    %c152 = arith.constant 152 : index
    %c0_20 = arith.constant 0 : index
    %37 = vector.load %arg14[%c152, %c0_20] : memref<176x64xbf16, #tpu.memory_space<vmem>>, vector<16x64xbf16>
    tpu.vector_store %arg14[%c152, %c0_20], %32 {strides = array<i32>} : memref<176x64xbf16, #tpu.memory_space<vmem>>, vector<16x64xbf16>,
    %cst_21 = arith.constant 0.000000e+00 : bf16
    %38 = vector.broadcast %cst_21 : bf16 to vector<8x64xbf16>
    %c168 = arith.constant 168 : index
    %c0_22 = arith.constant 0 : index
    %39 = vector.load %arg14[%c168, %c0_22] : memref<176x64xbf16, #tpu.memory_space<vmem>>, vector<8x64xbf16>
    tpu.vector_store %arg14[%c168, %c0_22], %38 {strides = array<i32>} : memref<176x64xbf16, #tpu.memory_space<vmem>>, vector<8x64xbf16>,
    %c7 = arith.constant 7 : index
    %c0_23 = arith.constant 0 : index
    %40 = vector.load %arg14[%c7, %c0_23] : memref<176x64xbf16, #tpu.memory_space<vmem>>, vector<128x64xbf16>
    %cst_24 = arith.constant 0.000000e+00 : bf16
    %41 = vector.broadcast %cst_24 : bf16 to vector<128x64xbf16>
    %42 = vector.shape_cast %20 : vector<128x1xi1> to vector<128x1xi1>
    %43 = vector.broadcast %42 : vector<128x1xi1> to vector<128x64xi1>
    %44 = arith.select %43, %40, %41 : vector<128x64xi1>, vector<128x64xbf16>
    %c0_25 = arith.constant 0 : index
    %c0_26 = arith.constant 0 : index
    %45 = vector.load %arg16[%c0_25, %c0_26] : memref<128x1152xbf16, #tpu.memory_space<vmem>>, vector<128x64xbf16>
    tpu.vector_store %arg16[%c0_25, %c0_26], %44 {strides = array<i32>} : memref<128x1152xbf16, #tpu.memory_space<vmem>>, vector<128x64xbf16>,
    %c8_27 = arith.constant 8 : index
    %c0_28 = arith.constant 0 : index
    %46 = vector.load %arg14[%c8_27, %c0_28] : memref<176x64xbf16, #tpu.memory_space<vmem>>, vector<128x64xbf16>
    %c0_29 = arith.constant 0 : index
    %c64 = arith.constant 64 : index
    %47 = vector.load %arg16[%c0_29, %c64] : memref<128x1152xbf16, #tpu.memory_space<vmem>>, vector<128x64xbf16>
    tpu.vector_store %arg16[%c0_29, %c64], %46 {strides = array<i32>} : memref<128x1152xbf16, #tpu.memory_space<vmem>>, vector<128x64xbf16>,
    %c9 = arith.constant 9 : index
    %c0_30 = arith.constant 0 : index
    %48 = vector.load %arg14[%c9, %c0_30] : memref<176x64xbf16, #tpu.memory_space<vmem>>, vector<128x64xbf16>
    %cst_31 = arith.constant 0.000000e+00 : bf16
    %49 = vector.broadcast %cst_31 : bf16 to vector<128x64xbf16>
    %50 = vector.shape_cast %18 : vector<128x1xi1> to vector<128x1xi1>
    %51 = vector.broadcast %50 : vector<128x1xi1> to vector<128x64xi1>
    %52 = arith.select %51, %48, %49 : vector<128x64xi1>, vector<128x64xbf16>
    %c0_32 = arith.constant 0 : index
    %c128 = arith.constant 128 : index
    %53 = vector.load %arg16[%c0_32, %c128] : memref<128x1152xbf16, #tpu.memory_space<vmem>>, vector<128x64xbf16>
    tpu.vector_store %arg16[%c0_32, %c128], %52 {strides = array<i32>} : memref<128x1152xbf16, #tpu.memory_space<vmem>>, vector<128x64xbf16>,
    %c23 = arith.constant 23 : index
    %c0_33 = arith.constant 0 : index
    %54 = vector.load %arg14[%c23, %c0_33] : memref<176x64xbf16, #tpu.memory_space<vmem>>, vector<128x64xbf16>
    %cst_34 = arith.constant 0.000000e+00 : bf16
    %55 = vector.broadcast %cst_34 : bf16 to vector<128x64xbf16>
    %56 = vector.shape_cast %20 : vector<128x1xi1> to vector<128x1xi1>
    %57 = vector.broadcast %56 : vector<128x1xi1> to vector<128x64xi1>
    %58 = arith.select %57, %54, %55 : vector<128x64xi1>, vector<128x64xbf16>
    %c0_35 = arith.constant 0 : index
    %c192 = arith.constant 192 : index
    %59 = vector.load %arg16[%c0_35, %c192] : memref<128x1152xbf16, #tpu.memory_space<vmem>>, vector<128x64xbf16>
    tpu.vector_store %arg16[%c0_35, %c192], %58 {strides = array<i32>} : memref<128x1152xbf16, #tpu.memory_space<vmem>>, vector<128x64xbf16>,
    %c24_36 = arith.constant 24 : index
    %c0_37 = arith.constant 0 : index
    %60 = vector.load %arg14[%c24_36, %c0_37] : memref<176x64xbf16, #tpu.memory_space<vmem>>, vector<128x64xbf16>
    %c0_38 = arith.constant 0 : index
    %c256 = arith.constant 256 : index
    %61 = vector.load %arg16[%c0_38, %c256] : memref<128x1152xbf16, #tpu.memory_space<vmem>>, vector<128x64xbf16>
    tpu.vector_store %arg16[%c0_38, %c256], %60 {strides = array<i32>} : memref<128x1152xbf16, #tpu.memory_space<vmem>>, vector<128x64xbf16>,
    %c25 = arith.constant 25 : index
    %c0_39 = arith.constant 0 : index
    %62 = vector.load %arg14[%c25, %c0_39] : memref<176x64xbf16, #tpu.memory_space<vmem>>, vector<128x64xbf16>
    %cst_40 = arith.constant 0.000000e+00 : bf16
    %63 = vector.broadcast %cst_40 : bf16 to vector<128x64xbf16>
    %64 = vector.shape_cast %18 : vector<128x1xi1> to vector<128x1xi1>
    %65 = vector.broadcast %64 : vector<128x1xi1> to vector<128x64xi1>
    %66 = arith.select %65, %62, %63 : vector<128x64xi1>, vector<128x64xbf16>
    %c0_41 = arith.constant 0 : index
    %c320 = arith.constant 320 : index
    %67 = vector.load %arg16[%c0_41, %c320] : memref<128x1152xbf16, #tpu.memory_space<vmem>>, vector<128x64xbf16>
    tpu.vector_store %arg16[%c0_41, %c320], %66 {strides = array<i32>} : memref<128x1152xbf16, #tpu.memory_space<vmem>>, vector<128x64xbf16>,
    %c39 = arith.constant 39 : index
    %c0_42 = arith.constant 0 : index
    %68 = vector.load %arg14[%c39, %c0_42] : memref<176x64xbf16, #tpu.memory_space<vmem>>, vector<128x64xbf16>
    %cst_43 = arith.constant 0.000000e+00 : bf16
    %69 = vector.broadcast %cst_43 : bf16 to vector<128x64xbf16>
    %70 = vector.shape_cast %20 : vector<128x1xi1> to vector<128x1xi1>
    %71 = vector.broadcast %70 : vector<128x1xi1> to vector<128x64xi1>
    %72 = arith.select %71, %68, %69 : vector<128x64xi1>, vector<128x64xbf16>
    %c0_44 = arith.constant 0 : index
    %c384 = arith.constant 384 : index
    %73 = vector.load %arg16[%c0_44, %c384] : memref<128x1152xbf16, #tpu.memory_space<vmem>>, vector<128x64xbf16>
    tpu.vector_store %arg16[%c0_44, %c384], %72 {strides = array<i32>} : memref<128x1152xbf16, #tpu.memory_space<vmem>>, vector<128x64xbf16>,
    %c40 = arith.constant 40 : index
    %c0_45 = arith.constant 0 : index
    %74 = vector.load %arg14[%c40, %c0_45] : memref<176x64xbf16, #tpu.memory_space<vmem>>, vector<128x64xbf16>
    %c0_46 = arith.constant 0 : index
    %c448 = arith.constant 448 : index
    %75 = vector.load %arg16[%c0_46, %c448] : memref<128x1152xbf16, #tpu.memory_space<vmem>>, vector<128x64xbf16>
    tpu.vector_store %arg16[%c0_46, %c448], %74 {strides = array<i32>} : memref<128x1152xbf16, #tpu.memory_space<vmem>>, vector<128x64xbf16>,
    %c41 = arith.constant 41 : index
    %c0_47 = arith.constant 0 : index
    %76 = vector.load %arg14[%c41, %c0_47] : memref<176x64xbf16, #tpu.memory_space<vmem>>, vector<128x64xbf16>
    %cst_48 = arith.constant 0.000000e+00 : bf16
    %77 = vector.broadcast %cst_48 : bf16 to vector<128x64xbf16>
    %78 = vector.shape_cast %18 : vector<128x1xi1> to vector<128x1xi1>
    %79 = vector.broadcast %78 : vector<128x1xi1> to vector<128x64xi1>
    %80 = arith.select %79, %76, %77 : vector<128x64xi1>, vector<128x64xbf16>
    %c0_49 = arith.constant 0 : index
    %c512 = arith.constant 512 : index
    %81 = vector.load %arg16[%c0_49, %c512] : memref<128x1152xbf16, #tpu.memory_space<vmem>>, vector<128x64xbf16>
    tpu.vector_store %arg16[%c0_49, %c512], %80 {strides = array<i32>} : memref<128x1152xbf16, #tpu.memory_space<vmem>>, vector<128x64xbf16>,
    %c0_50 = arith.constant 0 : index
    %c0_51 = arith.constant 0 : index
    %82 = vector.load %arg8[%c0_50, %c0_51] : memref<1x64xf32, #tpu.memory_space<vmem>>, vector<1x64xf32>
    %c0_52 = arith.constant 0 : index
    %c0_53 = arith.constant 0 : index
    %83 = vector.load %arg9[%c0_52, %c0_53] : memref<1x64xf32, #tpu.memory_space<vmem>>, vector<1x64xf32>
    %c0_54 = arith.constant 0 : index
    %c0_55 = arith.constant 0 : index
    %c0_56 = arith.constant 0 : index
    %84 = vector.load %arg5[%c0_54, %c0_55, %c0_56] : memref<8x16x64xbf16, #tpu.memory_space<vmem>>, vector<8x16x64xbf16>
    %85 = vector.shape_cast %84 : vector<8x16x64xbf16> to vector<128x64xbf16>
    %86 = arith.extf %85 : vector<128x64xbf16> to vector<128x64xf32>
    %87 = vector.broadcast %82 : vector<1x64xf32> to vector<128x64xf32>
    %88 = arith.mulf %86, %87 : vector<128x64xf32>
    %89 = vector.broadcast %83 : vector<1x64xf32> to vector<128x64xf32>
    %90 = arith.addf %88, %89 : vector<128x64xf32>
    %cst_57 = arith.constant 0.000000e+00 : f32
    %91 = vector.broadcast %cst_57 : f32 to vector<128x64xf32>
    %92 = arith.maximumf %90, %91 : vector<128x64xf32>
    %93 = arith.truncf %92 : vector<128x64xf32> to vector<128x64xbf16>
    %c0_58 = arith.constant 0 : index
    %c0_59 = arith.constant 0 : index
    %c0_60 = arith.constant 0 : index
    %94 = vector.load %arg6[%c0_58, %c0_59, %c0_60] : memref<1x16x64xbf16, #tpu.memory_space<vmem>>, vector<1x16x64xbf16>
    %95 = vector.shape_cast %94 : vector<1x16x64xbf16> to vector<16x64xbf16>
    %96 = arith.extf %95 : vector<16x64xbf16> to vector<16x64xf32>
    %97 = vector.broadcast %82 : vector<1x64xf32> to vector<16x64xf32>
    %98 = arith.mulf %96, %97 : vector<16x64xf32>
    %99 = vector.broadcast %83 : vector<1x64xf32> to vector<16x64xf32>
    %100 = arith.addf %98, %99 : vector<16x64xf32>
    %cst_61 = arith.constant 0.000000e+00 : f32
    %101 = vector.broadcast %cst_61 : f32 to vector<16x64xf32>
    %102 = arith.maximumf %100, %101 : vector<16x64xf32>
    %103 = arith.truncf %102 : vector<16x64xf32> to vector<16x64xbf16>
    %c0_62 = arith.constant 0 : index
    %c0_63 = arith.constant 0 : index
    %c0_64 = arith.constant 0 : index
    %104 = vector.load %arg7[%c0_62, %c0_63, %c0_64] : memref<1x16x64xbf16, #tpu.memory_space<vmem>>, vector<1x16x64xbf16>
    %105 = vector.shape_cast %104 : vector<1x16x64xbf16> to vector<16x64xbf16>
    %106 = arith.extf %105 : vector<16x64xbf16> to vector<16x64xf32>
    %107 = vector.broadcast %82 : vector<1x64xf32> to vector<16x64xf32>
    %108 = arith.mulf %106, %107 : vector<16x64xf32>
    %109 = vector.broadcast %83 : vector<1x64xf32> to vector<16x64xf32>
    %110 = arith.addf %108, %109 : vector<16x64xf32>
    %cst_65 = arith.constant 0.000000e+00 : f32
    %111 = vector.broadcast %cst_65 : f32 to vector<16x64xf32>
    %112 = arith.maximumf %110, %111 : vector<16x64xf32>
    %113 = arith.truncf %112 : vector<16x64xf32> to vector<16x64xbf16>
    %c0_i32_66 = arith.constant 0 : i32
    %114 = arith.cmpi eq, %arg1, %c0_i32_66 : i32
    %cst_67 = arith.constant 0.000000e+00 : bf16
    %115 = vector.broadcast %cst_67 : bf16 to vector<16x64xbf16>
    %116 = arith.select %114, %115, %103 : vector<16x64xbf16>
    %c1_i32_68 = arith.constant 1 : i32
    %117 = arith.cmpi eq, %arg1, %c1_i32_68 : i32
    %cst_69 = arith.constant 0.000000e+00 : bf16
    %118 = vector.broadcast %cst_69 : bf16 to vector<16x64xbf16>
    %119 = arith.select %117, %118, %113 : vector<16x64xbf16>
    %cst_70 = arith.constant 0.000000e+00 : bf16
    %120 = vector.broadcast %cst_70 : bf16 to vector<8x64xbf16>
    %c0_71 = arith.constant 0 : index
    %c0_72 = arith.constant 0 : index
    %121 = vector.load %arg15[%c0_71, %c0_72] : memref<176x64xbf16, #tpu.memory_space<vmem>>, vector<8x64xbf16>
    tpu.vector_store %arg15[%c0_71, %c0_72], %120 {strides = array<i32>} : memref<176x64xbf16, #tpu.memory_space<vmem>>, vector<8x64xbf16>,
    %c8_73 = arith.constant 8 : index
    %c0_74 = arith.constant 0 : index
    %122 = vector.load %arg15[%c8_73, %c0_74] : memref<176x64xbf16, #tpu.memory_space<vmem>>, vector<16x64xbf16>
    tpu.vector_store %arg15[%c8_73, %c0_74], %116 {strides = array<i32>} : memref<176x64xbf16, #tpu.memory_space<vmem>>, vector<16x64xbf16>,
    %c24_75 = arith.constant 24 : index
    %c0_76 = arith.constant 0 : index
    %123 = vector.load %arg15[%c24_75, %c0_76] : memref<176x64xbf16, #tpu.memory_space<vmem>>, vector<128x64xbf16>
    tpu.vector_store %arg15[%c24_75, %c0_76], %93 {strides = array<i32>} : memref<176x64xbf16, #tpu.memory_space<vmem>>, vector<128x64xbf16>,
    %c152_77 = arith.constant 152 : index
    %c0_78 = arith.constant 0 : index
    %124 = vector.load %arg15[%c152_77, %c0_78] : memref<176x64xbf16, #tpu.memory_space<vmem>>, vector<16x64xbf16>
    tpu.vector_store %arg15[%c152_77, %c0_78], %119 {strides = array<i32>} : memref<176x64xbf16, #tpu.memory_space<vmem>>, vector<16x64xbf16>,
    %cst_79 = arith.constant 0.000000e+00 : bf16
    %125 = vector.broadcast %cst_79 : bf16 to vector<8x64xbf16>
    %c168_80 = arith.constant 168 : index
    %c0_81 = arith.constant 0 : index
    %126 = vector.load %arg15[%c168_80, %c0_81] : memref<176x64xbf16, #tpu.memory_space<vmem>>, vector<8x64xbf16>
    tpu.vector_store %arg15[%c168_80, %c0_81], %125 {strides = array<i32>} : memref<176x64xbf16, #tpu.memory_space<vmem>>, vector<8x64xbf16>,
    %c7_82 = arith.constant 7 : index
    %c0_83 = arith.constant 0 : index
    %127 = vector.load %arg15[%c7_82, %c0_83] : memref<176x64xbf16, #tpu.memory_space<vmem>>, vector<128x64xbf16>
    %cst_84 = arith.constant 0.000000e+00 : bf16
    %128 = vector.broadcast %cst_84 : bf16 to vector<128x64xbf16>
    %129 = vector.shape_cast %20 : vector<128x1xi1> to vector<128x1xi1>
    %130 = vector.broadcast %129 : vector<128x1xi1> to vector<128x64xi1>
    %131 = arith.select %130, %127, %128 : vector<128x64xi1>, vector<128x64xbf16>
    %c0_85 = arith.constant 0 : index
    %c576 = arith.constant 576 : index
    %132 = vector.load %arg16[%c0_85, %c576] : memref<128x1152xbf16, #tpu.memory_space<vmem>>, vector<128x64xbf16>
    tpu.vector_store %arg16[%c0_85, %c576], %131 {strides = array<i32>} : memref<128x1152xbf16, #tpu.memory_space<vmem>>, vector<128x64xbf16>,
    %c8_86 = arith.constant 8 : index
    %c0_87 = arith.constant 0 : index
    %133 = vector.load %arg15[%c8_86, %c0_87] : memref<176x64xbf16, #tpu.memory_space<vmem>>, vector<128x64xbf16>
    %c0_88 = arith.constant 0 : index
    %c640 = arith.constant 640 : index
    %134 = vector.load %arg16[%c0_88, %c640] : memref<128x1152xbf16, #tpu.memory_space<vmem>>, vector<128x64xbf16>
    tpu.vector_store %arg16[%c0_88, %c640], %133 {strides = array<i32>} : memref<128x1152xbf16, #tpu.memory_space<vmem>>, vector<128x64xbf16>,
    %c9_89 = arith.constant 9 : index
    %c0_90 = arith.constant 0 : index
    %135 = vector.load %arg15[%c9_89, %c0_90] : memref<176x64xbf16, #tpu.memory_space<vmem>>, vector<128x64xbf16>
    %cst_91 = arith.constant 0.000000e+00 : bf16
    %136 = vector.broadcast %cst_91 : bf16 to vector<128x64xbf16>
    %137 = vector.shape_cast %18 : vector<128x1xi1> to vector<128x1xi1>
    %138 = vector.broadcast %137 : vector<128x1xi1> to vector<128x64xi1>
    %139 = arith.select %138, %135, %136 : vector<128x64xi1>, vector<128x64xbf16>
    %c0_92 = arith.constant 0 : index
    %c704 = arith.constant 704 : index
    %140 = vector.load %arg16[%c0_92, %c704] : memref<128x1152xbf16, #tpu.memory_space<vmem>>, vector<128x64xbf16>
    tpu.vector_store %arg16[%c0_92, %c704], %139 {strides = array<i32>} : memref<128x1152xbf16, #tpu.memory_space<vmem>>, vector<128x64xbf16>,
    %c23_93 = arith.constant 23 : index
    %c0_94 = arith.constant 0 : index
    %141 = vector.load %arg15[%c23_93, %c0_94] : memref<176x64xbf16, #tpu.memory_space<vmem>>, vector<128x64xbf16>
    %cst_95 = arith.constant 0.000000e+00 : bf16
    %142 = vector.broadcast %cst_95 : bf16 to vector<128x64xbf16>
    %143 = vector.shape_cast %20 : vector<128x1xi1> to vector<128x1xi1>
    %144 = vector.broadcast %143 : vector<128x1xi1> to vector<128x64xi1>
    %145 = arith.select %144, %141, %142 : vector<128x64xi1>, vector<128x64xbf16>
    %c0_96 = arith.constant 0 : index
    %c768 = arith.constant 768 : index
    %146 = vector.load %arg16[%c0_96, %c768] : memref<128x1152xbf16, #tpu.memory_space<vmem>>, vector<128x64xbf16>
    tpu.vector_store %arg16[%c0_96, %c768], %145 {strides = array<i32>} : memref<128x1152xbf16, #tpu.memory_space<vmem>>, vector<128x64xbf16>,
    %c24_97 = arith.constant 24 : index
    %c0_98 = arith.constant 0 : index
    %147 = vector.load %arg15[%c24_97, %c0_98] : memref<176x64xbf16, #tpu.memory_space<vmem>>, vector<128x64xbf16>
    %c0_99 = arith.constant 0 : index
    %c832 = arith.constant 832 : index
    %148 = vector.load %arg16[%c0_99, %c832] : memref<128x1152xbf16, #tpu.memory_space<vmem>>, vector<128x64xbf16>
    tpu.vector_store %arg16[%c0_99, %c832], %147 {strides = array<i32>} : memref<128x1152xbf16, #tpu.memory_space<vmem>>, vector<128x64xbf16>,
    %c25_100 = arith.constant 25 : index
    %c0_101 = arith.constant 0 : index
    %149 = vector.load %arg15[%c25_100, %c0_101] : memref<176x64xbf16, #tpu.memory_space<vmem>>, vector<128x64xbf16>
    %cst_102 = arith.constant 0.000000e+00 : bf16
    %150 = vector.broadcast %cst_102 : bf16 to vector<128x64xbf16>
    %151 = vector.shape_cast %18 : vector<128x1xi1> to vector<128x1xi1>
    %152 = vector.broadcast %151 : vector<128x1xi1> to vector<128x64xi1>
    %153 = arith.select %152, %149, %150 : vector<128x64xi1>, vector<128x64xbf16>
    %c0_103 = arith.constant 0 : index
    %c896 = arith.constant 896 : index
    %154 = vector.load %arg16[%c0_103, %c896] : memref<128x1152xbf16, #tpu.memory_space<vmem>>, vector<128x64xbf16>
    tpu.vector_store %arg16[%c0_103, %c896], %153 {strides = array<i32>} : memref<128x1152xbf16, #tpu.memory_space<vmem>>, vector<128x64xbf16>,
    %c39_104 = arith.constant 39 : index
    %c0_105 = arith.constant 0 : index
    %155 = vector.load %arg15[%c39_104, %c0_105] : memref<176x64xbf16, #tpu.memory_space<vmem>>, vector<128x64xbf16>
    %cst_106 = arith.constant 0.000000e+00 : bf16
    %156 = vector.broadcast %cst_106 : bf16 to vector<128x64xbf16>
    %157 = vector.shape_cast %20 : vector<128x1xi1> to vector<128x1xi1>
    %158 = vector.broadcast %157 : vector<128x1xi1> to vector<128x64xi1>
    %159 = arith.select %158, %155, %156 : vector<128x64xi1>, vector<128x64xbf16>
    %c0_107 = arith.constant 0 : index
    %c960 = arith.constant 960 : index
    %160 = vector.load %arg16[%c0_107, %c960] : memref<128x1152xbf16, #tpu.memory_space<vmem>>, vector<128x64xbf16>
    tpu.vector_store %arg16[%c0_107, %c960], %159 {strides = array<i32>} : memref<128x1152xbf16, #tpu.memory_space<vmem>>, vector<128x64xbf16>,
    %c40_108 = arith.constant 40 : index
    %c0_109 = arith.constant 0 : index
    %161 = vector.load %arg15[%c40_108, %c0_109] : memref<176x64xbf16, #tpu.memory_space<vmem>>, vector<128x64xbf16>
    %c0_110 = arith.constant 0 : index
    %c1024 = arith.constant 1024 : index
    %162 = vector.load %arg16[%c0_110, %c1024] : memref<128x1152xbf16, #tpu.memory_space<vmem>>, vector<128x64xbf16>
    tpu.vector_store %arg16[%c0_110, %c1024], %161 {strides = array<i32>} : memref<128x1152xbf16, #tpu.memory_space<vmem>>, vector<128x64xbf16>,
    %c41_111 = arith.constant 41 : index
    %c0_112 = arith.constant 0 : index
    %163 = vector.load %arg15[%c41_111, %c0_112] : memref<176x64xbf16, #tpu.memory_space<vmem>>, vector<128x64xbf16>
    %cst_113 = arith.constant 0.000000e+00 : bf16
    %164 = vector.broadcast %cst_113 : bf16 to vector<128x64xbf16>
    %165 = vector.shape_cast %18 : vector<128x1xi1> to vector<128x1xi1>
    %166 = vector.broadcast %165 : vector<128x1xi1> to vector<128x64xi1>
    %167 = arith.select %166, %163, %164 : vector<128x64xi1>, vector<128x64xbf16>
    %c0_114 = arith.constant 0 : index
    %c1088 = arith.constant 1088 : index
    %168 = vector.load %arg16[%c0_114, %c1088] : memref<128x1152xbf16, #tpu.memory_space<vmem>>, vector<128x64xbf16>
    tpu.vector_store %arg16[%c0_114, %c1088], %167 {strides = array<i32>} : memref<128x1152xbf16, #tpu.memory_space<vmem>>, vector<128x64xbf16>,
    %c0_115 = arith.constant 0 : index
    %c0_116 = arith.constant 0 : index
    %169 = vector.load %arg16[%c0_115, %c0_116] : memref<128x1152xbf16, #tpu.memory_space<vmem>>, vector<128x1152xbf16>
    %c0_117 = arith.constant 0 : index
    %c0_118 = arith.constant 0 : index
    %170 = vector.load %arg10[%c0_117, %c0_118] : memref<1152x64xbf16, #tpu.memory_space<vmem>>, vector<1152x64xbf16>
    %cst_119 = arith.constant dense<0.000000e+00> : vector<128x64xf32>
    %171 = tpu.matmul %169, %170, %cst_119 {dimension_numbers = #tpu.dot_dimension_numbers<[1], [0], [0], [1], [0, 0, 1, 1], [], []>} : vector<128x1152xbf16>, vector<1152x64xbf16>, vector<128x64xf32> -> vector<128x64xf32>
    %c0_120 = arith.constant 0 : index
    %c0_121 = arith.constant 0 : index
    %172 = vector.load %arg11[%c0_120, %c0_121] : memref<1x64xf32, #tpu.memory_space<vmem>>, vector<1x64xf32>
    %173 = vector.broadcast %172 : vector<1x64xf32> to vector<128x64xf32>
    %174 = arith.addf %171, %173 : vector<128x64xf32>
    %175 = vector.shape_cast %174 : vector<128x64xf32> to vector<8x16x64xf32>
    %176 = arith.truncf %175 : vector<8x16x64xf32> to vector<8x16x64xbf16>
    %c0_122 = arith.constant 0 : index
    %c0_123 = arith.constant 0 : index
    %c0_124 = arith.constant 0 : index
    %177 = vector.load %arg12[%c0_122, %c0_123, %c0_124] : memref<8x16x64xbf16, #tpu.memory_space<vmem>>, vector<8x16x64xbf16>
    tpu.vector_store %arg12[%c0_122, %c0_123, %c0_124], %176 {strides = array<i32>} : memref<8x16x64xbf16, #tpu.memory_space<vmem>>, vector<8x16x64xbf16>,
    %cst_125 = arith.constant dense<0.000000e+00> : vector<64xf32>
    %178 = vector.multi_reduction <add>, %174, %cst_125 [0] : vector<128x64xf32> to vector<64xf32>
    %179 = vector.shape_cast %178 : vector<64xf32> to vector<1x64xf32>
    %180 = vector.shape_cast %179 : vector<1x64xf32> to vector<1x1x64xf32>
    %c0_126 = arith.constant 0 : index
    %c0_127 = arith.constant 0 : index
    %c0_128 = arith.constant 0 : index
    %181 = vector.load %arg13[%c0_126, %c0_127, %c0_128] : memref<1x2x64xf32, #tpu.memory_space<vmem>>, vector<1x1x64xf32>
    tpu.vector_store %arg13[%c0_126, %c0_127, %c0_128], %180 {strides = array<i32>} : memref<1x2x64xf32, #tpu.memory_space<vmem>>, vector<1x1x64xf32>,
    %182 = arith.mulf %174, %174 : vector<128x64xf32>
    %cst_129 = arith.constant dense<0.000000e+00> : vector<64xf32>
    %183 = vector.multi_reduction <add>, %182, %cst_129 [0] : vector<128x64xf32> to vector<64xf32>
    %184 = vector.shape_cast %183 : vector<64xf32> to vector<1x64xf32>
    %185 = vector.shape_cast %184 : vector<1x64xf32> to vector<1x1x64xf32>
    %c0_130 = arith.constant 0 : index
    %c1 = arith.constant 1 : index
    %c0_131 = arith.constant 0 : index
    %186 = vector.load %arg13[%c0_130, %c1, %c0_131] : memref<1x2x64xf32, #tpu.memory_space<vmem>>, vector<1x1x64xf32>
    tpu.vector_store %arg13[%c0_130, %c1, %c0_131], %185 {strides = array<i32>} : memref<1x2x64xf32, #tpu.memory_space<vmem>>, vector<1x1x64xf32>,
    return
  }
  func.func @transform_0(%arg0: i32, %arg1: i32) -> (i32, i32, i32) {
    %c2_i32 = arith.constant 2 : i32
    %0 = arith.muli %arg0, %c2_i32 : i32
    %1 = arith.addi %0, %arg1 : i32
    %c0_i32 = arith.constant 0 : i32
    %c0_i32_0 = arith.constant 0 : i32
    %c0_i32_1 = arith.constant 0 : i32
    return %1, %c0_i32, %c0_i32_0 : i32, i32, i32
  }
  func.func @transform_1(%arg0: i32, %arg1: i32) -> (i32, i32, i32) {
    %c16_i32 = arith.constant 16 : i32
    %0 = arith.muli %arg0, %c16_i32 : i32
    %c8_i32 = arith.constant 8 : i32
    %1 = arith.muli %arg1, %c8_i32 : i32
    %c1_i32 = arith.constant 1 : i32
    %2 = arith.subi %1, %c1_i32 : i32
    %c0_i32 = arith.constant 0 : i32
    %3 = arith.maxsi %2, %c0_i32 : i32
    %4 = arith.addi %0, %3 : i32
    %c0_i32_0 = arith.constant 0 : i32
    %c0_i32_1 = arith.constant 0 : i32
    %c0_i32_2 = arith.constant 0 : i32
    return %4, %c0_i32_0, %c0_i32_1 : i32, i32, i32
  }
  func.func @transform_2(%arg0: i32, %arg1: i32) -> (i32, i32, i32) {
    %c16_i32 = arith.constant 16 : i32
    %0 = arith.muli %arg0, %c16_i32 : i32
    %c1_i32 = arith.constant 1 : i32
    %1 = arith.addi %arg1, %c1_i32 : i32
    %c8_i32 = arith.constant 8 : i32
    %2 = arith.muli %1, %c8_i32 : i32
    %c15_i32 = arith.constant 15 : i32
    %3 = arith.minsi %2, %c15_i32 : i32
    %4 = arith.addi %0, %3 : i32
    %c0_i32 = arith.constant 0 : i32
    %c0_i32_0 = arith.constant 0 : i32
    %c0_i32_1 = arith.constant 0 : i32
    return %4, %c0_i32, %c0_i32_0 : i32, i32, i32
  }
  func.func @transform_3(%arg0: i32, %arg1: i32) -> (i32, i32, i32) {
    %c2_i32 = arith.constant 2 : i32
    %0 = arith.muli %arg0, %c2_i32 : i32
    %1 = arith.addi %0, %arg1 : i32
    %c0_i32 = arith.constant 0 : i32
    %c0_i32_0 = arith.constant 0 : i32
    %c0_i32_1 = arith.constant 0 : i32
    return %1, %c0_i32, %c0_i32_0 : i32, i32, i32
  }
  func.func @transform_4(%arg0: i32, %arg1: i32) -> (i32, i32, i32) {
    %c16_i32 = arith.constant 16 : i32
    %0 = arith.muli %arg0, %c16_i32 : i32
    %c8_i32 = arith.constant 8 : i32
    %1 = arith.muli %arg1, %c8_i32 : i32
    %c1_i32 = arith.constant 1 : i32
    %2 = arith.subi %1, %c1_i32 : i32
    %c0_i32 = arith.constant 0 : i32
    %3 = arith.maxsi %2, %c0_i32 : i32
    %4 = arith.addi %0, %3 : i32
    %c0_i32_0 = arith.constant 0 : i32
    %c0_i32_1 = arith.constant 0 : i32
    %c0_i32_2 = arith.constant 0 : i32
    return %4, %c0_i32_0, %c0_i32_1 : i32, i32, i32
  }
  func.func @transform_5(%arg0: i32, %arg1: i32) -> (i32, i32, i32) {
    %c16_i32 = arith.constant 16 : i32
    %0 = arith.muli %arg0, %c16_i32 : i32
    %c1_i32 = arith.constant 1 : i32
    %1 = arith.addi %arg1, %c1_i32 : i32
    %c8_i32 = arith.constant 8 : i32
    %2 = arith.muli %1, %c8_i32 : i32
    %c15_i32 = arith.constant 15 : i32
    %3 = arith.minsi %2, %c15_i32 : i32
    %4 = arith.addi %0, %3 : i32
    %c0_i32 = arith.constant 0 : i32
    %c0_i32_0 = arith.constant 0 : i32
    %c0_i32_1 = arith.constant 0 : i32
    return %4, %c0_i32, %c0_i32_0 : i32, i32, i32
  }
  func.func @transform_6(%arg0: i32, %arg1: i32) -> (i32, i32) {
    %c0_i32 = arith.constant 0 : i32
    %c0_i32_0 = arith.constant 0 : i32
    %c0_i32_1 = arith.constant 0 : i32
    return %c0_i32, %c0_i32_0 : i32, i32
  }
  func.func @transform_7(%arg0: i32, %arg1: i32) -> (i32, i32) {
    %c0_i32 = arith.constant 0 : i32
    %c0_i32_0 = arith.constant 0 : i32
    %c0_i32_1 = arith.constant 0 : i32
    return %c0_i32, %c0_i32_0 : i32, i32
  }
  func.func @transform_8(%arg0: i32, %arg1: i32) -> (i32, i32) {
    %c0_i32 = arith.constant 0 : i32
    %c0_i32_0 = arith.constant 0 : i32
    %c0_i32_1 = arith.constant 0 : i32
    return %c0_i32, %c0_i32_0 : i32, i32
  }
  func.func @transform_9(%arg0: i32, %arg1: i32) -> (i32, i32) {
    %c0_i32 = arith.constant 0 : i32
    %c0_i32_0 = arith.constant 0 : i32
    %c0_i32_1 = arith.constant 0 : i32
    return %c0_i32, %c0_i32_0 : i32, i32
  }
  func.func @transform_10(%arg0: i32, %arg1: i32) -> (i32, i32, i32) {
    %c2_i32 = arith.constant 2 : i32
    %0 = arith.muli %arg0, %c2_i32 : i32
    %1 = arith.addi %0, %arg1 : i32
    %c0_i32 = arith.constant 0 : i32
    %c0_i32_0 = arith.constant 0 : i32
    %c0_i32_1 = arith.constant 0 : i32
    return %1, %c0_i32, %c0_i32_0 : i32, i32, i32
  }
  func.func @transform_11(%arg0: i32, %arg1: i32) -> (i32, i32, i32) {
    %c2_i32 = arith.constant 2 : i32
    %0 = arith.muli %arg0, %c2_i32 : i32
    %1 = arith.addi %0, %arg1 : i32
    %c0_i32 = arith.constant 0 : i32
    %c0_i32_0 = arith.constant 0 : i32
    %c0_i32_1 = arith.constant 0 : i32
    return %1, %c0_i32, %c0_i32_0 : i32, i32, i32
  }
}

module attributes {stable_mosaic.version = 11 : i64} {
  func.func @kernel(%arg0: i32, %arg1: memref<256x64xbf16, #tpu.memory_space<vmem>>, %arg2: memref<1x64xf32, #tpu.memory_space<vmem>>, %arg3: memref<1x64xf32, #tpu.memory_space<vmem>>, %arg4: memref<256x64xf32, #tpu.memory_space<vmem>>) attributes {dimension_semantics = [#tpu.dimension_semantics<parallel>], iteration_bounds = array<i64: 2>, scalar_prefetch = 0 : i64, scratch_operands = 0 : i64, tpu.core_type = #tpu.core_type<tc>, window_params = [{transform_indices = @transform_0, window_bounds = array<i64: 256, 64>}, {pipeline_mode = #tpu.pipeline_mode<synchronous>, transform_indices = @transform_1, window_bounds = array<i64: 1, 64>}, {pipeline_mode = #tpu.pipeline_mode<synchronous>, transform_indices = @transform_2, window_bounds = array<i64: 1, 64>}, {transform_indices = @transform_3, window_bounds = array<i64: 256, 64>}]} {
    %c0 = arith.constant 0 : index
    %c0_0 = arith.constant 0 : index
    %0 = vector.load %arg1[%c0, %c0_0] : memref<256x64xbf16, #tpu.memory_space<vmem>>, vector<256x64xbf16>
    %1 = arith.extf %0 : vector<256x64xbf16> to vector<256x64xf32>
    %c0_1 = arith.constant 0 : index
    %c0_2 = arith.constant 0 : index
    %2 = vector.load %arg2[%c0_1, %c0_2] : memref<1x64xf32, #tpu.memory_space<vmem>>, vector<1x64xf32>
    %3 = vector.broadcast %2 : vector<1x64xf32> to vector<256x64xf32>
    %4 = arith.mulf %1, %3 : vector<256x64xf32>
    %c0_3 = arith.constant 0 : index
    %c0_4 = arith.constant 0 : index
    %5 = vector.load %arg3[%c0_3, %c0_4] : memref<1x64xf32, #tpu.memory_space<vmem>>, vector<1x64xf32>
    %6 = vector.broadcast %5 : vector<1x64xf32> to vector<256x64xf32>
    %7 = arith.addf %4, %6 : vector<256x64xf32>
    %cst = arith.constant 0.000000e+00 : f32
    %8 = vector.broadcast %cst : f32 to vector<256x64xf32>
    %9 = arith.maximumf %7, %8 : vector<256x64xf32>
    %c0_5 = arith.constant 0 : index
    %c0_6 = arith.constant 0 : index
    %10 = vector.load %arg4[%c0_5, %c0_6] : memref<256x64xf32, #tpu.memory_space<vmem>>, vector<256x64xf32>
    tpu.vector_store %arg4[%c0_5, %c0_6], %9 {strides = array<i32>} : memref<256x64xf32, #tpu.memory_space<vmem>>, vector<256x64xf32>,
    return
  }
  func.func @transform_0(%arg0: i32) -> (i32, i32) {
    %c0_i32 = arith.constant 0 : i32
    %c0_i32_0 = arith.constant 0 : i32
    return %arg0, %c0_i32 : i32, i32
  }
  func.func @transform_1(%arg0: i32) -> (i32, i32) {
    %c0_i32 = arith.constant 0 : i32
    %c0_i32_0 = arith.constant 0 : i32
    %c0_i32_1 = arith.constant 0 : i32
    return %c0_i32, %c0_i32_0 : i32, i32
  }
  func.func @transform_2(%arg0: i32) -> (i32, i32) {
    %c0_i32 = arith.constant 0 : i32
    %c0_i32_0 = arith.constant 0 : i32
    %c0_i32_1 = arith.constant 0 : i32
    return %c0_i32, %c0_i32_0 : i32, i32
  }
  func.func @transform_3(%arg0: i32) -> (i32, i32) {
    %c0_i32 = arith.constant 0 : i32
    %c0_i32_0 = arith.constant 0 : i32
    return %arg0, %c0_i32 : i32, i32
  }
}

</mosaic_0001>

<llo_original>
// kernel: tile.25
$region0: #{tile.25}
  %s0 = inlined_call_operand.vmem [shape: f32[4,64], index: 0, kind: input, shape index: {}]
  %s1 = inlined_call_operand.vmem [shape: f32[1,256], index: 1, kind: output, shape index: {}]
  $region1: #{tile.25} parent=0
    #allocation0 [shape = 'u8[8192]{0}', space=vmem, size = 0x2000, scoped, tag = 'scoped mem for output reshape']
    #allocation1 [shape = 'u8[4096]{0}', space=vmem, size = 0x1000, scoped, tag = 'scoped mem for input reshape']
    %s3 = sshllo.u32 0, 4
    %v4 = vld [vmem:[%s0] sm:%s3]
    %5 = vst [vmem:[#allocation1] sm:%s3] %v4
    %s6 = smov 3
    %v7 = vld [vmem:[#allocation1] ss:$2 sm:%s6]
    %vm8 = vcmask 523264
    %9 = vst.msk [vmem:[#allocation0] ss:$8 sm:$0x3] %vm8, %v7
    %s10 = scalar_lea.vmem [#allocation1], 1
    %s11 = smov 3
    %v12 = vld [vmem:[%s10] ss:$2 sm:%s11]
    %13 = vrot.lane.b32.xlu0 %v12, 64
    %v14 = vpop.permute.xlu0 %13
    %vm15 = vcmask 1048064
    %16 = vst.msk [vmem:[#allocation0] ss:$8 sm:$0x3] %vm15, %v14
    %s18 = sshllo.u32 0, 1
    %v20 = vld [vmem:[#allocation0] sm:%s18]
    %s21 = sshllo.u32 0, 1
    %22 = vst [vmem:[%s1] sm:%s21] %v20
    %s23 = scalar_lea.vmem [#allocation0], 8
    %v24 = vld [vmem:[%s23] sm:%s18]
    %s25 = sshllo.u32 0, 1
    %s26 = scalar_lea.vmem %s1, 1
    %27 = vst [vmem:[%s26] sm:%s25] %v24

// kernel: tile.24
$region0: #{tile.24}
  #allocation2 [shape = 's32[1]{0}', space=sflag, size = 0x4, scoped, tag = 'scoped memory for tile.24']
  %s0 = inlined_call_operand.hbm [shape: f32[64], index: 0, kind: input, shape index: {}]
  %s1 = inlined_call_operand.vmem [shape: f32[4,64], index: 1, kind: output, shape index: {}]
  $region1: #{tile.24} parent=0
    #allocation0 [shape = 'u8[512]{0}', space=vmem, size = 0x400, scoped, tag = 'operand span for operand 0']
    #allocation1 [shape = 's32[1]{0}', space=sflag, size = 0x4, scoped, tag = 'scoped memory for tile.24']
    %2 = vsyncpa [#allocation1], 0
    // Predicated region
    $region2: #{tile.24} parent=1 // pred_check
      _
    $region3: #{tile.24} parent=1 // pred_check_branch
      %4 = sbr.rel (0) target = $region5
    $region4: #{tile.24} parent=1 // pred_region
      %s6 = ssub.s32 16, 16
      %7 = vsyncadd [#allocation1], %s6
      %s9 = sshll.u32 [#allocation0], 4
      %s10 = int_to_ptr.vmem [resolvable:$true] %s9
      %12 = dma.hbm_to_vmem [thread:$0]  %s0, 16, %s10, [#allocation1]
    $region5: #{tile.24} parent=1 // pred_fallthru
      _
    // Predicated region
    $region6: #{tile.24} parent=1 // pred_check
      _
    $region7: #{tile.24} parent=1 // pred_check_branch
      %14 = sbr.rel (0) target = $region9
    $region8: #{tile.24} parent=1 // pred_region
      %15 = dma.done [#allocation1], 16
    $region9: #{tile.24} parent=1 // pred_fallthru
      _
    %v16 = vld [vmem:[#allocation0] ss:$0 sm:$0xff]
    %17 = vst [vmem:[%s1] sm:$0xf] %v16
    %18 = vsyncpa [#allocation1], 1

// kernel: shallow_unet_forward.7
$region0: #{shallow_unet_forward.7}
  #allocation0 [shape = 'u32[]', space=smem, size = 0x4, offset = 0x4, fixed_abs, tag = 'smem constant byte address 0x4 - core index']
  #allocation1 [shape = 'u32[144,128]{1,0:T(1,128)}', space=vmem, size = 0x12000, scoped, tag = 'internal scratch']
  %s0 = inlined_call_operand.vmem [shape: bf16[16,8,128], index: 0, kind: input, shape index: {}]
  %s1 = inlined_call_operand.vmem [shape: bf16[128,256], index: 1, kind: input, shape index: {}]
  %s2 = inlined_call_operand.vmem [shape: f32[1,256], index: 2, kind: input, shape index: {}]
  %s3 = inlined_call_operand.vmem [shape: f32[1,128], index: 3, kind: input, shape index: {}]
  %s4 = inlined_call_operand.vmem [shape: f32[1,128], index: 4, kind: input, shape index: {}]
  %s5 = inlined_call_operand.vmem [shape: bf16[16,2,8,128], index: 5, kind: output, shape index: {}]
  %s6 = sld [smem:[#allocation0]]
  $region53: #{shallow_unet_forward.7} parent=0
    _
  %s8 = ssub.s32 1, %s6
  %s9 = scalar_select 0, %s8, %s6
  loop: start=0, step=1, limit=4
  $region2: #{shallow_unet_forward.7} parent=0 // loop_pre_header
    _
  $region3: #{shallow_unet_forward.7} parent=0 // loop_header
    %s11 = sphi 0, %s15
    %p12 = scmp.ge.s32.totalorder %s11, 4
    %s21 = sphi 0, %s23
    %s24 = sphi 0, %s21
    %s25 = sphi 0, %s24
    %s41 = sphi 0, %s25
    %s45 = sphi 0, %s45
    %s47 = sphi 0, %s45
    %s48 = sphi 0, %s47
    %s62 = sphi 0, %s48
    %s66 = sphi 0, %s66
    %s68 = sphi 0, %s66
    %s69 = sphi 0, %s68
    %s83 = sphi 0, %s69
    %s87 = sphi 0, %s87
    %s89 = sphi 0, %s87
    %s90 = sphi 0, %s89
    %s104 = sphi 0, %s90
    %s108 = sphi 0, %s108
    %s110 = sphi 0, %s108
    %s111 = sphi 0, %s110
    %s125 = sphi 0, %s111
    %s131 = sphi 0, %s133
    %s134 = sphi 0, %s131
    %s135 = sphi 0, %s134
    %s151 = sphi 0, %s135
  $region4: #{shallow_unet_forward.7} parent=0 // loop_header_branch
    %14 = sbr.rel (%p12) target = $region8
  $region5: #{shallow_unet_forward.7} parent=0 // loop_body
    %s16 = ssub.s32 %s11, 1
    %s17 = ssub.s32 %s11, 2
    %s18 = sadd.s32 %s11, 1
    %s19 = ssub.s32 %s11, %s18
    %p20 = scmp.eq.s32.totalorder %s19, 0
    %s22 = sadd.s32 %s21, 1
    %s23 = scalar_select %p20, %s21, %s22
    %p26 = pneg %p20
    %p27 = scmp.eq.s32.totalorder %s11, 1
    %p28 = por %p26, %p27
    %p29 = scmp.ne.s32.totalorder %s21, %s24
    %p30 = scmp.eq.s32.totalorder %s11, 0
    %p31 = por %p29, %p30
    %p32 = scmp.ne.s32.totalorder %s21, %s24
    %p33 = scmp.eq.s32.totalorder %s16, 1
    %p34 = por %p32, %p33
    %p35 = scmp.ne.s32.totalorder %s24, %s25
    %p36 = scmp.eq.s32.totalorder %s16, 0
    %p37 = por %p35, %p36
    %p38 = scmp.ne.s32.totalorder %s24, %s25
    %p39 = scmp.eq.s32.totalorder %s17, 1
    %p40 = por %p38, %p39
    %p42 = scmp.ne.s32.totalorder %s25, %s41
    %p43 = scmp.eq.s32.totalorder %s17, 0
    %p44 = por %p42, %p43
    %s46 = sadd.s32 %s45, 1
    %p49 = scmp.eq.s32.totalorder %s11, 1
    %p50 = scmp.ne.s32.totalorder %s45, %s47
    %p51 = scmp.eq.s32.totalorder %s11, 0
    %p52 = por %p50, %p51
    %p53 = scmp.ne.s32.totalorder %s45, %s47
    %p54 = scmp.eq.s32.totalorder %s16, 1
    %p55 = por %p53, %p54
    %p56 = scmp.ne.s32.totalorder %s47, %s48
    %p57 = scmp.eq.s32.totalorder %s16, 0
    %p58 = por %p56, %p57
    %p59 = scmp.ne.s32.totalorder %s47, %s48
    %p60 = scmp.eq.s32.totalorder %s17, 1
    %p61 = por %p59, %p60
    %p63 = scmp.ne.s32.totalorder %s48, %s62
    %p64 = scmp.eq.s32.totalorder %s17, 0
    %p65 = por %p63, %p64
    %s67 = sadd.s32 %s66, 1
    %p70 = scmp.eq.s32.totalorder %s11, 1
    %p71 = scmp.ne.s32.totalorder %s66, %s68
    %p72 = scmp.eq.s32.totalorder %s11, 0
    %p73 = por %p71, %p72
    %p74 = scmp.ne.s32.totalorder %s66, %s68
    %p75 = scmp.eq.s32.totalorder %s16, 1
    %p76 = por %p74, %p75
    %p77 = scmp.ne.s32.totalorder %s68, %s69
    %p78 = scmp.eq.s32.totalorder %s16, 0
    %p79 = por %p77, %p78
    %p80 = scmp.ne.s32.totalorder %s68, %s69
    %p81 = scmp.eq.s32.totalorder %s17, 1
    %p82 = por %p80, %p81
    %p84 = scmp.ne.s32.totalorder %s69, %s83
    %p85 = scmp.eq.s32.totalorder %s17, 0
    %p86 = por %p84, %p85
    %s88 = sadd.s32 %s87, 1
    %p91 = scmp.eq.s32.totalorder %s11, 1
    %p92 = scmp.ne.s32.totalorder %s87, %s89
    %p93 = scmp.eq.s32.totalorder %s11, 0
    %p94 = por %p92, %p93
    %p95 = scmp.ne.s32.totalorder %s87, %s89
    %p96 = scmp.eq.s32.totalorder %s16, 1
    %p97 = por %p95, %p96
    %p98 = scmp.ne.s32.totalorder %s89, %s90
    %p99 = scmp.eq.s32.totalorder %s16, 0
    %p100 = por %p98, %p99
    %p101 = scmp.ne.s32.totalorder %s89, %s90
    %p102 = scmp.eq.s32.totalorder %s17, 1
    %p103 = por %p101, %p102
    %p105 = scmp.ne.s32.totalorder %s90, %s104
    %p106 = scmp.eq.s32.totalorder %s17, 0
    %p107 = por %p105, %p106
    %s109 = sadd.s32 %s108, 1
    %p112 = scmp.eq.s32.totalorder %s11, 1
    %p113 = scmp.ne.s32.totalorder %s108, %s110
    %p114 = scmp.eq.s32.totalorder %s11, 0
    %p115 = por %p113, %p114
    %p116 = scmp.ne.s32.totalorder %s108, %s110
    %p117 = scmp.eq.s32.totalorder %s16, 1
    %p118 = por %p116, %p117
    %p119 = scmp.ne.s32.totalorder %s110, %s111
    %p120 = scmp.eq.s32.totalorder %s16, 0
    %p121 = por %p119, %p120
    %p122 = scmp.ne.s32.totalorder %s110, %s111
    %p123 = scmp.eq.s32.totalorder %s17, 1
    %p124 = por %p122, %p123
    %p126 = scmp.ne.s32.totalorder %s111, %s125
    %p127 = scmp.eq.s32.totalorder %s17, 0
    %p128 = por %p126, %p127
    %s129 = ssub.s32 %s11, %s18
    %p130 = scmp.eq.s32.totalorder %s129, 0
    %s132 = sadd.s32 %s131, 1
    %s133 = scalar_select %p130, %s131, %s132
    %p136 = pneg %p130
    %p137 = scmp.eq.s32.totalorder %s11, 1
    %p138 = por %p136, %p137
    %p139 = scmp.ne.s32.totalorder %s131, %s134
    %p140 = scmp.eq.s32.totalorder %s11, 0
    %p141 = por %p139, %p140
    %p142 = scmp.ne.s32.totalorder %s131, %s134
    %p143 = scmp.eq.s32.totalorder %s16, 1
    %p144 = por %p142, %p143
    %p145 = scmp.ne.s32.totalorder %s134, %s135
    %p146 = scmp.eq.s32.totalorder %s16, 0
    %p147 = por %p145, %p146
    %p148 = scmp.ne.s32.totalorder %s134, %s135
    %p149 = scmp.eq.s32.totalorder %s17, 1
    %p150 = por %p148, %p149
    %p152 = scmp.ne.s32.totalorder %s135, %s151
    %p153 = scmp.eq.s32.totalorder %s17, 0
    %p154 = por %p152, %p153
    %p155 = scmp.le.s32.totalorder 1, %s11
    %p156 = scmp.lt.s32.totalorder %s11, 3
    %p157 = pnand %p155, %p156
    %p158 = pneg %p157
    // Predicated region
    $region9: #{shallow_unet_forward.7} parent=5 // pred_check
      _
    $region10: #{shallow_unet_forward.7} parent=5 // pred_check_branch
      %160 = sbr.rel (%p157) target = $region12
    $region11: #{shallow_unet_forward.7} parent=5 // pred_region
      %s161 = ssub.s32 %s11, 1
      // Predicated region
      $region13: #{shallow_unet_forward.7} parent=11 // pred_check
        %p162 = pneg %p58
      $region14: #{shallow_unet_forward.7} parent=11 // pred_check_branch
        %164 = sbr.rel (%p162) target = $region16
      $region15: #{shallow_unet_forward.7} parent=11 // pred_region
        _
      $region16: #{shallow_unet_forward.7} parent=11 // pred_fallthru
        _
      // Predicated region
      $region17: #{shallow_unet_forward.7} parent=11 // pred_check
        %p165 = pneg %p79
      $region18: #{shallow_unet_forward.7} parent=11 // pred_check_branch
        %167 = sbr.rel (%p165) target = $region20
      $region19: #{shallow_unet_forward.7} parent=11 // pred_region
        _
      $region20: #{shallow_unet_forward.7} parent=11 // pred_fallthru
        _
      // Predicated region
      $region21: #{shallow_unet_forward.7} parent=11 // pred_check
        %p168 = pneg %p100
      $region22: #{shallow_unet_forward.7} parent=11 // pred_check_branch
        %170 = sbr.rel (%p168) target = $region24
      $region23: #{shallow_unet_forward.7} parent=11 // pred_region
        _
      $region24: #{shallow_unet_forward.7} parent=11 // pred_fallthru
        _
      // Predicated region
      $region25: #{shallow_unet_forward.7} parent=11 // pred_check
        %p171 = pneg %p121
      $region26: #{shallow_unet_forward.7} parent=11 // pred_check_branch
        %173 = sbr.rel (%p171) target = $region28
      $region27: #{shallow_unet_forward.7} parent=11 // pred_region
        _
      $region28: #{shallow_unet_forward.7} parent=11 // pred_fallthru
        _
    $region12: #{shallow_unet_forward.7} parent=5 // pred_fallthru
      _
    %p174 = scmp.lt.s32.totalorder %s11, 2
    // Predicated region
    $region29: #{shallow_unet_forward.7} parent=5 // pred_check
      %p175 = pneg %p174
    $region30: #{shallow_unet_forward.7} parent=5 // pred_check_branch
      %177 = sbr.rel (%p175) target = $region32
    $region31: #{shallow_unet_forward.7} parent=5 // pred_region
      // Predicated region
      $region33: #{shallow_unet_forward.7} parent=31 // pred_check
        %p178 = pneg %p31
      $region34: #{shallow_unet_forward.7} parent=31 // pred_check_branch
        %180 = sbr.rel (%p178) target = $region36
      $region35: #{shallow_unet_forward.7} parent=31 // pred_region
        %s181 = smul.u32 8, %s11
        %p182 = scmp.lt.s32.totalorder %s181, 15
        %s183 = scalar_select %p182, %s181, 15
        %s184 = smul.addr %s183, 4
        %s185 = scalar_lea.vmem %s0, %s184
        %s186 = smul.u32 8, %s11
      $region36: #{shallow_unet_forward.7} parent=31 // pred_fallthru
        _
    $region32: #{shallow_unet_forward.7} parent=5 // pred_fallthru
      _
    %p187 = scmp.le.s32.totalorder 1, %s11
    %p188 = scmp.lt.s32.totalorder %s11, 3
    %p189 = pnand %p187, %p188
    %p190 = pneg %p189
    // Predicated region
    $region37: #{shallow_unet_forward.7} parent=5 // pred_check
      _
    $region38: #{shallow_unet_forward.7} parent=5 // pred_check_branch
      %192 = sbr.rel (%p189) target = $region40
    $region39: #{shallow_unet_forward.7} parent=5 // pred_region
      %s193 = ssub.s32 %s11, 1
      %s194 = smul.u32 8, %s16
      %p195 = scmp.lt.s32.totalorder %s194, 15
      %s196 = scalar_select %p195, %s194, 15
      %s197 = smul.addr %s196, 4
      %s198 = scalar_lea.vmem %s0, %s197
      %p199 = pneg %p37
      %p200 = pneg %p34
      %p201 = pneg %p58
      %p202 = pneg %p55
      %p203 = pneg %p79
      %p204 = pneg %p76
      %p205 = pneg %p100
      %p206 = pneg %p97
      %p207 = pneg %p121
      %p208 = pneg %p118
      %p209 = pneg %p147
      %p210 = pneg %p144
      %s211 = smul.u32 8, %s16
      %p212 = scmp.lt.s32.totalorder %s211, 15
      %s213 = scalar_select %p212, %s211, 15
      %s214 = smul.addr %s213, 2
      %s215 = smul.addr %s214, 4
      %s216 = scalar_lea.vmem %s5, %s215
      %s217 = smul.u32 8, %s16
      %p218 = scmp.lt.s32.totalorder %s217, 15
      %s219 = scalar_select %p218, %s217, 15
      %s220 = smul.addr %s219, 4
      %s221 = scalar_lea.vmem %s0, %s220
      %s222 = smul.u32 8, %s16
      %s223 = smul.u32 8, %s16
      %p224 = scmp.lt.s32.totalorder %s223, 15
      %s225 = scalar_select %p224, %s223, 15
      %s226 = smul.addr %s225, 2
      %s227 = smul.addr %s226, 4
      %s228 = scalar_lea.vmem %s5, %s227
      %s229 = smul.u32 8, %s16
      %v231 = vld [vmem:[%s221] sm:$0xf]
      %v232 = vld [vmem:[%s221 + $0x4] sm:$0xf]
      %v233 = vld [vmem:[%s221 + $0x8] sm:$0xf]
      %v234 = vld [vmem:[%s221 + $0xc] sm:$0xf]
      %v235 = vld [vmem:[%s221 + $0x10] sm:$0xf]
      %v236 = vld [vmem:[%s221 + $0x14] sm:$0xf]
      %v237 = vld [vmem:[%s221 + $0x18] sm:$0xf]
      %v238 = vld [vmem:[%s221 + $0x1c] sm:$0xf]
      %v239 = vunpack.c.l.bf16 %v231
      %v240 = vunpack.c.l.bf16 %v232
      %v241 = vunpack.c.l.bf16 %v233
      %v242 = vunpack.c.l.bf16 %v234
      %v243 = vunpack.c.l.bf16 %v235
      %v244 = vunpack.c.l.bf16 %v236
      %v245 = vunpack.c.l.bf16 %v237
      %v246 = vunpack.c.l.bf16 %v238
      %v247 = vld [vmem:[%s3] sm:$0x1]
      %v249 = vlaneseq
      %v250 = vshrl.u32 %v249, 7
      %v251 = vsub.s32 0, %v250
      %v252 = vrot.slane %v247, %v251
      %v254 = vmul.f32 %v239, %v252
      %v255 = vmul.f32 %v240, %v252
      %v256 = vmul.f32 %v241, %v252
      %v257 = vmul.f32 %v242, %v252
      %v258 = vmul.f32 %v243, %v252
      %v259 = vmul.f32 %v244, %v252
      %v260 = vmul.f32 %v245, %v252
      %v261 = vmul.f32 %v246, %v252
      %v262 = vld [vmem:[%s4] sm:$0x1]
      %v264 = vlaneseq
      %v265 = vshrl.u32 %v264, 7
      %v266 = vsub.s32 0, %v265
      %v267 = vrot.slane %v262, %v266
      %v269 = vadd.f32 %v254, %v267
      %v270 = vadd.f32 %v255, %v267
      %v271 = vadd.f32 %v256, %v267
      %v272 = vadd.f32 %v257, %v267
      %v273 = vadd.f32 %v258, %v267
      %v274 = vadd.f32 %v259, %v267
      %v275 = vadd.f32 %v260, %v267
      %v276 = vadd.f32 %v261, %v267
      %v277 = vmax.f32 %v269, 0.0
      %v278 = vmax.f32 %v270, 0.0
      %v279 = vmax.f32 %v271, 0.0
      %v280 = vmax.f32 %v272, 0.0
      %v281 = vmax.f32 %v273, 0.0
      %v282 = vmax.f32 %v274, 0.0
      %v283 = vmax.f32 %v275, 0.0
      %v284 = vmax.f32 %v276, 0.0
      %v285 = vpack.c.bf16 %v278, %v277
      %v286 = vpack.c.bf16 %v280, %v279
      %v287 = vpack.c.bf16 %v282, %v281
      %v288 = vpack.c.bf16 %v284, %v283
      %v289 = vld [vmem:[%s1] sm:$0xff]
      %v290 = vld [vmem:[%s1 + $0x8] sm:$0xff]
      %v291 = vld [vmem:[%s1 + $0x10] sm:$0xff]
      %v292 = vld [vmem:[%s1 + $0x18] sm:$0xff]
      %v293 = vld [vmem:[%s1 + $0x20] sm:$0xff]
      %v294 = vld [vmem:[%s1 + $0x28] sm:$0xff]
      %v295 = vld [vmem:[%s1 + $0x30] sm:$0xff]
      %v296 = vld [vmem:[%s1 + $0x38] sm:$0xff]
      %v297 = vld [vmem:[%s1 + $0x40] sm:$0xff]
      %v298 = vld [vmem:[%s1 + $0x48] sm:$0xff]
      %v299 = vld [vmem:[%s1 + $0x50] sm:$0xff]
      %v300 = vld [vmem:[%s1 + $0x58] sm:$0xff]
      %v301 = vld [vmem:[%s1 + $0x60] sm:$0xff]
      %v302 = vld [vmem:[%s1 + $0x68] sm:$0xff]
      %v303 = vld [vmem:[%s1 + $0x70] sm:$0xff]
      %v304 = vld [vmem:[%s1 + $0x78] sm:$0xff]
      %v305 = vld [vmem:[%s2] sm:$0x3]
      %v307 = vlaneseq
      %v308 = vshrl.u32 %v307, 7
      %v309 = vsub.s32 0, %v308
      %v310 = vrot.slane %v305, %v309
      %v311 = vlaneseq
      %v312 = vshrl.u32 %v311, 7
      %v313 = vsub.s32 1, %v312
      %v314 = vrot.slane %v305, %v313
      %v333 = vunpack.c.l.b16 %v289
      %v334 = vunpack.c.h.b16 %v289
      %v335 = vunpack.c.l.b16 %v290
      %v336 = vunpack.c.h.b16 %v290
      %v337 = vunpack.c.l.b16 %v291
      %v338 = vunpack.c.h.b16 %v291
      %v339 = vunpack.c.l.b16 %v292
      %v340 = vunpack.c.h.b16 %v292
      %v341 = vunpack.c.l.b16 %v293
      %v342 = vunpack.c.h.b16 %v293
      %v343 = vunpack.c.l.b16 %v294
      %v344 = vunpack.c.h.b16 %v294
      %v345 = vunpack.c.l.b16 %v295
      %v346 = vunpack.c.h.b16 %v295
      %v347 = vunpack.c.l.b16 %v296
      %v348 = vunpack.c.h.b16 %v296
      %v349 = vunpack.c.l.b16 %v297
      %v350 = vunpack.c.h.b16 %v297
      %v351 = vunpack.c.l.b16 %v298
      %v352 = vunpack.c.h.b16 %v298
      %v353 = vunpack.c.l.b16 %v299
      %v354 = vunpack.c.h.b16 %v299
      %v355 = vunpack.c.l.b16 %v300
      %v356 = vunpack.c.h.b16 %v300
      %v357 = vunpack.c.l.b16 %v301
      %v358 = vunpack.c.h.b16 %v301
      %v359 = vunpack.c.l.b16 %v302
      %v360 = vunpack.c.h.b16 %v302
      %v361 = vunpack.c.l.b16 %v303
      %v362 = vunpack.c.h.b16 %v303
      %v363 = vunpack.c.l.b16 %v304
      %v364 = vunpack.c.h.b16 %v304
      %v365 = vpack.c.b16 %v335, %v333
      %v366 = vpack.c.b16 %v336, %v334
      %v367 = vpack.c.b16 %v339, %v337
      %v368 = vpack.c.b16 %v340, %v338
      %v369 = vpack.c.b16 %v343, %v341
      %v370 = vpack.c.b16 %v344, %v342
      %v371 = vpack.c.b16 %v347, %v345
      %v372 = vpack.c.b16 %v348, %v346
      %v373 = vpack.c.b16 %v351, %v349
      %v374 = vpack.c.b16 %v352, %v350
      %v375 = vpack.c.b16 %v355, %v353
      %v376 = vpack.c.b16 %v356, %v354
      %v377 = vpack.c.b16 %v359, %v357
      %v378 = vpack.c.b16 %v360, %v358
      %v379 = vpack.c.b16 %v363, %v361
      %v380 = vpack.c.b16 %v364, %v362
      %397 = vmatprep.subr.bf16.mxu0 %v366
      %398 = vmatpush1.bf16.msra.mxu0 %v365
      %399 = vmatprep.subr.bf16.mxu0 %v368
      %400 = vmatpush1.bf16.msra.mxu0 %v367
      %401 = vmatprep.subr.bf16.mxu0 %v370
      %402 = vmatpush1.bf16.msra.mxu0 %v369
      %403 = vmatprep.subr.bf16.mxu0 %v372
      %404 = vmatpush1.bf16.msra.mxu0 %v371
      %405 = vmatprep.subr.bf16.mxu0 %v374
      %406 = vmatpush1.bf16.msra.mxu0 %v373
      %407 = vmatprep.subr.bf16.mxu0 %v376
      %408 = vmatpush1.bf16.msra.mxu0 %v375
      %409 = vmatprep.subr.bf16.mxu0 %v378
      %410 = vmatpush1.bf16.msra.mxu0 %v377
      %411 = vmatprep.subr.bf16.mxu0 %v380
      %412 = vmatpush1.bf16.msra.mxu0 %v379
      %413 = vmatprep.subr.bf16.mxu0 0
      %414 = vmatpush1.bf16.msra.mxu0 0
      %415 = vmatprep.subr.bf16.mxu0 0
      %416 = vmatpush1.bf16.msra.mxu0 0
      %417 = vmatprep.subr.bf16.mxu0 0
      %418 = vmatpush1.bf16.msra.mxu0 0
      %419 = vmatprep.subr.bf16.mxu0 0
      %420 = vmatpush1.bf16.msra.mxu0 0
      %421 = vmatprep.subr.bf16.mxu0 0
      %422 = vmatpush1.bf16.msra.mxu0 0
      %423 = vmatprep.subr.bf16.mxu0 0
      %424 = vmatpush1.bf16.msra.mxu0 0
      %425 = vmatprep.subr.bf16.mxu0 0
      %426 = vmatpush1.bf16.msra.mxu0 0
      %427 = vmatprep.subr.bf16.mxu0 0
      %428 = vmatpush1.bf16.msra.mxu0 0
      %429 = vmatprep.mubr.bf16.mxu0 0
      %430 = vmatmul.mubr.bf16.gmra.mrb[0].mxu0 %v285
      %v431 = vpop.f32.mrb[0].mxu0
      %v432 = vadd.f32 %v310, %v431
      %v433 = vpop.f32.mrb[0].mxu0
      %v434 = vadd.f32 %v314, %v433
      %v435 = vpop.f32.mrb[0].mxu0
      %v436 = vadd.f32 %v310, %v435
      %v437 = vpop.f32.mrb[0].mxu0
      %v438 = vadd.f32 %v314, %v437
      %439 = vmatprep.mubr.bf16.mxu0 0
      %440 = vmatmul.mubr.bf16.gmra.mrb[0].mxu0 %v286
      %v441 = vpop.f32.mrb[0].mxu0
      %v442 = vadd.f32 %v310, %v441
      %v443 = vpop.f32.mrb[0].mxu0
      %v444 = vadd.f32 %v314, %v443
      %v445 = vpop.f32.mrb[0].mxu0
      %v446 = vadd.f32 %v310, %v445
      %v447 = vpop.f32.mrb[0].mxu0
      %v448 = vadd.f32 %v314, %v447
      %449 = vmatprep.mubr.bf16.mxu0 0
      %450 = vmatmul.mubr.bf16.gmra.mrb[0].mxu0 %v287
      %v451 = vpop.f32.mrb[0].mxu0
      %v452 = vadd.f32 %v310, %v451
      %v453 = vpop.f32.mrb[0].mxu0
      %v454 = vadd.f32 %v314, %v453
      %v455 = vpop.f32.mrb[0].mxu0
      %v456 = vadd.f32 %v310, %v455
      %v457 = vpop.f32.mrb[0].mxu0
      %v458 = vadd.f32 %v314, %v457
      %459 = vmatprep.mubr.bf16.mxu0 0
      %460 = vmatmul.mubr.bf16.gmra.mrb[0].mxu0 %v288
      %v461 = vpop.f32.mrb[0].mxu0
      %v462 = vadd.f32 %v310, %v461
      %v463 = vpop.f32.mrb[0].mxu0
      %v464 = vadd.f32 %v314, %v463
      %v465 = vpop.f32.mrb[0].mxu0
      %v466 = vadd.f32 %v310, %v465
      %v467 = vpop.f32.mrb[0].mxu0
      %v468 = vadd.f32 %v314, %v467
      %469 = vdwg.mxu0
      %v470 = vpack.c.bf16 %v436, %v432
      %v471 = vpack.c.bf16 %v438, %v434
      %v472 = vpack.c.bf16 %v446, %v442
      %v473 = vpack.c.bf16 %v448, %v444
      %v474 = vpack.c.bf16 %v456, %v452
      %v475 = vpack.c.bf16 %v458, %v454
      %v476 = vpack.c.bf16 %v466, %v462
      %v477 = vpack.c.bf16 %v468, %v464
      %v482 = vunpack.c.l.b16 %v470
      %v483 = vunpack.c.h.b16 %v470
      %v484 = vunpack.c.l.b16 %v472
      %v485 = vunpack.c.h.b16 %v472
      %v486 = vunpack.c.l.b16 %v474
      %v487 = vunpack.c.h.b16 %v474
      %v488 = vunpack.c.l.b16 %v476
      %v489 = vunpack.c.h.b16 %v476
      %v490 = vpack.c.b16 %v482, %v482
      %v491 = vpack.c.b16 %v483, %v483
      %v492 = vpack.c.b16 %v484, %v484
      %v493 = vpack.c.b16 %v485, %v485
      %v494 = vpack.c.b16 %v486, %v486
      %v495 = vpack.c.b16 %v487, %v487
      %v496 = vpack.c.b16 %v488, %v488
      %v497 = vpack.c.b16 %v489, %v489
      %506 = vst [vmem:[%s228] sm:$0xf] %v490
      %507 = vst [vmem:[%s228 + $0x8] sm:$0xf] %v491
      %508 = vst [vmem:[%s228 + $0x10] sm:$0xf] %v492
      %509 = vst [vmem:[%s228 + $0x18] sm:$0xf] %v493
      %510 = vst [vmem:[%s228 + $0x20] sm:$0xf] %v494
      %511 = vst [vmem:[%s228 + $0x28] sm:$0xf] %v495
      %512 = vst [vmem:[%s228 + $0x30] sm:$0xf] %v496
      %513 = vst [vmem:[%s228 + $0x38] sm:$0xf] %v497
      %v518 = vunpack.c.l.b16 %v471
      %v519 = vunpack.c.h.b16 %v471
      %v520 = vunpack.c.l.b16 %v473
      %v521 = vunpack.c.h.b16 %v473
      %v522 = vunpack.c.l.b16 %v475
      %v523 = vunpack.c.h.b16 %v475
      %v524 = vunpack.c.l.b16 %v477
      %v525 = vunpack.c.h.b16 %v477
      %v526 = vpack.c.b16 %v518, %v518
      %v527 = vpack.c.b16 %v519, %v519
      %v528 = vpack.c.b16 %v520, %v520
      %v529 = vpack.c.b16 %v521, %v521
      %v530 = vpack.c.b16 %v522, %v522
      %v531 = vpack.c.b16 %v523, %v523
      %v532 = vpack.c.b16 %v524, %v524
      %v533 = vpack.c.b16 %v525, %v525
      %s542 = scalar_lea.vmem %s228, 4
      %543 = vst [vmem:[%s542] sm:$0xf] %v526
      %544 = vst [vmem:[%s542 + $0x8] sm:$0xf] %v527
      %545 = vst [vmem:[%s542 + $0x10] sm:$0xf] %v528
      %546 = vst [vmem:[%s542 + $0x18] sm:$0xf] %v529
      %547 = vst [vmem:[%s542 + $0x20] sm:$0xf] %v530
      %548 = vst [vmem:[%s542 + $0x28] sm:$0xf] %v531
      %549 = vst [vmem:[%s542 + $0x30] sm:$0xf] %v532
      %550 = vst [vmem:[%s542 + $0x38] sm:$0xf] %v533
      %s551 = smul.u32 8, %s16
      %p552 = scmp.lt.s32.totalorder %s551, 15
      %s553 = scalar_select %p552, %s551, 15
      %s554 = smul.addr %s553, 2
      %s555 = smul.addr %s554, 4
      %s556 = scalar_lea.vmem %s5, %s555
      // Predicated region
      $region41: #{shallow_unet_forward.7} parent=39 // pred_check
        %p557 = pneg %p144
      $region42: #{shallow_unet_forward.7} parent=39 // pred_check_branch
        %559 = sbr.rel (%p557) target = $region44
      $region43: #{shallow_unet_forward.7} parent=39 // pred_region
        %s560 = smul.u32 8, %s16
      $region44: #{shallow_unet_forward.7} parent=39 // pred_fallthru
        _
    $region40: #{shallow_unet_forward.7} parent=5 // pred_fallthru
      _
    %p561 = scmp.le.s32.totalorder 2, %s11
    // Predicated region
    $region45: #{shallow_unet_forward.7} parent=5 // pred_check
      %p562 = pneg %p561
    $region46: #{shallow_unet_forward.7} parent=5 // pred_check_branch
      %564 = sbr.rel (%p562) target = $region48
    $region47: #{shallow_unet_forward.7} parent=5 // pred_region
      %s565 = ssub.s32 %s11, 2
      // Predicated region
      $region49: #{shallow_unet_forward.7} parent=47 // pred_check
        %p566 = pneg %p150
      $region50: #{shallow_unet_forward.7} parent=47 // pred_check_branch
        %568 = sbr.rel (%p566) target = $region52
      $region51: #{shallow_unet_forward.7} parent=47 // pred_region
        %s569 = smul.u32 8, %s17
        %p570 = scmp.lt.s32.totalorder %s569, 15
        %s571 = scalar_select %p570, %s569, 15
        %s572 = smul.addr %s571, 2
        %s573 = smul.addr %s572, 4
        %s574 = scalar_lea.vmem %s5, %s573
      $region52: #{shallow_unet_forward.7} parent=47 // pred_fallthru
        _
    $region48: #{shallow_unet_forward.7} parent=5 // pred_fallthru
      _
  $region6: #{shallow_unet_forward.7} parent=0 // loop_footer
    %s15 = sadd.s32 1, %s11
  $region7: #{shallow_unet_forward.7} parent=0 // loop_footer_branch
    %10 = sbr.rel target = $region3
  $region8: #{shallow_unet_forward.7} parent=0 // loop_exit
    _

// kernel: shallow_unet_forward.6
$region0: #{shallow_unet_forward.6}
  #allocation0 [shape = 'u32[]', space=smem, size = 0x4, offset = 0x4, fixed_abs, tag = 'smem constant byte address 0x4 - core index']
  #allocation1 [shape = 'u32[144,128]{1,0:T(1,128)}', space=vmem, size = 0x12000, scoped, tag = 'internal scratch']
  #allocation2 [shape = 'bf16[64,64]{1,0:T(16,128)(2,1)}', space=vmem, size = 0x4000, scoped, tag = 'scratch operand']
  #allocation3 [shape = 'bf16[32,576]{1,0:T(16,128)(2,1)}', space=vmem, size = 0xa000, scoped, tag = 'scratch operand']
  %s0 = inlined_call_operand.vmem [shape: bf16[32,8,128], index: 0, kind: input, shape index: {}, may-alias: {0,1,2}]
  %s1 = inlined_call_operand.vmem [shape: bf16[32,8,128], index: 1, kind: input, shape index: {}, may-alias: {0,1,2}]
  %s2 = inlined_call_operand.vmem [shape: bf16[32,8,128], index: 2, kind: input, shape index: {}, may-alias: {0,1,2}]
  %s3 = inlined_call_operand.vmem [shape: f32[1,128], index: 3, kind: input, shape index: {}]
  %s4 = inlined_call_operand.vmem [shape: f32[1,128], index: 4, kind: input, shape index: {}]
  %s5 = inlined_call_operand.vmem [shape: bf16[576,128], index: 5, kind: input, shape index: {}]
  %s6 = inlined_call_operand.vmem [shape: f32[1,128], index: 6, kind: input, shape index: {}]
  %s7 = inlined_call_operand.vmem [shape: bf16[16,8,128], index: 7, kind: output, shape index: {0}]
  %s8 = inlined_call_operand.vmem [shape: f32[4,2,128], index: 8, kind: output, shape index: {1}]
  %9 = xla_tuple %s7, %s8
  %s10 = sld [smem:[#allocation0]]
  $region69: #{shallow_unet_forward.6} parent=0
    _
  %s12 = ssub.s32 1, %s10
  %s13 = scalar_select 0, %s12, %s10
  loop: start=0, step=1, limit=6
  $region2: #{shallow_unet_forward.6} parent=0 // loop_pre_header
    _
  $region3: #{shallow_unet_forward.6} parent=0 // loop_header
    %s15 = sphi 0, %s19
    %p16 = scmp.ge.s32.totalorder %s15, 6
    %s22 = sphi 0, %s34
    %s23 = sphi 0, %s30
    %s24 = sphi 0, %s22
    %s25 = sphi 0, %s23
    %s26 = sphi 0, %s24
    %s27 = sphi 0, %s25
    %s41 = sphi 0, %s43
    %s44 = sphi 0, %s41
    %s45 = sphi 0, %s44
    %s61 = sphi 0, %s45
    %s79 = sphi 0, %s81
    %s82 = sphi 0, %s79
    %s83 = sphi 0, %s82
    %s99 = sphi 0, %s83
    %s117 = sphi 0, %s119
    %s120 = sphi 0, %s117
    %s121 = sphi 0, %s120
    %s137 = sphi 0, %s121
    %s141 = sphi 0, %s141
    %s143 = sphi 0, %s141
    %s144 = sphi 0, %s143
    %s158 = sphi 0, %s144
    %s162 = sphi 0, %s162
    %s164 = sphi 0, %s162
    %s165 = sphi 0, %s164
    %s179 = sphi 0, %s165
    %s183 = sphi 0, %s183
    %s185 = sphi 0, %s183
    %s186 = sphi 0, %s185
    %s200 = sphi 0, %s186
    %s204 = sphi 0, %s204
    %s206 = sphi 0, %s204
    %s207 = sphi 0, %s206
    %s221 = sphi 0, %s207
    %s231 = sphi 0, %s233
    %s234 = sphi 0, %s231
    %s235 = sphi 0, %s234
    %s251 = sphi 0, %s235
    %s261 = sphi 0, %s263
    %s264 = sphi 0, %s261
    %s265 = sphi 0, %s264
    %s281 = sphi 0, %s265
  $region4: #{shallow_unet_forward.6} parent=0 // loop_header_branch
    %18 = sbr.rel (%p16) target = $region8
  $region5: #{shallow_unet_forward.6} parent=0 // loop_body
    %s20 = ssub.s32 %s15, 1
    %s21 = ssub.s32 %s15, 2
    %s28 = sadd.s32 1, %s23
    %p29 = scmp.ge.s32.totalorder %s28, 2
    %s30 = scalar_select %p29, 0, %s28
    %s31 = sadd.s32 1, %s22
    %s32 = scalar_select %p29, %s31, %s22
    %p33 = scmp.ge.s32.totalorder %s32, 2
    %s34 = scalar_select %p33, 0, %s32
    %s35 = smul.u32 %s22, 2
    %s36 = sadd.s32 %s35, %s23
    %s37 = smul.u32 %s34, 2
    %s38 = sadd.s32 %s37, %s30
    %s39 = ssub.s32 %s36, %s38
    %p40 = scmp.eq.s32.totalorder %s39, 0
    %s42 = sadd.s32 %s41, 1
    %s43 = scalar_select %p40, %s41, %s42
    %p46 = pneg %p40
    %p47 = scmp.eq.s32.totalorder %s15, 3
    %p48 = por %p46, %p47
    %p49 = scmp.ne.s32.totalorder %s41, %s44
    %p50 = scmp.eq.s32.totalorder %s15, 0
    %p51 = por %p49, %p50
    %p52 = scmp.ne.s32.totalorder %s41, %s44
    %p53 = scmp.eq.s32.totalorder %s20, 3
    %p54 = por %p52, %p53
    %p55 = scmp.ne.s32.totalorder %s44, %s45
    %p56 = scmp.eq.s32.totalorder %s20, 0
    %p57 = por %p55, %p56
    %p58 = scmp.ne.s32.totalorder %s44, %s45
    %p59 = scmp.eq.s32.totalorder %s21, 3
    %p60 = por %p58, %p59
    %p62 = scmp.ne.s32.totalorder %s45, %s61
    %p63 = scmp.eq.s32.totalorder %s21, 0
    %p64 = por %p62, %p63
    %s65 = smul.u32 %s22, 8
    %s66 = smul.u32 %s23, 4
    %s67 = ssub.s32 %s66, 1
    %p68 = scmp.gt.s32.totalorder %s67, 0
    %s69 = scalar_select %p68, %s67, 0
    %s70 = sadd.s32 %s65, %s69
    %s71 = smul.u32 %s34, 8
    %s72 = smul.u32 %s30, 4
    %s73 = ssub.s32 %s72, 1
    %p74 = scmp.gt.s32.totalorder %s73, 0
    %s75 = scalar_select %p74, %s73, 0
    %s76 = sadd.s32 %s71, %s75
    %s77 = ssub.s32 %s70, %s76
    %p78 = scmp.eq.s32.totalorder %s77, 0
    %s80 = sadd.s32 %s79, 1
    %s81 = scalar_select %p78, %s79, %s80
    %p84 = pneg %p78
    %p85 = scmp.eq.s32.totalorder %s15, 3
    %p86 = por %p84, %p85
    %p87 = scmp.ne.s32.totalorder %s79, %s82
    %p88 = scmp.eq.s32.totalorder %s15, 0
    %p89 = por %p87, %p88
    %p90 = scmp.ne.s32.totalorder %s79, %s82
    %p91 = scmp.eq.s32.totalorder %s20, 3
    %p92 = por %p90, %p91
    %p93 = scmp.ne.s32.totalorder %s82, %s83
    %p94 = scmp.eq.s32.totalorder %s20, 0
    %p95 = por %p93, %p94
    %p96 = scmp.ne.s32.totalorder %s82, %s83
    %p97 = scmp.eq.s32.totalorder %s21, 3
    %p98 = por %p96, %p97
    %p100 = scmp.ne.s32.totalorder %s83, %s99
    %p101 = scmp.eq.s32.totalorder %s21, 0
    %p102 = por %p100, %p101
    %s103 = smul.u32 %s22, 8
    %s104 = sadd.s32 %s23, 1
    %s105 = smul.u32 %s104, 4
    %p106 = scmp.lt.s32.totalorder %s105, 7
    %s107 = scalar_select %p106, %s105, 7
    %s108 = sadd.s32 %s103, %s107
    %s109 = smul.u32 %s34, 8
    %s110 = sadd.s32 %s30, 1
    %s111 = smul.u32 %s110, 4
    %p112 = scmp.lt.s32.totalorder %s111, 7
    %s113 = scalar_select %p112, %s111, 7
    %s114 = sadd.s32 %s109, %s113
    %s115 = ssub.s32 %s108, %s114
    %p116 = scmp.eq.s32.totalorder %s115, 0
    %s118 = sadd.s32 %s117, 1
    %s119 = scalar_select %p116, %s117, %s118
    %p122 = pneg %p116
    %p123 = scmp.eq.s32.totalorder %s15, 3
    %p124 = por %p122, %p123
    %p125 = scmp.ne.s32.totalorder %s117, %s120
    %p126 = scmp.eq.s32.totalorder %s15, 0
    %p127 = por %p125, %p126
    %p128 = scmp.ne.s32.totalorder %s117, %s120
    %p129 = scmp.eq.s32.totalorder %s20, 3
    %p130 = por %p128, %p129
    %p131 = scmp.ne.s32.totalorder %s120, %s121
    %p132 = scmp.eq.s32.totalorder %s20, 0
    %p133 = por %p131, %p132
    %p134 = scmp.ne.s32.totalorder %s120, %s121
    %p135 = scmp.eq.s32.totalorder %s21, 3
    %p136 = por %p134, %p135
    %p138 = scmp.ne.s32.totalorder %s121, %s137
    %p139 = scmp.eq.s32.totalorder %s21, 0
    %p140 = por %p138, %p139
    %s142 = sadd.s32 %s141, 1
    %p145 = scmp.eq.s32.totalorder %s15, 3
    %p146 = scmp.ne.s32.totalorder %s141, %s143
    %p147 = scmp.eq.s32.totalorder %s15, 0
    %p148 = por %p146, %p147
    %p149 = scmp.ne.s32.totalorder %s141, %s143
    %p150 = scmp.eq.s32.totalorder %s20, 3
    %p151 = por %p149, %p150
    %p152 = scmp.ne.s32.totalorder %s143, %s144
    %p153 = scmp.eq.s32.totalorder %s20, 0
    %p154 = por %p152, %p153
    %p155 = scmp.ne.s32.totalorder %s143, %s144
    %p156 = scmp.eq.s32.totalorder %s21, 3
    %p157 = por %p155, %p156
    %p159 = scmp.ne.s32.totalorder %s144, %s158
    %p160 = scmp.eq.s32.totalorder %s21, 0
    %p161 = por %p159, %p160
    %s163 = sadd.s32 %s162, 1
    %p166 = scmp.eq.s32.totalorder %s15, 3
    %p167 = scmp.ne.s32.totalorder %s162, %s164
    %p168 = scmp.eq.s32.totalorder %s15, 0
    %p169 = por %p167, %p168
    %p170 = scmp.ne.s32.totalorder %s162, %s164
    %p171 = scmp.eq.s32.totalorder %s20, 3
    %p172 = por %p170, %p171
    %p173 = scmp.ne.s32.totalorder %s164, %s165
    %p174 = scmp.eq.s32.totalorder %s20, 0
    %p175 = por %p173, %p174
    %p176 = scmp.ne.s32.totalorder %s164, %s165
    %p177 = scmp.eq.s32.totalorder %s21, 3
    %p178 = por %p176, %p177
    %p180 = scmp.ne.s32.totalorder %s165, %s179
    %p181 = scmp.eq.s32.totalorder %s21, 0
    %p182 = por %p180, %p181
    %s184 = sadd.s32 %s183, 1
    %p187 = scmp.eq.s32.totalorder %s15, 3
    %p188 = scmp.ne.s32.totalorder %s183, %s185
    %p189 = scmp.eq.s32.totalorder %s15, 0
    %p190 = por %p188, %p189
    %p191 = scmp.ne.s32.totalorder %s183, %s185
    %p192 = scmp.eq.s32.totalorder %s20, 3
    %p193 = por %p191, %p192
    %p194 = scmp.ne.s32.totalorder %s185, %s186
    %p195 = scmp.eq.s32.totalorder %s20, 0
    %p196 = por %p194, %p195
    %p197 = scmp.ne.s32.totalorder %s185, %s186
    %p198 = scmp.eq.s32.totalorder %s21, 3
    %p199 = por %p197, %p198
    %p201 = scmp.ne.s32.totalorder %s186, %s200
    %p202 = scmp.eq.s32.totalorder %s21, 0
    %p203 = por %p201, %p202
    %s205 = sadd.s32 %s204, 1
    %p208 = scmp.eq.s32.totalorder %s15, 3
    %p209 = scmp.ne.s32.totalorder %s204, %s206
    %p210 = scmp.eq.s32.totalorder %s15, 0
    %p211 = por %p209, %p210
    %p212 = scmp.ne.s32.totalorder %s204, %s206
    %p213 = scmp.eq.s32.totalorder %s20, 3
    %p214 = por %p212, %p213
    %p215 = scmp.ne.s32.totalorder %s206, %s207
    %p216 = scmp.eq.s32.totalorder %s20, 0
    %p217 = por %p215, %p216
    %p218 = scmp.ne.s32.totalorder %s206, %s207
    %p219 = scmp.eq.s32.totalorder %s21, 3
    %p220 = por %p218, %p219
    %p222 = scmp.ne.s32.totalorder %s207, %s221
    %p223 = scmp.eq.s32.totalorder %s21, 0
    %p224 = por %p222, %p223
    %s225 = smul.u32 %s22, 2
    %s226 = sadd.s32 %s225, %s23
    %s227 = smul.u32 %s34, 2
    %s228 = sadd.s32 %s227, %s30
    %s229 = ssub.s32 %s226, %s228
    %p230 = scmp.eq.s32.totalorder %s229, 0
    %s232 = sadd.s32 %s231, 1
    %s233 = scalar_select %p230, %s231, %s232
    %p236 = pneg %p230
    %p237 = scmp.eq.s32.totalorder %s15, 3
    %p238 = por %p236, %p237
    %p239 = scmp.ne.s32.totalorder %s231, %s234
    %p240 = scmp.eq.s32.totalorder %s15, 0
    %p241 = por %p239, %p240
    %p242 = scmp.ne.s32.totalorder %s231, %s234
    %p243 = scmp.eq.s32.totalorder %s20, 3
    %p244 = por %p242, %p243
    %p245 = scmp.ne.s32.totalorder %s234, %s235
    %p246 = scmp.eq.s32.totalorder %s20, 0
    %p247 = por %p245, %p246
    %p248 = scmp.ne.s32.totalorder %s234, %s235
    %p249 = scmp.eq.s32.totalorder %s21, 3
    %p250 = por %p248, %p249
    %p252 = scmp.ne.s32.totalorder %s235, %s251
    %p253 = scmp.eq.s32.totalorder %s21, 0
    %p254 = por %p252, %p253
    %s255 = smul.u32 %s22, 2
    %s256 = sadd.s32 %s255, %s23
    %s257 = smul.u32 %s34, 2
    %s258 = sadd.s32 %s257, %s30
    %s259 = ssub.s32 %s256, %s258
    %p260 = scmp.eq.s32.totalorder %s259, 0
    %s262 = sadd.s32 %s261, 1
    %s263 = scalar_select %p260, %s261, %s262
    %p266 = pneg %p260
    %p267 = scmp.eq.s32.totalorder %s15, 3
    %p268 = por %p266, %p267
    %p269 = scmp.ne.s32.totalorder %s261, %s264
    %p270 = scmp.eq.s32.totalorder %s15, 0
    %p271 = por %p269, %p270
    %p272 = scmp.ne.s32.totalorder %s261, %s264
    %p273 = scmp.eq.s32.totalorder %s20, 3
    %p274 = por %p272, %p273
    %p275 = scmp.ne.s32.totalorder %s264, %s265
    %p276 = scmp.eq.s32.totalorder %s20, 0
    %p277 = por %p275, %p276
    %p278 = scmp.ne.s32.totalorder %s264, %s265
    %p279 = scmp.eq.s32.totalorder %s21, 3
    %p280 = por %p278, %p279
    %p282 = scmp.ne.s32.totalorder %s265, %s281
    %p283 = scmp.eq.s32.totalorder %s21, 0
    %p284 = por %p282, %p283
    %p285 = scmp.le.s32.totalorder 1, %s15
    %p286 = scmp.lt.s32.totalorder %s15, 5
    %p287 = pnand %p285, %p286
    %p288 = pneg %p287
    // Predicated region
    $region9: #{shallow_unet_forward.6} parent=5 // pred_check
      _
    $region10: #{shallow_unet_forward.6} parent=5 // pred_check_branch
      %290 = sbr.rel (%p287) target = $region12
    $region11: #{shallow_unet_forward.6} parent=5 // pred_region
      %s291 = ssub.s32 %s15, 1
      // Predicated region
      $region13: #{shallow_unet_forward.6} parent=11 // pred_check
        %p292 = pneg %p154
      $region14: #{shallow_unet_forward.6} parent=11 // pred_check_branch
        %294 = sbr.rel (%p292) target = $region16
      $region15: #{shallow_unet_forward.6} parent=11 // pred_region
        _
      $region16: #{shallow_unet_forward.6} parent=11 // pred_fallthru
        _
      // Predicated region
      $region17: #{shallow_unet_forward.6} parent=11 // pred_check
        %p295 = pneg %p175
      $region18: #{shallow_unet_forward.6} parent=11 // pred_check_branch
        %297 = sbr.rel (%p295) target = $region20
      $region19: #{shallow_unet_forward.6} parent=11 // pred_region
        _
      $region20: #{shallow_unet_forward.6} parent=11 // pred_fallthru
        _
      // Predicated region
      $region21: #{shallow_unet_forward.6} parent=11 // pred_check
        %p298 = pneg %p196
      $region22: #{shallow_unet_forward.6} parent=11 // pred_check_branch
        %300 = sbr.rel (%p298) target = $region24
      $region23: #{shallow_unet_forward.6} parent=11 // pred_region
        _
      $region24: #{shallow_unet_forward.6} parent=11 // pred_fallthru
        _
      // Predicated region
      $region25: #{shallow_unet_forward.6} parent=11 // pred_check
        %p301 = pneg %p217
      $region26: #{shallow_unet_forward.6} parent=11 // pred_check_branch
        %303 = sbr.rel (%p301) target = $region28
      $region27: #{shallow_unet_forward.6} parent=11 // pred_region
        _
      $region28: #{shallow_unet_forward.6} parent=11 // pred_fallthru
        _
    $region12: #{shallow_unet_forward.6} parent=5 // pred_fallthru
      _
    %p304 = scmp.lt.s32.totalorder %s15, 4
    // Predicated region
    $region29: #{shallow_unet_forward.6} parent=5 // pred_check
      %p305 = pneg %p304
    $region30: #{shallow_unet_forward.6} parent=5 // pred_check_branch
      %307 = sbr.rel (%p305) target = $region32
    $region31: #{shallow_unet_forward.6} parent=5 // pred_region
      // Predicated region
      $region33: #{shallow_unet_forward.6} parent=31 // pred_check
        %p308 = pneg %p51
      $region34: #{shallow_unet_forward.6} parent=31 // pred_check_branch
        %310 = sbr.rel (%p308) target = $region36
      $region35: #{shallow_unet_forward.6} parent=31 // pred_region
        %s311 = smul.u32 %s22, 2
        %s312 = sadd.s32 %s311, %s23
        %s313 = smul.u32 8, %s312
        %p314 = scmp.lt.s32.totalorder %s313, 31
        %s315 = scalar_select %p314, %s313, 31
        %s316 = smul.addr %s315, 4
        %s317 = scalar_lea.vmem %s0, %s316
        %s318 = smul.u32 %s22, 2
        %s319 = sadd.s32 %s318, %s23
        %s320 = smul.u32 8, %s319
      $region36: #{shallow_unet_forward.6} parent=31 // pred_fallthru
        _
      // Predicated region
      $region37: #{shallow_unet_forward.6} parent=31 // pred_check
        %p321 = pneg %p89
      $region38: #{shallow_unet_forward.6} parent=31 // pred_check_branch
        %323 = sbr.rel (%p321) target = $region40
      $region39: #{shallow_unet_forward.6} parent=31 // pred_region
        %s324 = smul.u32 %s22, 8
        %s325 = smul.u32 %s23, 4
        %s326 = ssub.s32 %s325, 1
        %p327 = scmp.gt.s32.totalorder %s326, 0
        %s328 = scalar_select %p327, %s326, 0
        %s329 = sadd.s32 %s324, %s328
        %s330 = smul.u32 2, %s329
        %p331 = scmp.lt.s32.totalorder %s330, 31
        %s332 = scalar_select %p331, %s330, 31
        %s333 = smul.addr %s332, 4
        %s334 = scalar_lea.vmem %s1, %s333
        %s335 = smul.u32 %s22, 8
        %s336 = smul.u32 %s23, 4
        %s337 = ssub.s32 %s336, 1
        %p338 = scmp.gt.s32.totalorder %s337, 0
        %s339 = scalar_select %p338, %s337, 0
        %s340 = sadd.s32 %s335, %s339
        %s341 = smul.u32 2, %s340
      $region40: #{shallow_unet_forward.6} parent=31 // pred_fallthru
        _
      // Predicated region
      $region41: #{shallow_unet_forward.6} parent=31 // pred_check
        %p342 = pneg %p127
      $region42: #{shallow_unet_forward.6} parent=31 // pred_check_branch
        %344 = sbr.rel (%p342) target = $region44
      $region43: #{shallow_unet_forward.6} parent=31 // pred_region
        %s345 = smul.u32 %s22, 8
        %s346 = sadd.s32 %s23, 1
        %s347 = smul.u32 %s346, 4
        %p348 = scmp.lt.s32.totalorder %s347, 7
        %s349 = scalar_select %p348, %s347, 7
        %s350 = sadd.s32 %s345, %s349
        %s351 = smul.u32 2, %s350
        %p352 = scmp.lt.s32.totalorder %s351, 31
        %s353 = scalar_select %p352, %s351, 31
        %s354 = smul.addr %s353, 4
        %s355 = scalar_lea.vmem %s2, %s354
        %s356 = smul.u32 %s22, 8
        %s357 = sadd.s32 %s23, 1
        %s358 = smul.u32 %s357, 4
        %p359 = scmp.lt.s32.totalorder %s358, 7
        %s360 = scalar_select %p359, %s358, 7
        %s361 = sadd.s32 %s356, %s360
        %s362 = smul.u32 2, %s361
      $region44: #{shallow_unet_forward.6} parent=31 // pred_fallthru
        _
    $region32: #{shallow_unet_forward.6} parent=5 // pred_fallthru
      _
    %p363 = scmp.le.s32.totalorder 1, %s15
    %p364 = scmp.lt.s32.totalorder %s15, 5
    %p365 = pnand %p363, %p364
    %p366 = pneg %p365
    // Predicated region
    $region45: #{shallow_unet_forward.6} parent=5 // pred_check
      _
    $region46: #{shallow_unet_forward.6} parent=5 // pred_check_branch
      %368 = sbr.rel (%p365) target = $region48
    $region47: #{shallow_unet_forward.6} parent=5 // pred_region
      %s369 = ssub.s32 %s15, 1
      %s370 = smul.u32 %s24, 2
      %s371 = sadd.s32 %s370, %s25
      %s372 = smul.u32 8, %s371
      %p373 = scmp.lt.s32.totalorder %s372, 31
      %s374 = scalar_select %p373, %s372, 31
      %s375 = smul.addr %s374, 4
      %s376 = scalar_lea.vmem %s0, %s375
      %p377 = pneg %p57
      %p378 = pneg %p54
      %s379 = smul.u32 %s24, 8
      %s380 = smul.u32 %s25, 4
      %s381 = ssub.s32 %s380, 1
      %p382 = scmp.gt.s32.totalorder %s381, 0
      %s383 = scalar_select %p382, %s381, 0
      %s384 = sadd.s32 %s379, %s383
      %s385 = smul.u32 2, %s384
      %p386 = scmp.lt.s32.totalorder %s385, 31
      %s387 = scalar_select %p386, %s385, 31
      %s388 = smul.addr %s387, 4
      %s389 = scalar_lea.vmem %s1, %s388
      %p390 = pneg %p95
      %p391 = pneg %p92
      %s392 = smul.u32 %s24, 8
      %s393 = sadd.s32 %s25, 1
      %s394 = smul.u32 %s393, 4
      %p395 = scmp.lt.s32.totalorder %s394, 7
      %s396 = scalar_select %p395, %s394, 7
      %s397 = sadd.s32 %s392, %s396
      %s398 = smul.u32 2, %s397
      %p399 = scmp.lt.s32.totalorder %s398, 31
      %s400 = scalar_select %p399, %s398, 31
      %s401 = smul.addr %s400, 4
      %s402 = scalar_lea.vmem %s2, %s401
      %p403 = pneg %p133
      %p404 = pneg %p130
      %p405 = pneg %p154
      %p406 = pneg %p151
      %p407 = pneg %p175
      %p408 = pneg %p172
      %p409 = pneg %p196
      %p410 = pneg %p193
      %p411 = pneg %p217
      %p412 = pneg %p214
      %p413 = pneg %p247
      %p414 = pneg %p244
      %s415 = smul.u32 %s24, 2
      %s416 = sadd.s32 %s415, %s25
      %s417 = smul.u32 4, %s416
      %p418 = scmp.lt.s32.totalorder %s417, 15
      %s419 = scalar_select %p418, %s417, 15
      %s420 = smul.addr %s419, 4
      %s421 = scalar_lea.vmem %s7, %s420
      %p422 = pneg %p277
      %p423 = pneg %p274
      %s424 = smul.u32 %s24, 2
      %s425 = sadd.s32 %s424, %s25
      %p426 = scmp.lt.s32.totalorder %s425, 3
      %s427 = scalar_select %p426, %s425, 3
      %s428 = smul.addr %s427, 2
      %s429 = scalar_lea.vmem %s8, %s428
      %s430 = smul.u32 %s24, 2
      %s431 = sadd.s32 %s430, %s25
      %s432 = smul.u32 8, %s431
      %p433 = scmp.lt.s32.totalorder %s432, 31
      %s434 = scalar_select %p433, %s432, 31
      %s435 = smul.addr %s434, 4
      %s436 = scalar_lea.vmem %s0, %s435
      %s437 = smul.u32 %s24, 2
      %s438 = sadd.s32 %s437, %s25
      %s439 = smul.u32 8, %s438
      %s440 = smul.u32 %s24, 8
      %s441 = smul.u32 %s25, 4
      %s442 = ssub.s32 %s441, 1
      %p443 = scmp.gt.s32.totalorder %s442, 0
      %s444 = scalar_select %p443, %s442, 0
      %s445 = sadd.s32 %s440, %s444
      %s446 = smul.u32 2, %s445
      %p447 = scmp.lt.s32.totalorder %s446, 31
      %s448 = scalar_select %p447, %s446, 31
      %s449 = smul.addr %s448, 4
      %s450 = scalar_lea.vmem %s1, %s449
      %s451 = smul.u32 %s24, 8
      %s452 = smul.u32 %s25, 4
      %s453 = ssub.s32 %s452, 1
      %p454 = scmp.gt.s32.totalorder %s453, 0
      %s455 = scalar_select %p454, %s453, 0
      %s456 = sadd.s32 %s451, %s455
      %s457 = smul.u32 2, %s456
      %s458 = smul.u32 %s24, 8
      %s459 = sadd.s32 %s25, 1
      %s460 = smul.u32 %s459, 4
      %p461 = scmp.lt.s32.totalorder %s460, 7
      %s462 = scalar_select %p461, %s460, 7
      %s463 = sadd.s32 %s458, %s462
      %s464 = smul.u32 2, %s463
      %p465 = scmp.lt.s32.totalorder %s464, 31
      %s466 = scalar_select %p465, %s464, 31
      %s467 = smul.addr %s466, 4
      %s468 = scalar_lea.vmem %s2, %s467
      %s469 = smul.u32 %s24, 8
      %s470 = sadd.s32 %s25, 1
      %s471 = smul.u32 %s470, 4
      %p472 = scmp.lt.s32.totalorder %s471, 7
      %s473 = scalar_select %p472, %s471, 7
      %s474 = sadd.s32 %s469, %s473
      %s475 = smul.u32 2, %s474
      %s476 = smul.u32 %s24, 2
      %s477 = sadd.s32 %s476, %s25
      %s478 = smul.u32 4, %s477
      %p479 = scmp.lt.s32.totalorder %s478, 15
      %s480 = scalar_select %p479, %s478, 15
      %s481 = smul.addr %s480, 4
      %s482 = scalar_lea.vmem %s7, %s481
      %s483 = smul.u32 %s24, 2
      %s484 = sadd.s32 %s483, %s25
      %s485 = smul.u32 4, %s484
      %s486 = smul.u32 %s24, 2
      %s487 = sadd.s32 %s486, %s25
      %p488 = scmp.lt.s32.totalorder %s487, 3
      %s489 = scalar_select %p488, %s487, 3
      %s490 = smul.addr %s489, 2
      %s491 = scalar_lea.vmem %s8, %s490
      %s492 = smul.u32 %s24, 2
      %s493 = sadd.s32 %s492, %s25
      %v497 = vlaneseq
      %v498 = vshrl.u32 %v497, 7
      %v499 = vadd.s32 %v498, 8
      %v500 = vadd.s32 %v498, 16
      %v501 = vadd.s32 %v498, 24
      %vm502 = vcmp.lt.s32.totalorder %v498, 0
      %v503 = vsub.s32 0, %v498
      %v504 = vsel %vm502, %v503, %v498
      %v505 = vshrl.u32 %v504, 3
      %v506 = vand.u32 %v504, 7
      %v507 = vsub.s32 0, %v506
      %v508 = vsel %vm502, %v507, %v506
      %vm509 = vcmp.lt.s32.totalorder %v499, 0
      %v510 = vsub.s32 0, %v499
      %v511 = vsel %vm509, %v510, %v499
      %v512 = vshrl.u32 %v511, 3
      %v513 = vand.u32 %v511, 7
      %v514 = vsub.s32 0, %v513
      %v515 = vsel %vm509, %v514, %v513
      %vm516 = vcmp.lt.s32.totalorder %v500, 0
      %v517 = vsub.s32 0, %v500
      %v518 = vsel %vm516, %v517, %v500
      %v519 = vshrl.u32 %v518, 3
      %v520 = vand.u32 %v518, 7
      %v521 = vsub.s32 0, %v520
      %v522 = vsel %vm516, %v521, %v520
      %vm523 = vcmp.lt.s32.totalorder %v501, 0
      %v524 = vsub.s32 0, %v501
      %v525 = vsel %vm523, %v524, %v501
      %v526 = vshrl.u32 %v525, 3
      %v527 = vand.u32 %v525, 7
      %v528 = vsub.s32 0, %v527
      %v529 = vsel %vm523, %v528, %v527
      %vm530 = vcmp.ne.s32.totalorder %v508, 0
      %vm531 = vcmp.ne.s32.totalorder %v515, 0
      %vm532 = vcmp.ne.s32.totalorder %v522, 0
      %vm533 = vcmp.ne.s32.totalorder %v529, 0
      %vm534 = vcmp.lt.s32.totalorder %v508, 0
      %vm535 = vcmp.lt.s32.totalorder %v515, 0
      %vm536 = vcmp.lt.s32.totalorder %v522, 0
      %vm537 = vcmp.lt.s32.totalorder %v529, 0
      %vm538 = vmand %vm534, %vm530
      %vm539 = vmand %vm535, %vm531
      %vm540 = vmand %vm536, %vm532
      %vm541 = vmand %vm537, %vm533
      %v542 = vadd.s32 %v508, 8
      %v543 = vadd.s32 %v515, 8
      %v544 = vadd.s32 %v522, 8
      %v545 = vadd.s32 %v529, 8
      %v546 = vsel %vm538, %v542, %v508
      %v547 = vsel %vm539, %v543, %v515
      %v548 = vsel %vm540, %v544, %v522
      %v549 = vsel %vm541, %v545, %v529
      %vm550 = vcmp.ne.s32.totalorder %v546, 7
      %vm551 = vcmp.ne.s32.totalorder %v547, 7
      %vm552 = vcmp.ne.s32.totalorder %v548, 7
      %vm553 = vcmp.ne.s32.totalorder %v549, 7
      %vm554 = vcmp.ne.s32.totalorder %v546, 0
      %vm555 = vcmp.ne.s32.totalorder %v547, 0
      %vm556 = vcmp.ne.s32.totalorder %v548, 0
      %vm557 = vcmp.ne.s32.totalorder %v549, 0
      %v558 = vld [vmem:[%s3] sm:$0x1]
      %v559 = vld [vmem:[%s4] sm:$0x1]
      %v560 = vld [vmem:[%s436] sm:$0xf]
      %v561 = vld [vmem:[%s436 + $0x4] sm:$0xf]
      %v562 = vld [vmem:[%s436 + $0x8] sm:$0xf]
      %v563 = vld [vmem:[%s436 + $0xc] sm:$0xf]
      %v564 = vld [vmem:[%s436 + $0x10] sm:$0xf]
      %v565 = vld [vmem:[%s436 + $0x14] sm:$0xf]
      %v566 = vld [vmem:[%s436 + $0x18] sm:$0xf]
      %v567 = vld [vmem:[%s436 + $0x1c] sm:$0xf]
      %v568 = vunpack.c.l.bf16 %v560
      %v569 = vunpack.c.l.bf16 %v561
      %v570 = vunpack.c.l.bf16 %v562
      %v571 = vunpack.c.l.bf16 %v563
      %v572 = vunpack.c.l.bf16 %v564
      %v573 = vunpack.c.l.bf16 %v565
      %v574 = vunpack.c.l.bf16 %v566
      %v575 = vunpack.c.l.bf16 %v567
      %v577 = vlaneseq
      %v578 = vshrl.u32 %v577, 7
      %v579 = vsub.s32 0, %v578
      %v580 = vrot.slane %v558, %v579
      %v582 = vmul.f32 %v568, %v580
      %v583 = vmul.f32 %v569, %v580
      %v584 = vmul.f32 %v570, %v580
      %v585 = vmul.f32 %v571, %v580
      %v586 = vmul.f32 %v572, %v580
      %v587 = vmul.f32 %v573, %v580
      %v588 = vmul.f32 %v574, %v580
      %v589 = vmul.f32 %v575, %v580
      %v591 = vlaneseq
      %v592 = vshrl.u32 %v591, 7
      %v593 = vsub.s32 0, %v592
      %v594 = vrot.slane %v559, %v593
      %v596 = vadd.f32 %v582, %v594
      %v597 = vadd.f32 %v583, %v594
      %v598 = vadd.f32 %v584, %v594
      %v599 = vadd.f32 %v585, %v594
      %v600 = vadd.f32 %v586, %v594
      %v601 = vadd.f32 %v587, %v594
      %v602 = vadd.f32 %v588, %v594
      %v603 = vadd.f32 %v589, %v594
      %v604 = vmax.f32 %v596, 0.0
      %v605 = vmax.f32 %v597, 0.0
      %v606 = vmax.f32 %v598, 0.0
      %v607 = vmax.f32 %v599, 0.0
      %v608 = vmax.f32 %v600, 0.0
      %v609 = vmax.f32 %v601, 0.0
      %v610 = vmax.f32 %v602, 0.0
      %v611 = vmax.f32 %v603, 0.0
      %620 = vrot.lane.b32.xlu0 %v604, 64
      %v621 = vpop.permute.xlu0 %620
      %622 = vrot.lane.b32.xlu0 %v605, 64
      %v623 = vpop.permute.xlu0 %622
      %624 = vrot.lane.b32.xlu0 %v606, 64
      %v625 = vpop.permute.xlu0 %624
      %626 = vrot.lane.b32.xlu0 %v607, 64
      %v627 = vpop.permute.xlu0 %626
      %628 = vrot.lane.b32.xlu0 %v608, 64
      %v629 = vpop.permute.xlu0 %628
      %630 = vrot.lane.b32.xlu0 %v609, 64
      %v631 = vpop.permute.xlu0 %630
      %632 = vrot.lane.b32.xlu0 %v610, 64
      %v633 = vpop.permute.xlu0 %632
      %634 = vrot.lane.b32.xlu0 %v611, 64
      %v635 = vpop.permute.xlu0 %634
      %v644 = vmax.f32 %v604, %v621
      %v645 = vmax.f32 %v605, %v623
      %v646 = vmax.f32 %v606, %v625
      %v647 = vmax.f32 %v607, %v627
      %v648 = vmax.f32 %v608, %v629
      %v649 = vmax.f32 %v609, %v631
      %v650 = vmax.f32 %v610, %v633
      %v651 = vmax.f32 %v611, %v635
      %v652 = vmax.f32 %v644, %v645
      %v653 = vmax.f32 %v646, %v647
      %v654 = vmax.f32 %v648, %v649
      %v655 = vmax.f32 %v650, %v651
      %v656 = vpack.c.bf16 %v653, %v652
      %v657 = vpack.c.bf16 %v655, %v654
      %v658 = vld [vmem:[%s450] sm:$0xf]
      %v659 = vld [vmem:[%s450 + $0x4] sm:$0xf]
      %v660 = vunpack.c.l.bf16 %v658
      %v661 = vunpack.c.l.bf16 %v659
      %v662 = vmul.f32 %v660, %v580
      %v663 = vmul.f32 %v661, %v580
      %v664 = vadd.f32 %v662, %v594
      %v665 = vadd.f32 %v663, %v594
      %v666 = vmax.f32 %v664, 0.0
      %v667 = vmax.f32 %v665, 0.0
      %670 = vrot.lane.b32.xlu0 %v666, 64
      %v671 = vpop.permute.xlu0 %670
      %672 = vrot.lane.b32.xlu0 %v667, 64
      %v673 = vpop.permute.xlu0 %672
      %v676 = vmax.f32 %v666, %v671
      %v677 = vmax.f32 %v667, %v673
      %v678 = vmax.f32 %v676, %v677
      %v679 = vpack.c.bf16 %v678, %v678
      %v680 = vld [vmem:[%s468] sm:$0xf]
      %v681 = vld [vmem:[%s468 + $0x4] sm:$0xf]
      %v682 = vunpack.c.l.bf16 %v680
      %v683 = vunpack.c.l.bf16 %v681
      %v684 = vmul.f32 %v682, %v580
      %v685 = vmul.f32 %v683, %v580
      %v686 = vadd.f32 %v684, %v594
      %v687 = vadd.f32 %v685, %v594
      %v688 = vmax.f32 %v686, 0.0
      %v689 = vmax.f32 %v687, 0.0
      %692 = vrot.lane.b32.xlu0 %v688, 64
      %v693 = vpop.permute.xlu0 %692
      %694 = vrot.lane.b32.xlu0 %v689, 64
      %v695 = vpop.permute.xlu0 %694
      %v698 = vmax.f32 %v688, %v693
      %v699 = vmax.f32 %v689, %v695
      %v700 = vmax.f32 %v698, %v699
      %v701 = vpack.c.bf16 %v700, %v700
      %p702 = scmp.eq.s32.totalorder %s25, 0
      %s703 = scalar_select %p702, 1, 0
      %v704 = vstv %s703
      %vm705 = vcmp.eq.s32.totalorder %v704, 1
      %v706 = vsel %vm705, 0, %v679
      %p707 = scmp.eq.s32.totalorder %s25, 1
      %s708 = scalar_select %p707, 1, 0
      %v709 = vstv %s708
      %vm710 = vcmp.eq.s32.totalorder %v709, 1
      %v711 = vsel %vm710, 0, %v701
      %vm712 = vcmask 519168
      %713 = vst.msk [vmem:[#allocation2] sm:$0xf] %vm712, 0
      %v715 = vrot.slane %v706, 4
      %vm717 = vcmask 523268
      %718 = vst.msk [vmem:[#allocation2] sm:$0xf0] %vm717, %v715
      %vm719 = vcmask 523264
      %720 = vst.msk [vmem:[#allocation2 + $0x8] sm:$0xff] %vm719, %v656
      %721 = vst.msk [vmem:[#allocation2 + $0x10] sm:$0xff] %vm719, %v657
      %722 = vst.msk [vmem:[#allocation2 + $0x18] sm:$0xf] %vm712, %v711
      %723 = vst.msk [vmem:[#allocation2 + $0x18] sm:$0xf0] %vm717, 0
      %v724 = vld [vmem:[#allocation2] sm:$0xf8]
      %v725 = vld [vmem:[#allocation2 + $0x8] sm:$0xff]
      %v726 = vld [vmem:[#allocation2 + $0x10] sm:$0xf]
      %v727 = vsel %vm554, 1, 0
      %v728 = vsel %vm555, 1, 0
      %v729 = vsel %vm556, 1, 0
      %v730 = vsel %vm557, 1, 0
      %vm731 = vcmp.eq.s32.totalorder %v727, 1
      %vm732 = vcmp.eq.s32.totalorder %v728, 1
      %vm733 = vcmp.eq.s32.totalorder %v729, 1
      %vm734 = vcmp.eq.s32.totalorder %v730, 1
      %vm735 = vmpackc.low %vm731, %vm731
      %vm736 = vmpackc.low %vm732, %vm732
      %vm737 = vmpackc.low %vm733, %vm733
      %vm738 = vmpackc.low %vm734, %vm734
      %v739 = vsel %vm735, 65537, 0
      %v740 = vsel %vm736, 65537, 0
      %v741 = vsel %vm737, 65537, 0
      %v742 = vsel %vm738, 65537, 0
      %v743 = vunpack.c.l.b16 %v739
      %v744 = vunpack.c.l.b16 %v740
      %v745 = vunpack.c.l.b16 %v741
      %v746 = vunpack.c.l.b16 %v742
      %v747 = vpack.c.b16 %v744, %v743
      %v748 = vpack.c.b16 %v746, %v745
      %vm749 = vsmask.f32 3328
      %v751 = vshrl.u32 %v747, 16
      %v753 = vrot.slane %v751, 4
      %v754 = vshll.u32 %v747, 16
      %v756 = vrot.slane %v754, 5
      %v757 = vor.u32 %v753, %v756
      %v759 = vshrl.u32 %v748, 16
      %v761 = vrot.slane %v759, 4
      %v762 = vshll.u32 %v748, 16
      %v764 = vrot.slane %v762, 5
      %v765 = vor.u32 %v761, %v764
      %v766 = vsel %vm749, %v757, %v765
      %vm767 = vcmp.ne.s16.totalorder %v757, 0
      %vm768 = vcmp.ne.s16.totalorder %v766, 0
      %vm769 = vcmp.ne.s16.totalorder %v765, 0
      %v770 = vsel %vm767, %v724, 0
      %v771 = vsel %vm768, %v725, 0
      %v772 = vsel %vm769, %v726, 0
      %vm773 = vsmask.f32 4352
      %v775 = vshrl.u32 %v770, 16
      %v777 = vrot.slane %v775, 3
      %v778 = vshll.u32 %v770, 16
      %v780 = vrot.slane %v778, 4
      %v781 = vor.u32 %v777, %v780
      %v783 = vshrl.u32 %v771, 16
      %v785 = vrot.slane %v783, 3
      %v786 = vshll.u32 %v771, 16
      %v788 = vrot.slane %v786, 4
      %v789 = vor.u32 %v785, %v788
      %v790 = vsel %vm773, %v781, %v789
      %v792 = vshrl.u32 %v772, 16
      %v794 = vrot.slane %v792, 3
      %v795 = vshll.u32 %v772, 16
      %v797 = vrot.slane %v795, 4
      %v798 = vor.u32 %v794, %v797
      %v799 = vsel %vm773, %v789, %v798
      %802 = vst.msk [vmem:[#allocation3] sm:$0xff] %vm719, %v790
      %803 = vst.msk [vmem:[#allocation3 + $0x28] sm:$0xff] %vm719, %v799
      %v804 = vld [vmem:[#allocation2] sm:$0xf0]
      %v805 = vld [vmem:[#allocation2 + $0x8] sm:$0xff]
      %v806 = vld [vmem:[#allocation2 + $0x10] sm:$0xf]
      %vm810 = vcmask 1043456
      %v811 = vrot.slane %v804, 4
      %v812 = vrot.slane %v805, 4
      %v813 = vsel %vm810, %v811, %v812
      %v814 = vrot.slane %v806, 4
      %v815 = vsel %vm810, %v812, %v814
      %816 = vrot.lane.b32.xlu0 %v813, 64
      %v817 = vpop.permute.xlu0 %816
      %818 = vrot.lane.b32.xlu0 %v815, 64
      %v819 = vpop.permute.xlu0 %818
      %vm822 = vcmask 1048064
      %823 = vst.msk [vmem:[#allocation3] sm:$0xff] %vm822, %v817
      %824 = vst.msk [vmem:[#allocation3 + $0x28] sm:$0xff] %vm822, %v819
      %v825 = vld [vmem:[#allocation2] sm:$0xf0]
      %v826 = vld [vmem:[#allocation2 + $0x8] sm:$0xff]
      %v827 = vld [vmem:[#allocation2 + $0x10] sm:$0x1f]
      %v828 = vsel %vm550, 1, 0
      %v829 = vsel %vm551, 1, 0
      %v830 = vsel %vm552, 1, 0
      %v831 = vsel %vm553, 1, 0
      %vm832 = vcmp.eq.s32.totalorder %v828, 1
      %vm833 = vcmp.eq.s32.totalorder %v829, 1
      %vm834 = vcmp.eq.s32.totalorder %v830, 1
      %vm835 = vcmp.eq.s32.totalorder %v831, 1
      %vm836 = vmpackc.low %vm832, %vm832
      %vm837 = vmpackc.low %vm833, %vm833
      %vm838 = vmpackc.low %vm834, %vm834
      %vm839 = vmpackc.low %vm835, %vm835
      %v840 = vsel %vm836, 65537, 0
      %v841 = vsel %vm837, 65537, 0
      %v842 = vsel %vm838, 65537, 0
      %v843 = vsel %vm839, 65537, 0
      %v844 = vunpack.c.l.b16 %v840
      %v845 = vunpack.c.l.b16 %v841
      %v846 = vunpack.c.l.b16 %v842
      %v847 = vunpack.c.l.b16 %v843
      %v848 = vpack.c.b16 %v845, %v844
      %v849 = vpack.c.b16 %v847, %v846
      %v851 = vshrl.u32 %v848, 16
      %v853 = vrot.slane %v851, 3
      %v854 = vshll.u32 %v848, 16
      %v856 = vrot.slane %v854, 4
      %v857 = vor.u32 %v853, %v856
      %v859 = vshrl.u32 %v849, 16
      %v861 = vrot.slane %v859, 3
      %v862 = vshll.u32 %v849, 16
      %v864 = vrot.slane %v862, 4
      %v865 = vor.u32 %v861, %v864
      %v866 = vsel %vm773, %v857, %v865
      %vm867 = vcmp.ne.s16.totalorder %v857, 0
      %vm868 = vcmp.ne.s16.totalorder %v866, 0
      %vm869 = vcmp.ne.s16.totalorder %v865, 0
      %v870 = vsel %vm867, %v825, 0
      %v871 = vsel %vm868, %v826, 0
      %v872 = vsel %vm869, %v827, 0
      %v874 = vshrl.u32 %v870, 16
      %v876 = vrot.slane %v874, 4
      %v877 = vshll.u32 %v870, 16
      %v879 = vrot.slane %v877, 5
      %v880 = vor.u32 %v876, %v879
      %v882 = vshrl.u32 %v871, 16
      %v884 = vrot.slane %v882, 4
      %v885 = vshll.u32 %v871, 16
      %v887 = vrot.slane %v885, 5
      %v888 = vor.u32 %v884, %v887
      %v889 = vsel %vm749, %v880, %v888
      %v891 = vshrl.u32 %v872, 16
      %v893 = vrot.slane %v891, 4
      %v894 = vshll.u32 %v872, 16
      %v896 = vrot.slane %v894, 5
      %v897 = vor.u32 %v893, %v896
      %v898 = vsel %vm749, %v888, %v897
      %901 = vst.msk [vmem:[#allocation3 + $0x8] sm:$0xff] %vm719, %v889
      %902 = vst.msk [vmem:[#allocation3 + $0x30] sm:$0xff] %vm719, %v898
      %v903 = vld [vmem:[#allocation2] sm:$0x80]
      %v904 = vld [vmem:[#allocation2 + $0x8] sm:$0xff]
      %v905 = vld [vmem:[#allocation2 + $0x10] sm:$0xff]
      %vm906 = vsmask.f32 7424
      %v907 = vrot.slane %v754, 1
      %v908 = vor.u32 %v751, %v907
      %v909 = vrot.slane %v762, 1
      %v910 = vsel %vm906, %v908, %v909
      %v911 = vor.u32 %v759, %v909
      %vm912 = vcmp.ne.s16.totalorder %v907, 0
      %vm913 = vcmp.ne.s16.totalorder %v910, 0
      %vm914 = vcmp.ne.s16.totalorder %v911, 0
      %v915 = vsel %vm912, %v903, 0
      %v916 = vsel %vm913, %v904, 0
      %v917 = vsel %vm914, %v905, 0
      %vm918 = vsmask.f32 256
      %v920 = vshrl.u32 %v915, 16
      %v922 = vrot.slane %v920, 7
      %v924 = vshrl.u32 %v916, 16
      %v926 = vrot.slane %v924, 7
      %v927 = vshll.u32 %v916, 16
      %v929 = vor.u32 %v926, %v927
      %v930 = vsel %vm918, %v922, %v929
      %v932 = vshrl.u32 %v917, 16
      %v934 = vrot.slane %v932, 7
      %v935 = vshll.u32 %v917, 16
      %v937 = vor.u32 %v934, %v935
      %v938 = vsel %vm918, %v926, %v937
      %939 = vrot.lane.b32.xlu0 %v930, 64
      %v940 = vpop.permute.xlu0 %939
      %941 = vrot.lane.b32.xlu0 %v938, 64
      %v942 = vpop.permute.xlu0 %941
      %945 = vst.msk [vmem:[#allocation3 + $0x8] sm:$0xff] %vm822, %v940
      %946 = vst.msk [vmem:[#allocation3 + $0x30] sm:$0xff] %vm822, %v942
      %v947 = vld [vmem:[#allocation2 + $0x8] sm:$0xff]
      %v948 = vld [vmem:[#allocation2 + $0x10] sm:$0xff]
      %949 = vst.msk [vmem:[#allocation3 + $0x10] sm:$0xff] %vm719, %v947
      %950 = vst.msk [vmem:[#allocation3 + $0x38] sm:$0xff] %vm719, %v948
      %v951 = vld [vmem:[#allocation2 + $0x8] sm:$0xff]
      %v952 = vld [vmem:[#allocation2 + $0x10] sm:$0xff]
      %v953 = vld [vmem:[#allocation2 + $0x18] sm:$0x1]
      %v954 = vrot.slane %v851, 7
      %v955 = vor.u32 %v954, %v854
      %v956 = vrot.slane %v859, 7
      %v957 = vor.u32 %v956, %v862
      %v958 = vsel %vm918, %v954, %v957
      %vm959 = vcmp.ne.s16.totalorder %v955, 0
      %vm960 = vcmp.ne.s16.totalorder %v958, 0
      %vm961 = vcmp.ne.s16.totalorder %v956, 0
      %v962 = vsel %vm959, %v951, 0
      %v963 = vsel %vm960, %v952, 0
      %v964 = vsel %vm961, %v953, 0
      %v966 = vshrl.u32 %v962, 16
      %v968 = vshll.u32 %v962, 16
      %v970 = vrot.slane %v968, 1
      %v971 = vor.u32 %v966, %v970
      %v973 = vshll.u32 %v963, 16
      %v975 = vrot.slane %v973, 1
      %v976 = vsel %vm906, %v971, %v975
      %v977 = vshrl.u32 %v963, 16
      %v979 = vor.u32 %v977, %v975
      %v981 = vshll.u32 %v964, 16
      %v983 = vrot.slane %v981, 1
      %v984 = vsel %vm906, %v979, %v983
      %985 = vrot.lane.b32.xlu0 %v976, 64
      %v986 = vpop.permute.xlu0 %985
      %987 = vrot.lane.b32.xlu0 %v984, 64
      %v988 = vpop.permute.xlu0 %987
      %991 = vst.msk [vmem:[#allocation3 + $0x10] sm:$0xff] %vm822, %v986
      %992 = vst.msk [vmem:[#allocation3 + $0x38] sm:$0xff] %vm822, %v988
      %v993 = vld [vmem:[#allocation2 + $0x8] sm:$0xf8]
      %v994 = vld [vmem:[#allocation2 + $0x10] sm:$0xff]
      %v995 = vld [vmem:[#allocation2 + $0x18] sm:$0xf]
      %v996 = vsel %vm767, %v993, 0
      %v997 = vsel %vm768, %v994, 0
      %v998 = vsel %vm769, %v995, 0
      %v1000 = vshrl.u32 %v996, 16
      %v1002 = vrot.slane %v1000, 3
      %v1003 = vshll.u32 %v996, 16
      %v1005 = vrot.slane %v1003, 4
      %v1006 = vor.u32 %v1002, %v1005
      %v1008 = vshrl.u32 %v997, 16
      %v1010 = vrot.slane %v1008, 3
      %v1011 = vshll.u32 %v997, 16
      %v1013 = vrot.slane %v1011, 4
      %v1014 = vor.u32 %v1010, %v1013
      %v1015 = vsel %vm773, %v1006, %v1014
      %v1017 = vshrl.u32 %v998, 16
      %v1019 = vrot.slane %v1017, 3
      %v1020 = vshll.u32 %v998, 16
      %v1022 = vrot.slane %v1020, 4
      %v1023 = vor.u32 %v1019, %v1022
      %v1024 = vsel %vm773, %v1014, %v1023
      %1027 = vst.msk [vmem:[#allocation3 + $0x18] sm:$0xff] %vm719, %v1015
      %1028 = vst.msk [vmem:[#allocation3 + $0x40] sm:$0xff] %vm719, %v1024
      %v1029 = vld [vmem:[#allocation2 + $0x8] sm:$0xf0]
      %v1030 = vld [vmem:[#allocation2 + $0x10] sm:$0xff]
      %v1031 = vld [vmem:[#allocation2 + $0x18] sm:$0xf]
      %v1035 = vrot.slane %v1029, 4
      %v1036 = vrot.slane %v1030, 4
      %v1037 = vsel %vm810, %v1035, %v1036
      %v1038 = vrot.slane %v1031, 4
      %v1039 = vsel %vm810, %v1036, %v1038
      %1040 = vrot.lane.b32.xlu0 %v1037, 64
      %v1041 = vpop.permute.xlu0 %1040
      %1042 = vrot.lane.b32.xlu0 %v1039, 64
      %v1043 = vpop.permute.xlu0 %1042
      %1046 = vst.msk [vmem:[#allocation3 + $0x18] sm:$0xff] %vm822, %v1041
      %1047 = vst.msk [vmem:[#allocation3 + $0x40] sm:$0xff] %vm822, %v1043
      %v1048 = vld [vmem:[#allocation2 + $0x8] sm:$0xf0]
      %v1049 = vld [vmem:[#allocation2 + $0x10] sm:$0xff]
      %v1050 = vld [vmem:[#allocation2 + $0x18] sm:$0x1f]
      %v1051 = vsel %vm867, %v1048, 0
      %v1052 = vsel %vm868, %v1049, 0
      %v1053 = vsel %vm869, %v1050, 0
      %v1055 = vshrl.u32 %v1051, 16
      %v1057 = vrot.slane %v1055, 4
      %v1058 = vshll.u32 %v1051, 16
      %v1060 = vrot.slane %v1058, 5
      %v1061 = vor.u32 %v1057, %v1060
      %v1063 = vshrl.u32 %v1052, 16
      %v1065 = vrot.slane %v1063, 4
      %v1066 = vshll.u32 %v1052, 16
      %v1068 = vrot.slane %v1066, 5
      %v1069 = vor.u32 %v1065, %v1068
      %v1070 = vsel %vm749, %v1061, %v1069
      %v1072 = vshrl.u32 %v1053, 16
      %v1074 = vrot.slane %v1072, 4
      %v1075 = vshll.u32 %v1053, 16
      %v1077 = vrot.slane %v1075, 5
      %v1078 = vor.u32 %v1074, %v1077
      %v1079 = vsel %vm749, %v1069, %v1078
      %1082 = vst.msk [vmem:[#allocation3 + $0x20] sm:$0xff] %vm719, %v1070
      %1083 = vst.msk [vmem:[#allocation3 + $0x48] sm:$0xff] %vm719, %v1079
      %v1084 = vld [vmem:[#allocation3] sm:$0xff]
      %v1085 = vld [vmem:[#allocation3 + $0x8] sm:$0xff]
      %v1086 = vld [vmem:[#allocation3 + $0x10] sm:$0xff]
      %v1087 = vld [vmem:[#allocation3 + $0x18] sm:$0xff]
      %v1088 = vld [vmem:[#allocation3 + $0x20] sm:$0xff]
      %v1089 = vld [vmem:[#allocation3 + $0x28] sm:$0xff]
      %v1090 = vld [vmem:[#allocation3 + $0x30] sm:$0xff]
      %v1091 = vld [vmem:[#allocation3 + $0x38] sm:$0xff]
      %v1092 = vld [vmem:[#allocation3 + $0x40] sm:$0xff]
      %v1093 = vld [vmem:[#allocation3 + $0x48] sm:$0xff]
      %v1094 = vld [vmem:[%s5] sm:$0xf]
      %v1095 = vld [vmem:[%s5 + $0x4] sm:$0xf]
      %v1096 = vld [vmem:[%s5 + $0x8] sm:$0xf]
      %v1097 = vld [vmem:[%s5 + $0xc] sm:$0xf]
      %v1098 = vld [vmem:[%s5 + $0x10] sm:$0xf]
      %v1099 = vld [vmem:[%s5 + $0x14] sm:$0xf]
      %v1100 = vld [vmem:[%s5 + $0x18] sm:$0xf]
      %v1101 = vld [vmem:[%s5 + $0x1c] sm:$0xf]
      %v1102 = vld [vmem:[%s5 + $0x20] sm:$0xf]
      %v1103 = vld [vmem:[%s5 + $0x24] sm:$0xf]
      %v1104 = vld [vmem:[%s5 + $0x28] sm:$0xf]
      %v1105 = vld [vmem:[%s5 + $0x2c] sm:$0xf]
      %v1106 = vld [vmem:[%s5 + $0x30] sm:$0xf]
      %v1107 = vld [vmem:[%s5 + $0x34] sm:$0xf]
      %v1108 = vld [vmem:[%s5 + $0x38] sm:$0xf]
      %v1109 = vld [vmem:[%s5 + $0x3c] sm:$0xf]
      %v1110 = vld [vmem:[%s5 + $0x40] sm:$0xf]
      %v1111 = vld [vmem:[%s5 + $0x44] sm:$0xf]
      %v1112 = vld [vmem:[%s5 + $0x48] sm:$0xf]
      %v1113 = vld [vmem:[%s5 + $0x4c] sm:$0xf]
      %v1114 = vld [vmem:[%s5 + $0x50] sm:$0xf]
      %v1115 = vld [vmem:[%s5 + $0x54] sm:$0xf]
      %v1116 = vld [vmem:[%s5 + $0x58] sm:$0xf]
      %v1117 = vld [vmem:[%s5 + $0x5c] sm:$0xf]
      %v1118 = vld [vmem:[%s5 + $0x60] sm:$0xf]
      %v1119 = vld [vmem:[%s5 + $0x64] sm:$0xf]
      %v1120 = vld [vmem:[%s5 + $0x68] sm:$0xf]
      %v1121 = vld [vmem:[%s5 + $0x6c] sm:$0xf]
      %v1122 = vld [vmem:[%s5 + $0x70] sm:$0xf]
      %v1123 = vld [vmem:[%s5 + $0x74] sm:$0xf]
      %v1124 = vld [vmem:[%s5 + $0x78] sm:$0xf]
      %v1125 = vld [vmem:[%s5 + $0x7c] sm:$0xf]
      %v1126 = vld [vmem:[%s5 + $0x80] sm:$0xf]
      %v1127 = vld [vmem:[%s5 + $0x84] sm:$0xf]
      %v1128 = vld [vmem:[%s5 + $0x88] sm:$0xf]
      %v1129 = vld [vmem:[%s5 + $0x8c] sm:$0xf]
      %v1130 = vld [vmem:[%s5 + $0x90] sm:$0xf]
      %v1131 = vld [vmem:[%s5 + $0x94] sm:$0xf]
      %v1132 = vld [vmem:[%s5 + $0x98] sm:$0xf]
      %v1133 = vld [vmem:[%s5 + $0x9c] sm:$0xf]
      %v1134 = vld [vmem:[%s5 + $0xa0] sm:$0xf]
      %v1135 = vld [vmem:[%s5 + $0xa4] sm:$0xf]
      %v1136 = vld [vmem:[%s5 + $0xa8] sm:$0xf]
      %v1137 = vld [vmem:[%s5 + $0xac] sm:$0xf]
      %v1138 = vld [vmem:[%s5 + $0xb0] sm:$0xf]
      %v1139 = vld [vmem:[%s5 + $0xb4] sm:$0xf]
      %v1140 = vld [vmem:[%s5 + $0xb8] sm:$0xf]
      %v1141 = vld [vmem:[%s5 + $0xbc] sm:$0xf]
      %v1142 = vld [vmem:[%s5 + $0xc0] sm:$0xf]
      %v1143 = vld [vmem:[%s5 + $0xc4] sm:$0xf]
      %v1144 = vld [vmem:[%s5 + $0xc8] sm:$0xf]
      %v1145 = vld [vmem:[%s5 + $0xcc] sm:$0xf]
      %v1146 = vld [vmem:[%s5 + $0xd0] sm:$0xf]
      %v1147 = vld [vmem:[%s5 + $0xd4] sm:$0xf]
      %v1148 = vld [vmem:[%s5 + $0xd8] sm:$0xf]
      %v1149 = vld [vmem:[%s5 + $0xdc] sm:$0xf]
      %v1150 = vld [vmem:[%s5 + $0xe0] sm:$0xf]
      %v1151 = vld [vmem:[%s5 + $0xe4] sm:$0xf]
      %v1152 = vld [vmem:[%s5 + $0xe8] sm:$0xf]
      %v1153 = vld [vmem:[%s5 + $0xec] sm:$0xf]
      %v1154 = vld [vmem:[%s5 + $0xf0] sm:$0xf]
      %v1155 = vld [vmem:[%s5 + $0xf4] sm:$0xf]
      %v1156 = vld [vmem:[%s5 + $0xf8] sm:$0xf]
      %v1157 = vld [vmem:[%s5 + $0xfc] sm:$0xf]
      %v1158 = vld [vmem:[%s5 + $0x100] sm:$0xf]
      %v1159 = vld [vmem:[%s5 + $0x104] sm:$0xf]
      %v1160 = vld [vmem:[%s5 + $0x108] sm:$0xf]
      %v1161 = vld [vmem:[%s5 + $0x10c] sm:$0xf]
      %v1162 = vld [vmem:[%s5 + $0x110] sm:$0xf]
      %v1163 = vld [vmem:[%s5 + $0x114] sm:$0xf]
      %v1164 = vld [vmem:[%s5 + $0x118] sm:$0xf]
      %v1165 = vld [vmem:[%s5 + $0x11c] sm:$0xf]
      %v1166 = vld [vmem:[%s6] sm:$0x1]
      %v1168 = vlaneseq
      %v1169 = vshrl.u32 %v1168, 7
      %v1170 = vsub.s32 0, %v1169
      %v1171 = vrot.slane %v1166, %v1170
      %v1245 = vunpack.c.l.b16 %v1094
      %v1246 = vunpack.c.l.b16 %v1095
      %v1247 = vunpack.c.l.b16 %v1096
      %v1248 = vunpack.c.l.b16 %v1097
      %v1249 = vunpack.c.l.b16 %v1098
      %v1250 = vunpack.c.l.b16 %v1099
      %v1251 = vunpack.c.l.b16 %v1100
      %v1252 = vunpack.c.l.b16 %v1101
      %v1253 = vunpack.c.l.b16 %v1102
      %v1254 = vunpack.c.l.b16 %v1103
      %v1255 = vunpack.c.l.b16 %v1104
      %v1256 = vunpack.c.l.b16 %v1105
      %v1257 = vunpack.c.l.b16 %v1106
      %v1258 = vunpack.c.l.b16 %v1107
      %v1259 = vunpack.c.l.b16 %v1108
      %v1260 = vunpack.c.l.b16 %v1109
      %v1261 = vunpack.c.l.b16 %v1110
      %v1262 = vunpack.c.l.b16 %v1111
      %v1263 = vunpack.c.l.b16 %v1112
      %v1264 = vunpack.c.l.b16 %v1113
      %v1265 = vunpack.c.l.b16 %v1114
      %v1266 = vunpack.c.l.b16 %v1115
      %v1267 = vunpack.c.l.b16 %v1116
      %v1268 = vunpack.c.l.b16 %v1117
      %v1269 = vunpack.c.l.b16 %v1118
      %v1270 = vunpack.c.l.b16 %v1119
      %v1271 = vunpack.c.l.b16 %v1120
      %v1272 = vunpack.c.l.b16 %v1121
      %v1273 = vunpack.c.l.b16 %v1122
      %v1274 = vunpack.c.l.b16 %v1123
      %v1275 = vunpack.c.l.b16 %v1124
      %v1276 = vunpack.c.l.b16 %v1125
      %v1277 = vunpack.c.l.b16 %v1126
      %v1278 = vunpack.c.l.b16 %v1127
      %v1279 = vunpack.c.l.b16 %v1128
      %v1280 = vunpack.c.l.b16 %v1129
      %v1281 = vunpack.c.l.b16 %v1130
      %v1282 = vunpack.c.l.b16 %v1131
      %v1283 = vunpack.c.l.b16 %v1132
      %v1284 = vunpack.c.l.b16 %v1133
      %v1285 = vunpack.c.l.b16 %v1134
      %v1286 = vunpack.c.l.b16 %v1135
      %v1287 = vunpack.c.l.b16 %v1136
      %v1288 = vunpack.c.l.b16 %v1137
      %v1289 = vunpack.c.l.b16 %v1138
      %v1290 = vunpack.c.l.b16 %v1139
      %v1291 = vunpack.c.l.b16 %v1140
      %v1292 = vunpack.c.l.b16 %v1141
      %v1293 = vunpack.c.l.b16 %v1142
      %v1294 = vunpack.c.l.b16 %v1143
      %v1295 = vunpack.c.l.b16 %v1144
      %v1296 = vunpack.c.l.b16 %v1145
      %v1297 = vunpack.c.l.b16 %v1146
      %v1298 = vunpack.c.l.b16 %v1147
      %v1299 = vunpack.c.l.b16 %v1148
      %v1300 = vunpack.c.l.b16 %v1149
      %v1301 = vunpack.c.l.b16 %v1150
      %v1302 = vunpack.c.l.b16 %v1151
      %v1303 = vunpack.c.l.b16 %v1152
      %v1304 = vunpack.c.l.b16 %v1153
      %v1305 = vunpack.c.l.b16 %v1154
      %v1306 = vunpack.c.l.b16 %v1155
      %v1307 = vunpack.c.l.b16 %v1156
      %v1308 = vunpack.c.l.b16 %v1157
      %v1309 = vunpack.c.l.b16 %v1158
      %v1310 = vunpack.c.l.b16 %v1159
      %v1311 = vunpack.c.l.b16 %v1160
      %v1312 = vunpack.c.l.b16 %v1161
      %v1313 = vunpack.c.l.b16 %v1162
      %v1314 = vunpack.c.l.b16 %v1163
      %v1315 = vunpack.c.l.b16 %v1164
      %v1316 = vunpack.c.l.b16 %v1165
      %v1317 = vpack.c.b16 %v1246, %v1245
      %v1318 = vpack.c.b16 %v1248, %v1247
      %v1319 = vpack.c.b16 %v1250, %v1249
      %v1320 = vpack.c.b16 %v1252, %v1251
      %v1321 = vpack.c.b16 %v1254, %v1253
      %v1322 = vpack.c.b16 %v1256, %v1255
      %v1323 = vpack.c.b16 %v1258, %v1257
      %v1324 = vpack.c.b16 %v1260, %v1259
      %v1325 = vpack.c.b16 %v1262, %v1261
      %v1326 = vpack.c.b16 %v1264, %v1263
      %v1327 = vpack.c.b16 %v1266, %v1265
      %v1328 = vpack.c.b16 %v1268, %v1267
      %v1329 = vpack.c.b16 %v1270, %v1269
      %v1330 = vpack.c.b16 %v1272, %v1271
      %v1331 = vpack.c.b16 %v1274, %v1273
      %v1332 = vpack.c.b16 %v1276, %v1275
      %v1333 = vpack.c.b16 %v1278, %v1277
      %v1334 = vpack.c.b16 %v1280, %v1279
      %v1335 = vpack.c.b16 %v1282, %v1281
      %v1336 = vpack.c.b16 %v1284, %v1283
      %v1337 = vpack.c.b16 %v1286, %v1285
      %v1338 = vpack.c.b16 %v1288, %v1287
      %v1339 = vpack.c.b16 %v1290, %v1289
      %v1340 = vpack.c.b16 %v1292, %v1291
      %v1341 = vpack.c.b16 %v1294, %v1293
      %v1342 = vpack.c.b16 %v1296, %v1295
      %v1343 = vpack.c.b16 %v1298, %v1297
      %v1344 = vpack.c.b16 %v1300, %v1299
      %v1345 = vpack.c.b16 %v1302, %v1301
      %v1346 = vpack.c.b16 %v1304, %v1303
      %v1347 = vpack.c.b16 %v1306, %v1305
      %v1348 = vpack.c.b16 %v1308, %v1307
      %v1349 = vpack.c.b16 %v1310, %v1309
      %v1350 = vpack.c.b16 %v1312, %v1311
      %v1351 = vpack.c.b16 %v1314, %v1313
      %v1352 = vpack.c.b16 %v1316, %v1315
      %v1390 = vsel %vm719, %v1088, 0
      %v1393 = vsel %vm719, %v1093, 0
      %1395 = vmatprep.subr.bf16.mxu0 0
      %1396 = vmatpush1.bf16.msra.mxu0 %v1317
      %1397 = vmatprep.subr.bf16.mxu0 0
      %1398 = vmatpush1.bf16.msra.mxu0 %v1318
      %1399 = vmatprep.subr.bf16.mxu0 0
      %1400 = vmatpush1.bf16.msra.mxu0 %v1319
      %1401 = vmatprep.subr.bf16.mxu0 0
      %1402 = vmatpush1.bf16.msra.mxu0 %v1320
      %1403 = vmatprep.subr.bf16.mxu0 0
      %1404 = vmatpush1.bf16.msra.mxu0 %v1321
      %1405 = vmatprep.subr.bf16.mxu0 0
      %1406 = vmatpush1.bf16.msra.mxu0 %v1322
      %1407 = vmatprep.subr.bf16.mxu0 0
      %1408 = vmatpush1.bf16.msra.mxu0 %v1323
      %1409 = vmatprep.subr.bf16.mxu0 0
      %1410 = vmatpush1.bf16.msra.mxu0 %v1324
      %1411 = vmatprep.subr.bf16.mxu0 0
      %1412 = vmatpush1.bf16.msra.mxu0 %v1325
      %1413 = vmatprep.subr.bf16.mxu0 0
      %1414 = vmatpush1.bf16.msra.mxu0 %v1326
      %1415 = vmatprep.subr.bf16.mxu0 0
      %1416 = vmatpush1.bf16.msra.mxu0 %v1327
      %1417 = vmatprep.subr.bf16.mxu0 0
      %1418 = vmatpush1.bf16.msra.mxu0 %v1328
      %1419 = vmatprep.subr.bf16.mxu0 0
      %1420 = vmatpush1.bf16.msra.mxu0 %v1329
      %1421 = vmatprep.subr.bf16.mxu0 0
      %1422 = vmatpush1.bf16.msra.mxu0 %v1330
      %1423 = vmatprep.subr.bf16.mxu0 0
      %1424 = vmatpush1.bf16.msra.mxu0 %v1331
      %1425 = vmatprep.subr.bf16.mxu0 0
      %1426 = vmatpush1.bf16.msra.mxu0 %v1332
      %1427 = vmatprep.mubr.bf16.mxu0 %v1085
      %1428 = vmatmul.mubr.bf16.gmra.mrb[0].mxu0 %v1084
      %v1429 = vpop.f32.mrb[0].mxu0
      %v1430 = vadd.f32 %v1171, %v1429
      %v1431 = vpop.f32.mrb[0].mxu0
      %v1432 = vpop.f32.mrb[0].mxu0
      %v1433 = vadd.f32 %v1171, %v1432
      %v1434 = vpop.f32.mrb[0].mxu0
      %1435 = vmatprep.mubr.bf16.mxu0 %v1090
      %1436 = vmatmul.mubr.bf16.gmra.mrb[0].mxu0 %v1089
      %v1437 = vpop.f32.mrb[0].mxu0
      %v1438 = vadd.f32 %v1171, %v1437
      %v1439 = vpop.f32.mrb[0].mxu0
      %v1440 = vpop.f32.mrb[0].mxu0
      %v1441 = vadd.f32 %v1171, %v1440
      %v1442 = vpop.f32.mrb[0].mxu0
      %1443 = vdwg.mxu0
      %1444 = vmatprep.subr.bf16.mxu0 0
      %1445 = vmatpush1.bf16.msra.mxu0 %v1333
      %1446 = vmatprep.subr.bf16.mxu0 0
      %1447 = vmatpush1.bf16.msra.mxu0 %v1334
      %1448 = vmatprep.subr.bf16.mxu0 0
      %1449 = vmatpush1.bf16.msra.mxu0 %v1335
      %1450 = vmatprep.subr.bf16.mxu0 0
      %1451 = vmatpush1.bf16.msra.mxu0 %v1336
      %1452 = vmatprep.subr.bf16.mxu0 0
      %1453 = vmatpush1.bf16.msra.mxu0 %v1337
      %1454 = vmatprep.subr.bf16.mxu0 0
      %1455 = vmatpush1.bf16.msra.mxu0 %v1338
      %1456 = vmatprep.subr.bf16.mxu0 0
      %1457 = vmatpush1.bf16.msra.mxu0 %v1339
      %1458 = vmatprep.subr.bf16.mxu0 0
      %1459 = vmatpush1.bf16.msra.mxu0 %v1340
      %1460 = vmatprep.subr.bf16.mxu0 0
      %1461 = vmatpush1.bf16.msra.mxu0 %v1341
      %1462 = vmatprep.subr.bf16.mxu0 0
      %1463 = vmatpush1.bf16.msra.mxu0 %v1342
      %1464 = vmatprep.subr.bf16.mxu0 0
      %1465 = vmatpush1.bf16.msra.mxu0 %v1343
      %1466 = vmatprep.subr.bf16.mxu0 0
      %1467 = vmatpush1.bf16.msra.mxu0 %v1344
      %1468 = vmatprep.subr.bf16.mxu0 0
      %1469 = vmatpush1.bf16.msra.mxu0 %v1345
      %1470 = vmatprep.subr.bf16.mxu0 0
      %1471 = vmatpush1.bf16.msra.mxu0 %v1346
      %1472 = vmatprep.subr.bf16.mxu0 0
      %1473 = vmatpush1.bf16.msra.mxu0 %v1347
      %1474 = vmatprep.subr.bf16.mxu0 0
      %1475 = vmatpush1.bf16.msra.mxu0 %v1348
      %1476 = vmatprep.mubr.bf16.mxu0 %v1087
      %1477 = vmatmul.mubr.bf16.gmra.mrb[0].mxu0 %v1086
      %v1478 = vpop.f32.mrb[0].mxu0
      %v1479 = vadd.f32 %v1430, %v1478
      %v1480 = vpop.f32.mrb[0].mxu0
      %v1481 = vpop.f32.mrb[0].mxu0
      %v1482 = vadd.f32 %v1433, %v1481
      %v1483 = vpop.f32.mrb[0].mxu0
      %1484 = vmatprep.mubr.bf16.mxu0 %v1092
      %1485 = vmatmul.mubr.bf16.gmra.mrb[0].mxu0 %v1091
      %v1486 = vpop.f32.mrb[0].mxu0
      %v1487 = vadd.f32 %v1438, %v1486
      %v1488 = vpop.f32.mrb[0].mxu0
      %v1489 = vpop.f32.mrb[0].mxu0
      %v1490 = vadd.f32 %v1441, %v1489
      %v1491 = vpop.f32.mrb[0].mxu0
      %1492 = vdwg.mxu0
      %1493 = vmatprep.subr.bf16.mxu0 0
      %1494 = vmatpush1.bf16.msra.mxu0 %v1349
      %1495 = vmatprep.subr.bf16.mxu0 0
      %1496 = vmatpush1.bf16.msra.mxu0 %v1350
      %1497 = vmatprep.subr.bf16.mxu0 0
      %1498 = vmatpush1.bf16.msra.mxu0 %v1351
      %1499 = vmatprep.subr.bf16.mxu0 0
      %1500 = vmatpush1.bf16.msra.mxu0 %v1352
      %1501 = vmatprep.subr.bf16.mxu0 0
      %1502 = vmatpush1.bf16.msra.mxu0 0
      %1503 = vmatprep.subr.bf16.mxu0 0
      %1504 = vmatpush1.bf16.msra.mxu0 0
      %1505 = vmatprep.subr.bf16.mxu0 0
      %1506 = vmatpush1.bf16.msra.mxu0 0
      %1507 = vmatprep.subr.bf16.mxu0 0
      %1508 = vmatpush1.bf16.msra.mxu0 0
      %1509 = vmatprep.subr.bf16.mxu0 0
      %1510 = vmatpush1.bf16.msra.mxu0 0
      %1511 = vmatprep.subr.bf16.mxu0 0
      %1512 = vmatpush1.bf16.msra.mxu0 0
      %1513 = vmatprep.subr.bf16.mxu0 0
      %1514 = vmatpush1.bf16.msra.mxu0 0
      %1515 = vmatprep.subr.bf16.mxu0 0
      %1516 = vmatpush1.bf16.msra.mxu0 0
      %1517 = vmatprep.subr.bf16.mxu0 0
      %1518 = vmatpush1.bf16.msra.mxu0 0
      %1519 = vmatprep.subr.bf16.mxu0 0
      %1520 = vmatpush1.bf16.msra.mxu0 0
      %1521 = vmatprep.subr.bf16.mxu0 0
      %1522 = vmatpush1.bf16.msra.mxu0 0
      %1523 = vmatprep.subr.bf16.mxu0 0
      %1524 = vmatpush1.bf16.msra.mxu0 0
      %1525 = vmatprep.mubr.bf16.mxu0 0
      %1526 = vmatmul.mubr.bf16.gmra.mrb[0].mxu0 %v1390
      %v1527 = vpop.f32.mrb[0].mxu0
      %v1528 = vadd.f32 %v1479, %v1527
      %v1529 = vpop.f32.mrb[0].mxu0
      %v1530 = vpop.f32.mrb[0].mxu0
      %v1531 = vadd.f32 %v1482, %v1530
      %v1532 = vpop.f32.mrb[0].mxu0
      %1533 = vmatprep.mubr.bf16.mxu0 0
      %1534 = vmatmul.mubr.bf16.gmra.mrb[0].mxu0 %v1393
      %v1535 = vpop.f32.mrb[0].mxu0
      %v1536 = vadd.f32 %v1487, %v1535
      %v1537 = vpop.f32.mrb[0].mxu0
      %v1538 = vpop.f32.mrb[0].mxu0
      %v1539 = vadd.f32 %v1490, %v1538
      %v1540 = vpop.f32.mrb[0].mxu0
      %1541 = vdwg.mxu0
      %v1542 = vpack.c.bf16 %v1528, %v1528
      %v1543 = vpack.c.bf16 %v1531, %v1531
      %v1544 = vpack.c.bf16 %v1536, %v1536
      %v1545 = vpack.c.bf16 %v1539, %v1539
      %1546 = vst [vmem:[%s482] sm:$0xf] %v1542
      %1547 = vst [vmem:[%s482 + $0x4] sm:$0xf] %v1543
      %1548 = vst [vmem:[%s482 + $0x8] sm:$0xf] %v1544
      %1549 = vst [vmem:[%s482 + $0xc] sm:$0xf] %v1545
      %v1550 = vadd.f32 %v1528, %v1531
      %v1551 = vadd.f32 %v1550, %v1536
      %v1552 = vadd.f32 %v1551, %v1539
      %v1553 = vrot.slane %v1552, 4
      %v1554 = vadd.f32 %v1552, %v1553
      %v1555 = vrot.slane %v1554, 2
      %v1556 = vadd.f32 %v1554, %v1555
      %v1557 = vrot.slane %v1556, 1
      %v1558 = vadd.f32 %v1556, %v1557
      %1559 = vst [vmem:[%s491] sm:$0x1] %v1558
      %v1560 = vmul.f32 %v1528, %v1528
      %v1561 = vmul.f32 %v1531, %v1531
      %v1562 = vmul.f32 %v1536, %v1536
      %v1563 = vmul.f32 %v1539, %v1539
      %v1564 = vadd.f32 %v1560, %v1561
      %v1565 = vadd.f32 %v1564, %v1562
      %v1566 = vadd.f32 %v1565, %v1563
      %v1567 = vrot.slane %v1566, 4
      %v1568 = vadd.f32 %v1566, %v1567
      %v1569 = vrot.slane %v1568, 2
      %v1570 = vadd.f32 %v1568, %v1569
      %v1571 = vrot.slane %v1570, 1
      %v1572 = vadd.f32 %v1570, %v1571
      %1573 = vst [vmem:[%s491 + $0x1] sm:$0x1] %v1572
      %s1574 = smul.u32 %s24, 2
      %s1575 = sadd.s32 %s1574, %s25
      %s1576 = smul.u32 4, %s1575
      %p1577 = scmp.lt.s32.totalorder %s1576, 15
      %s1578 = scalar_select %p1577, %s1576, 15
      %s1579 = smul.addr %s1578, 4
      %s1580 = scalar_lea.vmem %s7, %s1579
      %s1581 = smul.u32 %s24, 2
      %s1582 = sadd.s32 %s1581, %s25
      %p1583 = scmp.lt.s32.totalorder %s1582, 3
      %s1584 = scalar_select %p1583, %s1582, 3
      %s1585 = smul.addr %s1584, 2
      %s1586 = scalar_lea.vmem %s8, %s1585
      // Predicated region
      $region49: #{shallow_unet_forward.6} parent=47 // pred_check
        %p1587 = pneg %p244
      $region50: #{shallow_unet_forward.6} parent=47 // pred_check_branch
        %1589 = sbr.rel (%p1587) target = $region52
      $region51: #{shallow_unet_forward.6} parent=47 // pred_region
        %s1590 = smul.u32 %s24, 2
        %s1591 = sadd.s32 %s1590, %s25
        %s1592 = smul.u32 4, %s1591
      $region52: #{shallow_unet_forward.6} parent=47 // pred_fallthru
        _
      // Predicated region
      $region53: #{shallow_unet_forward.6} parent=47 // pred_check
        %p1593 = pneg %p274
      $region54: #{shallow_unet_forward.6} parent=47 // pred_check_branch
        %1595 = sbr.rel (%p1593) target = $region56
      $region55: #{shallow_unet_forward.6} parent=47 // pred_region
        %s1596 = smul.u32 %s24, 2
        %s1597 = sadd.s32 %s1596, %s25
      $region56: #{shallow_unet_forward.6} parent=47 // pred_fallthru
        _
    $region48: #{shallow_unet_forward.6} parent=5 // pred_fallthru
      _
    %p1598 = scmp.le.s32.totalorder 2, %s15
    // Predicated region
    $region57: #{shallow_unet_forward.6} parent=5 // pred_check
      %p1599 = pneg %p1598
    $region58: #{shallow_unet_forward.6} parent=5 // pred_check_branch
      %1601 = sbr.rel (%p1599) target = $region60
    $region59: #{shallow_unet_forward.6} parent=5 // pred_region
      %s1602 = ssub.s32 %s15, 2
      // Predicated region
      $region61: #{shallow_unet_forward.6} parent=59 // pred_check
        %p1603 = pneg %p250
      $region62: #{shallow_unet_forward.6} parent=59 // pred_check_branch
        %1605 = sbr.rel (%p1603) target = $region64
      $region63: #{shallow_unet_forward.6} parent=59 // pred_region
        %s1606 = smul.u32 %s26, 2
        %s1607 = sadd.s32 %s1606, %s27
        %s1608 = smul.u32 4, %s1607
        %p1609 = scmp.lt.s32.totalorder %s1608, 15
        %s1610 = scalar_select %p1609, %s1608, 15
        %s1611 = smul.addr %s1610, 4
        %s1612 = scalar_lea.vmem %s7, %s1611
      $region64: #{shallow_unet_forward.6} parent=59 // pred_fallthru
        _
      // Predicated region
      $region65: #{shallow_unet_forward.6} parent=59 // pred_check
        %p1613 = pneg %p280
      $region66: #{shallow_unet_forward.6} parent=59 // pred_check_branch
        %1615 = sbr.rel (%p1613) target = $region68
      $region67: #{shallow_unet_forward.6} parent=59 // pred_region
        %s1616 = smul.u32 %s26, 2
        %s1617 = sadd.s32 %s1616, %s27
        %p1618 = scmp.lt.s32.totalorder %s1617, 3
        %s1619 = scalar_select %p1618, %s1617, 3
        %s1620 = smul.addr %s1619, 2
        %s1621 = scalar_lea.vmem %s8, %s1620
      $region68: #{shallow_unet_forward.6} parent=59 // pred_fallthru
        _
    $region60: #{shallow_unet_forward.6} parent=5 // pred_fallthru
      _
  $region6: #{shallow_unet_forward.6} parent=0 // loop_footer
    %s19 = sadd.s32 1, %s15
  $region7: #{shallow_unet_forward.6} parent=0 // loop_footer_branch
    %14 = sbr.rel target = $region3
  $region8: #{shallow_unet_forward.6} parent=0 // loop_exit
    _

// kernel: shallow_unet_forward.5
$region0: #{shallow_unet_forward.5}
  #allocation0 [shape = 'u32[]', space=smem, size = 0x4, offset = 0x4, fixed_abs, tag = 'smem constant byte address 0x4 - core index']
  #allocation1 [shape = 'u32[144,128]{1,0:T(1,128)}', space=vmem, size = 0x12000, scoped, tag = 'internal scratch']
  #allocation2 [shape = 'bf16[176,3]{1,0:T(16,128)(2,1)}', space=vmem, size = 0xb000, scoped, tag = 'scratch operand']
  #allocation3 [shape = 'bf16[128,32]{1,0:T(16,128)(2,1)}', space=vmem, size = 0x8000, scoped, tag = 'scratch operand']
  %s0 = inlined_call_operand.vmem [shape: bf16[32,16,3], index: 0, kind: input, shape index: {}, may-alias: {0,1,2}]
  %s1 = inlined_call_operand.vmem [shape: bf16[32,16,3], index: 1, kind: input, shape index: {}, may-alias: {0,1,2}]
  %s2 = inlined_call_operand.vmem [shape: bf16[32,16,3], index: 2, kind: input, shape index: {}, may-alias: {0,1,2}]
  %s3 = inlined_call_operand.vmem [shape: bf16[32,64], index: 3, kind: input, shape index: {}]
  %s4 = inlined_call_operand.vmem [shape: f32[1,64], index: 4, kind: input, shape index: {}]
  %s5 = inlined_call_operand.vmem [shape: bf16[32,16,64], index: 5, kind: output, shape index: {0}]
  %s6 = inlined_call_operand.vmem [shape: f32[4,2,64], index: 6, kind: output, shape index: {1}]
  %7 = xla_tuple %s5, %s6
  %s8 = sld [smem:[#allocation0]]
  $region61: #{shallow_unet_forward.5} parent=0
    _
  %s10 = ssub.s32 1, %s8
  %s11 = scalar_select 0, %s10, %s8
  loop: start=0, step=1, limit=6
  $region2: #{shallow_unet_forward.5} parent=0 // loop_pre_header
    _
  $region3: #{shallow_unet_forward.5} parent=0 // loop_header
    %s13 = sphi 0, %s17
    %p14 = scmp.ge.s32.totalorder %s13, 6
    %s20 = sphi 0, %s32
    %s21 = sphi 0, %s28
    %s22 = sphi 0, %s20
    %s23 = sphi 0, %s21
    %s24 = sphi 0, %s22
    %s25 = sphi 0, %s23
    %s39 = sphi 0, %s41
    %s42 = sphi 0, %s39
    %s43 = sphi 0, %s42
    %s59 = sphi 0, %s43
    %s77 = sphi 0, %s79
    %s80 = sphi 0, %s77
    %s81 = sphi 0, %s80
    %s97 = sphi 0, %s81
    %s115 = sphi 0, %s117
    %s118 = sphi 0, %s115
    %s119 = sphi 0, %s118
    %s135 = sphi 0, %s119
    %s139 = sphi 0, %s139
    %s141 = sphi 0, %s139
    %s142 = sphi 0, %s141
    %s156 = sphi 0, %s142
    %s160 = sphi 0, %s160
    %s162 = sphi 0, %s160
    %s163 = sphi 0, %s162
    %s177 = sphi 0, %s163
    %s187 = sphi 0, %s189
    %s190 = sphi 0, %s187
    %s191 = sphi 0, %s190
    %s207 = sphi 0, %s191
    %s217 = sphi 0, %s219
    %s220 = sphi 0, %s217
    %s221 = sphi 0, %s220
    %s237 = sphi 0, %s221
  $region4: #{shallow_unet_forward.5} parent=0 // loop_header_branch
    %16 = sbr.rel (%p14) target = $region8
  $region5: #{shallow_unet_forward.5} parent=0 // loop_body
    %s18 = ssub.s32 %s13, 1
    %s19 = ssub.s32 %s13, 2
    %s26 = sadd.s32 1, %s21
    %p27 = scmp.ge.s32.totalorder %s26, 2
    %s28 = scalar_select %p27, 0, %s26
    %s29 = sadd.s32 1, %s20
    %s30 = scalar_select %p27, %s29, %s20
    %p31 = scmp.ge.s32.totalorder %s30, 2
    %s32 = scalar_select %p31, 0, %s30
    %s33 = smul.u32 %s20, 2
    %s34 = sadd.s32 %s33, %s21
    %s35 = smul.u32 %s32, 2
    %s36 = sadd.s32 %s35, %s28
    %s37 = ssub.s32 %s34, %s36
    %p38 = scmp.eq.s32.totalorder %s37, 0
    %s40 = sadd.s32 %s39, 1
    %s41 = scalar_select %p38, %s39, %s40
    %p44 = pneg %p38
    %p45 = scmp.eq.s32.totalorder %s13, 3
    %p46 = por %p44, %p45
    %p47 = scmp.ne.s32.totalorder %s39, %s42
    %p48 = scmp.eq.s32.totalorder %s13, 0
    %p49 = por %p47, %p48
    %p50 = scmp.ne.s32.totalorder %s39, %s42
    %p51 = scmp.eq.s32.totalorder %s18, 3
    %p52 = por %p50, %p51
    %p53 = scmp.ne.s32.totalorder %s42, %s43
    %p54 = scmp.eq.s32.totalorder %s18, 0
    %p55 = por %p53, %p54
    %p56 = scmp.ne.s32.totalorder %s42, %s43
    %p57 = scmp.eq.s32.totalorder %s19, 3
    %p58 = por %p56, %p57
    %p60 = scmp.ne.s32.totalorder %s43, %s59
    %p61 = scmp.eq.s32.totalorder %s19, 0
    %p62 = por %p60, %p61
    %s63 = smul.u32 %s20, 16
    %s64 = smul.u32 %s21, 8
    %s65 = ssub.s32 %s64, 1
    %p66 = scmp.gt.s32.totalorder %s65, 0
    %s67 = scalar_select %p66, %s65, 0
    %s68 = sadd.s32 %s63, %s67
    %s69 = smul.u32 %s32, 16
    %s70 = smul.u32 %s28, 8
    %s71 = ssub.s32 %s70, 1
    %p72 = scmp.gt.s32.totalorder %s71, 0
    %s73 = scalar_select %p72, %s71, 0
    %s74 = sadd.s32 %s69, %s73
    %s75 = ssub.s32 %s68, %s74
    %p76 = scmp.eq.s32.totalorder %s75, 0
    %s78 = sadd.s32 %s77, 1
    %s79 = scalar_select %p76, %s77, %s78
    %p82 = pneg %p76
    %p83 = scmp.eq.s32.totalorder %s13, 3
    %p84 = por %p82, %p83
    %p85 = scmp.ne.s32.totalorder %s77, %s80
    %p86 = scmp.eq.s32.totalorder %s13, 0
    %p87 = por %p85, %p86
    %p88 = scmp.ne.s32.totalorder %s77, %s80
    %p89 = scmp.eq.s32.totalorder %s18, 3
    %p90 = por %p88, %p89
    %p91 = scmp.ne.s32.totalorder %s80, %s81
    %p92 = scmp.eq.s32.totalorder %s18, 0
    %p93 = por %p91, %p92
    %p94 = scmp.ne.s32.totalorder %s80, %s81
    %p95 = scmp.eq.s32.totalorder %s19, 3
    %p96 = por %p94, %p95
    %p98 = scmp.ne.s32.totalorder %s81, %s97
    %p99 = scmp.eq.s32.totalorder %s19, 0
    %p100 = por %p98, %p99
    %s101 = smul.u32 %s20, 16
    %s102 = sadd.s32 %s21, 1
    %s103 = smul.u32 %s102, 8
    %p104 = scmp.lt.s32.totalorder %s103, 15
    %s105 = scalar_select %p104, %s103, 15
    %s106 = sadd.s32 %s101, %s105
    %s107 = smul.u32 %s32, 16
    %s108 = sadd.s32 %s28, 1
    %s109 = smul.u32 %s108, 8
    %p110 = scmp.lt.s32.totalorder %s109, 15
    %s111 = scalar_select %p110, %s109, 15
    %s112 = sadd.s32 %s107, %s111
    %s113 = ssub.s32 %s106, %s112
    %p114 = scmp.eq.s32.totalorder %s113, 0
    %s116 = sadd.s32 %s115, 1
    %s117 = scalar_select %p114, %s115, %s116
    %p120 = pneg %p114
    %p121 = scmp.eq.s32.totalorder %s13, 3
    %p122 = por %p120, %p121
    %p123 = scmp.ne.s32.totalorder %s115, %s118
    %p124 = scmp.eq.s32.totalorder %s13, 0
    %p125 = por %p123, %p124
    %p126 = scmp.ne.s32.totalorder %s115, %s118
    %p127 = scmp.eq.s32.totalorder %s18, 3
    %p128 = por %p126, %p127
    %p129 = scmp.ne.s32.totalorder %s118, %s119
    %p130 = scmp.eq.s32.totalorder %s18, 0
    %p131 = por %p129, %p130
    %p132 = scmp.ne.s32.totalorder %s118, %s119
    %p133 = scmp.eq.s32.totalorder %s19, 3
    %p134 = por %p132, %p133
    %p136 = scmp.ne.s32.totalorder %s119, %s135
    %p137 = scmp.eq.s32.totalorder %s19, 0
    %p138 = por %p136, %p137
    %s140 = sadd.s32 %s139, 1
    %p143 = scmp.eq.s32.totalorder %s13, 3
    %p144 = scmp.ne.s32.totalorder %s139, %s141
    %p145 = scmp.eq.s32.totalorder %s13, 0
    %p146 = por %p144, %p145
    %p147 = scmp.ne.s32.totalorder %s139, %s141
    %p148 = scmp.eq.s32.totalorder %s18, 3
    %p149 = por %p147, %p148
    %p150 = scmp.ne.s32.totalorder %s141, %s142
    %p151 = scmp.eq.s32.totalorder %s18, 0
    %p152 = por %p150, %p151
    %p153 = scmp.ne.s32.totalorder %s141, %s142
    %p154 = scmp.eq.s32.totalorder %s19, 3
    %p155 = por %p153, %p154
    %p157 = scmp.ne.s32.totalorder %s142, %s156
    %p158 = scmp.eq.s32.totalorder %s19, 0
    %p159 = por %p157, %p158
    %s161 = sadd.s32 %s160, 1
    %p164 = scmp.eq.s32.totalorder %s13, 3
    %p165 = scmp.ne.s32.totalorder %s160, %s162
    %p166 = scmp.eq.s32.totalorder %s13, 0
    %p167 = por %p165, %p166
    %p168 = scmp.ne.s32.totalorder %s160, %s162
    %p169 = scmp.eq.s32.totalorder %s18, 3
    %p170 = por %p168, %p169
    %p171 = scmp.ne.s32.totalorder %s162, %s163
    %p172 = scmp.eq.s32.totalorder %s18, 0
    %p173 = por %p171, %p172
    %p174 = scmp.ne.s32.totalorder %s162, %s163
    %p175 = scmp.eq.s32.totalorder %s19, 3
    %p176 = por %p174, %p175
    %p178 = scmp.ne.s32.totalorder %s163, %s177
    %p179 = scmp.eq.s32.totalorder %s19, 0
    %p180 = por %p178, %p179
    %s181 = smul.u32 %s20, 2
    %s182 = sadd.s32 %s181, %s21
    %s183 = smul.u32 %s32, 2
    %s184 = sadd.s32 %s183, %s28
    %s185 = ssub.s32 %s182, %s184
    %p186 = scmp.eq.s32.totalorder %s185, 0
    %s188 = sadd.s32 %s187, 1
    %s189 = scalar_select %p186, %s187, %s188
    %p192 = pneg %p186
    %p193 = scmp.eq.s32.totalorder %s13, 3
    %p194 = por %p192, %p193
    %p195 = scmp.ne.s32.totalorder %s187, %s190
    %p196 = scmp.eq.s32.totalorder %s13, 0
    %p197 = por %p195, %p196
    %p198 = scmp.ne.s32.totalorder %s187, %s190
    %p199 = scmp.eq.s32.totalorder %s18, 3
    %p200 = por %p198, %p199
    %p201 = scmp.ne.s32.totalorder %s190, %s191
    %p202 = scmp.eq.s32.totalorder %s18, 0
    %p203 = por %p201, %p202
    %p204 = scmp.ne.s32.totalorder %s190, %s191
    %p205 = scmp.eq.s32.totalorder %s19, 3
    %p206 = por %p204, %p205
    %p208 = scmp.ne.s32.totalorder %s191, %s207
    %p209 = scmp.eq.s32.totalorder %s19, 0
    %p210 = por %p208, %p209
    %s211 = smul.u32 %s20, 2
    %s212 = sadd.s32 %s211, %s21
    %s213 = smul.u32 %s32, 2
    %s214 = sadd.s32 %s213, %s28
    %s215 = ssub.s32 %s212, %s214
    %p216 = scmp.eq.s32.totalorder %s215, 0
    %s218 = sadd.s32 %s217, 1
    %s219 = scalar_select %p216, %s217, %s218
    %p222 = pneg %p216
    %p223 = scmp.eq.s32.totalorder %s13, 3
    %p224 = por %p222, %p223
    %p225 = scmp.ne.s32.totalorder %s217, %s220
    %p226 = scmp.eq.s32.totalorder %s13, 0
    %p227 = por %p225, %p226
    %p228 = scmp.ne.s32.totalorder %s217, %s220
    %p229 = scmp.eq.s32.totalorder %s18, 3
    %p230 = por %p228, %p229
    %p231 = scmp.ne.s32.totalorder %s220, %s221
    %p232 = scmp.eq.s32.totalorder %s18, 0
    %p233 = por %p231, %p232
    %p234 = scmp.ne.s32.totalorder %s220, %s221
    %p235 = scmp.eq.s32.totalorder %s19, 3
    %p236 = por %p234, %p235
    %p238 = scmp.ne.s32.totalorder %s221, %s237
    %p239 = scmp.eq.s32.totalorder %s19, 0
    %p240 = por %p238, %p239
    %p241 = scmp.le.s32.totalorder 1, %s13
    %p242 = scmp.lt.s32.totalorder %s13, 5
    %p243 = pnand %p241, %p242
    %p244 = pneg %p243
    // Predicated region
    $region9: #{shallow_unet_forward.5} parent=5 // pred_check
      _
    $region10: #{shallow_unet_forward.5} parent=5 // pred_check_branch
      %246 = sbr.rel (%p243) target = $region12
    $region11: #{shallow_unet_forward.5} parent=5 // pred_region
      %s247 = ssub.s32 %s13, 1
      // Predicated region
      $region13: #{shallow_unet_forward.5} parent=11 // pred_check
        %p248 = pneg %p152
      $region14: #{shallow_unet_forward.5} parent=11 // pred_check_branch
        %250 = sbr.rel (%p248) target = $region16
      $region15: #{shallow_unet_forward.5} parent=11 // pred_region
        _
      $region16: #{shallow_unet_forward.5} parent=11 // pred_fallthru
        _
      // Predicated region
      $region17: #{shallow_unet_forward.5} parent=11 // pred_check
        %p251 = pneg %p173
      $region18: #{shallow_unet_forward.5} parent=11 // pred_check_branch
        %253 = sbr.rel (%p251) target = $region20
      $region19: #{shallow_unet_forward.5} parent=11 // pred_region
        _
      $region20: #{shallow_unet_forward.5} parent=11 // pred_fallthru
        _
    $region12: #{shallow_unet_forward.5} parent=5 // pred_fallthru
      _
    %p254 = scmp.lt.s32.totalorder %s13, 4
    // Predicated region
    $region21: #{shallow_unet_forward.5} parent=5 // pred_check
      %p255 = pneg %p254
    $region22: #{shallow_unet_forward.5} parent=5 // pred_check_branch
      %257 = sbr.rel (%p255) target = $region24
    $region23: #{shallow_unet_forward.5} parent=5 // pred_region
      // Predicated region
      $region25: #{shallow_unet_forward.5} parent=23 // pred_check
        %p258 = pneg %p49
      $region26: #{shallow_unet_forward.5} parent=23 // pred_check_branch
        %260 = sbr.rel (%p258) target = $region28
      $region27: #{shallow_unet_forward.5} parent=23 // pred_region
        %s261 = smul.u32 %s20, 2
        %s262 = sadd.s32 %s261, %s21
        %s263 = smul.u32 8, %s262
        %p264 = scmp.lt.s32.totalorder %s263, 31
        %s265 = scalar_select %p264, %s263, 31
        %s266 = smul.addr %s265, 2
        %s267 = smul.addr %s266, 4
        %s268 = scalar_lea.vmem %s0, %s267
        %s269 = smul.u32 %s20, 2
        %s270 = sadd.s32 %s269, %s21
        %s271 = smul.u32 8, %s270
      $region28: #{shallow_unet_forward.5} parent=23 // pred_fallthru
        _
      // Predicated region
      $region29: #{shallow_unet_forward.5} parent=23 // pred_check
        %p272 = pneg %p87
      $region30: #{shallow_unet_forward.5} parent=23 // pred_check_branch
        %274 = sbr.rel (%p272) target = $region32
      $region31: #{shallow_unet_forward.5} parent=23 // pred_region
        %s275 = smul.u32 %s20, 16
        %s276 = smul.u32 %s21, 8
        %s277 = ssub.s32 %s276, 1
        %p278 = scmp.gt.s32.totalorder %s277, 0
        %s279 = scalar_select %p278, %s277, 0
        %s280 = sadd.s32 %s275, %s279
        %p281 = scmp.lt.s32.totalorder %s280, 31
        %s282 = scalar_select %p281, %s280, 31
        %s283 = smul.addr %s282, 2
        %s284 = smul.addr %s283, 4
        %s285 = scalar_lea.vmem %s1, %s284
        %s286 = smul.u32 %s20, 16
        %s287 = smul.u32 %s21, 8
        %s288 = ssub.s32 %s287, 1
        %p289 = scmp.gt.s32.totalorder %s288, 0
        %s290 = scalar_select %p289, %s288, 0
        %s291 = sadd.s32 %s286, %s290
      $region32: #{shallow_unet_forward.5} parent=23 // pred_fallthru
        _
      // Predicated region
      $region33: #{shallow_unet_forward.5} parent=23 // pred_check
        %p292 = pneg %p125
      $region34: #{shallow_unet_forward.5} parent=23 // pred_check_branch
        %294 = sbr.rel (%p292) target = $region36
      $region35: #{shallow_unet_forward.5} parent=23 // pred_region
        %s295 = smul.u32 %s20, 16
        %s296 = sadd.s32 %s21, 1
        %s297 = smul.u32 %s296, 8
        %p298 = scmp.lt.s32.totalorder %s297, 15
        %s299 = scalar_select %p298, %s297, 15
        %s300 = sadd.s32 %s295, %s299
        %p301 = scmp.lt.s32.totalorder %s300, 31
        %s302 = scalar_select %p301, %s300, 31
        %s303 = smul.addr %s302, 2
        %s304 = smul.addr %s303, 4
        %s305 = scalar_lea.vmem %s2, %s304
        %s306 = smul.u32 %s20, 16
        %s307 = sadd.s32 %s21, 1
        %s308 = smul.u32 %s307, 8
        %p309 = scmp.lt.s32.totalorder %s308, 15
        %s310 = scalar_select %p309, %s308, 15
        %s311 = sadd.s32 %s306, %s310
      $region36: #{shallow_unet_forward.5} parent=23 // pred_fallthru
        _
    $region24: #{shallow_unet_forward.5} parent=5 // pred_fallthru
      _
    %p312 = scmp.le.s32.totalorder 1, %s13
    %p313 = scmp.lt.s32.totalorder %s13, 5
    %p314 = pnand %p312, %p313
    %p315 = pneg %p314
    // Predicated region
    $region37: #{shallow_unet_forward.5} parent=5 // pred_check
      _
    $region38: #{shallow_unet_forward.5} parent=5 // pred_check_branch
      %317 = sbr.rel (%p314) target = $region40
    $region39: #{shallow_unet_forward.5} parent=5 // pred_region
      %s318 = ssub.s32 %s13, 1
      %s319 = smul.u32 %s22, 2
      %s320 = sadd.s32 %s319, %s23
      %s321 = smul.u32 8, %s320
      %p322 = scmp.lt.s32.totalorder %s321, 31
      %s323 = scalar_select %p322, %s321, 31
      %s324 = smul.addr %s323, 2
      %s325 = smul.addr %s324, 4
      %s326 = scalar_lea.vmem %s0, %s325
      %p327 = pneg %p55
      %p328 = pneg %p52
      %s329 = smul.u32 %s22, 16
      %s330 = smul.u32 %s23, 8
      %s331 = ssub.s32 %s330, 1
      %p332 = scmp.gt.s32.totalorder %s331, 0
      %s333 = scalar_select %p332, %s331, 0
      %s334 = sadd.s32 %s329, %s333
      %p335 = scmp.lt.s32.totalorder %s334, 31
      %s336 = scalar_select %p335, %s334, 31
      %s337 = smul.addr %s336, 2
      %s338 = smul.addr %s337, 4
      %s339 = scalar_lea.vmem %s1, %s338
      %p340 = pneg %p93
      %p341 = pneg %p90
      %s342 = smul.u32 %s22, 16
      %s343 = sadd.s32 %s23, 1
      %s344 = smul.u32 %s343, 8
      %p345 = scmp.lt.s32.totalorder %s344, 15
      %s346 = scalar_select %p345, %s344, 15
      %s347 = sadd.s32 %s342, %s346
      %p348 = scmp.lt.s32.totalorder %s347, 31
      %s349 = scalar_select %p348, %s347, 31
      %s350 = smul.addr %s349, 2
      %s351 = smul.addr %s350, 4
      %s352 = scalar_lea.vmem %s2, %s351
      %p353 = pneg %p131
      %p354 = pneg %p128
      %p355 = pneg %p152
      %p356 = pneg %p149
      %p357 = pneg %p173
      %p358 = pneg %p170
      %p359 = pneg %p203
      %p360 = pneg %p200
      %s361 = smul.u32 %s22, 2
      %s362 = sadd.s32 %s361, %s23
      %s363 = smul.u32 8, %s362
      %p364 = scmp.lt.s32.totalorder %s363, 31
      %s365 = scalar_select %p364, %s363, 31
      %s366 = smul.addr %s365, 2
      %s367 = smul.addr %s366, 4
      %s368 = scalar_lea.vmem %s5, %s367
      %p369 = pneg %p233
      %p370 = pneg %p230
      %s371 = smul.u32 %s22, 2
      %s372 = sadd.s32 %s371, %s23
      %p373 = scmp.lt.s32.totalorder %s372, 3
      %s374 = scalar_select %p373, %s372, 3
      %s375 = smul.addr %s374, 2
      %s376 = scalar_lea.vmem %s6, %s375
      %s377 = smul.u32 %s22, 2
      %s378 = sadd.s32 %s377, %s23
      %s379 = smul.u32 8, %s378
      %p380 = scmp.lt.s32.totalorder %s379, 31
      %s381 = scalar_select %p380, %s379, 31
      %s382 = smul.addr %s381, 2
      %s383 = smul.addr %s382, 4
      %s384 = scalar_lea.vmem %s0, %s383
      %s385 = smul.u32 %s22, 2
      %s386 = sadd.s32 %s385, %s23
      %s387 = smul.u32 8, %s386
      %s388 = smul.u32 %s22, 16
      %s389 = smul.u32 %s23, 8
      %s390 = ssub.s32 %s389, 1
      %p391 = scmp.gt.s32.totalorder %s390, 0
      %s392 = scalar_select %p391, %s390, 0
      %s393 = sadd.s32 %s388, %s392
      %p394 = scmp.lt.s32.totalorder %s393, 31
      %s395 = scalar_select %p394, %s393, 31
      %s396 = smul.addr %s395, 2
      %s397 = smul.addr %s396, 4
      %s398 = scalar_lea.vmem %s1, %s397
      %s399 = smul.u32 %s22, 16
      %s400 = smul.u32 %s23, 8
      %s401 = ssub.s32 %s400, 1
      %p402 = scmp.gt.s32.totalorder %s401, 0
      %s403 = scalar_select %p402, %s401, 0
      %s404 = sadd.s32 %s399, %s403
      %s405 = smul.u32 %s22, 16
      %s406 = sadd.s32 %s23, 1
      %s407 = smul.u32 %s406, 8
      %p408 = scmp.lt.s32.totalorder %s407, 15
      %s409 = scalar_select %p408, %s407, 15
      %s410 = sadd.s32 %s405, %s409
      %p411 = scmp.lt.s32.totalorder %s410, 31
      %s412 = scalar_select %p411, %s410, 31
      %s413 = smul.addr %s412, 2
      %s414 = smul.addr %s413, 4
      %s415 = scalar_lea.vmem %s2, %s414
      %s416 = smul.u32 %s22, 16
      %s417 = sadd.s32 %s23, 1
      %s418 = smul.u32 %s417, 8
      %p419 = scmp.lt.s32.totalorder %s418, 15
      %s420 = scalar_select %p419, %s418, 15
      %s421 = sadd.s32 %s416, %s420
      %s422 = smul.u32 %s22, 2
      %s423 = sadd.s32 %s422, %s23
      %s424 = smul.u32 8, %s423
      %p425 = scmp.lt.s32.totalorder %s424, 31
      %s426 = scalar_select %p425, %s424, 31
      %s427 = smul.addr %s426, 2
      %s428 = smul.addr %s427, 4
      %s429 = scalar_lea.vmem %s5, %s428
      %s430 = smul.u32 %s22, 2
      %s431 = sadd.s32 %s430, %s23
      %s432 = smul.u32 8, %s431
      %s433 = smul.u32 %s22, 2
      %s434 = sadd.s32 %s433, %s23
      %p435 = scmp.lt.s32.totalorder %s434, 3
      %s436 = scalar_select %p435, %s434, 3
      %s437 = smul.addr %s436, 2
      %s438 = scalar_lea.vmem %s6, %s437
      %s439 = smul.u32 %s22, 2
      %s440 = sadd.s32 %s439, %s23
      %v444 = vlaneseq
      %v445 = vshrl.u32 %v444, 7
      %v446 = vadd.s32 %v445, 8
      %v447 = vadd.s32 %v445, 16
      %v448 = vadd.s32 %v445, 24
      %v449 = vadd.s32 %v445, 32
      %v450 = vadd.s32 %v445, 40
      %v451 = vadd.s32 %v445, 48
      %v452 = vadd.s32 %v445, 56
      %v453 = vadd.s32 %v445, 64
      %v454 = vadd.s32 %v445, 72
      %v455 = vadd.s32 %v445, 80
      %v456 = vadd.s32 %v445, 88
      %v457 = vadd.s32 %v445, 96
      %v458 = vadd.s32 %v445, 104
      %v459 = vadd.s32 %v445, 112
      %v460 = vadd.s32 %v445, 120
      %vm461 = vcmp.lt.s32.totalorder %v445, 0
      %v462 = vsub.s32 0, %v445
      %v463 = vsel %vm461, %v462, %v445
      %v464 = vshrl.u32 %v463, 4
      %v465 = vand.u32 %v463, 15
      %v466 = vsub.s32 0, %v465
      %v467 = vsel %vm461, %v466, %v465
      %vm468 = vcmp.lt.s32.totalorder %v446, 0
      %v469 = vsub.s32 0, %v446
      %v470 = vsel %vm468, %v469, %v446
      %v471 = vshrl.u32 %v470, 4
      %v472 = vand.u32 %v470, 15
      %v473 = vsub.s32 0, %v472
      %v474 = vsel %vm468, %v473, %v472
      %vm475 = vcmp.lt.s32.totalorder %v447, 0
      %v476 = vsub.s32 0, %v447
      %v477 = vsel %vm475, %v476, %v447
      %v478 = vshrl.u32 %v477, 4
      %v479 = vand.u32 %v477, 15
      %v480 = vsub.s32 0, %v479
      %v481 = vsel %vm475, %v480, %v479
      %vm482 = vcmp.lt.s32.totalorder %v448, 0
      %v483 = vsub.s32 0, %v448
      %v484 = vsel %vm482, %v483, %v448
      %v485 = vshrl.u32 %v484, 4
      %v486 = vand.u32 %v484, 15
      %v487 = vsub.s32 0, %v486
      %v488 = vsel %vm482, %v487, %v486
      %vm489 = vcmp.lt.s32.totalorder %v449, 0
      %v490 = vsub.s32 0, %v449
      %v491 = vsel %vm489, %v490, %v449
      %v492 = vshrl.u32 %v491, 4
      %v493 = vand.u32 %v491, 15
      %v494 = vsub.s32 0, %v493
      %v495 = vsel %vm489, %v494, %v493
      %vm496 = vcmp.lt.s32.totalorder %v450, 0
      %v497 = vsub.s32 0, %v450
      %v498 = vsel %vm496, %v497, %v450
      %v499 = vshrl.u32 %v498, 4
      %v500 = vand.u32 %v498, 15
      %v501 = vsub.s32 0, %v500
      %v502 = vsel %vm496, %v501, %v500
      %vm503 = vcmp.lt.s32.totalorder %v451, 0
      %v504 = vsub.s32 0, %v451
      %v505 = vsel %vm503, %v504, %v451
      %v506 = vshrl.u32 %v505, 4
      %v507 = vand.u32 %v505, 15
      %v508 = vsub.s32 0, %v507
      %v509 = vsel %vm503, %v508, %v507
      %vm510 = vcmp.lt.s32.totalorder %v452, 0
      %v511 = vsub.s32 0, %v452
      %v512 = vsel %vm510, %v511, %v452
      %v513 = vshrl.u32 %v512, 4
      %v514 = vand.u32 %v512, 15
      %v515 = vsub.s32 0, %v514
      %v516 = vsel %vm510, %v515, %v514
      %vm517 = vcmp.lt.s32.totalorder %v453, 0
      %v518 = vsub.s32 0, %v453
      %v519 = vsel %vm517, %v518, %v453
      %v520 = vshrl.u32 %v519, 4
      %v521 = vand.u32 %v519, 15
      %v522 = vsub.s32 0, %v521
      %v523 = vsel %vm517, %v522, %v521
      %vm524 = vcmp.lt.s32.totalorder %v454, 0
      %v525 = vsub.s32 0, %v454
      %v526 = vsel %vm524, %v525, %v454
      %v527 = vshrl.u32 %v526, 4
      %v528 = vand.u32 %v526, 15
      %v529 = vsub.s32 0, %v528
      %v530 = vsel %vm524, %v529, %v528
      %vm531 = vcmp.lt.s32.totalorder %v455, 0
      %v532 = vsub.s32 0, %v455
      %v533 = vsel %vm531, %v532, %v455
      %v534 = vshrl.u32 %v533, 4
      %v535 = vand.u32 %v533, 15
      %v536 = vsub.s32 0, %v535
      %v537 = vsel %vm531, %v536, %v535
      %vm538 = vcmp.lt.s32.totalorder %v456, 0
      %v539 = vsub.s32 0, %v456
      %v540 = vsel %vm538, %v539, %v456
      %v541 = vshrl.u32 %v540, 4
      %v542 = vand.u32 %v540, 15
      %v543 = vsub.s32 0, %v542
      %v544 = vsel %vm538, %v543, %v542
      %vm545 = vcmp.lt.s32.totalorder %v457, 0
      %v546 = vsub.s32 0, %v457
      %v547 = vsel %vm545, %v546, %v457
      %v548 = vshrl.u32 %v547, 4
      %v549 = vand.u32 %v547, 15
      %v550 = vsub.s32 0, %v549
      %v551 = vsel %vm545, %v550, %v549
      %vm552 = vcmp.lt.s32.totalorder %v458, 0
      %v553 = vsub.s32 0, %v458
      %v554 = vsel %vm552, %v553, %v458
      %v555 = vshrl.u32 %v554, 4
      %v556 = vand.u32 %v554, 15
      %v557 = vsub.s32 0, %v556
      %v558 = vsel %vm552, %v557, %v556
      %vm559 = vcmp.lt.s32.totalorder %v459, 0
      %v560 = vsub.s32 0, %v459
      %v561 = vsel %vm559, %v560, %v459
      %v562 = vshrl.u32 %v561, 4
      %v563 = vand.u32 %v561, 15
      %v564 = vsub.s32 0, %v563
      %v565 = vsel %vm559, %v564, %v563
      %vm566 = vcmp.lt.s32.totalorder %v460, 0
      %v567 = vsub.s32 0, %v460
      %v568 = vsel %vm566, %v567, %v460
      %v569 = vshrl.u32 %v568, 4
      %v570 = vand.u32 %v568, 15
      %v571 = vsub.s32 0, %v570
      %v572 = vsel %vm566, %v571, %v570
      %vm573 = vcmp.ne.s32.totalorder %v467, 0
      %vm574 = vcmp.ne.s32.totalorder %v474, 0
      %vm575 = vcmp.ne.s32.totalorder %v481, 0
      %vm576 = vcmp.ne.s32.totalorder %v488, 0
      %vm577 = vcmp.ne.s32.totalorder %v495, 0
      %vm578 = vcmp.ne.s32.totalorder %v502, 0
      %vm579 = vcmp.ne.s32.totalorder %v509, 0
      %vm580 = vcmp.ne.s32.totalorder %v516, 0
      %vm581 = vcmp.ne.s32.totalorder %v523, 0
      %vm582 = vcmp.ne.s32.totalorder %v530, 0
      %vm583 = vcmp.ne.s32.totalorder %v537, 0
      %vm584 = vcmp.ne.s32.totalorder %v544, 0
      %vm585 = vcmp.ne.s32.totalorder %v551, 0
      %vm586 = vcmp.ne.s32.totalorder %v558, 0
      %vm587 = vcmp.ne.s32.totalorder %v565, 0
      %vm588 = vcmp.ne.s32.totalorder %v572, 0
      %vm589 = vcmp.lt.s32.totalorder %v467, 0
      %vm590 = vcmp.lt.s32.totalorder %v474, 0
      %vm591 = vcmp.lt.s32.totalorder %v481, 0
      %vm592 = vcmp.lt.s32.totalorder %v488, 0
      %vm593 = vcmp.lt.s32.totalorder %v495, 0
      %vm594 = vcmp.lt.s32.totalorder %v502, 0
      %vm595 = vcmp.lt.s32.totalorder %v509, 0
      %vm596 = vcmp.lt.s32.totalorder %v516, 0
      %vm597 = vcmp.lt.s32.totalorder %v523, 0
      %vm598 = vcmp.lt.s32.totalorder %v530, 0
      %vm599 = vcmp.lt.s32.totalorder %v537, 0
      %vm600 = vcmp.lt.s32.totalorder %v544, 0
      %vm601 = vcmp.lt.s32.totalorder %v551, 0
      %vm602 = vcmp.lt.s32.totalorder %v558, 0
      %vm603 = vcmp.lt.s32.totalorder %v565, 0
      %vm604 = vcmp.lt.s32.totalorder %v572, 0
      %vm605 = vmand %vm589, %vm573
      %vm606 = vmand %vm590, %vm574
      %vm607 = vmand %vm591, %vm575
      %vm608 = vmand %vm592, %vm576
      %vm609 = vmand %vm593, %vm577
      %vm610 = vmand %vm594, %vm578
      %vm611 = vmand %vm595, %vm579
      %vm612 = vmand %vm596, %vm580
      %vm613 = vmand %vm597, %vm581
      %vm614 = vmand %vm598, %vm582
      %vm615 = vmand %vm599, %vm583
      %vm616 = vmand %vm600, %vm584
      %vm617 = vmand %vm601, %vm585
      %vm618 = vmand %vm602, %vm586
      %vm619 = vmand %vm603, %vm587
      %vm620 = vmand %vm604, %vm588
      %v621 = vadd.s32 %v467, 16
      %v622 = vadd.s32 %v474, 16
      %v623 = vadd.s32 %v481, 16
      %v624 = vadd.s32 %v488, 16
      %v625 = vadd.s32 %v495, 16
      %v626 = vadd.s32 %v502, 16
      %v627 = vadd.s32 %v509, 16
      %v628 = vadd.s32 %v516, 16
      %v629 = vadd.s32 %v523, 16
      %v630 = vadd.s32 %v530, 16
      %v631 = vadd.s32 %v537, 16
      %v632 = vadd.s32 %v544, 16
      %v633 = vadd.s32 %v551, 16
      %v634 = vadd.s32 %v558, 16
      %v635 = vadd.s32 %v565, 16
      %v636 = vadd.s32 %v572, 16
      %v637 = vsel %vm605, %v621, %v467
      %v638 = vsel %vm606, %v622, %v474
      %v639 = vsel %vm607, %v623, %v481
      %v640 = vsel %vm608, %v624, %v488
      %v641 = vsel %vm609, %v625, %v495
      %v642 = vsel %vm610, %v626, %v502
      %v643 = vsel %vm611, %v627, %v509
      %v644 = vsel %vm612, %v628, %v516
      %v645 = vsel %vm613, %v629, %v523
      %v646 = vsel %vm614, %v630, %v530
      %v647 = vsel %vm615, %v631, %v537
      %v648 = vsel %vm616, %v632, %v544
      %v649 = vsel %vm617, %v633, %v551
      %v650 = vsel %vm618, %v634, %v558
      %v651 = vsel %vm619, %v635, %v565
      %v652 = vsel %vm620, %v636, %v572
      %vm653 = vcmp.ne.s32.totalorder %v637, 15
      %vm654 = vcmp.ne.s32.totalorder %v638, 15
      %vm655 = vcmp.ne.s32.totalorder %v639, 15
      %vm656 = vcmp.ne.s32.totalorder %v640, 15
      %vm657 = vcmp.ne.s32.totalorder %v641, 15
      %vm658 = vcmp.ne.s32.totalorder %v642, 15
      %vm659 = vcmp.ne.s32.totalorder %v643, 15
      %vm660 = vcmp.ne.s32.totalorder %v644, 15
      %vm661 = vcmp.ne.s32.totalorder %v645, 15
      %vm662 = vcmp.ne.s32.totalorder %v646, 15
      %vm663 = vcmp.ne.s32.totalorder %v647, 15
      %vm664 = vcmp.ne.s32.totalorder %v648, 15
      %vm665 = vcmp.ne.s32.totalorder %v649, 15
      %vm666 = vcmp.ne.s32.totalorder %v650, 15
      %vm667 = vcmp.ne.s32.totalorder %v651, 15
      %vm668 = vcmp.ne.s32.totalorder %v652, 15
      %vm669 = vcmp.ne.s32.totalorder %v637, 0
      %vm670 = vcmp.ne.s32.totalorder %v638, 0
      %vm671 = vcmp.ne.s32.totalorder %v639, 0
      %vm672 = vcmp.ne.s32.totalorder %v640, 0
      %vm673 = vcmp.ne.s32.totalorder %v641, 0
      %vm674 = vcmp.ne.s32.totalorder %v642, 0
      %vm675 = vcmp.ne.s32.totalorder %v643, 0
      %vm676 = vcmp.ne.s32.totalorder %v644, 0
      %vm677 = vcmp.ne.s32.totalorder %v645, 0
      %vm678 = vcmp.ne.s32.totalorder %v646, 0
      %vm679 = vcmp.ne.s32.totalorder %v647, 0
      %vm680 = vcmp.ne.s32.totalorder %v648, 0
      %vm681 = vcmp.ne.s32.totalorder %v649, 0
      %vm682 = vcmp.ne.s32.totalorder %v650, 0
      %vm683 = vcmp.ne.s32.totalorder %v651, 0
      %vm684 = vcmp.ne.s32.totalorder %v652, 0
      %v685 = vld [vmem:[%s384] sm:$0xf]
      %v686 = vld [vmem:[%s384 + $0x4] sm:$0xf]
      %v687 = vld [vmem:[%s384 + $0x8] sm:$0xf]
      %v688 = vld [vmem:[%s384 + $0xc] sm:$0xf]
      %v689 = vld [vmem:[%s384 + $0x10] sm:$0xf]
      %v690 = vld [vmem:[%s384 + $0x14] sm:$0xf]
      %v691 = vld [vmem:[%s384 + $0x18] sm:$0xf]
      %v692 = vld [vmem:[%s384 + $0x1c] sm:$0xf]
      %v693 = vld [vmem:[%s384 + $0x20] sm:$0xf]
      %v694 = vld [vmem:[%s384 + $0x24] sm:$0xf]
      %v695 = vld [vmem:[%s384 + $0x28] sm:$0xf]
      %v696 = vld [vmem:[%s384 + $0x2c] sm:$0xf]
      %v697 = vld [vmem:[%s384 + $0x30] sm:$0xf]
      %v698 = vld [vmem:[%s384 + $0x34] sm:$0xf]
      %v699 = vld [vmem:[%s384 + $0x38] sm:$0xf]
      %v700 = vld [vmem:[%s384 + $0x3c] sm:$0xf]
      %v701 = vld [vmem:[%s398] sm:$0xf]
      %v702 = vld [vmem:[%s398 + $0x4] sm:$0xf]
      %v703 = vld [vmem:[%s415] sm:$0xf]
      %v704 = vld [vmem:[%s415 + $0x4] sm:$0xf]
      %p705 = scmp.eq.s32.totalorder %s23, 0
      %s706 = scalar_select %p705, 1, 0
      %v707 = vstv %s706
      %vm708 = vcmp.eq.s32.totalorder %v707, 1
      %v709 = vsel %vm708, 0, %v701
      %v710 = vsel %vm708, 0, %v702
      %p711 = scmp.eq.s32.totalorder %s23, 1
      %s712 = scalar_select %p711, 1, 0
      %v713 = vstv %s712
      %vm714 = vcmp.eq.s32.totalorder %v713, 1
      %v715 = vsel %vm714, 0, %v703
      %v716 = vsel %vm714, 0, %v704
      %vm717 = vcmask 19456
      %718 = vst.msk [vmem:[#allocation2] sm:$0xf] %vm717, 0
      %v721 = vunpack.c.l.b16 %v709
      %v722 = vunpack.c.l.b16 %v710
      %v723 = vpack.c.b16 %v721, %v721
      %v724 = vpack.c.b16 %v722, %v722
      %vm727 = vcmask 23556
      %728 = vst.msk [vmem:[#allocation2] sm:$0xf0] %vm727, %v723
      %729 = vst.msk [vmem:[#allocation2 + $0x8] sm:$0xf] %vm717, %v724
      %v746 = vunpack.c.l.b16 %v685
      %v747 = vunpack.c.l.b16 %v686
      %v748 = vunpack.c.l.b16 %v687
      %v749 = vunpack.c.l.b16 %v688
      %v750 = vunpack.c.l.b16 %v689
      %v751 = vunpack.c.l.b16 %v690
      %v752 = vunpack.c.l.b16 %v691
      %v753 = vunpack.c.l.b16 %v692
      %v754 = vunpack.c.l.b16 %v693
      %v755 = vunpack.c.l.b16 %v694
      %v756 = vunpack.c.l.b16 %v695
      %v757 = vunpack.c.l.b16 %v696
      %v758 = vunpack.c.l.b16 %v697
      %v759 = vunpack.c.l.b16 %v698
      %v760 = vunpack.c.l.b16 %v699
      %v761 = vunpack.c.l.b16 %v700
      %v762 = vpack.c.b16 %v746, %v746
      %v763 = vpack.c.b16 %v748, %v747
      %v764 = vpack.c.b16 %v750, %v749
      %v765 = vpack.c.b16 %v752, %v751
      %v766 = vpack.c.b16 %v754, %v753
      %v767 = vpack.c.b16 %v756, %v755
      %v768 = vpack.c.b16 %v758, %v757
      %v769 = vpack.c.b16 %v760, %v759
      %v770 = vpack.c.b16 %v761, %v761
      %780 = vst.msk [vmem:[#allocation2 + $0x8] sm:$0xf0] %vm727, %v762
      %vm781 = vcmask 23552
      %782 = vst.msk [vmem:[#allocation2 + $0x10] sm:$0xff] %vm781, %v763
      %783 = vst.msk [vmem:[#allocation2 + $0x18] sm:$0xff] %vm781, %v764
      %784 = vst.msk [vmem:[#allocation2 + $0x20] sm:$0xff] %vm781, %v765
      %785 = vst.msk [vmem:[#allocation2 + $0x28] sm:$0xff] %vm781, %v766
      %786 = vst.msk [vmem:[#allocation2 + $0x30] sm:$0xff] %vm781, %v767
      %787 = vst.msk [vmem:[#allocation2 + $0x38] sm:$0xff] %vm781, %v768
      %788 = vst.msk [vmem:[#allocation2 + $0x40] sm:$0xff] %vm781, %v769
      %789 = vst.msk [vmem:[#allocation2 + $0x48] sm:$0xf] %vm717, %v770
      %v792 = vunpack.c.l.b16 %v715
      %v793 = vunpack.c.l.b16 %v716
      %v794 = vpack.c.b16 %v792, %v792
      %v795 = vpack.c.b16 %v793, %v793
      %798 = vst.msk [vmem:[#allocation2 + $0x48] sm:$0xf0] %vm727, %v794
      %799 = vst.msk [vmem:[#allocation2 + $0x50] sm:$0xf] %vm717, %v795
      %800 = vst.msk [vmem:[#allocation2 + $0x50] sm:$0xf0] %vm727, 0
      %v801 = vld [vmem:[#allocation2] sm:$0xf8]
      %v802 = vld [vmem:[#allocation2 + $0x8] sm:$0xff]
      %v803 = vld [vmem:[#allocation2 + $0x10] sm:$0xff]
      %v804 = vld [vmem:[#allocation2 + $0x18] sm:$0xff]
      %v805 = vld [vmem:[#allocation2 + $0x20] sm:$0xff]
      %v806 = vld [vmem:[#allocation2 + $0x28] sm:$0xff]
      %v807 = vld [vmem:[#allocation2 + $0x30] sm:$0xff]
      %v808 = vld [vmem:[#allocation2 + $0x38] sm:$0xff]
      %v809 = vld [vmem:[#allocation2 + $0x40] sm:$0xf]
      %v810 = vsel %vm669, 1, 0
      %v811 = vsel %vm670, 1, 0
      %v812 = vsel %vm671, 1, 0
      %v813 = vsel %vm672, 1, 0
      %v814 = vsel %vm673, 1, 0
      %v815 = vsel %vm674, 1, 0
      %v816 = vsel %vm675, 1, 0
      %v817 = vsel %vm676, 1, 0
      %v818 = vsel %vm677, 1, 0
      %v819 = vsel %vm678, 1, 0
      %v820 = vsel %vm679, 1, 0
      %v821 = vsel %vm680, 1, 0
      %v822 = vsel %vm681, 1, 0
      %v823 = vsel %vm682, 1, 0
      %v824 = vsel %vm683, 1, 0
      %v825 = vsel %vm684, 1, 0
      %vm826 = vcmp.eq.s32.totalorder %v810, 1
      %vm827 = vcmp.eq.s32.totalorder %v811, 1
      %vm828 = vcmp.eq.s32.totalorder %v812, 1
      %vm829 = vcmp.eq.s32.totalorder %v813, 1
      %vm830 = vcmp.eq.s32.totalorder %v814, 1
      %vm831 = vcmp.eq.s32.totalorder %v815, 1
      %vm832 = vcmp.eq.s32.totalorder %v816, 1
      %vm833 = vcmp.eq.s32.totalorder %v817, 1
      %vm834 = vcmp.eq.s32.totalorder %v818, 1
      %vm835 = vcmp.eq.s32.totalorder %v819, 1
      %vm836 = vcmp.eq.s32.totalorder %v820, 1
      %vm837 = vcmp.eq.s32.totalorder %v821, 1
      %vm838 = vcmp.eq.s32.totalorder %v822, 1
      %vm839 = vcmp.eq.s32.totalorder %v823, 1
      %vm840 = vcmp.eq.s32.totalorder %v824, 1
      %vm841 = vcmp.eq.s32.totalorder %v825, 1
      %vm842 = vmpackc.low %vm826, %vm826
      %vm843 = vmpackc.low %vm827, %vm827
      %vm844 = vmpackc.low %vm828, %vm828
      %vm845 = vmpackc.low %vm829, %vm829
      %vm846 = vmpackc.low %vm830, %vm830
      %vm847 = vmpackc.low %vm831, %vm831
      %vm848 = vmpackc.low %vm832, %vm832
      %vm849 = vmpackc.low %vm833, %vm833
      %vm850 = vmpackc.low %vm834, %vm834
      %vm851 = vmpackc.low %vm835, %vm835
      %vm852 = vmpackc.low %vm836, %vm836
      %vm853 = vmpackc.low %vm837, %vm837
      %vm854 = vmpackc.low %vm838, %vm838
      %vm855 = vmpackc.low %vm839, %vm839
      %vm856 = vmpackc.low %vm840, %vm840
      %vm857 = vmpackc.low %vm841, %vm841
      %v858 = vsel %vm842, 65537, 0
      %v859 = vsel %vm843, 65537, 0
      %v860 = vsel %vm844, 65537, 0
      %v861 = vsel %vm845, 65537, 0
      %v862 = vsel %vm846, 65537, 0
      %v863 = vsel %vm847, 65537, 0
      %v864 = vsel %vm848, 65537, 0
      %v865 = vsel %vm849, 65537, 0
      %v866 = vsel %vm850, 65537, 0
      %v867 = vsel %vm851, 65537, 0
      %v868 = vsel %vm852, 65537, 0
      %v869 = vsel %vm853, 65537, 0
      %v870 = vsel %vm854, 65537, 0
      %v871 = vsel %vm855, 65537, 0
      %v872 = vsel %vm856, 65537, 0
      %v873 = vsel %vm857, 65537, 0
      %v874 = vunpack.c.l.b16 %v858
      %v875 = vunpack.c.l.b16 %v859
      %v876 = vunpack.c.l.b16 %v860
      %v877 = vunpack.c.l.b16 %v861
      %v878 = vunpack.c.l.b16 %v862
      %v879 = vunpack.c.l.b16 %v863
      %v880 = vunpack.c.l.b16 %v864
      %v881 = vunpack.c.l.b16 %v865
      %v882 = vunpack.c.l.b16 %v866
      %v883 = vunpack.c.l.b16 %v867
      %v884 = vunpack.c.l.b16 %v868
      %v885 = vunpack.c.l.b16 %v869
      %v886 = vunpack.c.l.b16 %v870
      %v887 = vunpack.c.l.b16 %v871
      %v888 = vunpack.c.l.b16 %v872
      %v889 = vunpack.c.l.b16 %v873
      %v890 = vpack.c.b16 %v875, %v874
      %v891 = vpack.c.b16 %v877, %v876
      %v892 = vpack.c.b16 %v879, %v878
      %v893 = vpack.c.b16 %v881, %v880
      %v894 = vpack.c.b16 %v883, %v882
      %v895 = vpack.c.b16 %v885, %v884
      %v896 = vpack.c.b16 %v887, %v886
      %v897 = vpack.c.b16 %v889, %v888
      %vm898 = vsmask.f32 3328
      %v900 = vshrl.u32 %v890, 16
      %v902 = vrot.slane %v900, 4
      %v903 = vshll.u32 %v890, 16
      %v905 = vrot.slane %v903, 5
      %v906 = vor.u32 %v902, %v905
      %v908 = vshrl.u32 %v891, 16
      %v910 = vrot.slane %v908, 4
      %v911 = vshll.u32 %v891, 16
      %v913 = vrot.slane %v911, 5
      %v914 = vor.u32 %v910, %v913
      %v915 = vsel %vm898, %v906, %v914
      %v917 = vshrl.u32 %v892, 16
      %v919 = vrot.slane %v917, 4
      %v920 = vshll.u32 %v892, 16
      %v922 = vrot.slane %v920, 5
      %v923 = vor.u32 %v919, %v922
      %v924 = vsel %vm898, %v914, %v923
      %v926 = vshrl.u32 %v893, 16
      %v928 = vrot.slane %v926, 4
      %v929 = vshll.u32 %v893, 16
      %v931 = vrot.slane %v929, 5
      %v932 = vor.u32 %v928, %v931
      %v933 = vsel %vm898, %v923, %v932
      %v935 = vshrl.u32 %v894, 16
      %v937 = vrot.slane %v935, 4
      %v938 = vshll.u32 %v894, 16
      %v940 = vrot.slane %v938, 5
      %v941 = vor.u32 %v937, %v940
      %v942 = vsel %vm898, %v932, %v941
      %v944 = vshrl.u32 %v895, 16
      %v946 = vrot.slane %v944, 4
      %v947 = vshll.u32 %v895, 16
      %v949 = vrot.slane %v947, 5
      %v950 = vor.u32 %v946, %v949
      %v951 = vsel %vm898, %v941, %v950
      %v953 = vshrl.u32 %v896, 16
      %v955 = vrot.slane %v953, 4
      %v956 = vshll.u32 %v896, 16
      %v958 = vrot.slane %v956, 5
      %v959 = vor.u32 %v955, %v958
      %v960 = vsel %vm898, %v950, %v959
      %v962 = vshrl.u32 %v897, 16
      %v964 = vrot.slane %v962, 4
      %v965 = vshll.u32 %v897, 16
      %v967 = vrot.slane %v965, 5
      %v968 = vor.u32 %v964, %v967
      %v969 = vsel %vm898, %v959, %v968
      %vm970 = vcmp.ne.s16.totalorder %v906, 0
      %vm971 = vcmp.ne.s16.totalorder %v915, 0
      %vm972 = vcmp.ne.s16.totalorder %v924, 0
      %vm973 = vcmp.ne.s16.totalorder %v933, 0
      %vm974 = vcmp.ne.s16.totalorder %v942, 0
      %vm975 = vcmp.ne.s16.totalorder %v951, 0
      %vm976 = vcmp.ne.s16.totalorder %v960, 0
      %vm977 = vcmp.ne.s16.totalorder %v969, 0
      %vm978 = vcmp.ne.s16.totalorder %v968, 0
      %v979 = vsel %vm970, %v801, 0
      %v980 = vsel %vm971, %v802, 0
      %v981 = vsel %vm972, %v803, 0
      %v982 = vsel %vm973, %v804, 0
      %v983 = vsel %vm974, %v805, 0
      %v984 = vsel %vm975, %v806, 0
      %v985 = vsel %vm976, %v807, 0
      %v986 = vsel %vm977, %v808, 0
      %v987 = vsel %vm978, %v809, 0
      %vm988 = vsmask.f32 4352
      %v990 = vshrl.u32 %v979, 16
      %v992 = vrot.slane %v990, 3
      %v993 = vshll.u32 %v979, 16
      %v995 = vrot.slane %v993, 4
      %v996 = vor.u32 %v992, %v995
      %v998 = vshrl.u32 %v980, 16
      %v1000 = vrot.slane %v998, 3
      %v1001 = vshll.u32 %v980, 16
      %v1003 = vrot.slane %v1001, 4
      %v1004 = vor.u32 %v1000, %v1003
      %v1005 = vsel %vm988, %v996, %v1004
      %v1007 = vshrl.u32 %v981, 16
      %v1009 = vrot.slane %v1007, 3
      %v1010 = vshll.u32 %v981, 16
      %v1012 = vrot.slane %v1010, 4
      %v1013 = vor.u32 %v1009, %v1012
      %v1014 = vsel %vm988, %v1004, %v1013
      %v1016 = vshrl.u32 %v982, 16
      %v1018 = vrot.slane %v1016, 3
      %v1019 = vshll.u32 %v982, 16
      %v1021 = vrot.slane %v1019, 4
      %v1022 = vor.u32 %v1018, %v1021
      %v1023 = vsel %vm988, %v1013, %v1022
      %v1025 = vshrl.u32 %v983, 16
      %v1027 = vrot.slane %v1025, 3
      %v1028 = vshll.u32 %v983, 16
      %v1030 = vrot.slane %v1028, 4
      %v1031 = vor.u32 %v1027, %v1030
      %v1032 = vsel %vm988, %v1022, %v1031
      %v1034 = vshrl.u32 %v984, 16
      %v1036 = vrot.slane %v1034, 3
      %v1037 = vshll.u32 %v984, 16
      %v1039 = vrot.slane %v1037, 4
      %v1040 = vor.u32 %v1036, %v1039
      %v1041 = vsel %vm988, %v1031, %v1040
      %v1043 = vshrl.u32 %v985, 16
      %v1045 = vrot.slane %v1043, 3
      %v1046 = vshll.u32 %v985, 16
      %v1048 = vrot.slane %v1046, 4
      %v1049 = vor.u32 %v1045, %v1048
      %v1050 = vsel %vm988, %v1040, %v1049
      %v1052 = vshrl.u32 %v986, 16
      %v1054 = vrot.slane %v1052, 3
      %v1055 = vshll.u32 %v986, 16
      %v1057 = vrot.slane %v1055, 4
      %v1058 = vor.u32 %v1054, %v1057
      %v1059 = vsel %vm988, %v1049, %v1058
      %v1061 = vshrl.u32 %v987, 16
      %v1063 = vrot.slane %v1061, 3
      %v1064 = vshll.u32 %v987, 16
      %v1066 = vrot.slane %v1064, 4
      %v1067 = vor.u32 %v1063, %v1066
      %v1068 = vsel %vm988, %v1058, %v1067
      %1077 = vst.msk [vmem:[#allocation3] sm:$0xff] %vm781, %v1005
      %1078 = vst.msk [vmem:[#allocation3 + $0x8] sm:$0xff] %vm781, %v1014
      %1079 = vst.msk [vmem:[#allocation3 + $0x10] sm:$0xff] %vm781, %v1023
      %1080 = vst.msk [vmem:[#allocation3 + $0x18] sm:$0xff] %vm781, %v1032
      %1081 = vst.msk [vmem:[#allocation3 + $0x20] sm:$0xff] %vm781, %v1041
      %1082 = vst.msk [vmem:[#allocation3 + $0x28] sm:$0xff] %vm781, %v1050
      %1083 = vst.msk [vmem:[#allocation3 + $0x30] sm:$0xff] %vm781, %v1059
      %1084 = vst.msk [vmem:[#allocation3 + $0x38] sm:$0xff] %vm781, %v1068
      %v1085 = vld [vmem:[#allocation2] sm:$0xf0]
      %v1086 = vld [vmem:[#allocation2 + $0x8] sm:$0xff]
      %v1087 = vld [vmem:[#allocation2 + $0x10] sm:$0xff]
      %v1088 = vld [vmem:[#allocation2 + $0x18] sm:$0xff]
      %v1089 = vld [vmem:[#allocation2 + $0x20] sm:$0xff]
      %v1090 = vld [vmem:[#allocation2 + $0x28] sm:$0xff]
      %v1091 = vld [vmem:[#allocation2 + $0x30] sm:$0xff]
      %v1092 = vld [vmem:[#allocation2 + $0x38] sm:$0xff]
      %v1093 = vld [vmem:[#allocation2 + $0x40] sm:$0xf]
      %vm1103 = vcmask 1043456
      %v1104 = vrot.slane %v1085, 4
      %v1105 = vrot.slane %v1086, 4
      %v1106 = vsel %vm1103, %v1104, %v1105
      %v1107 = vrot.slane %v1087, 4
      %v1108 = vsel %vm1103, %v1105, %v1107
      %v1109 = vrot.slane %v1088, 4
      %v1110 = vsel %vm1103, %v1107, %v1109
      %v1111 = vrot.slane %v1089, 4
      %v1112 = vsel %vm1103, %v1109, %v1111
      %v1113 = vrot.slane %v1090, 4
      %v1114 = vsel %vm1103, %v1111, %v1113
      %v1115 = vrot.slane %v1091, 4
      %v1116 = vsel %vm1103, %v1113, %v1115
      %v1117 = vrot.slane %v1092, 4
      %v1118 = vsel %vm1103, %v1115, %v1117
      %v1119 = vrot.slane %v1093, 4
      %v1120 = vsel %vm1103, %v1117, %v1119
      %1121 = vrot.lane.b32.xlu0 %v1106, 3
      %v1122 = vpop.permute.xlu0 %1121
      %1123 = vrot.lane.b32.xlu0 %v1108, 3
      %v1124 = vpop.permute.xlu0 %1123
      %1125 = vrot.lane.b32.xlu0 %v1110, 3
      %v1126 = vpop.permute.xlu0 %1125
      %1127 = vrot.lane.b32.xlu0 %v1112, 3
      %v1128 = vpop.permute.xlu0 %1127
      %1129 = vrot.lane.b32.xlu0 %v1114, 3
      %v1130 = vpop.permute.xlu0 %1129
      %1131 = vrot.lane.b32.xlu0 %v1116, 3
      %v1132 = vpop.permute.xlu0 %1131
      %1133 = vrot.lane.b32.xlu0 %v1118, 3
      %v1134 = vpop.permute.xlu0 %1133
      %1135 = vrot.lane.b32.xlu0 %v1120, 3
      %v1136 = vpop.permute.xlu0 %1135
      %vm1145 = vcmask 48152
      %1146 = vst.msk [vmem:[#allocation3] sm:$0xff] %vm1145, %v1122
      %1147 = vst.msk [vmem:[#allocation3 + $0x8] sm:$0xff] %vm1145, %v1124
      %1148 = vst.msk [vmem:[#allocation3 + $0x10] sm:$0xff] %vm1145, %v1126
      %1149 = vst.msk [vmem:[#allocation3 + $0x18] sm:$0xff] %vm1145, %v1128
      %1150 = vst.msk [vmem:[#allocation3 + $0x20] sm:$0xff] %vm1145, %v1130
      %1151 = vst.msk [vmem:[#allocation3 + $0x28] sm:$0xff] %vm1145, %v1132
      %1152 = vst.msk [vmem:[#allocation3 + $0x30] sm:$0xff] %vm1145, %v1134
      %1153 = vst.msk [vmem:[#allocation3 + $0x38] sm:$0xff] %vm1145, %v1136
      %v1154 = vld [vmem:[#allocation2] sm:$0xf0]
      %v1155 = vld [vmem:[#allocation2 + $0x8] sm:$0xff]
      %v1156 = vld [vmem:[#allocation2 + $0x10] sm:$0xff]
      %v1157 = vld [vmem:[#allocation2 + $0x18] sm:$0xff]
      %v1158 = vld [vmem:[#allocation2 + $0x20] sm:$0xff]
      %v1159 = vld [vmem:[#allocation2 + $0x28] sm:$0xff]
      %v1160 = vld [vmem:[#allocation2 + $0x30] sm:$0xff]
      %v1161 = vld [vmem:[#allocation2 + $0x38] sm:$0xff]
      %v1162 = vld [vmem:[#allocation2 + $0x40] sm:$0x1f]
      %v1163 = vsel %vm653, 1, 0
      %v1164 = vsel %vm654, 1, 0
      %v1165 = vsel %vm655, 1, 0
      %v1166 = vsel %vm656, 1, 0
      %v1167 = vsel %vm657, 1, 0
      %v1168 = vsel %vm658, 1, 0
      %v1169 = vsel %vm659, 1, 0
      %v1170 = vsel %vm660, 1, 0
      %v1171 = vsel %vm661, 1, 0
      %v1172 = vsel %vm662, 1, 0
      %v1173 = vsel %vm663, 1, 0
      %v1174 = vsel %vm664, 1, 0
      %v1175 = vsel %vm665, 1, 0
      %v1176 = vsel %vm666, 1, 0
      %v1177 = vsel %vm667, 1, 0
      %v1178 = vsel %vm668, 1, 0
      %vm1179 = vcmp.eq.s32.totalorder %v1163, 1
      %vm1180 = vcmp.eq.s32.totalorder %v1164, 1
      %vm1181 = vcmp.eq.s32.totalorder %v1165, 1
      %vm1182 = vcmp.eq.s32.totalorder %v1166, 1
      %vm1183 = vcmp.eq.s32.totalorder %v1167, 1
      %vm1184 = vcmp.eq.s32.totalorder %v1168, 1
      %vm1185 = vcmp.eq.s32.totalorder %v1169, 1
      %vm1186 = vcmp.eq.s32.totalorder %v1170, 1
      %vm1187 = vcmp.eq.s32.totalorder %v1171, 1
      %vm1188 = vcmp.eq.s32.totalorder %v1172, 1
      %vm1189 = vcmp.eq.s32.totalorder %v1173, 1
      %vm1190 = vcmp.eq.s32.totalorder %v1174, 1
      %vm1191 = vcmp.eq.s32.totalorder %v1175, 1
      %vm1192 = vcmp.eq.s32.totalorder %v1176, 1
      %vm1193 = vcmp.eq.s32.totalorder %v1177, 1
      %vm1194 = vcmp.eq.s32.totalorder %v1178, 1
      %vm1195 = vmpackc.low %vm1179, %vm1179
      %vm1196 = vmpackc.low %vm1180, %vm1180
      %vm1197 = vmpackc.low %vm1181, %vm1181
      %vm1198 = vmpackc.low %vm1182, %vm1182
      %vm1199 = vmpackc.low %vm1183, %vm1183
      %vm1200 = vmpackc.low %vm1184, %vm1184
      %vm1201 = vmpackc.low %vm1185, %vm1185
      %vm1202 = vmpackc.low %vm1186, %vm1186
      %vm1203 = vmpackc.low %vm1187, %vm1187
      %vm1204 = vmpackc.low %vm1188, %vm1188
      %vm1205 = vmpackc.low %vm1189, %vm1189
      %vm1206 = vmpackc.low %vm1190, %vm1190
      %vm1207 = vmpackc.low %vm1191, %vm1191
      %vm1208 = vmpackc.low %vm1192, %vm1192
      %vm1209 = vmpackc.low %vm1193, %vm1193
      %vm1210 = vmpackc.low %vm1194, %vm1194
      %v1211 = vsel %vm1195, 65537, 0
      %v1212 = vsel %vm1196, 65537, 0
      %v1213 = vsel %vm1197, 65537, 0
      %v1214 = vsel %vm1198, 65537, 0
      %v1215 = vsel %vm1199, 65537, 0
      %v1216 = vsel %vm1200, 65537, 0
      %v1217 = vsel %vm1201, 65537, 0
      %v1218 = vsel %vm1202, 65537, 0
      %v1219 = vsel %vm1203, 65537, 0
      %v1220 = vsel %vm1204, 65537, 0
      %v1221 = vsel %vm1205, 65537, 0
      %v1222 = vsel %vm1206, 65537, 0
      %v1223 = vsel %vm1207, 65537, 0
      %v1224 = vsel %vm1208, 65537, 0
      %v1225 = vsel %vm1209, 65537, 0
      %v1226 = vsel %vm1210, 65537, 0
      %v1227 = vunpack.c.l.b16 %v1211
      %v1228 = vunpack.c.l.b16 %v1212
      %v1229 = vunpack.c.l.b16 %v1213
      %v1230 = vunpack.c.l.b16 %v1214
      %v1231 = vunpack.c.l.b16 %v1215
      %v1232 = vunpack.c.l.b16 %v1216
      %v1233 = vunpack.c.l.b16 %v1217
      %v1234 = vunpack.c.l.b16 %v1218
      %v1235 = vunpack.c.l.b16 %v1219
      %v1236 = vunpack.c.l.b16 %v1220
      %v1237 = vunpack.c.l.b16 %v1221
      %v1238 = vunpack.c.l.b16 %v1222
      %v1239 = vunpack.c.l.b16 %v1223
      %v1240 = vunpack.c.l.b16 %v1224
      %v1241 = vunpack.c.l.b16 %v1225
      %v1242 = vunpack.c.l.b16 %v1226
      %v1243 = vpack.c.b16 %v1228, %v1227
      %v1244 = vpack.c.b16 %v1230, %v1229
      %v1245 = vpack.c.b16 %v1232, %v1231
      %v1246 = vpack.c.b16 %v1234, %v1233
      %v1247 = vpack.c.b16 %v1236, %v1235
      %v1248 = vpack.c.b16 %v1238, %v1237
      %v1249 = vpack.c.b16 %v1240, %v1239
      %v1250 = vpack.c.b16 %v1242, %v1241
      %v1252 = vshrl.u32 %v1243, 16
      %v1254 = vrot.slane %v1252, 3
      %v1255 = vshll.u32 %v1243, 16
      %v1257 = vrot.slane %v1255, 4
      %v1258 = vor.u32 %v1254, %v1257
      %v1260 = vshrl.u32 %v1244, 16
      %v1262 = vrot.slane %v1260, 3
      %v1263 = vshll.u32 %v1244, 16
      %v1265 = vrot.slane %v1263, 4
      %v1266 = vor.u32 %v1262, %v1265
      %v1267 = vsel %vm988, %v1258, %v1266
      %v1269 = vshrl.u32 %v1245, 16
      %v1271 = vrot.slane %v1269, 3
      %v1272 = vshll.u32 %v1245, 16
      %v1274 = vrot.slane %v1272, 4
      %v1275 = vor.u32 %v1271, %v1274
      %v1276 = vsel %vm988, %v1266, %v1275
      %v1278 = vshrl.u32 %v1246, 16
      %v1280 = vrot.slane %v1278, 3
      %v1281 = vshll.u32 %v1246, 16
      %v1283 = vrot.slane %v1281, 4
      %v1284 = vor.u32 %v1280, %v1283
      %v1285 = vsel %vm988, %v1275, %v1284
      %v1287 = vshrl.u32 %v1247, 16
      %v1289 = vrot.slane %v1287, 3
      %v1290 = vshll.u32 %v1247, 16
      %v1292 = vrot.slane %v1290, 4
      %v1293 = vor.u32 %v1289, %v1292
      %v1294 = vsel %vm988, %v1284, %v1293
      %v1296 = vshrl.u32 %v1248, 16
      %v1298 = vrot.slane %v1296, 3
      %v1299 = vshll.u32 %v1248, 16
      %v1301 = vrot.slane %v1299, 4
      %v1302 = vor.u32 %v1298, %v1301
      %v1303 = vsel %vm988, %v1293, %v1302
      %v1305 = vshrl.u32 %v1249, 16
      %v1307 = vrot.slane %v1305, 3
      %v1308 = vshll.u32 %v1249, 16
      %v1310 = vrot.slane %v1308, 4
      %v1311 = vor.u32 %v1307, %v1310
      %v1312 = vsel %vm988, %v1302, %v1311
      %v1314 = vshrl.u32 %v1250, 16
      %v1316 = vrot.slane %v1314, 3
      %v1317 = vshll.u32 %v1250, 16
      %v1319 = vrot.slane %v1317, 4
      %v1320 = vor.u32 %v1316, %v1319
      %v1321 = vsel %vm988, %v1311, %v1320
      %vm1322 = vcmp.ne.s16.totalorder %v1258, 0
      %vm1323 = vcmp.ne.s16.totalorder %v1267, 0
      %vm1324 = vcmp.ne.s16.totalorder %v1276, 0
      %vm1325 = vcmp.ne.s16.totalorder %v1285, 0
      %vm1326 = vcmp.ne.s16.totalorder %v1294, 0
      %vm1327 = vcmp.ne.s16.totalorder %v1303, 0
      %vm1328 = vcmp.ne.s16.totalorder %v1312, 0
      %vm1329 = vcmp.ne.s16.totalorder %v1321, 0
      %vm1330 = vcmp.ne.s16.totalorder %v1320, 0
      %v1331 = vsel %vm1322, %v1154, 0
      %v1332 = vsel %vm1323, %v1155, 0
      %v1333 = vsel %vm1324, %v1156, 0
      %v1334 = vsel %vm1325, %v1157, 0
      %v1335 = vsel %vm1326, %v1158, 0
      %v1336 = vsel %vm1327, %v1159, 0
      %v1337 = vsel %vm1328, %v1160, 0
      %v1338 = vsel %vm1329, %v1161, 0
      %v1339 = vsel %vm1330, %v1162, 0
      %v1341 = vshrl.u32 %v1331, 16
      %v1343 = vrot.slane %v1341, 4
      %v1344 = vshll.u32 %v1331, 16
      %v1346 = vrot.slane %v1344, 5
      %v1347 = vor.u32 %v1343, %v1346
      %v1349 = vshrl.u32 %v1332, 16
      %v1351 = vrot.slane %v1349, 4
      %v1352 = vshll.u32 %v1332, 16
      %v1354 = vrot.slane %v1352, 5
      %v1355 = vor.u32 %v1351, %v1354
      %v1356 = vsel %vm898, %v1347, %v1355
      %v1358 = vshrl.u32 %v1333, 16
      %v1360 = vrot.slane %v1358, 4
      %v1361 = vshll.u32 %v1333, 16
      %v1363 = vrot.slane %v1361, 5
      %v1364 = vor.u32 %v1360, %v1363
      %v1365 = vsel %vm898, %v1355, %v1364
      %v1367 = vshrl.u32 %v1334, 16
      %v1369 = vrot.slane %v1367, 4
      %v1370 = vshll.u32 %v1334, 16
      %v1372 = vrot.slane %v1370, 5
      %v1373 = vor.u32 %v1369, %v1372
      %v1374 = vsel %vm898, %v1364, %v1373
      %v1376 = vshrl.u32 %v1335, 16
      %v1378 = vrot.slane %v1376, 4
      %v1379 = vshll.u32 %v1335, 16
      %v1381 = vrot.slane %v1379, 5
      %v1382 = vor.u32 %v1378, %v1381
      %v1383 = vsel %vm898, %v1373, %v1382
      %v1385 = vshrl.u32 %v1336, 16
      %v1387 = vrot.slane %v1385, 4
      %v1388 = vshll.u32 %v1336, 16
      %v1390 = vrot.slane %v1388, 5
      %v1391 = vor.u32 %v1387, %v1390
      %v1392 = vsel %vm898, %v1382, %v1391
      %v1394 = vshrl.u32 %v1337, 16
      %v1396 = vrot.slane %v1394, 4
      %v1397 = vshll.u32 %v1337, 16
      %v1399 = vrot.slane %v1397, 5
      %v1400 = vor.u32 %v1396, %v1399
      %v1401 = vsel %vm898, %v1391, %v1400
      %v1403 = vshrl.u32 %v1338, 16
      %v1405 = vrot.slane %v1403, 4
      %v1406 = vshll.u32 %v1338, 16
      %v1408 = vrot.slane %v1406, 5
      %v1409 = vor.u32 %v1405, %v1408
      %v1410 = vsel %vm898, %v1400, %v1409
      %v1412 = vshrl.u32 %v1339, 16
      %v1414 = vrot.slane %v1412, 4
      %v1415 = vshll.u32 %v1339, 16
      %v1417 = vrot.slane %v1415, 5
      %v1418 = vor.u32 %v1414, %v1417
      %v1419 = vsel %vm898, %v1409, %v1418
      %1420 = vrot.lane.b32.xlu0 %v1356, 6
      %v1421 = vpop.permute.xlu0 %1420
      %1422 = vrot.lane.b32.xlu0 %v1365, 6
      %v1423 = vpop.permute.xlu0 %1422
      %1424 = vrot.lane.b32.xlu0 %v1374, 6
      %v1425 = vpop.permute.xlu0 %1424
      %1426 = vrot.lane.b32.xlu0 %v1383, 6
      %v1427 = vpop.permute.xlu0 %1426
      %1428 = vrot.lane.b32.xlu0 %v1392, 6
      %v1429 = vpop.permute.xlu0 %1428
      %1430 = vrot.lane.b32.xlu0 %v1401, 6
      %v1431 = vpop.permute.xlu0 %1430
      %1432 = vrot.lane.b32.xlu0 %v1410, 6
      %v1433 = vpop.permute.xlu0 %1432
      %1434 = vrot.lane.b32.xlu0 %v1419, 6
      %v1435 = vpop.permute.xlu0 %1434
      %vm1444 = vcmask 72752
      %1445 = vst.msk [vmem:[#allocation3] sm:$0xff] %vm1444, %v1421
      %1446 = vst.msk [vmem:[#allocation3 + $0x8] sm:$0xff] %vm1444, %v1423
      %1447 = vst.msk [vmem:[#allocation3 + $0x10] sm:$0xff] %vm1444, %v1425
      %1448 = vst.msk [vmem:[#allocation3 + $0x18] sm:$0xff] %vm1444, %v1427
      %1449 = vst.msk [vmem:[#allocation3 + $0x20] sm:$0xff] %vm1444, %v1429
      %1450 = vst.msk [vmem:[#allocation3 + $0x28] sm:$0xff] %vm1444, %v1431
      %1451 = vst.msk [vmem:[#allocation3 + $0x30] sm:$0xff] %vm1444, %v1433
      %1452 = vst.msk [vmem:[#allocation3 + $0x38] sm:$0xff] %vm1444, %v1435
      %v1453 = vld [vmem:[#allocation2 + $0x8] sm:$0xf8]
      %v1454 = vld [vmem:[#allocation2 + $0x10] sm:$0xff]
      %v1455 = vld [vmem:[#allocation2 + $0x18] sm:$0xff]
      %v1456 = vld [vmem:[#allocation2 + $0x20] sm:$0xff]
      %v1457 = vld [vmem:[#allocation2 + $0x28] sm:$0xff]
      %v1458 = vld [vmem:[#allocation2 + $0x30] sm:$0xff]
      %v1459 = vld [vmem:[#allocation2 + $0x38] sm:$0xff]
      %v1460 = vld [vmem:[#allocation2 + $0x40] sm:$0xff]
      %v1461 = vld [vmem:[#allocation2 + $0x48] sm:$0xf]
      %v1462 = vsel %vm970, %v1453, 0
      %v1463 = vsel %vm971, %v1454, 0
      %v1464 = vsel %vm972, %v1455, 0
      %v1465 = vsel %vm973, %v1456, 0
      %v1466 = vsel %vm974, %v1457, 0
      %v1467 = vsel %vm975, %v1458, 0
      %v1468 = vsel %vm976, %v1459, 0
      %v1469 = vsel %vm977, %v1460, 0
      %v1470 = vsel %vm978, %v1461, 0
      %v1472 = vshrl.u32 %v1462, 16
      %v1474 = vrot.slane %v1472, 3
      %v1475 = vshll.u32 %v1462, 16
      %v1477 = vrot.slane %v1475, 4
      %v1478 = vor.u32 %v1474, %v1477
      %v1480 = vshrl.u32 %v1463, 16
      %v1482 = vrot.slane %v1480, 3
      %v1483 = vshll.u32 %v1463, 16
      %v1485 = vrot.slane %v1483, 4
      %v1486 = vor.u32 %v1482, %v1485
      %v1487 = vsel %vm988, %v1478, %v1486
      %v1489 = vshrl.u32 %v1464, 16
      %v1491 = vrot.slane %v1489, 3
      %v1492 = vshll.u32 %v1464, 16
      %v1494 = vrot.slane %v1492, 4
      %v1495 = vor.u32 %v1491, %v1494
      %v1496 = vsel %vm988, %v1486, %v1495
      %v1498 = vshrl.u32 %v1465, 16
      %v1500 = vrot.slane %v1498, 3
      %v1501 = vshll.u32 %v1465, 16
      %v1503 = vrot.slane %v1501, 4
      %v1504 = vor.u32 %v1500, %v1503
      %v1505 = vsel %vm988, %v1495, %v1504
      %v1507 = vshrl.u32 %v1466, 16
      %v1509 = vrot.slane %v1507, 3
      %v1510 = vshll.u32 %v1466, 16
      %v1512 = vrot.slane %v1510, 4
      %v1513 = vor.u32 %v1509, %v1512
      %v1514 = vsel %vm988, %v1504, %v1513
      %v1516 = vshrl.u32 %v1467, 16
      %v1518 = vrot.slane %v1516, 3
      %v1519 = vshll.u32 %v1467, 16
      %v1521 = vrot.slane %v1519, 4
      %v1522 = vor.u32 %v1518, %v1521
      %v1523 = vsel %vm988, %v1513, %v1522
      %v1525 = vshrl.u32 %v1468, 16
      %v1527 = vrot.slane %v1525, 3
      %v1528 = vshll.u32 %v1468, 16
      %v1530 = vrot.slane %v1528, 4
      %v1531 = vor.u32 %v1527, %v1530
      %v1532 = vsel %vm988, %v1522, %v1531
      %v1534 = vshrl.u32 %v1469, 16
      %v1536 = vrot.slane %v1534, 3
      %v1537 = vshll.u32 %v1469, 16
      %v1539 = vrot.slane %v1537, 4
      %v1540 = vor.u32 %v1536, %v1539
      %v1541 = vsel %vm988, %v1531, %v1540
      %v1543 = vshrl.u32 %v1470, 16
      %v1545 = vrot.slane %v1543, 3
      %v1546 = vshll.u32 %v1470, 16
      %v1548 = vrot.slane %v1546, 4
      %v1549 = vor.u32 %v1545, %v1548
      %v1550 = vsel %vm988, %v1540, %v1549
      %1551 = vrot.lane.b32.xlu0 %v1487, 9
      %v1552 = vpop.permute.xlu0 %1551
      %1553 = vrot.lane.b32.xlu0 %v1496, 9
      %v1554 = vpop.permute.xlu0 %1553
      %1555 = vrot.lane.b32.xlu0 %v1505, 9
      %v1556 = vpop.permute.xlu0 %1555
      %1557 = vrot.lane.b32.xlu0 %v1514, 9
      %v1558 = vpop.permute.xlu0 %1557
      %1559 = vrot.lane.b32.xlu0 %v1523, 9
      %v1560 = vpop.permute.xlu0 %1559
      %1561 = vrot.lane.b32.xlu0 %v1532, 9
      %v1562 = vpop.permute.xlu0 %1561
      %1563 = vrot.lane.b32.xlu0 %v1541, 9
      %v1564 = vpop.permute.xlu0 %1563
      %1565 = vrot.lane.b32.xlu0 %v1550, 9
      %v1566 = vpop.permute.xlu0 %1565
      %vm1575 = vcmask 97352
      %1576 = vst.msk [vmem:[#allocation3] sm:$0xff] %vm1575, %v1552
      %1577 = vst.msk [vmem:[#allocation3 + $0x8] sm:$0xff] %vm1575, %v1554
      %1578 = vst.msk [vmem:[#allocation3 + $0x10] sm:$0xff] %vm1575, %v1556
      %1579 = vst.msk [vmem:[#allocation3 + $0x18] sm:$0xff] %vm1575, %v1558
      %1580 = vst.msk [vmem:[#allocation3 + $0x20] sm:$0xff] %vm1575, %v1560
      %1581 = vst.msk [vmem:[#allocation3 + $0x28] sm:$0xff] %vm1575, %v1562
      %1582 = vst.msk [vmem:[#allocation3 + $0x30] sm:$0xff] %vm1575, %v1564
      %1583 = vst.msk [vmem:[#allocation3 + $0x38] sm:$0xff] %vm1575, %v1566
      %v1584 = vld [vmem:[#allocation2 + $0x8] sm:$0xf0]
      %v1585 = vld [vmem:[#allocation2 + $0x10] sm:$0xff]
      %v1586 = vld [vmem:[#allocation2 + $0x18] sm:$0xff]
      %v1587 = vld [vmem:[#allocation2 + $0x20] sm:$0xff]
      %v1588 = vld [vmem:[#allocation2 + $0x28] sm:$0xff]
      %v1589 = vld [vmem:[#allocation2 + $0x30] sm:$0xff]
      %v1590 = vld [vmem:[#allocation2 + $0x38] sm:$0xff]
      %v1591 = vld [vmem:[#allocation2 + $0x40] sm:$0xff]
      %v1592 = vld [vmem:[#allocation2 + $0x48] sm:$0xf]
      %v1602 = vrot.slane %v1584, 4
      %v1603 = vrot.slane %v1585, 4
      %v1604 = vsel %vm1103, %v1602, %v1603
      %v1605 = vrot.slane %v1586, 4
      %v1606 = vsel %vm1103, %v1603, %v1605
      %v1607 = vrot.slane %v1587, 4
      %v1608 = vsel %vm1103, %v1605, %v1607
      %v1609 = vrot.slane %v1588, 4
      %v1610 = vsel %vm1103, %v1607, %v1609
      %v1611 = vrot.slane %v1589, 4
      %v1612 = vsel %vm1103, %v1609, %v1611
      %v1613 = vrot.slane %v1590, 4
      %v1614 = vsel %vm1103, %v1611, %v1613
      %v1615 = vrot.slane %v1591, 4
      %v1616 = vsel %vm1103, %v1613, %v1615
      %v1617 = vrot.slane %v1592, 4
      %v1618 = vsel %vm1103, %v1615, %v1617
      %1619 = vrot.lane.b32.xlu0 %v1604, 12
      %v1620 = vpop.permute.xlu0 %1619
      %1621 = vrot.lane.b32.xlu0 %v1606, 12
      %v1622 = vpop.permute.xlu0 %1621
      %1623 = vrot.lane.b32.xlu0 %v1608, 12
      %v1624 = vpop.permute.xlu0 %1623
      %1625 = vrot.lane.b32.xlu0 %v1610, 12
      %v1626 = vpop.permute.xlu0 %1625
      %1627 = vrot.lane.b32.xlu0 %v1612, 12
      %v1628 = vpop.permute.xlu0 %1627
      %1629 = vrot.lane.b32.xlu0 %v1614, 12
      %v1630 = vpop.permute.xlu0 %1629
      %1631 = vrot.lane.b32.xlu0 %v1616, 12
      %v1632 = vpop.permute.xlu0 %1631
      %1633 = vrot.lane.b32.xlu0 %v1618, 12
      %v1634 = vpop.permute.xlu0 %1633
      %vm1643 = vcmask 121952
      %1644 = vst.msk [vmem:[#allocation3] sm:$0xff] %vm1643, %v1620
      %1645 = vst.msk [vmem:[#allocation3 + $0x8] sm:$0xff] %vm1643, %v1622
      %1646 = vst.msk [vmem:[#allocation3 + $0x10] sm:$0xff] %vm1643, %v1624
      %1647 = vst.msk [vmem:[#allocation3 + $0x18] sm:$0xff] %vm1643, %v1626
      %1648 = vst.msk [vmem:[#allocation3 + $0x20] sm:$0xff] %vm1643, %v1628
      %1649 = vst.msk [vmem:[#allocation3 + $0x28] sm:$0xff] %vm1643, %v1630
      %1650 = vst.msk [vmem:[#allocation3 + $0x30] sm:$0xff] %vm1643, %v1632
      %1651 = vst.msk [vmem:[#allocation3 + $0x38] sm:$0xff] %vm1643, %v1634
      %v1652 = vld [vmem:[#allocation2 + $0x8] sm:$0xf0]
      %v1653 = vld [vmem:[#allocation2 + $0x10] sm:$0xff]
      %v1654 = vld [vmem:[#allocation2 + $0x18] sm:$0xff]
      %v1655 = vld [vmem:[#allocation2 + $0x20] sm:$0xff]
      %v1656 = vld [vmem:[#allocation2 + $0x28] sm:$0xff]
      %v1657 = vld [vmem:[#allocation2 + $0x30] sm:$0xff]
      %v1658 = vld [vmem:[#allocation2 + $0x38] sm:$0xff]
      %v1659 = vld [vmem:[#allocation2 + $0x40] sm:$0xff]
      %v1660 = vld [vmem:[#allocation2 + $0x48] sm:$0x1f]
      %v1661 = vsel %vm1322, %v1652, 0
      %v1662 = vsel %vm1323, %v1653, 0
      %v1663 = vsel %vm1324, %v1654, 0
      %v1664 = vsel %vm1325, %v1655, 0
      %v1665 = vsel %vm1326, %v1656, 0
      %v1666 = vsel %vm1327, %v1657, 0
      %v1667 = vsel %vm1328, %v1658, 0
      %v1668 = vsel %vm1329, %v1659, 0
      %v1669 = vsel %vm1330, %v1660, 0
      %v1671 = vshrl.u32 %v1661, 16
      %v1673 = vrot.slane %v1671, 4
      %v1674 = vshll.u32 %v1661, 16
      %v1676 = vrot.slane %v1674, 5
      %v1677 = vor.u32 %v1673, %v1676
      %v1679 = vshrl.u32 %v1662, 16
      %v1681 = vrot.slane %v1679, 4
      %v1682 = vshll.u32 %v1662, 16
      %v1684 = vrot.slane %v1682, 5
      %v1685 = vor.u32 %v1681, %v1684
      %v1686 = vsel %vm898, %v1677, %v1685
      %v1688 = vshrl.u32 %v1663, 16
      %v1690 = vrot.slane %v1688, 4
      %v1691 = vshll.u32 %v1663, 16
      %v1693 = vrot.slane %v1691, 5
      %v1694 = vor.u32 %v1690, %v1693
      %v1695 = vsel %vm898, %v1685, %v1694
      %v1697 = vshrl.u32 %v1664, 16
      %v1699 = vrot.slane %v1697, 4
      %v1700 = vshll.u32 %v1664, 16
      %v1702 = vrot.slane %v1700, 5
      %v1703 = vor.u32 %v1699, %v1702
      %v1704 = vsel %vm898, %v1694, %v1703
      %v1706 = vshrl.u32 %v1665, 16
      %v1708 = vrot.slane %v1706, 4
      %v1709 = vshll.u32 %v1665, 16
      %v1711 = vrot.slane %v1709, 5
      %v1712 = vor.u32 %v1708, %v1711
      %v1713 = vsel %vm898, %v1703, %v1712
      %v1715 = vshrl.u32 %v1666, 16
      %v1717 = vrot.slane %v1715, 4
      %v1718 = vshll.u32 %v1666, 16
      %v1720 = vrot.slane %v1718, 5
      %v1721 = vor.u32 %v1717, %v1720
      %v1722 = vsel %vm898, %v1712, %v1721
      %v1724 = vshrl.u32 %v1667, 16
      %v1726 = vrot.slane %v1724, 4
      %v1727 = vshll.u32 %v1667, 16
      %v1729 = vrot.slane %v1727, 5
      %v1730 = vor.u32 %v1726, %v1729
      %v1731 = vsel %vm898, %v1721, %v1730
      %v1733 = vshrl.u32 %v1668, 16
      %v1735 = vrot.slane %v1733, 4
      %v1736 = vshll.u32 %v1668, 16
      %v1738 = vrot.slane %v1736, 5
      %v1739 = vor.u32 %v1735, %v1738
      %v1740 = vsel %vm898, %v1730, %v1739
      %v1742 = vshrl.u32 %v1669, 16
      %v1744 = vrot.slane %v1742, 4
      %v1745 = vshll.u32 %v1669, 16
      %v1747 = vrot.slane %v1745, 5
      %v1748 = vor.u32 %v1744, %v1747
      %v1749 = vsel %vm898, %v1739, %v1748
      %1750 = vrot.lane.b32.xlu0 %v1686, 15
      %v1751 = vpop.permute.xlu0 %1750
      %1752 = vrot.lane.b32.xlu0 %v1695, 15
      %v1753 = vpop.permute.xlu0 %1752
      %1754 = vrot.lane.b32.xlu0 %v1704, 15
      %v1755 = vpop.permute.xlu0 %1754
      %1756 = vrot.lane.b32.xlu0 %v1713, 15
      %v1757 = vpop.permute.xlu0 %1756
      %1758 = vrot.lane.b32.xlu0 %v1722, 15
      %v1759 = vpop.permute.xlu0 %1758
      %1760 = vrot.lane.b32.xlu0 %v1731, 15
      %v1761 = vpop.permute.xlu0 %1760
      %1762 = vrot.lane.b32.xlu0 %v1740, 15
      %v1763 = vpop.permute.xlu0 %1762
      %1764 = vrot.lane.b32.xlu0 %v1749, 15
      %v1765 = vpop.permute.xlu0 %1764
      %vm1774 = vcmask 146552
      %1775 = vst.msk [vmem:[#allocation3] sm:$0xff] %vm1774, %v1751
      %1776 = vst.msk [vmem:[#allocation3 + $0x8] sm:$0xff] %vm1774, %v1753
      %1777 = vst.msk [vmem:[#allocation3 + $0x10] sm:$0xff] %vm1774, %v1755
      %1778 = vst.msk [vmem:[#allocation3 + $0x18] sm:$0xff] %vm1774, %v1757
      %1779 = vst.msk [vmem:[#allocation3 + $0x20] sm:$0xff] %vm1774, %v1759
      %1780 = vst.msk [vmem:[#allocation3 + $0x28] sm:$0xff] %vm1774, %v1761
      %1781 = vst.msk [vmem:[#allocation3 + $0x30] sm:$0xff] %vm1774, %v1763
      %1782 = vst.msk [vmem:[#allocation3 + $0x38] sm:$0xff] %vm1774, %v1765
      %v1783 = vld [vmem:[#allocation2 + $0x10] sm:$0xf8]
      %v1784 = vld [vmem:[#allocation2 + $0x18] sm:$0xff]
      %v1785 = vld [vmem:[#allocation2 + $0x20] sm:$0xff]
      %v1786 = vld [vmem:[#allocation2 + $0x28] sm:$0xff]
      %v1787 = vld [vmem:[#allocation2 + $0x30] sm:$0xff]
      %v1788 = vld [vmem:[#allocation2 + $0x38] sm:$0xff]
      %v1789 = vld [vmem:[#allocation2 + $0x40] sm:$0xff]
      %v1790 = vld [vmem:[#allocation2 + $0x48] sm:$0xff]
      %v1791 = vld [vmem:[#allocation2 + $0x50] sm:$0xf]
      %v1792 = vsel %vm970, %v1783, 0
      %v1793 = vsel %vm971, %v1784, 0
      %v1794 = vsel %vm972, %v1785, 0
      %v1795 = vsel %vm973, %v1786, 0
      %v1796 = vsel %vm974, %v1787, 0
      %v1797 = vsel %vm975, %v1788, 0
      %v1798 = vsel %vm976, %v1789, 0
      %v1799 = vsel %vm977, %v1790, 0
      %v1800 = vsel %vm978, %v1791, 0
      %v1802 = vshrl.u32 %v1792, 16
      %v1804 = vrot.slane %v1802, 3
      %v1805 = vshll.u32 %v1792, 16
      %v1807 = vrot.slane %v1805, 4
      %v1808 = vor.u32 %v1804, %v1807
      %v1810 = vshrl.u32 %v1793, 16
      %v1812 = vrot.slane %v1810, 3
      %v1813 = vshll.u32 %v1793, 16
      %v1815 = vrot.slane %v1813, 4
      %v1816 = vor.u32 %v1812, %v1815
      %v1817 = vsel %vm988, %v1808, %v1816
      %v1819 = vshrl.u32 %v1794, 16
      %v1821 = vrot.slane %v1819, 3
      %v1822 = vshll.u32 %v1794, 16
      %v1824 = vrot.slane %v1822, 4
      %v1825 = vor.u32 %v1821, %v1824
      %v1826 = vsel %vm988, %v1816, %v1825
      %v1828 = vshrl.u32 %v1795, 16
      %v1830 = vrot.slane %v1828, 3
      %v1831 = vshll.u32 %v1795, 16
      %v1833 = vrot.slane %v1831, 4
      %v1834 = vor.u32 %v1830, %v1833
      %v1835 = vsel %vm988, %v1825, %v1834
      %v1837 = vshrl.u32 %v1796, 16
      %v1839 = vrot.slane %v1837, 3
      %v1840 = vshll.u32 %v1796, 16
      %v1842 = vrot.slane %v1840, 4
      %v1843 = vor.u32 %v1839, %v1842
      %v1844 = vsel %vm988, %v1834, %v1843
      %v1846 = vshrl.u32 %v1797, 16
      %v1848 = vrot.slane %v1846, 3
      %v1849 = vshll.u32 %v1797, 16
      %v1851 = vrot.slane %v1849, 4
      %v1852 = vor.u32 %v1848, %v1851
      %v1853 = vsel %vm988, %v1843, %v1852
      %v1855 = vshrl.u32 %v1798, 16
      %v1857 = vrot.slane %v1855, 3
      %v1858 = vshll.u32 %v1798, 16
      %v1860 = vrot.slane %v1858, 4
      %v1861 = vor.u32 %v1857, %v1860
      %v1862 = vsel %vm988, %v1852, %v1861
      %v1864 = vshrl.u32 %v1799, 16
      %v1866 = vrot.slane %v1864, 3
      %v1867 = vshll.u32 %v1799, 16
      %v1869 = vrot.slane %v1867, 4
      %v1870 = vor.u32 %v1866, %v1869
      %v1871 = vsel %vm988, %v1861, %v1870
      %v1873 = vshrl.u32 %v1800, 16
      %v1875 = vrot.slane %v1873, 3
      %v1876 = vshll.u32 %v1800, 16
      %v1878 = vrot.slane %v1876, 4
      %v1879 = vor.u32 %v1875, %v1878
      %v1880 = vsel %vm988, %v1870, %v1879
      %1881 = vrot.lane.b32.xlu0 %v1817, 18
      %v1882 = vpop.permute.xlu0 %1881
      %1883 = vrot.lane.b32.xlu0 %v1826, 18
      %v1884 = vpop.permute.xlu0 %1883
      %1885 = vrot.lane.b32.xlu0 %v1835, 18
      %v1886 = vpop.permute.xlu0 %1885
      %1887 = vrot.lane.b32.xlu0 %v1844, 18
      %v1888 = vpop.permute.xlu0 %1887
      %1889 = vrot.lane.b32.xlu0 %v1853, 18
      %v1890 = vpop.permute.xlu0 %1889
      %1891 = vrot.lane.b32.xlu0 %v1862, 18
      %v1892 = vpop.permute.xlu0 %1891
      %1893 = vrot.lane.b32.xlu0 %v1871, 18
      %v1894 = vpop.permute.xlu0 %1893
      %1895 = vrot.lane.b32.xlu0 %v1880, 18
      %v1896 = vpop.permute.xlu0 %1895
      %vm1905 = vcmask 171152
      %1906 = vst.msk [vmem:[#allocation3] sm:$0xff] %vm1905, %v1882
      %1907 = vst.msk [vmem:[#allocation3 + $0x8] sm:$0xff] %vm1905, %v1884
      %1908 = vst.msk [vmem:[#allocation3 + $0x10] sm:$0xff] %vm1905, %v1886
      %1909 = vst.msk [vmem:[#allocation3 + $0x18] sm:$0xff] %vm1905, %v1888
      %1910 = vst.msk [vmem:[#allocation3 + $0x20] sm:$0xff] %vm1905, %v1890
      %1911 = vst.msk [vmem:[#allocation3 + $0x28] sm:$0xff] %vm1905, %v1892
      %1912 = vst.msk [vmem:[#allocation3 + $0x30] sm:$0xff] %vm1905, %v1894
      %1913 = vst.msk [vmem:[#allocation3 + $0x38] sm:$0xff] %vm1905, %v1896
      %v1914 = vld [vmem:[#allocation2 + $0x10] sm:$0xf0]
      %v1915 = vld [vmem:[#allocation2 + $0x18] sm:$0xff]
      %v1916 = vld [vmem:[#allocation2 + $0x20] sm:$0xff]
      %v1917 = vld [vmem:[#allocation2 + $0x28] sm:$0xff]
      %v1918 = vld [vmem:[#allocation2 + $0x30] sm:$0xff]
      %v1919 = vld [vmem:[#allocation2 + $0x38] sm:$0xff]
      %v1920 = vld [vmem:[#allocation2 + $0x40] sm:$0xff]
      %v1921 = vld [vmem:[#allocation2 + $0x48] sm:$0xff]
      %v1922 = vld [vmem:[#allocation2 + $0x50] sm:$0xf]
      %v1932 = vrot.slane %v1914, 4
      %v1933 = vrot.slane %v1915, 4
      %v1934 = vsel %vm1103, %v1932, %v1933
      %v1935 = vrot.slane %v1916, 4
      %v1936 = vsel %vm1103, %v1933, %v1935
      %v1937 = vrot.slane %v1917, 4
      %v1938 = vsel %vm1103, %v1935, %v1937
      %v1939 = vrot.slane %v1918, 4
      %v1940 = vsel %vm1103, %v1937, %v1939
      %v1941 = vrot.slane %v1919, 4
      %v1942 = vsel %vm1103, %v1939, %v1941
      %v1943 = vrot.slane %v1920, 4
      %v1944 = vsel %vm1103, %v1941, %v1943
      %v1945 = vrot.slane %v1921, 4
      %v1946 = vsel %vm1103, %v1943, %v1945
      %v1947 = vrot.slane %v1922, 4
      %v1948 = vsel %vm1103, %v1945, %v1947
      %1949 = vrot.lane.b32.xlu0 %v1934, 21
      %v1950 = vpop.permute.xlu0 %1949
      %1951 = vrot.lane.b32.xlu0 %v1936, 21
      %v1952 = vpop.permute.xlu0 %1951
      %1953 = vrot.lane.b32.xlu0 %v1938, 21
      %v1954 = vpop.permute.xlu0 %1953
      %1955 = vrot.lane.b32.xlu0 %v1940, 21
      %v1956 = vpop.permute.xlu0 %1955
      %1957 = vrot.lane.b32.xlu0 %v1942, 21
      %v1958 = vpop.permute.xlu0 %1957
      %1959 = vrot.lane.b32.xlu0 %v1944, 21
      %v1960 = vpop.permute.xlu0 %1959
      %1961 = vrot.lane.b32.xlu0 %v1946, 21
      %v1962 = vpop.permute.xlu0 %1961
      %1963 = vrot.lane.b32.xlu0 %v1948, 21
      %v1964 = vpop.permute.xlu0 %1963
      %vm1973 = vcmask 195752
      %1974 = vst.msk [vmem:[#allocation3] sm:$0xff] %vm1973, %v1950
      %1975 = vst.msk [vmem:[#allocation3 + $0x8] sm:$0xff] %vm1973, %v1952
      %1976 = vst.msk [vmem:[#allocation3 + $0x10] sm:$0xff] %vm1973, %v1954
      %1977 = vst.msk [vmem:[#allocation3 + $0x18] sm:$0xff] %vm1973, %v1956
      %1978 = vst.msk [vmem:[#allocation3 + $0x20] sm:$0xff] %vm1973, %v1958
      %1979 = vst.msk [vmem:[#allocation3 + $0x28] sm:$0xff] %vm1973, %v1960
      %1980 = vst.msk [vmem:[#allocation3 + $0x30] sm:$0xff] %vm1973, %v1962
      %1981 = vst.msk [vmem:[#allocation3 + $0x38] sm:$0xff] %vm1973, %v1964
      %v1982 = vld [vmem:[#allocation2 + $0x10] sm:$0xf0]
      %v1983 = vld [vmem:[#allocation2 + $0x18] sm:$0xff]
      %v1984 = vld [vmem:[#allocation2 + $0x20] sm:$0xff]
      %v1985 = vld [vmem:[#allocation2 + $0x28] sm:$0xff]
      %v1986 = vld [vmem:[#allocation2 + $0x30] sm:$0xff]
      %v1987 = vld [vmem:[#allocation2 + $0x38] sm:$0xff]
      %v1988 = vld [vmem:[#allocation2 + $0x40] sm:$0xff]
      %v1989 = vld [vmem:[#allocation2 + $0x48] sm:$0xff]
      %v1990 = vld [vmem:[#allocation2 + $0x50] sm:$0x1f]
      %v1991 = vsel %vm1322, %v1982, 0
      %v1992 = vsel %vm1323, %v1983, 0
      %v1993 = vsel %vm1324, %v1984, 0
      %v1994 = vsel %vm1325, %v1985, 0
      %v1995 = vsel %vm1326, %v1986, 0
      %v1996 = vsel %vm1327, %v1987, 0
      %v1997 = vsel %vm1328, %v1988, 0
      %v1998 = vsel %vm1329, %v1989, 0
      %v1999 = vsel %vm1330, %v1990, 0
      %v2001 = vshrl.u32 %v1991, 16
      %v2003 = vrot.slane %v2001, 4
      %v2004 = vshll.u32 %v1991, 16
      %v2006 = vrot.slane %v2004, 5
      %v2007 = vor.u32 %v2003, %v2006
      %v2009 = vshrl.u32 %v1992, 16
      %v2011 = vrot.slane %v2009, 4
      %v2012 = vshll.u32 %v1992, 16
      %v2014 = vrot.slane %v2012, 5
      %v2015 = vor.u32 %v2011, %v2014
      %v2016 = vsel %vm898, %v2007, %v2015
      %v2018 = vshrl.u32 %v1993, 16
      %v2020 = vrot.slane %v2018, 4
      %v2021 = vshll.u32 %v1993, 16
      %v2023 = vrot.slane %v2021, 5
      %v2024 = vor.u32 %v2020, %v2023
      %v2025 = vsel %vm898, %v2015, %v2024
      %v2027 = vshrl.u32 %v1994, 16
      %v2029 = vrot.slane %v2027, 4
      %v2030 = vshll.u32 %v1994, 16
      %v2032 = vrot.slane %v2030, 5
      %v2033 = vor.u32 %v2029, %v2032
      %v2034 = vsel %vm898, %v2024, %v2033
      %v2036 = vshrl.u32 %v1995, 16
      %v2038 = vrot.slane %v2036, 4
      %v2039 = vshll.u32 %v1995, 16
      %v2041 = vrot.slane %v2039, 5
      %v2042 = vor.u32 %v2038, %v2041
      %v2043 = vsel %vm898, %v2033, %v2042
      %v2045 = vshrl.u32 %v1996, 16
      %v2047 = vrot.slane %v2045, 4
      %v2048 = vshll.u32 %v1996, 16
      %v2050 = vrot.slane %v2048, 5
      %v2051 = vor.u32 %v2047, %v2050
      %v2052 = vsel %vm898, %v2042, %v2051
      %v2054 = vshrl.u32 %v1997, 16
      %v2056 = vrot.slane %v2054, 4
      %v2057 = vshll.u32 %v1997, 16
      %v2059 = vrot.slane %v2057, 5
      %v2060 = vor.u32 %v2056, %v2059
      %v2061 = vsel %vm898, %v2051, %v2060
      %v2063 = vshrl.u32 %v1998, 16
      %v2065 = vrot.slane %v2063, 4
      %v2066 = vshll.u32 %v1998, 16
      %v2068 = vrot.slane %v2066, 5
      %v2069 = vor.u32 %v2065, %v2068
      %v2070 = vsel %vm898, %v2060, %v2069
      %v2072 = vshrl.u32 %v1999, 16
      %v2074 = vrot.slane %v2072, 4
      %v2075 = vshll.u32 %v1999, 16
      %v2077 = vrot.slane %v2075, 5
      %v2078 = vor.u32 %v2074, %v2077
      %v2079 = vsel %vm898, %v2069, %v2078
      %2080 = vrot.lane.b32.xlu0 %v2016, 24
      %v2081 = vpop.permute.xlu0 %2080
      %2082 = vrot.lane.b32.xlu0 %v2025, 24
      %v2083 = vpop.permute.xlu0 %2082
      %2084 = vrot.lane.b32.xlu0 %v2034, 24
      %v2085 = vpop.permute.xlu0 %2084
      %2086 = vrot.lane.b32.xlu0 %v2043, 24
      %v2087 = vpop.permute.xlu0 %2086
      %2088 = vrot.lane.b32.xlu0 %v2052, 24
      %v2089 = vpop.permute.xlu0 %2088
      %2090 = vrot.lane.b32.xlu0 %v2061, 24
      %v2091 = vpop.permute.xlu0 %2090
      %2092 = vrot.lane.b32.xlu0 %v2070, 24
      %v2093 = vpop.permute.xlu0 %2092
      %2094 = vrot.lane.b32.xlu0 %v2079, 24
      %v2095 = vpop.permute.xlu0 %2094
      %vm2104 = vcmask 220352
      %2105 = vst.msk [vmem:[#allocation3] sm:$0xff] %vm2104, %v2081
      %2106 = vst.msk [vmem:[#allocation3 + $0x8] sm:$0xff] %vm2104, %v2083
      %2107 = vst.msk [vmem:[#allocation3 + $0x10] sm:$0xff] %vm2104, %v2085
      %2108 = vst.msk [vmem:[#allocation3 + $0x18] sm:$0xff] %vm2104, %v2087
      %2109 = vst.msk [vmem:[#allocation3 + $0x20] sm:$0xff] %vm2104, %v2089
      %2110 = vst.msk [vmem:[#allocation3 + $0x28] sm:$0xff] %vm2104, %v2091
      %2111 = vst.msk [vmem:[#allocation3 + $0x30] sm:$0xff] %vm2104, %v2093
      %2112 = vst.msk [vmem:[#allocation3 + $0x38] sm:$0xff] %vm2104, %v2095
      %vm2113 = vcmask 261336
      %2114 = vst.msk [vmem:[#allocation3] sm:$0xff] %vm2113, 0
      %2115 = vst.msk [vmem:[#allocation3 + $0x8] sm:$0xff] %vm2113, 0
      %2116 = vst.msk [vmem:[#allocation3 + $0x10] sm:$0xff] %vm2113, 0
      %2117 = vst.msk [vmem:[#allocation3 + $0x18] sm:$0xff] %vm2113, 0
      %2118 = vst.msk [vmem:[#allocation3 + $0x20] sm:$0xff] %vm2113, 0
      %2119 = vst.msk [vmem:[#allocation3 + $0x28] sm:$0xff] %vm2113, 0
      %2120 = vst.msk [vmem:[#allocation3 + $0x30] sm:$0xff] %vm2113, 0
      %2121 = vst.msk [vmem:[#allocation3 + $0x38] sm:$0xff] %vm2113, 0
      %v2122 = vld [vmem:[#allocation3] sm:$0xff]
      %v2123 = vld [vmem:[#allocation3 + $0x8] sm:$0xff]
      %v2124 = vld [vmem:[#allocation3 + $0x10] sm:$0xff]
      %v2125 = vld [vmem:[#allocation3 + $0x18] sm:$0xff]
      %v2126 = vld [vmem:[#allocation3 + $0x20] sm:$0xff]
      %v2127 = vld [vmem:[#allocation3 + $0x28] sm:$0xff]
      %v2128 = vld [vmem:[#allocation3 + $0x30] sm:$0xff]
      %v2129 = vld [vmem:[#allocation3 + $0x38] sm:$0xff]
      %v2130 = vld [vmem:[%s3] sm:$0xf]
      %v2131 = vld [vmem:[%s3 + $0x4] sm:$0xf]
      %v2132 = vld [vmem:[%s3 + $0x8] sm:$0xf]
      %v2133 = vld [vmem:[%s3 + $0xc] sm:$0xf]
      %v2134 = vld [vmem:[%s4] sm:$0x1]
      %v2136 = vlaneseq
      %v2137 = vshrl.u32 %v2136, 7
      %v2138 = vsub.s32 0, %v2137
      %v2139 = vrot.slane %v2134, %v2138
      %v2145 = vunpack.c.l.b16 %v2130
      %v2146 = vunpack.c.l.b16 %v2131
      %v2147 = vunpack.c.l.b16 %v2132
      %v2148 = vunpack.c.l.b16 %v2133
      %v2149 = vpack.c.b16 %v2146, %v2145
      %v2150 = vpack.c.b16 %v2148, %v2147
      %vm2153 = vcmask 261120
      %v2155 = vsel %vm2153, %v2122, 0
      %v2158 = vsel %vm2153, %v2123, 0
      %v2161 = vsel %vm2153, %v2124, 0
      %v2164 = vsel %vm2153, %v2125, 0
      %v2167 = vsel %vm2153, %v2126, 0
      %v2170 = vsel %vm2153, %v2127, 0
      %v2173 = vsel %vm2153, %v2128, 0
      %v2176 = vsel %vm2153, %v2129, 0
      %2178 = vmatprep.subr.bf16.mxu0 0
      %2179 = vmatpush1.bf16.msra.mxu0 %v2149
      %2180 = vmatprep.subr.bf16.mxu0 0
      %2181 = vmatpush1.bf16.msra.mxu0 %v2150
      %2182 = vmatprep.subr.bf16.mxu0 0
      %2183 = vmatpush1.bf16.msra.mxu0 0
      %2184 = vmatprep.subr.bf16.mxu0 0
      %2185 = vmatpush1.bf16.msra.mxu0 0
      %2186 = vmatprep.subr.bf16.mxu0 0
      %2187 = vmatpush1.bf16.msra.mxu0 0
      %2188 = vmatprep.subr.bf16.mxu0 0
      %2189 = vmatpush1.bf16.msra.mxu0 0
      %2190 = vmatprep.subr.bf16.mxu0 0
      %2191 = vmatpush1.bf16.msra.mxu0 0
      %2192 = vmatprep.subr.bf16.mxu0 0
      %2193 = vmatpush1.bf16.msra.mxu0 0
      %2194 = vmatprep.subr.bf16.mxu0 0
      %2195 = vmatpush1.bf16.msra.mxu0 0
      %2196 = vmatprep.subr.bf16.mxu0 0
      %2197 = vmatpush1.bf16.msra.mxu0 0
      %2198 = vmatprep.subr.bf16.mxu0 0
      %2199 = vmatpush1.bf16.msra.mxu0 0
      %2200 = vmatprep.subr.bf16.mxu0 0
      %2201 = vmatpush1.bf16.msra.mxu0 0
      %2202 = vmatprep.subr.bf16.mxu0 0
      %2203 = vmatpush1.bf16.msra.mxu0 0
      %2204 = vmatprep.subr.bf16.mxu0 0
      %2205 = vmatpush1.bf16.msra.mxu0 0
      %2206 = vmatprep.subr.bf16.mxu0 0
      %2207 = vmatpush1.bf16.msra.mxu0 0
      %2208 = vmatprep.subr.bf16.mxu0 0
      %2209 = vmatpush1.bf16.msra.mxu0 0
      %2210 = vmatprep.mubr.bf16.mxu0 0
      %2211 = vmatmul.mubr.bf16.gmra.mrb[0].mxu0 %v2155
      %v2212 = vpop.f32.mrb[0].mxu0
      %v2213 = vadd.f32 %v2139, %v2212
      %v2214 = vpop.f32.mrb[0].mxu0
      %v2215 = vpop.f32.mrb[0].mxu0
      %v2216 = vadd.f32 %v2139, %v2215
      %v2217 = vpop.f32.mrb[0].mxu0
      %2218 = vmatprep.mubr.bf16.mxu0 0
      %2219 = vmatmul.mubr.bf16.gmra.mrb[0].mxu0 %v2158
      %v2220 = vpop.f32.mrb[0].mxu0
      %v2221 = vadd.f32 %v2139, %v2220
      %v2222 = vpop.f32.mrb[0].mxu0
      %v2223 = vpop.f32.mrb[0].mxu0
      %v2224 = vadd.f32 %v2139, %v2223
      %v2225 = vpop.f32.mrb[0].mxu0
      %2226 = vmatprep.mubr.bf16.mxu0 0
      %2227 = vmatmul.mubr.bf16.gmra.mrb[0].mxu0 %v2161
      %v2228 = vpop.f32.mrb[0].mxu0
      %v2229 = vadd.f32 %v2139, %v2228
      %v2230 = vpop.f32.mrb[0].mxu0
      %v2231 = vpop.f32.mrb[0].mxu0
      %v2232 = vadd.f32 %v2139, %v2231
      %v2233 = vpop.f32.mrb[0].mxu0
      %2234 = vmatprep.mubr.bf16.mxu0 0
      %2235 = vmatmul.mubr.bf16.gmra.mrb[0].mxu0 %v2164
      %v2236 = vpop.f32.mrb[0].mxu0
      %v2237 = vadd.f32 %v2139, %v2236
      %v2238 = vpop.f32.mrb[0].mxu0
      %v2239 = vpop.f32.mrb[0].mxu0
      %v2240 = vadd.f32 %v2139, %v2239
      %v2241 = vpop.f32.mrb[0].mxu0
      %2242 = vmatprep.mubr.bf16.mxu0 0
      %2243 = vmatmul.mubr.bf16.gmra.mrb[0].mxu0 %v2167
      %v2244 = vpop.f32.mrb[0].mxu0
      %v2245 = vadd.f32 %v2139, %v2244
      %v2246 = vpop.f32.mrb[0].mxu0
      %v2247 = vpop.f32.mrb[0].mxu0
      %v2248 = vadd.f32 %v2139, %v2247
      %v2249 = vpop.f32.mrb[0].mxu0
      %2250 = vmatprep.mubr.bf16.mxu0 0
      %2251 = vmatmul.mubr.bf16.gmra.mrb[0].mxu0 %v2170
      %v2252 = vpop.f32.mrb[0].mxu0
      %v2253 = vadd.f32 %v2139, %v2252
      %v2254 = vpop.f32.mrb[0].mxu0
      %v2255 = vpop.f32.mrb[0].mxu0
      %v2256 = vadd.f32 %v2139, %v2255
      %v2257 = vpop.f32.mrb[0].mxu0
      %2258 = vmatprep.mubr.bf16.mxu0 0
      %2259 = vmatmul.mubr.bf16.gmra.mrb[0].mxu0 %v2173
      %v2260 = vpop.f32.mrb[0].mxu0
      %v2261 = vadd.f32 %v2139, %v2260
      %v2262 = vpop.f32.mrb[0].mxu0
      %v2263 = vpop.f32.mrb[0].mxu0
      %v2264 = vadd.f32 %v2139, %v2263
      %v2265 = vpop.f32.mrb[0].mxu0
      %2266 = vmatprep.mubr.bf16.mxu0 0
      %2267 = vmatmul.mubr.bf16.gmra.mrb[0].mxu0 %v2176
      %v2268 = vpop.f32.mrb[0].mxu0
      %v2269 = vadd.f32 %v2139, %v2268
      %v2270 = vpop.f32.mrb[0].mxu0
      %v2271 = vpop.f32.mrb[0].mxu0
      %v2272 = vadd.f32 %v2139, %v2271
      %v2273 = vpop.f32.mrb[0].mxu0
      %2274 = vdwg.mxu0
      %v2275 = vpack.c.bf16 %v2216, %v2213
      %v2276 = vpack.c.bf16 %v2224, %v2221
      %v2277 = vpack.c.bf16 %v2232, %v2229
      %v2278 = vpack.c.bf16 %v2240, %v2237
      %v2279 = vpack.c.bf16 %v2248, %v2245
      %v2280 = vpack.c.bf16 %v2256, %v2253
      %v2281 = vpack.c.bf16 %v2264, %v2261
      %v2282 = vpack.c.bf16 %v2272, %v2269
      %v2291 = vunpack.c.l.b16 %v2275
      %v2292 = vunpack.c.h.b16 %v2275
      %v2293 = vunpack.c.l.b16 %v2276
      %v2294 = vunpack.c.h.b16 %v2276
      %v2295 = vunpack.c.l.b16 %v2277
      %v2296 = vunpack.c.h.b16 %v2277
      %v2297 = vunpack.c.l.b16 %v2278
      %v2298 = vunpack.c.h.b16 %v2278
      %v2299 = vunpack.c.l.b16 %v2279
      %v2300 = vunpack.c.h.b16 %v2279
      %v2301 = vunpack.c.l.b16 %v2280
      %v2302 = vunpack.c.h.b16 %v2280
      %v2303 = vunpack.c.l.b16 %v2281
      %v2304 = vunpack.c.h.b16 %v2281
      %v2305 = vunpack.c.l.b16 %v2282
      %v2306 = vunpack.c.h.b16 %v2282
      %v2307 = vpack.c.b16 %v2291, %v2291
      %v2308 = vpack.c.b16 %v2292, %v2292
      %v2309 = vpack.c.b16 %v2293, %v2293
      %v2310 = vpack.c.b16 %v2294, %v2294
      %v2311 = vpack.c.b16 %v2295, %v2295
      %v2312 = vpack.c.b16 %v2296, %v2296
      %v2313 = vpack.c.b16 %v2297, %v2297
      %v2314 = vpack.c.b16 %v2298, %v2298
      %v2315 = vpack.c.b16 %v2299, %v2299
      %v2316 = vpack.c.b16 %v2300, %v2300
      %v2317 = vpack.c.b16 %v2301, %v2301
      %v2318 = vpack.c.b16 %v2302, %v2302
      %v2319 = vpack.c.b16 %v2303, %v2303
      %v2320 = vpack.c.b16 %v2304, %v2304
      %v2321 = vpack.c.b16 %v2305, %v2305
      %v2322 = vpack.c.b16 %v2306, %v2306
      %vm2339 = vcmask 519168
      %2340 = vst.msk [vmem:[%s429] sm:$0xf] %vm2339, %v2307
      %2341 = vst.msk [vmem:[%s429 + $0x4] sm:$0xf] %vm2339, %v2308
      %2342 = vst.msk [vmem:[%s429 + $0x8] sm:$0xf] %vm2339, %v2309
      %2343 = vst.msk [vmem:[%s429 + $0xc] sm:$0xf] %vm2339, %v2310
      %2344 = vst.msk [vmem:[%s429 + $0x10] sm:$0xf] %vm2339, %v2311
      %2345 = vst.msk [vmem:[%s429 + $0x14] sm:$0xf] %vm2339, %v2312
      %2346 = vst.msk [vmem:[%s429 + $0x18] sm:$0xf] %vm2339, %v2313
      %2347 = vst.msk [vmem:[%s429 + $0x1c] sm:$0xf] %vm2339, %v2314
      %2348 = vst.msk [vmem:[%s429 + $0x20] sm:$0xf] %vm2339, %v2315
      %2349 = vst.msk [vmem:[%s429 + $0x24] sm:$0xf] %vm2339, %v2316
      %2350 = vst.msk [vmem:[%s429 + $0x28] sm:$0xf] %vm2339, %v2317
      %2351 = vst.msk [vmem:[%s429 + $0x2c] sm:$0xf] %vm2339, %v2318
      %2352 = vst.msk [vmem:[%s429 + $0x30] sm:$0xf] %vm2339, %v2319
      %2353 = vst.msk [vmem:[%s429 + $0x34] sm:$0xf] %vm2339, %v2320
      %2354 = vst.msk [vmem:[%s429 + $0x38] sm:$0xf] %vm2339, %v2321
      %2355 = vst.msk [vmem:[%s429 + $0x3c] sm:$0xf] %vm2339, %v2322
      %vm2356 = vcmask 523264
      %v2357 = vsel %vm2356, %v2213, 0.0
      %v2358 = vsel %vm2356, %v2216, 0.0
      %v2359 = vadd.f32 %v2357, %v2358
      %v2360 = vsel %vm2356, %v2221, 0.0
      %v2361 = vadd.f32 %v2359, %v2360
      %v2362 = vsel %vm2356, %v2224, 0.0
      %v2363 = vadd.f32 %v2361, %v2362
      %v2364 = vsel %vm2356, %v2229, 0.0
      %v2365 = vadd.f32 %v2363, %v2364
      %v2366 = vsel %vm2356, %v2232, 0.0
      %v2367 = vadd.f32 %v2365, %v2366
      %v2368 = vsel %vm2356, %v2237, 0.0
      %v2369 = vadd.f32 %v2367, %v2368
      %v2370 = vsel %vm2356, %v2240, 0.0
      %v2371 = vadd.f32 %v2369, %v2370
      %v2372 = vsel %vm2356, %v2245, 0.0
      %v2373 = vadd.f32 %v2371, %v2372
      %v2374 = vsel %vm2356, %v2248, 0.0
      %v2375 = vadd.f32 %v2373, %v2374
      %v2376 = vsel %vm2356, %v2253, 0.0
      %v2377 = vadd.f32 %v2375, %v2376
      %v2378 = vsel %vm2356, %v2256, 0.0
      %v2379 = vadd.f32 %v2377, %v2378
      %v2380 = vsel %vm2356, %v2261, 0.0
      %v2381 = vadd.f32 %v2379, %v2380
      %v2382 = vsel %vm2356, %v2264, 0.0
      %v2383 = vadd.f32 %v2381, %v2382
      %v2384 = vsel %vm2356, %v2269, 0.0
      %v2385 = vadd.f32 %v2383, %v2384
      %v2386 = vsel %vm2356, %v2272, 0.0
      %v2387 = vadd.f32 %v2385, %v2386
      %v2388 = vrot.slane %v2387, 4
      %v2389 = vadd.f32 %v2387, %v2388
      %v2390 = vrot.slane %v2389, 2
      %v2391 = vadd.f32 %v2389, %v2390
      %v2392 = vrot.slane %v2391, 1
      %v2393 = vadd.f32 %v2391, %v2392
      %vm2394 = vcmask 516096
      %2395 = vst.msk [vmem:[%s438] sm:$0x1] %vm2394, %v2393
      %v2396 = vmul.f32 %v2213, %v2213
      %v2397 = vmul.f32 %v2216, %v2216
      %v2398 = vmul.f32 %v2221, %v2221
      %v2399 = vmul.f32 %v2224, %v2224
      %v2400 = vmul.f32 %v2229, %v2229
      %v2401 = vmul.f32 %v2232, %v2232
      %v2402 = vmul.f32 %v2237, %v2237
      %v2403 = vmul.f32 %v2240, %v2240
      %v2404 = vmul.f32 %v2245, %v2245
      %v2405 = vmul.f32 %v2248, %v2248
      %v2406 = vmul.f32 %v2253, %v2253
      %v2407 = vmul.f32 %v2256, %v2256
      %v2408 = vmul.f32 %v2261, %v2261
      %v2409 = vmul.f32 %v2264, %v2264
      %v2410 = vmul.f32 %v2269, %v2269
      %v2411 = vmul.f32 %v2272, %v2272
      %v2412 = vsel %vm2356, %v2396, 0.0
      %v2413 = vsel %vm2356, %v2397, 0.0
      %v2414 = vadd.f32 %v2412, %v2413
      %v2415 = vsel %vm2356, %v2398, 0.0
      %v2416 = vadd.f32 %v2414, %v2415
      %v2417 = vsel %vm2356, %v2399, 0.0
      %v2418 = vadd.f32 %v2416, %v2417
      %v2419 = vsel %vm2356, %v2400, 0.0
      %v2420 = vadd.f32 %v2418, %v2419
      %v2421 = vsel %vm2356, %v2401, 0.0
      %v2422 = vadd.f32 %v2420, %v2421
      %v2423 = vsel %vm2356, %v2402, 0.0
      %v2424 = vadd.f32 %v2422, %v2423
      %v2425 = vsel %vm2356, %v2403, 0.0
      %v2426 = vadd.f32 %v2424, %v2425
      %v2427 = vsel %vm2356, %v2404, 0.0
      %v2428 = vadd.f32 %v2426, %v2427
      %v2429 = vsel %vm2356, %v2405, 0.0
      %v2430 = vadd.f32 %v2428, %v2429
      %v2431 = vsel %vm2356, %v2406, 0.0
      %v2432 = vadd.f32 %v2430, %v2431
      %v2433 = vsel %vm2356, %v2407, 0.0
      %v2434 = vadd.f32 %v2432, %v2433
      %v2435 = vsel %vm2356, %v2408, 0.0
      %v2436 = vadd.f32 %v2434, %v2435
      %v2437 = vsel %vm2356, %v2409, 0.0
      %v2438 = vadd.f32 %v2436, %v2437
      %v2439 = vsel %vm2356, %v2410, 0.0
      %v2440 = vadd.f32 %v2438, %v2439
      %v2441 = vsel %vm2356, %v2411, 0.0
      %v2442 = vadd.f32 %v2440, %v2441
      %v2443 = vrot.slane %v2442, 4
      %v2444 = vadd.f32 %v2442, %v2443
      %v2445 = vrot.slane %v2444, 2
      %v2446 = vadd.f32 %v2444, %v2445
      %v2447 = vrot.slane %v2446, 1
      %v2448 = vadd.f32 %v2446, %v2447
      %2449 = vst.msk [vmem:[%s438 + $0x1] sm:$0x1] %vm2394, %v2448
      %s2450 = smul.u32 %s22, 2
      %s2451 = sadd.s32 %s2450, %s23
      %s2452 = smul.u32 8, %s2451
      %p2453 = scmp.lt.s32.totalorder %s2452, 31
      %s2454 = scalar_select %p2453, %s2452, 31
      %s2455 = smul.addr %s2454, 2
      %s2456 = smul.addr %s2455, 4
      %s2457 = scalar_lea.vmem %s5, %s2456
      %s2458 = smul.u32 %s22, 2
      %s2459 = sadd.s32 %s2458, %s23
      %p2460 = scmp.lt.s32.totalorder %s2459, 3
      %s2461 = scalar_select %p2460, %s2459, 3
      %s2462 = smul.addr %s2461, 2
      %s2463 = scalar_lea.vmem %s6, %s2462
      // Predicated region
      $region41: #{shallow_unet_forward.5} parent=39 // pred_check
        %p2464 = pneg %p200
      $region42: #{shallow_unet_forward.5} parent=39 // pred_check_branch
        %2466 = sbr.rel (%p2464) target = $region44
      $region43: #{shallow_unet_forward.5} parent=39 // pred_region
        %s2467 = smul.u32 %s22, 2
        %s2468 = sadd.s32 %s2467, %s23
        %s2469 = smul.u32 8, %s2468
      $region44: #{shallow_unet_forward.5} parent=39 // pred_fallthru
        _
      // Predicated region
      $region45: #{shallow_unet_forward.5} parent=39 // pred_check
        %p2470 = pneg %p230
      $region46: #{shallow_unet_forward.5} parent=39 // pred_check_branch
        %2472 = sbr.rel (%p2470) target = $region48
      $region47: #{shallow_unet_forward.5} parent=39 // pred_region
        %s2473 = smul.u32 %s22, 2
        %s2474 = sadd.s32 %s2473, %s23
      $region48: #{shallow_unet_forward.5} parent=39 // pred_fallthru
        _
    $region40: #{shallow_unet_forward.5} parent=5 // pred_fallthru
      _
    %p2475 = scmp.le.s32.totalorder 2, %s13
    // Predicated region
    $region49: #{shallow_unet_forward.5} parent=5 // pred_check
      %p2476 = pneg %p2475
    $region50: #{shallow_unet_forward.5} parent=5 // pred_check_branch
      %2478 = sbr.rel (%p2476) target = $region52
    $region51: #{shallow_unet_forward.5} parent=5 // pred_region
      %s2479 = ssub.s32 %s13, 2
      // Predicated region
      $region53: #{shallow_unet_forward.5} parent=51 // pred_check
        %p2480 = pneg %p206
      $region54: #{shallow_unet_forward.5} parent=51 // pred_check_branch
        %2482 = sbr.rel (%p2480) target = $region56
      $region55: #{shallow_unet_forward.5} parent=51 // pred_region
        %s2483 = smul.u32 %s24, 2
        %s2484 = sadd.s32 %s2483, %s25
        %s2485 = smul.u32 8, %s2484
        %p2486 = scmp.lt.s32.totalorder %s2485, 31
        %s2487 = scalar_select %p2486, %s2485, 31
        %s2488 = smul.addr %s2487, 2
        %s2489 = smul.addr %s2488, 4
        %s2490 = scalar_lea.vmem %s5, %s2489
      $region56: #{shallow_unet_forward.5} parent=51 // pred_fallthru
        _
      // Predicated region
      $region57: #{shallow_unet_forward.5} parent=51 // pred_check
        %p2491 = pneg %p236
      $region58: #{shallow_unet_forward.5} parent=51 // pred_check_branch
        %2493 = sbr.rel (%p2491) target = $region60
      $region59: #{shallow_unet_forward.5} parent=51 // pred_region
        %s2494 = smul.u32 %s24, 2
        %s2495 = sadd.s32 %s2494, %s25
        %p2496 = scmp.lt.s32.totalorder %s2495, 3
        %s2497 = scalar_select %p2496, %s2495, 3
        %s2498 = smul.addr %s2497, 2
        %s2499 = scalar_lea.vmem %s6, %s2498
      $region60: #{shallow_unet_forward.5} parent=51 // pred_fallthru
        _
    $region52: #{shallow_unet_forward.5} parent=5 // pred_fallthru
      _
  $region6: #{shallow_unet_forward.5} parent=0 // loop_footer
    %s17 = sadd.s32 1, %s13
  $region7: #{shallow_unet_forward.5} parent=0 // loop_footer_branch
    %12 = sbr.rel target = $region3
  $region8: #{shallow_unet_forward.5} parent=0 // loop_exit
    _

// kernel: shallow_unet_forward.9
$region0: #{shallow_unet_forward.9}
  #allocation0 [shape = 'u32[]', space=smem, size = 0x4, offset = 0x4, fixed_abs, tag = 'smem constant byte address 0x4 - core index']
  #allocation1 [shape = 'u32[144,128]{1,0:T(1,128)}', space=vmem, size = 0x12000, scoped, tag = 'internal scratch']
  %s0 = inlined_call_operand.vmem [shape: bf16[512,64], index: 0, kind: input, shape index: {}]
  %s1 = inlined_call_operand.vmem [shape: f32[1,64], index: 1, kind: input, shape index: {}]
  %s2 = inlined_call_operand.vmem [shape: f32[1,64], index: 2, kind: input, shape index: {}]
  %s3 = inlined_call_operand.hbm [shape: f32[512,64], index: 3, kind: output, shape index: {}]
  %s4 = sld [smem:[#allocation0]]
  $region45: #{shallow_unet_forward.9} parent=0
    _
  %s6 = ssub.s32 1, %s4
  %s7 = scalar_select 0, %s6, %s4
  $region1: #{shallow_unet_forward.9} parent=0
    #allocation2 [shape = 'u8[262144]{0}', space=vmem, size = 0x40000, scoped, tag = 'output window, operand 0']
    #allocation3 [shape = 's32[2]{0}', space=sflag, size = 0x8, scoped, tag = 'scoped memory for shallow_unet_forward.9']
    %8 = vsyncpa [#allocation3], 0
    %s9 = scalar_lea.sflag [#allocation3], 1
    %10 = vsyncpa %s9, 0
    loop: start=0, step=1, limit=4
    $region2: #{shallow_unet_forward.9} parent=1 // loop_pre_header
      _
    $region3: #{shallow_unet_forward.9} parent=1 // loop_header
      %s12 = sphi 0, %s16
      %p13 = scmp.ge.s32.totalorder %s12, 4
      %s22 = sphi 0, %s24
      %s25 = sphi 0, %s22
      %s26 = sphi 0, %s25
      %s42 = sphi 0, %s26
      %s46 = sphi 0, %s46
      %s48 = sphi 0, %s46
      %s49 = sphi 0, %s48
      %s63 = sphi 0, %s49
      %s67 = sphi 0, %s67
      %s69 = sphi 0, %s67
      %s70 = sphi 0, %s69
      %s84 = sphi 0, %s70
      %s90 = sphi 0, %s92
      %s93 = sphi 0, %s90
      %s94 = sphi 0, %s93
      %s110 = sphi 0, %s94
    $region4: #{shallow_unet_forward.9} parent=1 // loop_header_branch
      %15 = sbr.rel (%p13) target = $region8
    $region5: #{shallow_unet_forward.9} parent=1 // loop_body
      %s17 = ssub.s32 %s12, 1
      %s18 = ssub.s32 %s12, 2
      %s19 = sadd.s32 %s12, 1
      %s20 = ssub.s32 %s12, %s19
      %p21 = scmp.eq.s32.totalorder %s20, 0
      %s23 = sadd.s32 %s22, 1
      %s24 = scalar_select %p21, %s22, %s23
      %p27 = pneg %p21
      %p28 = scmp.eq.s32.totalorder %s12, 1
      %p29 = por %p27, %p28
      %p30 = scmp.ne.s32.totalorder %s22, %s25
      %p31 = scmp.eq.s32.totalorder %s12, 0
      %p32 = por %p30, %p31
      %p33 = scmp.ne.s32.totalorder %s22, %s25
      %p34 = scmp.eq.s32.totalorder %s17, 1
      %p35 = por %p33, %p34
      %p36 = scmp.ne.s32.totalorder %s25, %s26
      %p37 = scmp.eq.s32.totalorder %s17, 0
      %p38 = por %p36, %p37
      %p39 = scmp.ne.s32.totalorder %s25, %s26
      %p40 = scmp.eq.s32.totalorder %s18, 1
      %p41 = por %p39, %p40
      %p43 = scmp.ne.s32.totalorder %s26, %s42
      %p44 = scmp.eq.s32.totalorder %s18, 0
      %p45 = por %p43, %p44
      %s47 = sadd.s32 %s46, 1
      %p50 = scmp.eq.s32.totalorder %s12, 1
      %p51 = scmp.ne.s32.totalorder %s46, %s48
      %p52 = scmp.eq.s32.totalorder %s12, 0
      %p53 = por %p51, %p52
      %p54 = scmp.ne.s32.totalorder %s46, %s48
      %p55 = scmp.eq.s32.totalorder %s17, 1
      %p56 = por %p54, %p55
      %p57 = scmp.ne.s32.totalorder %s48, %s49
      %p58 = scmp.eq.s32.totalorder %s17, 0
      %p59 = por %p57, %p58
      %p60 = scmp.ne.s32.totalorder %s48, %s49
      %p61 = scmp.eq.s32.totalorder %s18, 1
      %p62 = por %p60, %p61
      %p64 = scmp.ne.s32.totalorder %s49, %s63
      %p65 = scmp.eq.s32.totalorder %s18, 0
      %p66 = por %p64, %p65
      %s68 = sadd.s32 %s67, 1
      %p71 = scmp.eq.s32.totalorder %s12, 1
      %p72 = scmp.ne.s32.totalorder %s67, %s69
      %p73 = scmp.eq.s32.totalorder %s12, 0
      %p74 = por %p72, %p73
      %p75 = scmp.ne.s32.totalorder %s67, %s69
      %p76 = scmp.eq.s32.totalorder %s17, 1
      %p77 = por %p75, %p76
      %p78 = scmp.ne.s32.totalorder %s69, %s70
      %p79 = scmp.eq.s32.totalorder %s17, 0
      %p80 = por %p78, %p79
      %p81 = scmp.ne.s32.totalorder %s69, %s70
      %p82 = scmp.eq.s32.totalorder %s18, 1
      %p83 = por %p81, %p82
      %p85 = scmp.ne.s32.totalorder %s70, %s84
      %p86 = scmp.eq.s32.totalorder %s18, 0
      %p87 = por %p85, %p86
      %s88 = ssub.s32 %s12, %s19
      %p89 = scmp.eq.s32.totalorder %s88, 0
      %s91 = sadd.s32 %s90, 1
      %s92 = scalar_select %p89, %s90, %s91
      %p95 = pneg %p89
      %p96 = scmp.eq.s32.totalorder %s12, 1
      %p97 = por %p95, %p96
      %p98 = scmp.ne.s32.totalorder %s90, %s93
      %p99 = scmp.eq.s32.totalorder %s12, 0
      %p100 = por %p98, %p99
      %p101 = scmp.ne.s32.totalorder %s90, %s93
      %p102 = scmp.eq.s32.totalorder %s17, 1
      %p103 = por %p101, %p102
      %p104 = scmp.ne.s32.totalorder %s93, %s94
      %p105 = scmp.eq.s32.totalorder %s17, 0
      %p106 = por %p104, %p105
      %p107 = scmp.ne.s32.totalorder %s93, %s94
      %p108 = scmp.eq.s32.totalorder %s18, 1
      %p109 = por %p107, %p108
      %p111 = scmp.ne.s32.totalorder %s94, %s110
      %p112 = scmp.eq.s32.totalorder %s18, 0
      %p113 = por %p111, %p112
      %p114 = scmp.le.s32.totalorder 1, %s12
      %p115 = scmp.lt.s32.totalorder %s12, 3
      %p116 = pnand %p114, %p115
      %p117 = pneg %p116
      // Predicated region
      $region9: #{shallow_unet_forward.9} parent=5 // pred_check
        _
      $region10: #{shallow_unet_forward.9} parent=5 // pred_check_branch
        %119 = sbr.rel (%p116) target = $region12
      $region11: #{shallow_unet_forward.9} parent=5 // pred_region
        %s120 = ssub.s32 %s12, 1
        // Predicated region
        $region13: #{shallow_unet_forward.9} parent=11 // pred_check
          %p121 = pneg %p59
        $region14: #{shallow_unet_forward.9} parent=11 // pred_check_branch
          %123 = sbr.rel (%p121) target = $region16
        $region15: #{shallow_unet_forward.9} parent=11 // pred_region
          _
        $region16: #{shallow_unet_forward.9} parent=11 // pred_fallthru
          _
        // Predicated region
        $region17: #{shallow_unet_forward.9} parent=11 // pred_check
          %p124 = pneg %p80
        $region18: #{shallow_unet_forward.9} parent=11 // pred_check_branch
          %126 = sbr.rel (%p124) target = $region20
        $region19: #{shallow_unet_forward.9} parent=11 // pred_region
          _
        $region20: #{shallow_unet_forward.9} parent=11 // pred_fallthru
          _
      $region12: #{shallow_unet_forward.9} parent=5 // pred_fallthru
        _
      %p127 = scmp.lt.s32.totalorder %s12, 2
      // Predicated region
      $region21: #{shallow_unet_forward.9} parent=5 // pred_check
        %p128 = pneg %p127
      $region22: #{shallow_unet_forward.9} parent=5 // pred_check_branch
        %130 = sbr.rel (%p128) target = $region24
      $region23: #{shallow_unet_forward.9} parent=5 // pred_region
        // Predicated region
        $region25: #{shallow_unet_forward.9} parent=23 // pred_check
          %p131 = pneg %p32
        $region26: #{shallow_unet_forward.9} parent=23 // pred_check_branch
          %133 = sbr.rel (%p131) target = $region28
        $region27: #{shallow_unet_forward.9} parent=23 // pred_region
          %s134 = smul.u32 32, %s12
          %p135 = scmp.lt.s32.totalorder %s134, 63
          %s136 = scalar_select %p135, %s134, 63
          %s137 = smul.addr %s136, 4
          %s138 = scalar_lea.vmem %s0, %s137
          %s139 = smul.u32 32, %s12
        $region28: #{shallow_unet_forward.9} parent=23 // pred_fallthru
          _
      $region24: #{shallow_unet_forward.9} parent=5 // pred_fallthru
        _
      %p140 = scmp.le.s32.totalorder 1, %s12
      %p141 = scmp.lt.s32.totalorder %s12, 3
      %p142 = pnand %p140, %p141
      %p143 = pneg %p142
      // Predicated region
      $region29: #{shallow_unet_forward.9} parent=5 // pred_check
        _
      $region30: #{shallow_unet_forward.9} parent=5 // pred_check_branch
        %145 = sbr.rel (%p142) target = $region32
      $region31: #{shallow_unet_forward.9} parent=5 // pred_region
        %s146 = ssub.s32 %s12, 1
        %s147 = smul.u32 32, %s17
        %p148 = scmp.lt.s32.totalorder %s147, 63
        %s149 = scalar_select %p148, %s147, 63
        %s150 = smul.addr %s149, 4
        %s151 = scalar_lea.vmem %s0, %s150
        %p152 = pneg %p38
        %p153 = pneg %p35
        %p154 = pneg %p59
        %p155 = pneg %p56
        %p156 = pneg %p80
        %p157 = pneg %p77
        %p158 = pneg %p106
        %p159 = pneg %p103
        %s160 = sand.u32 %s93, 1
        %s161 = scalar_lea.sflag [#allocation3], %s160
        %s162 = sand.u32 %s93, 1
        %s163 = smul.addr %s162, 256
        %s164 = scalar_lea.vmem [#allocation2], %s163
        %s165 = smul.u32 32, %s17
        %p166 = scmp.lt.s32.totalorder %s165, 63
        %s167 = scalar_select %p166, %s165, 63
        %s168 = smul.addr %s167, 4
        %s169 = scalar_lea.vmem %s0, %s168
        %s170 = smul.u32 32, %s17
        %s171 = smul.u32 32, %s17
        %v172 = vld [vmem:[%s169] sm:$0xf]
        %v173 = vld [vmem:[%s169 + $0x4] sm:$0xf]
        %v174 = vld [vmem:[%s169 + $0x8] sm:$0xf]
        %v175 = vld [vmem:[%s169 + $0xc] sm:$0xf]
        %v176 = vld [vmem:[%s169 + $0x10] sm:$0xf]
        %v177 = vld [vmem:[%s169 + $0x14] sm:$0xf]
        %v178 = vld [vmem:[%s169 + $0x18] sm:$0xf]
        %v179 = vld [vmem:[%s169 + $0x1c] sm:$0xf]
        %v180 = vld [vmem:[%s169 + $0x20] sm:$0xf]
        %v181 = vld [vmem:[%s169 + $0x24] sm:$0xf]
        %v182 = vld [vmem:[%s169 + $0x28] sm:$0xf]
        %v183 = vld [vmem:[%s169 + $0x2c] sm:$0xf]
        %v184 = vld [vmem:[%s169 + $0x30] sm:$0xf]
        %v185 = vld [vmem:[%s169 + $0x34] sm:$0xf]
        %v186 = vld [vmem:[%s169 + $0x38] sm:$0xf]
        %v187 = vld [vmem:[%s169 + $0x3c] sm:$0xf]
        %v188 = vld [vmem:[%s169 + $0x40] sm:$0xf]
        %v189 = vld [vmem:[%s169 + $0x44] sm:$0xf]
        %v190 = vld [vmem:[%s169 + $0x48] sm:$0xf]
        %v191 = vld [vmem:[%s169 + $0x4c] sm:$0xf]
        %v192 = vld [vmem:[%s169 + $0x50] sm:$0xf]
        %v193 = vld [vmem:[%s169 + $0x54] sm:$0xf]
        %v194 = vld [vmem:[%s169 + $0x58] sm:$0xf]
        %v195 = vld [vmem:[%s169 + $0x5c] sm:$0xf]
        %v196 = vld [vmem:[%s169 + $0x60] sm:$0xf]
        %v197 = vld [vmem:[%s169 + $0x64] sm:$0xf]
        %v198 = vld [vmem:[%s169 + $0x68] sm:$0xf]
        %v199 = vld [vmem:[%s169 + $0x6c] sm:$0xf]
        %v200 = vld [vmem:[%s169 + $0x70] sm:$0xf]
        %v201 = vld [vmem:[%s169 + $0x74] sm:$0xf]
        %v202 = vld [vmem:[%s169 + $0x78] sm:$0xf]
        %v203 = vld [vmem:[%s169 + $0x7c] sm:$0xf]
        %v204 = vunpack.c.l.bf16 %v172
        %v205 = vunpack.c.l.bf16 %v173
        %v206 = vunpack.c.l.bf16 %v174
        %v207 = vunpack.c.l.bf16 %v175
        %v208 = vunpack.c.l.bf16 %v176
        %v209 = vunpack.c.l.bf16 %v177
        %v210 = vunpack.c.l.bf16 %v178
        %v211 = vunpack.c.l.bf16 %v179
        %v212 = vunpack.c.l.bf16 %v180
        %v213 = vunpack.c.l.bf16 %v181
        %v214 = vunpack.c.l.bf16 %v182
        %v215 = vunpack.c.l.bf16 %v183
        %v216 = vunpack.c.l.bf16 %v184
        %v217 = vunpack.c.l.bf16 %v185
        %v218 = vunpack.c.l.bf16 %v186
        %v219 = vunpack.c.l.bf16 %v187
        %v220 = vunpack.c.l.bf16 %v188
        %v221 = vunpack.c.l.bf16 %v189
        %v222 = vunpack.c.l.bf16 %v190
        %v223 = vunpack.c.l.bf16 %v191
        %v224 = vunpack.c.l.bf16 %v192
        %v225 = vunpack.c.l.bf16 %v193
        %v226 = vunpack.c.l.bf16 %v194
        %v227 = vunpack.c.l.bf16 %v195
        %v228 = vunpack.c.l.bf16 %v196
        %v229 = vunpack.c.l.bf16 %v197
        %v230 = vunpack.c.l.bf16 %v198
        %v231 = vunpack.c.l.bf16 %v199
        %v232 = vunpack.c.l.bf16 %v200
        %v233 = vunpack.c.l.bf16 %v201
        %v234 = vunpack.c.l.bf16 %v202
        %v235 = vunpack.c.l.bf16 %v203
        %v236 = vld [vmem:[%s1] sm:$0x1]
        %v238 = vlaneseq
        %v239 = vshrl.u32 %v238, 7
        %v240 = vsub.s32 0, %v239
        %v241 = vrot.slane %v236, %v240
        %v243 = vmul.f32 %v204, %v241
        %v244 = vmul.f32 %v205, %v241
        %v245 = vmul.f32 %v206, %v241
        %v246 = vmul.f32 %v207, %v241
        %v247 = vmul.f32 %v208, %v241
        %v248 = vmul.f32 %v209, %v241
        %v249 = vmul.f32 %v210, %v241
        %v250 = vmul.f32 %v211, %v241
        %v251 = vmul.f32 %v212, %v241
        %v252 = vmul.f32 %v213, %v241
        %v253 = vmul.f32 %v214, %v241
        %v254 = vmul.f32 %v215, %v241
        %v255 = vmul.f32 %v216, %v241
        %v256 = vmul.f32 %v217, %v241
        %v257 = vmul.f32 %v218, %v241
        %v258 = vmul.f32 %v219, %v241
        %v259 = vmul.f32 %v220, %v241
        %v260 = vmul.f32 %v221, %v241
        %v261 = vmul.f32 %v222, %v241
        %v262 = vmul.f32 %v223, %v241
        %v263 = vmul.f32 %v224, %v241
        %v264 = vmul.f32 %v225, %v241
        %v265 = vmul.f32 %v226, %v241
        %v266 = vmul.f32 %v227, %v241
        %v267 = vmul.f32 %v228, %v241
        %v268 = vmul.f32 %v229, %v241
        %v269 = vmul.f32 %v230, %v241
        %v270 = vmul.f32 %v231, %v241
        %v271 = vmul.f32 %v232, %v241
        %v272 = vmul.f32 %v233, %v241
        %v273 = vmul.f32 %v234, %v241
        %v274 = vmul.f32 %v235, %v241
        %v275 = vld [vmem:[%s2] sm:$0x1]
        %v277 = vlaneseq
        %v278 = vshrl.u32 %v277, 7
        %v279 = vsub.s32 0, %v278
        %v280 = vrot.slane %v275, %v279
        %v282 = vadd.f32 %v243, %v280
        %v283 = vadd.f32 %v244, %v280
        %v284 = vadd.f32 %v245, %v280
        %v285 = vadd.f32 %v246, %v280
        %v286 = vadd.f32 %v247, %v280
        %v287 = vadd.f32 %v248, %v280
        %v288 = vadd.f32 %v249, %v280
        %v289 = vadd.f32 %v250, %v280
        %v290 = vadd.f32 %v251, %v280
        %v291 = vadd.f32 %v252, %v280
        %v292 = vadd.f32 %v253, %v280
        %v293 = vadd.f32 %v254, %v280
        %v294 = vadd.f32 %v255, %v280
        %v295 = vadd.f32 %v256, %v280
        %v296 = vadd.f32 %v257, %v280
        %v297 = vadd.f32 %v258, %v280
        %v298 = vadd.f32 %v259, %v280
        %v299 = vadd.f32 %v260, %v280
        %v300 = vadd.f32 %v261, %v280
        %v301 = vadd.f32 %v262, %v280
        %v302 = vadd.f32 %v263, %v280
        %v303 = vadd.f32 %v264, %v280
        %v304 = vadd.f32 %v265, %v280
        %v305 = vadd.f32 %v266, %v280
        %v306 = vadd.f32 %v267, %v280
        %v307 = vadd.f32 %v268, %v280
        %v308 = vadd.f32 %v269, %v280
        %v309 = vadd.f32 %v270, %v280
        %v310 = vadd.f32 %v271, %v280
        %v311 = vadd.f32 %v272, %v280
        %v312 = vadd.f32 %v273, %v280
        %v313 = vadd.f32 %v274, %v280
        %v314 = vmax.f32 %v282, 0.0
        %v315 = vmax.f32 %v283, 0.0
        %v316 = vmax.f32 %v284, 0.0
        %v317 = vmax.f32 %v285, 0.0
        %v318 = vmax.f32 %v286, 0.0
        %v319 = vmax.f32 %v287, 0.0
        %v320 = vmax.f32 %v288, 0.0
        %v321 = vmax.f32 %v289, 0.0
        %v322 = vmax.f32 %v290, 0.0
        %v323 = vmax.f32 %v291, 0.0
        %v324 = vmax.f32 %v292, 0.0
        %v325 = vmax.f32 %v293, 0.0
        %v326 = vmax.f32 %v294, 0.0
        %v327 = vmax.f32 %v295, 0.0
        %v328 = vmax.f32 %v296, 0.0
        %v329 = vmax.f32 %v297, 0.0
        %v330 = vmax.f32 %v298, 0.0
        %v331 = vmax.f32 %v299, 0.0
        %v332 = vmax.f32 %v300, 0.0
        %v333 = vmax.f32 %v301, 0.0
        %v334 = vmax.f32 %v302, 0.0
        %v335 = vmax.f32 %v303, 0.0
        %v336 = vmax.f32 %v304, 0.0
        %v337 = vmax.f32 %v305, 0.0
        %v338 = vmax.f32 %v306, 0.0
        %v339 = vmax.f32 %v307, 0.0
        %v340 = vmax.f32 %v308, 0.0
        %v341 = vmax.f32 %v309, 0.0
        %v342 = vmax.f32 %v310, 0.0
        %v343 = vmax.f32 %v311, 0.0
        %v344 = vmax.f32 %v312, 0.0
        %v345 = vmax.f32 %v313, 0.0
        %vm346 = vcmask 523264
        %347 = vst.msk [vmem:[%s164] sm:$0xff] %vm346, %v314
        %348 = vst.msk [vmem:[%s164 + $0x8] sm:$0xff] %vm346, %v315
        %349 = vst.msk [vmem:[%s164 + $0x10] sm:$0xff] %vm346, %v316
        %350 = vst.msk [vmem:[%s164 + $0x18] sm:$0xff] %vm346, %v317
        %351 = vst.msk [vmem:[%s164 + $0x20] sm:$0xff] %vm346, %v318
        %352 = vst.msk [vmem:[%s164 + $0x28] sm:$0xff] %vm346, %v319
        %353 = vst.msk [vmem:[%s164 + $0x30] sm:$0xff] %vm346, %v320
        %354 = vst.msk [vmem:[%s164 + $0x38] sm:$0xff] %vm346, %v321
        %355 = vst.msk [vmem:[%s164 + $0x40] sm:$0xff] %vm346, %v322
        %356 = vst.msk [vmem:[%s164 + $0x48] sm:$0xff] %vm346, %v323
        %357 = vst.msk [vmem:[%s164 + $0x50] sm:$0xff] %vm346, %v324
        %358 = vst.msk [vmem:[%s164 + $0x58] sm:$0xff] %vm346, %v325
        %359 = vst.msk [vmem:[%s164 + $0x60] sm:$0xff] %vm346, %v326
        %360 = vst.msk [vmem:[%s164 + $0x68] sm:$0xff] %vm346, %v327
        %361 = vst.msk [vmem:[%s164 + $0x70] sm:$0xff] %vm346, %v328
        %362 = vst.msk [vmem:[%s164 + $0x78] sm:$0xff] %vm346, %v329
        %363 = vst.msk [vmem:[%s164 + $0x80] sm:$0xff] %vm346, %v330
        %364 = vst.msk [vmem:[%s164 + $0x88] sm:$0xff] %vm346, %v331
        %365 = vst.msk [vmem:[%s164 + $0x90] sm:$0xff] %vm346, %v332
        %366 = vst.msk [vmem:[%s164 + $0x98] sm:$0xff] %vm346, %v333
        %367 = vst.msk [vmem:[%s164 + $0xa0] sm:$0xff] %vm346, %v334
        %368 = vst.msk [vmem:[%s164 + $0xa8] sm:$0xff] %vm346, %v335
        %369 = vst.msk [vmem:[%s164 + $0xb0] sm:$0xff] %vm346, %v336
        %370 = vst.msk [vmem:[%s164 + $0xb8] sm:$0xff] %vm346, %v337
        %371 = vst.msk [vmem:[%s164 + $0xc0] sm:$0xff] %vm346, %v338
        %372 = vst.msk [vmem:[%s164 + $0xc8] sm:$0xff] %vm346, %v339
        %373 = vst.msk [vmem:[%s164 + $0xd0] sm:$0xff] %vm346, %v340
        %374 = vst.msk [vmem:[%s164 + $0xd8] sm:$0xff] %vm346, %v341
        %375 = vst.msk [vmem:[%s164 + $0xe0] sm:$0xff] %vm346, %v342
        %376 = vst.msk [vmem:[%s164 + $0xe8] sm:$0xff] %vm346, %v343
        %377 = vst.msk [vmem:[%s164 + $0xf0] sm:$0xff] %vm346, %v344
        %378 = vst.msk [vmem:[%s164 + $0xf8] sm:$0xff] %vm346, %v345
        %s379 = sand.u32 %s93, 1
        %s380 = scalar_lea.sflag [#allocation3], %s379
        %s381 = sand.u32 %s93, 1
        %s382 = smul.addr %s381, 256
        %s383 = scalar_lea.vmem [#allocation2], %s382
        // Predicated region
        $region33: #{shallow_unet_forward.9} parent=31 // pred_check
          %p384 = pneg %p103
        $region34: #{shallow_unet_forward.9} parent=31 // pred_check_branch
          %386 = sbr.rel (%p384) target = $region36
        $region35: #{shallow_unet_forward.9} parent=31 // pred_region
          %s387 = smul.u32 32, %s17
          %s389 = ssub.s32 4096, 4096
          %390 = vsyncadd %s380, %s389
          %s391 = smul.addr %s387, 128
          %s392 = scalar_lea.hbm %s3, %s391
          %s393 = sshll.u32 %s383, 4
          %s394 = int_to_ptr.vmem [resolvable:$true] %s393
          %399 = dma.vmem_to_hbm [thread:$0]  %s394, 4096, %s392, %s380, 128, 128, 8
        $region36: #{shallow_unet_forward.9} parent=31 // pred_fallthru
          _
      $region32: #{shallow_unet_forward.9} parent=5 // pred_fallthru
        _
      %p400 = scmp.le.s32.totalorder 2, %s12
      // Predicated region
      $region37: #{shallow_unet_forward.9} parent=5 // pred_check
        %p401 = pneg %p400
      $region38: #{shallow_unet_forward.9} parent=5 // pred_check_branch
        %403 = sbr.rel (%p401) target = $region40
      $region39: #{shallow_unet_forward.9} parent=5 // pred_region
        %s404 = ssub.s32 %s12, 2
        // Predicated region
        $region41: #{shallow_unet_forward.9} parent=39 // pred_check
          %p405 = pneg %p109
        $region42: #{shallow_unet_forward.9} parent=39 // pred_check_branch
          %407 = sbr.rel (%p405) target = $region44
        $region43: #{shallow_unet_forward.9} parent=39 // pred_region
          %s408 = sand.u32 %s94, 1
          %s409 = scalar_lea.sflag [#allocation3], %s408
          %s410 = sand.u32 %s94, 1
          %s411 = smul.addr %s410, 256
          %s412 = scalar_lea.vmem [#allocation2], %s411
          %413 = dma.done %s409, 4096
        $region44: #{shallow_unet_forward.9} parent=39 // pred_fallthru
          _
      $region40: #{shallow_unet_forward.9} parent=5 // pred_fallthru
        _
    $region6: #{shallow_unet_forward.9} parent=1 // loop_footer
      %s16 = sadd.s32 1, %s12
    $region7: #{shallow_unet_forward.9} parent=1 // loop_footer_branch
      %11 = sbr.rel target = $region3
    $region8: #{shallow_unet_forward.9} parent=1 // loop_exit
      _
    %414 = vsyncpa [#allocation3], 1
    %s415 = scalar_lea.sflag [#allocation3], 1
    %416 = vsyncpa %s415, 1

// kernel: shallow_unet_forward.8
$region0: #{shallow_unet_forward.8}
  #allocation0 [shape = 'u32[]', space=smem, size = 0x4, offset = 0x4, fixed_abs, tag = 'smem constant byte address 0x4 - core index']
  #allocation1 [shape = 'u32[144,128]{1,0:T(1,128)}', space=vmem, size = 0x12000, scoped, tag = 'internal scratch']
  #allocation2 [shape = 'bf16[176,64]{1,0:T(16,128)(2,1)}', space=vmem, size = 0xb000, scoped, tag = 'scratch operand']
  #allocation3 [shape = 'bf16[176,64]{1,0:T(16,128)(2,1)}', space=vmem, size = 0xb000, scoped, tag = 'scratch operand']
  #allocation4 [shape = 'bf16[128,1152]{1,0:T(16,128)(2,1)}', space=vmem, size = 0x48000, scoped, tag = 'scratch operand']
  %s0 = inlined_call_operand.vmem [shape: bf16[32,16,64], index: 0, kind: input, shape index: {}, may-alias: {0,1,2}]
  %s1 = inlined_call_operand.vmem [shape: bf16[32,16,64], index: 1, kind: input, shape index: {}, may-alias: {0,1,2}]
  %s2 = inlined_call_operand.vmem [shape: bf16[32,16,64], index: 2, kind: input, shape index: {}, may-alias: {0,1,2}]
  %s3 = inlined_call_operand.vmem [shape: bf16[32,16,64], index: 3, kind: input, shape index: {}, may-alias: {3,4,5}]
  %s4 = inlined_call_operand.vmem [shape: bf16[32,16,64], index: 4, kind: input, shape index: {}, may-alias: {3,4,5}]
  %s5 = inlined_call_operand.vmem [shape: bf16[32,16,64], index: 5, kind: input, shape index: {}, may-alias: {3,4,5}]
  %s6 = inlined_call_operand.vmem [shape: f32[1,64], index: 6, kind: input, shape index: {}]
  %s7 = inlined_call_operand.vmem [shape: f32[1,64], index: 7, kind: input, shape index: {}]
  %s8 = inlined_call_operand.vmem [shape: bf16[1152,64], index: 8, kind: input, shape index: {}]
  %s9 = inlined_call_operand.vmem [shape: f32[1,64], index: 9, kind: input, shape index: {}]
  %s10 = inlined_call_operand.vmem [shape: bf16[32,16,64], index: 10, kind: output, shape index: {0}]
  %s11 = inlined_call_operand.vmem [shape: f32[4,2,64], index: 11, kind: output, shape index: {1}]
  %12 = xla_tuple %s10, %s11
  %s13 = sld [smem:[#allocation0]]
  $region81: #{shallow_unet_forward.8} parent=0
    _
  %s15 = ssub.s32 1, %s13
  %s16 = scalar_select 0, %s15, %s13
  loop: start=0, step=1, limit=6
  $region2: #{shallow_unet_forward.8} parent=0 // loop_pre_header
    _
  $region3: #{shallow_unet_forward.8} parent=0 // loop_header
    %s18 = sphi 0, %s22
    %p19 = scmp.ge.s32.totalorder %s18, 6
    %s25 = sphi 0, %s37
    %s26 = sphi 0, %s33
    %s27 = sphi 0, %s25
    %s28 = sphi 0, %s26
    %s29 = sphi 0, %s27
    %s30 = sphi 0, %s28
    %s44 = sphi 0, %s46
    %s47 = sphi 0, %s44
    %s48 = sphi 0, %s47
    %s64 = sphi 0, %s48
    %s82 = sphi 0, %s84
    %s85 = sphi 0, %s82
    %s86 = sphi 0, %s85
    %s102 = sphi 0, %s86
    %s120 = sphi 0, %s122
    %s123 = sphi 0, %s120
    %s124 = sphi 0, %s123
    %s140 = sphi 0, %s124
    %s150 = sphi 0, %s152
    %s153 = sphi 0, %s150
    %s154 = sphi 0, %s153
    %s170 = sphi 0, %s154
    %s188 = sphi 0, %s190
    %s191 = sphi 0, %s188
    %s192 = sphi 0, %s191
    %s208 = sphi 0, %s192
    %s226 = sphi 0, %s228
    %s229 = sphi 0, %s226
    %s230 = sphi 0, %s229
    %s246 = sphi 0, %s230
    %s250 = sphi 0, %s250
    %s252 = sphi 0, %s250
    %s253 = sphi 0, %s252
    %s267 = sphi 0, %s253
    %s271 = sphi 0, %s271
    %s273 = sphi 0, %s271
    %s274 = sphi 0, %s273
    %s288 = sphi 0, %s274
    %s292 = sphi 0, %s292
    %s294 = sphi 0, %s292
    %s295 = sphi 0, %s294
    %s309 = sphi 0, %s295
    %s313 = sphi 0, %s313
    %s315 = sphi 0, %s313
    %s316 = sphi 0, %s315
    %s330 = sphi 0, %s316
    %s340 = sphi 0, %s342
    %s343 = sphi 0, %s340
    %s344 = sphi 0, %s343
    %s360 = sphi 0, %s344
    %s370 = sphi 0, %s372
    %s373 = sphi 0, %s370
    %s374 = sphi 0, %s373
    %s390 = sphi 0, %s374
  $region4: #{shallow_unet_forward.8} parent=0 // loop_header_branch
    %21 = sbr.rel (%p19) target = $region8
  $region5: #{shallow_unet_forward.8} parent=0 // loop_body
    %s23 = ssub.s32 %s18, 1
    %s24 = ssub.s32 %s18, 2
    %s31 = sadd.s32 1, %s26
    %p32 = scmp.ge.s32.totalorder %s31, 2
    %s33 = scalar_select %p32, 0, %s31
    %s34 = sadd.s32 1, %s25
    %s35 = scalar_select %p32, %s34, %s25
    %p36 = scmp.ge.s32.totalorder %s35, 2
    %s37 = scalar_select %p36, 0, %s35
    %s38 = smul.u32 %s25, 2
    %s39 = sadd.s32 %s38, %s26
    %s40 = smul.u32 %s37, 2
    %s41 = sadd.s32 %s40, %s33
    %s42 = ssub.s32 %s39, %s41
    %p43 = scmp.eq.s32.totalorder %s42, 0
    %s45 = sadd.s32 %s44, 1
    %s46 = scalar_select %p43, %s44, %s45
    %p49 = pneg %p43
    %p50 = scmp.eq.s32.totalorder %s18, 3
    %p51 = por %p49, %p50
    %p52 = scmp.ne.s32.totalorder %s44, %s47
    %p53 = scmp.eq.s32.totalorder %s18, 0
    %p54 = por %p52, %p53
    %p55 = scmp.ne.s32.totalorder %s44, %s47
    %p56 = scmp.eq.s32.totalorder %s23, 3
    %p57 = por %p55, %p56
    %p58 = scmp.ne.s32.totalorder %s47, %s48
    %p59 = scmp.eq.s32.totalorder %s23, 0
    %p60 = por %p58, %p59
    %p61 = scmp.ne.s32.totalorder %s47, %s48
    %p62 = scmp.eq.s32.totalorder %s24, 3
    %p63 = por %p61, %p62
    %p65 = scmp.ne.s32.totalorder %s48, %s64
    %p66 = scmp.eq.s32.totalorder %s24, 0
    %p67 = por %p65, %p66
    %s68 = smul.u32 %s25, 16
    %s69 = smul.u32 %s26, 8
    %s70 = ssub.s32 %s69, 1
    %p71 = scmp.gt.s32.totalorder %s70, 0
    %s72 = scalar_select %p71, %s70, 0
    %s73 = sadd.s32 %s68, %s72
    %s74 = smul.u32 %s37, 16
    %s75 = smul.u32 %s33, 8
    %s76 = ssub.s32 %s75, 1
    %p77 = scmp.gt.s32.totalorder %s76, 0
    %s78 = scalar_select %p77, %s76, 0
    %s79 = sadd.s32 %s74, %s78
    %s80 = ssub.s32 %s73, %s79
    %p81 = scmp.eq.s32.totalorder %s80, 0
    %s83 = sadd.s32 %s82, 1
    %s84 = scalar_select %p81, %s82, %s83
    %p87 = pneg %p81
    %p88 = scmp.eq.s32.totalorder %s18, 3
    %p89 = por %p87, %p88
    %p90 = scmp.ne.s32.totalorder %s82, %s85
    %p91 = scmp.eq.s32.totalorder %s18, 0
    %p92 = por %p90, %p91
    %p93 = scmp.ne.s32.totalorder %s82, %s85
    %p94 = scmp.eq.s32.totalorder %s23, 3
    %p95 = por %p93, %p94
    %p96 = scmp.ne.s32.totalorder %s85, %s86
    %p97 = scmp.eq.s32.totalorder %s23, 0
    %p98 = por %p96, %p97
    %p99 = scmp.ne.s32.totalorder %s85, %s86
    %p100 = scmp.eq.s32.totalorder %s24, 3
    %p101 = por %p99, %p100
    %p103 = scmp.ne.s32.totalorder %s86, %s102
    %p104 = scmp.eq.s32.totalorder %s24, 0
    %p105 = por %p103, %p104
    %s106 = smul.u32 %s25, 16
    %s107 = sadd.s32 %s26, 1
    %s108 = smul.u32 %s107, 8
    %p109 = scmp.lt.s32.totalorder %s108, 15
    %s110 = scalar_select %p109, %s108, 15
    %s111 = sadd.s32 %s106, %s110
    %s112 = smul.u32 %s37, 16
    %s113 = sadd.s32 %s33, 1
    %s114 = smul.u32 %s113, 8
    %p115 = scmp.lt.s32.totalorder %s114, 15
    %s116 = scalar_select %p115, %s114, 15
    %s117 = sadd.s32 %s112, %s116
    %s118 = ssub.s32 %s111, %s117
    %p119 = scmp.eq.s32.totalorder %s118, 0
    %s121 = sadd.s32 %s120, 1
    %s122 = scalar_select %p119, %s120, %s121
    %p125 = pneg %p119
    %p126 = scmp.eq.s32.totalorder %s18, 3
    %p127 = por %p125, %p126
    %p128 = scmp.ne.s32.totalorder %s120, %s123
    %p129 = scmp.eq.s32.totalorder %s18, 0
    %p130 = por %p128, %p129
    %p131 = scmp.ne.s32.totalorder %s120, %s123
    %p132 = scmp.eq.s32.totalorder %s23, 3
    %p133 = por %p131, %p132
    %p134 = scmp.ne.s32.totalorder %s123, %s124
    %p135 = scmp.eq.s32.totalorder %s23, 0
    %p136 = por %p134, %p135
    %p137 = scmp.ne.s32.totalorder %s123, %s124
    %p138 = scmp.eq.s32.totalorder %s24, 3
    %p139 = por %p137, %p138
    %p141 = scmp.ne.s32.totalorder %s124, %s140
    %p142 = scmp.eq.s32.totalorder %s24, 0
    %p143 = por %p141, %p142
    %s144 = smul.u32 %s25, 2
    %s145 = sadd.s32 %s144, %s26
    %s146 = smul.u32 %s37, 2
    %s147 = sadd.s32 %s146, %s33
    %s148 = ssub.s32 %s145, %s147
    %p149 = scmp.eq.s32.totalorder %s148, 0
    %s151 = sadd.s32 %s150, 1
    %s152 = scalar_select %p149, %s150, %s151
    %p155 = pneg %p149
    %p156 = scmp.eq.s32.totalorder %s18, 3
    %p157 = por %p155, %p156
    %p158 = scmp.ne.s32.totalorder %s150, %s153
    %p159 = scmp.eq.s32.totalorder %s18, 0
    %p160 = por %p158, %p159
    %p161 = scmp.ne.s32.totalorder %s150, %s153
    %p162 = scmp.eq.s32.totalorder %s23, 3
    %p163 = por %p161, %p162
    %p164 = scmp.ne.s32.totalorder %s153, %s154
    %p165 = scmp.eq.s32.totalorder %s23, 0
    %p166 = por %p164, %p165
    %p167 = scmp.ne.s32.totalorder %s153, %s154
    %p168 = scmp.eq.s32.totalorder %s24, 3
    %p169 = por %p167, %p168
    %p171 = scmp.ne.s32.totalorder %s154, %s170
    %p172 = scmp.eq.s32.totalorder %s24, 0
    %p173 = por %p171, %p172
    %s174 = smul.u32 %s25, 16
    %s175 = smul.u32 %s26, 8
    %s176 = ssub.s32 %s175, 1
    %p177 = scmp.gt.s32.totalorder %s176, 0
    %s178 = scalar_select %p177, %s176, 0
    %s179 = sadd.s32 %s174, %s178
    %s180 = smul.u32 %s37, 16
    %s181 = smul.u32 %s33, 8
    %s182 = ssub.s32 %s181, 1
    %p183 = scmp.gt.s32.totalorder %s182, 0
    %s184 = scalar_select %p183, %s182, 0
    %s185 = sadd.s32 %s180, %s184
    %s186 = ssub.s32 %s179, %s185
    %p187 = scmp.eq.s32.totalorder %s186, 0
    %s189 = sadd.s32 %s188, 1
    %s190 = scalar_select %p187, %s188, %s189
    %p193 = pneg %p187
    %p194 = scmp.eq.s32.totalorder %s18, 3
    %p195 = por %p193, %p194
    %p196 = scmp.ne.s32.totalorder %s188, %s191
    %p197 = scmp.eq.s32.totalorder %s18, 0
    %p198 = por %p196, %p197
    %p199 = scmp.ne.s32.totalorder %s188, %s191
    %p200 = scmp.eq.s32.totalorder %s23, 3
    %p201 = por %p199, %p200
    %p202 = scmp.ne.s32.totalorder %s191, %s192
    %p203 = scmp.eq.s32.totalorder %s23, 0
    %p204 = por %p202, %p203
    %p205 = scmp.ne.s32.totalorder %s191, %s192
    %p206 = scmp.eq.s32.totalorder %s24, 3
    %p207 = por %p205, %p206
    %p209 = scmp.ne.s32.totalorder %s192, %s208
    %p210 = scmp.eq.s32.totalorder %s24, 0
    %p211 = por %p209, %p210
    %s212 = smul.u32 %s25, 16
    %s213 = sadd.s32 %s26, 1
    %s214 = smul.u32 %s213, 8
    %p215 = scmp.lt.s32.totalorder %s214, 15
    %s216 = scalar_select %p215, %s214, 15
    %s217 = sadd.s32 %s212, %s216
    %s218 = smul.u32 %s37, 16
    %s219 = sadd.s32 %s33, 1
    %s220 = smul.u32 %s219, 8
    %p221 = scmp.lt.s32.totalorder %s220, 15
    %s222 = scalar_select %p221, %s220, 15
    %s223 = sadd.s32 %s218, %s222
    %s224 = ssub.s32 %s217, %s223
    %p225 = scmp.eq.s32.totalorder %s224, 0
    %s227 = sadd.s32 %s226, 1
    %s228 = scalar_select %p225, %s226, %s227
    %p231 = pneg %p225
    %p232 = scmp.eq.s32.totalorder %s18, 3
    %p233 = por %p231, %p232
    %p234 = scmp.ne.s32.totalorder %s226, %s229
    %p235 = scmp.eq.s32.totalorder %s18, 0
    %p236 = por %p234, %p235
    %p237 = scmp.ne.s32.totalorder %s226, %s229
    %p238 = scmp.eq.s32.totalorder %s23, 3
    %p239 = por %p237, %p238
    %p240 = scmp.ne.s32.totalorder %s229, %s230
    %p241 = scmp.eq.s32.totalorder %s23, 0
    %p242 = por %p240, %p241
    %p243 = scmp.ne.s32.totalorder %s229, %s230
    %p244 = scmp.eq.s32.totalorder %s24, 3
    %p245 = por %p243, %p244
    %p247 = scmp.ne.s32.totalorder %s230, %s246
    %p248 = scmp.eq.s32.totalorder %s24, 0
    %p249 = por %p247, %p248
    %s251 = sadd.s32 %s250, 1
    %p254 = scmp.eq.s32.totalorder %s18, 3
    %p255 = scmp.ne.s32.totalorder %s250, %s252
    %p256 = scmp.eq.s32.totalorder %s18, 0
    %p257 = por %p255, %p256
    %p258 = scmp.ne.s32.totalorder %s250, %s252
    %p259 = scmp.eq.s32.totalorder %s23, 3
    %p260 = por %p258, %p259
    %p261 = scmp.ne.s32.totalorder %s252, %s253
    %p262 = scmp.eq.s32.totalorder %s23, 0
    %p263 = por %p261, %p262
    %p264 = scmp.ne.s32.totalorder %s252, %s253
    %p265 = scmp.eq.s32.totalorder %s24, 3
    %p266 = por %p264, %p265
    %p268 = scmp.ne.s32.totalorder %s253, %s267
    %p269 = scmp.eq.s32.totalorder %s24, 0
    %p270 = por %p268, %p269
    %s272 = sadd.s32 %s271, 1
    %p275 = scmp.eq.s32.totalorder %s18, 3
    %p276 = scmp.ne.s32.totalorder %s271, %s273
    %p277 = scmp.eq.s32.totalorder %s18, 0
    %p278 = por %p276, %p277
    %p279 = scmp.ne.s32.totalorder %s271, %s273
    %p280 = scmp.eq.s32.totalorder %s23, 3
    %p281 = por %p279, %p280
    %p282 = scmp.ne.s32.totalorder %s273, %s274
    %p283 = scmp.eq.s32.totalorder %s23, 0
    %p284 = por %p282, %p283
    %p285 = scmp.ne.s32.totalorder %s273, %s274
    %p286 = scmp.eq.s32.totalorder %s24, 3
    %p287 = por %p285, %p286
    %p289 = scmp.ne.s32.totalorder %s274, %s288
    %p290 = scmp.eq.s32.totalorder %s24, 0
    %p291 = por %p289, %p290
    %s293 = sadd.s32 %s292, 1
    %p296 = scmp.eq.s32.totalorder %s18, 3
    %p297 = scmp.ne.s32.totalorder %s292, %s294
    %p298 = scmp.eq.s32.totalorder %s18, 0
    %p299 = por %p297, %p298
    %p300 = scmp.ne.s32.totalorder %s292, %s294
    %p301 = scmp.eq.s32.totalorder %s23, 3
    %p302 = por %p300, %p301
    %p303 = scmp.ne.s32.totalorder %s294, %s295
    %p304 = scmp.eq.s32.totalorder %s23, 0
    %p305 = por %p303, %p304
    %p306 = scmp.ne.s32.totalorder %s294, %s295
    %p307 = scmp.eq.s32.totalorder %s24, 3
    %p308 = por %p306, %p307
    %p310 = scmp.ne.s32.totalorder %s295, %s309
    %p311 = scmp.eq.s32.totalorder %s24, 0
    %p312 = por %p310, %p311
    %s314 = sadd.s32 %s313, 1
    %p317 = scmp.eq.s32.totalorder %s18, 3
    %p318 = scmp.ne.s32.totalorder %s313, %s315
    %p319 = scmp.eq.s32.totalorder %s18, 0
    %p320 = por %p318, %p319
    %p321 = scmp.ne.s32.totalorder %s313, %s315
    %p322 = scmp.eq.s32.totalorder %s23, 3
    %p323 = por %p321, %p322
    %p324 = scmp.ne.s32.totalorder %s315, %s316
    %p325 = scmp.eq.s32.totalorder %s23, 0
    %p326 = por %p324, %p325
    %p327 = scmp.ne.s32.totalorder %s315, %s316
    %p328 = scmp.eq.s32.totalorder %s24, 3
    %p329 = por %p327, %p328
    %p331 = scmp.ne.s32.totalorder %s316, %s330
    %p332 = scmp.eq.s32.totalorder %s24, 0
    %p333 = por %p331, %p332
    %s334 = smul.u32 %s25, 2
    %s335 = sadd.s32 %s334, %s26
    %s336 = smul.u32 %s37, 2
    %s337 = sadd.s32 %s336, %s33
    %s338 = ssub.s32 %s335, %s337
    %p339 = scmp.eq.s32.totalorder %s338, 0
    %s341 = sadd.s32 %s340, 1
    %s342 = scalar_select %p339, %s340, %s341
    %p345 = pneg %p339
    %p346 = scmp.eq.s32.totalorder %s18, 3
    %p347 = por %p345, %p346
    %p348 = scmp.ne.s32.totalorder %s340, %s343
    %p349 = scmp.eq.s32.totalorder %s18, 0
    %p350 = por %p348, %p349
    %p351 = scmp.ne.s32.totalorder %s340, %s343
    %p352 = scmp.eq.s32.totalorder %s23, 3
    %p353 = por %p351, %p352
    %p354 = scmp.ne.s32.totalorder %s343, %s344
    %p355 = scmp.eq.s32.totalorder %s23, 0
    %p356 = por %p354, %p355
    %p357 = scmp.ne.s32.totalorder %s343, %s344
    %p358 = scmp.eq.s32.totalorder %s24, 3
    %p359 = por %p357, %p358
    %p361 = scmp.ne.s32.totalorder %s344, %s360
    %p362 = scmp.eq.s32.totalorder %s24, 0
    %p363 = por %p361, %p362
    %s364 = smul.u32 %s25, 2
    %s365 = sadd.s32 %s364, %s26
    %s366 = smul.u32 %s37, 2
    %s367 = sadd.s32 %s366, %s33
    %s368 = ssub.s32 %s365, %s367
    %p369 = scmp.eq.s32.totalorder %s368, 0
    %s371 = sadd.s32 %s370, 1
    %s372 = scalar_select %p369, %s370, %s371
    %p375 = pneg %p369
    %p376 = scmp.eq.s32.totalorder %s18, 3
    %p377 = por %p375, %p376
    %p378 = scmp.ne.s32.totalorder %s370, %s373
    %p379 = scmp.eq.s32.totalorder %s18, 0
    %p380 = por %p378, %p379
    %p381 = scmp.ne.s32.totalorder %s370, %s373
    %p382 = scmp.eq.s32.totalorder %s23, 3
    %p383 = por %p381, %p382
    %p384 = scmp.ne.s32.totalorder %s373, %s374
    %p385 = scmp.eq.s32.totalorder %s23, 0
    %p386 = por %p384, %p385
    %p387 = scmp.ne.s32.totalorder %s373, %s374
    %p388 = scmp.eq.s32.totalorder %s24, 3
    %p389 = por %p387, %p388
    %p391 = scmp.ne.s32.totalorder %s374, %s390
    %p392 = scmp.eq.s32.totalorder %s24, 0
    %p393 = por %p391, %p392
    %p394 = scmp.le.s32.totalorder 1, %s18
    %p395 = scmp.lt.s32.totalorder %s18, 5
    %p396 = pnand %p394, %p395
    %p397 = pneg %p396
    // Predicated region
    $region9: #{shallow_unet_forward.8} parent=5 // pred_check
      _
    $region10: #{shallow_unet_forward.8} parent=5 // pred_check_branch
      %399 = sbr.rel (%p396) target = $region12
    $region11: #{shallow_unet_forward.8} parent=5 // pred_region
      %s400 = ssub.s32 %s18, 1
      // Predicated region
      $region13: #{shallow_unet_forward.8} parent=11 // pred_check
        %p401 = pneg %p263
      $region14: #{shallow_unet_forward.8} parent=11 // pred_check_branch
        %403 = sbr.rel (%p401) target = $region16
      $region15: #{shallow_unet_forward.8} parent=11 // pred_region
        _
      $region16: #{shallow_unet_forward.8} parent=11 // pred_fallthru
        _
      // Predicated region
      $region17: #{shallow_unet_forward.8} parent=11 // pred_check
        %p404 = pneg %p284
      $region18: #{shallow_unet_forward.8} parent=11 // pred_check_branch
        %406 = sbr.rel (%p404) target = $region20
      $region19: #{shallow_unet_forward.8} parent=11 // pred_region
        _
      $region20: #{shallow_unet_forward.8} parent=11 // pred_fallthru
        _
      // Predicated region
      $region21: #{shallow_unet_forward.8} parent=11 // pred_check
        %p407 = pneg %p305
      $region22: #{shallow_unet_forward.8} parent=11 // pred_check_branch
        %409 = sbr.rel (%p407) target = $region24
      $region23: #{shallow_unet_forward.8} parent=11 // pred_region
        _
      $region24: #{shallow_unet_forward.8} parent=11 // pred_fallthru
        _
      // Predicated region
      $region25: #{shallow_unet_forward.8} parent=11 // pred_check
        %p410 = pneg %p326
      $region26: #{shallow_unet_forward.8} parent=11 // pred_check_branch
        %412 = sbr.rel (%p410) target = $region28
      $region27: #{shallow_unet_forward.8} parent=11 // pred_region
        _
      $region28: #{shallow_unet_forward.8} parent=11 // pred_fallthru
        _
    $region12: #{shallow_unet_forward.8} parent=5 // pred_fallthru
      _
    %p413 = scmp.lt.s32.totalorder %s18, 4
    // Predicated region
    $region29: #{shallow_unet_forward.8} parent=5 // pred_check
      %p414 = pneg %p413
    $region30: #{shallow_unet_forward.8} parent=5 // pred_check_branch
      %416 = sbr.rel (%p414) target = $region32
    $region31: #{shallow_unet_forward.8} parent=5 // pred_region
      // Predicated region
      $region33: #{shallow_unet_forward.8} parent=31 // pred_check
        %p417 = pneg %p54
      $region34: #{shallow_unet_forward.8} parent=31 // pred_check_branch
        %419 = sbr.rel (%p417) target = $region36
      $region35: #{shallow_unet_forward.8} parent=31 // pred_region
        %s420 = smul.u32 %s25, 2
        %s421 = sadd.s32 %s420, %s26
        %s422 = smul.u32 8, %s421
        %p423 = scmp.lt.s32.totalorder %s422, 31
        %s424 = scalar_select %p423, %s422, 31
        %s425 = smul.addr %s424, 2
        %s426 = smul.addr %s425, 4
        %s427 = scalar_lea.vmem %s0, %s426
        %s428 = smul.u32 %s25, 2
        %s429 = sadd.s32 %s428, %s26
        %s430 = smul.u32 8, %s429
      $region36: #{shallow_unet_forward.8} parent=31 // pred_fallthru
        _
      // Predicated region
      $region37: #{shallow_unet_forward.8} parent=31 // pred_check
        %p431 = pneg %p92
      $region38: #{shallow_unet_forward.8} parent=31 // pred_check_branch
        %433 = sbr.rel (%p431) target = $region40
      $region39: #{shallow_unet_forward.8} parent=31 // pred_region
        %s434 = smul.u32 %s25, 16
        %s435 = smul.u32 %s26, 8
        %s436 = ssub.s32 %s435, 1
        %p437 = scmp.gt.s32.totalorder %s436, 0
        %s438 = scalar_select %p437, %s436, 0
        %s439 = sadd.s32 %s434, %s438
        %p440 = scmp.lt.s32.totalorder %s439, 31
        %s441 = scalar_select %p440, %s439, 31
        %s442 = smul.addr %s441, 2
        %s443 = smul.addr %s442, 4
        %s444 = scalar_lea.vmem %s1, %s443
        %s445 = smul.u32 %s25, 16
        %s446 = smul.u32 %s26, 8
        %s447 = ssub.s32 %s446, 1
        %p448 = scmp.gt.s32.totalorder %s447, 0
        %s449 = scalar_select %p448, %s447, 0
        %s450 = sadd.s32 %s445, %s449
      $region40: #{shallow_unet_forward.8} parent=31 // pred_fallthru
        _
      // Predicated region
      $region41: #{shallow_unet_forward.8} parent=31 // pred_check
        %p451 = pneg %p130
      $region42: #{shallow_unet_forward.8} parent=31 // pred_check_branch
        %453 = sbr.rel (%p451) target = $region44
      $region43: #{shallow_unet_forward.8} parent=31 // pred_region
        %s454 = smul.u32 %s25, 16
        %s455 = sadd.s32 %s26, 1
        %s456 = smul.u32 %s455, 8
        %p457 = scmp.lt.s32.totalorder %s456, 15
        %s458 = scalar_select %p457, %s456, 15
        %s459 = sadd.s32 %s454, %s458
        %p460 = scmp.lt.s32.totalorder %s459, 31
        %s461 = scalar_select %p460, %s459, 31
        %s462 = smul.addr %s461, 2
        %s463 = smul.addr %s462, 4
        %s464 = scalar_lea.vmem %s2, %s463
        %s465 = smul.u32 %s25, 16
        %s466 = sadd.s32 %s26, 1
        %s467 = smul.u32 %s466, 8
        %p468 = scmp.lt.s32.totalorder %s467, 15
        %s469 = scalar_select %p468, %s467, 15
        %s470 = sadd.s32 %s465, %s469
      $region44: #{shallow_unet_forward.8} parent=31 // pred_fallthru
        _
      // Predicated region
      $region45: #{shallow_unet_forward.8} parent=31 // pred_check
        %p471 = pneg %p160
      $region46: #{shallow_unet_forward.8} parent=31 // pred_check_branch
        %473 = sbr.rel (%p471) target = $region48
      $region47: #{shallow_unet_forward.8} parent=31 // pred_region
        %s474 = smul.u32 %s25, 2
        %s475 = sadd.s32 %s474, %s26
        %s476 = smul.u32 8, %s475
        %p477 = scmp.lt.s32.totalorder %s476, 31
        %s478 = scalar_select %p477, %s476, 31
        %s479 = smul.addr %s478, 2
        %s480 = smul.addr %s479, 4
        %s481 = scalar_lea.vmem %s3, %s480
        %s482 = smul.u32 %s25, 2
        %s483 = sadd.s32 %s482, %s26
        %s484 = smul.u32 8, %s483
      $region48: #{shallow_unet_forward.8} parent=31 // pred_fallthru
        _
      // Predicated region
      $region49: #{shallow_unet_forward.8} parent=31 // pred_check
        %p485 = pneg %p198
      $region50: #{shallow_unet_forward.8} parent=31 // pred_check_branch
        %487 = sbr.rel (%p485) target = $region52
      $region51: #{shallow_unet_forward.8} parent=31 // pred_region
        %s488 = smul.u32 %s25, 16
        %s489 = smul.u32 %s26, 8
        %s490 = ssub.s32 %s489, 1
        %p491 = scmp.gt.s32.totalorder %s490, 0
        %s492 = scalar_select %p491, %s490, 0
        %s493 = sadd.s32 %s488, %s492
        %p494 = scmp.lt.s32.totalorder %s493, 31
        %s495 = scalar_select %p494, %s493, 31
        %s496 = smul.addr %s495, 2
        %s497 = smul.addr %s496, 4
        %s498 = scalar_lea.vmem %s4, %s497
        %s499 = smul.u32 %s25, 16
        %s500 = smul.u32 %s26, 8
        %s501 = ssub.s32 %s500, 1
        %p502 = scmp.gt.s32.totalorder %s501, 0
        %s503 = scalar_select %p502, %s501, 0
        %s504 = sadd.s32 %s499, %s503
      $region52: #{shallow_unet_forward.8} parent=31 // pred_fallthru
        _
      // Predicated region
      $region53: #{shallow_unet_forward.8} parent=31 // pred_check
        %p505 = pneg %p236
      $region54: #{shallow_unet_forward.8} parent=31 // pred_check_branch
        %507 = sbr.rel (%p505) target = $region56
      $region55: #{shallow_unet_forward.8} parent=31 // pred_region
        %s508 = smul.u32 %s25, 16
        %s509 = sadd.s32 %s26, 1
        %s510 = smul.u32 %s509, 8
        %p511 = scmp.lt.s32.totalorder %s510, 15
        %s512 = scalar_select %p511, %s510, 15
        %s513 = sadd.s32 %s508, %s512
        %p514 = scmp.lt.s32.totalorder %s513, 31
        %s515 = scalar_select %p514, %s513, 31
        %s516 = smul.addr %s515, 2
        %s517 = smul.addr %s516, 4
        %s518 = scalar_lea.vmem %s5, %s517
        %s519 = smul.u32 %s25, 16
        %s520 = sadd.s32 %s26, 1
        %s521 = smul.u32 %s520, 8
        %p522 = scmp.lt.s32.totalorder %s521, 15
        %s523 = scalar_select %p522, %s521, 15
        %s524 = sadd.s32 %s519, %s523
      $region56: #{shallow_unet_forward.8} parent=31 // pred_fallthru
        _
    $region32: #{shallow_unet_forward.8} parent=5 // pred_fallthru
      _
    %p525 = scmp.le.s32.totalorder 1, %s18
    %p526 = scmp.lt.s32.totalorder %s18, 5
    %p527 = pnand %p525, %p526
    %p528 = pneg %p527
    // Predicated region
    $region57: #{shallow_unet_forward.8} parent=5 // pred_check
      _
    $region58: #{shallow_unet_forward.8} parent=5 // pred_check_branch
      %530 = sbr.rel (%p527) target = $region60
    $region59: #{shallow_unet_forward.8} parent=5 // pred_region
      %s531 = ssub.s32 %s18, 1
      %s532 = smul.u32 %s27, 2
      %s533 = sadd.s32 %s532, %s28
      %s534 = smul.u32 8, %s533
      %p535 = scmp.lt.s32.totalorder %s534, 31
      %s536 = scalar_select %p535, %s534, 31
      %s537 = smul.addr %s536, 2
      %s538 = smul.addr %s537, 4
      %s539 = scalar_lea.vmem %s0, %s538
      %p540 = pneg %p60
      %p541 = pneg %p57
      %s542 = smul.u32 %s27, 16
      %s543 = smul.u32 %s28, 8
      %s544 = ssub.s32 %s543, 1
      %p545 = scmp.gt.s32.totalorder %s544, 0
      %s546 = scalar_select %p545, %s544, 0
      %s547 = sadd.s32 %s542, %s546
      %p548 = scmp.lt.s32.totalorder %s547, 31
      %s549 = scalar_select %p548, %s547, 31
      %s550 = smul.addr %s549, 2
      %s551 = smul.addr %s550, 4
      %s552 = scalar_lea.vmem %s1, %s551
      %p553 = pneg %p98
      %p554 = pneg %p95
      %s555 = smul.u32 %s27, 16
      %s556 = sadd.s32 %s28, 1
      %s557 = smul.u32 %s556, 8
      %p558 = scmp.lt.s32.totalorder %s557, 15
      %s559 = scalar_select %p558, %s557, 15
      %s560 = sadd.s32 %s555, %s559
      %p561 = scmp.lt.s32.totalorder %s560, 31
      %s562 = scalar_select %p561, %s560, 31
      %s563 = smul.addr %s562, 2
      %s564 = smul.addr %s563, 4
      %s565 = scalar_lea.vmem %s2, %s564
      %p566 = pneg %p136
      %p567 = pneg %p133
      %s568 = smul.u32 %s27, 2
      %s569 = sadd.s32 %s568, %s28
      %s570 = smul.u32 8, %s569
      %p571 = scmp.lt.s32.totalorder %s570, 31
      %s572 = scalar_select %p571, %s570, 31
      %s573 = smul.addr %s572, 2
      %s574 = smul.addr %s573, 4
      %s575 = scalar_lea.vmem %s3, %s574
      %p576 = pneg %p166
      %p577 = pneg %p163
      %s578 = smul.u32 %s27, 16
      %s579 = smul.u32 %s28, 8
      %s580 = ssub.s32 %s579, 1
      %p581 = scmp.gt.s32.totalorder %s580, 0
      %s582 = scalar_select %p581, %s580, 0
      %s583 = sadd.s32 %s578, %s582
      %p584 = scmp.lt.s32.totalorder %s583, 31
      %s585 = scalar_select %p584, %s583, 31
      %s586 = smul.addr %s585, 2
      %s587 = smul.addr %s586, 4
      %s588 = scalar_lea.vmem %s4, %s587
      %p589 = pneg %p204
      %p590 = pneg %p201
      %s591 = smul.u32 %s27, 16
      %s592 = sadd.s32 %s28, 1
      %s593 = smul.u32 %s592, 8
      %p594 = scmp.lt.s32.totalorder %s593, 15
      %s595 = scalar_select %p594, %s593, 15
      %s596 = sadd.s32 %s591, %s595
      %p597 = scmp.lt.s32.totalorder %s596, 31
      %s598 = scalar_select %p597, %s596, 31
      %s599 = smul.addr %s598, 2
      %s600 = smul.addr %s599, 4
      %s601 = scalar_lea.vmem %s5, %s600
      %p602 = pneg %p242
      %p603 = pneg %p239
      %p604 = pneg %p263
      %p605 = pneg %p260
      %p606 = pneg %p284
      %p607 = pneg %p281
      %p608 = pneg %p305
      %p609 = pneg %p302
      %p610 = pneg %p326
      %p611 = pneg %p323
      %p612 = pneg %p356
      %p613 = pneg %p353
      %s614 = smul.u32 %s27, 2
      %s615 = sadd.s32 %s614, %s28
      %s616 = smul.u32 8, %s615
      %p617 = scmp.lt.s32.totalorder %s616, 31
      %s618 = scalar_select %p617, %s616, 31
      %s619 = smul.addr %s618, 2
      %s620 = smul.addr %s619, 4
      %s621 = scalar_lea.vmem %s10, %s620
      %p622 = pneg %p386
      %p623 = pneg %p383
      %s624 = smul.u32 %s27, 2
      %s625 = sadd.s32 %s624, %s28
      %p626 = scmp.lt.s32.totalorder %s625, 3
      %s627 = scalar_select %p626, %s625, 3
      %s628 = smul.addr %s627, 2
      %s629 = scalar_lea.vmem %s11, %s628
      %s630 = smul.u32 %s27, 2
      %s631 = sadd.s32 %s630, %s28
      %s632 = smul.u32 8, %s631
      %p633 = scmp.lt.s32.totalorder %s632, 31
      %s634 = scalar_select %p633, %s632, 31
      %s635 = smul.addr %s634, 2
      %s636 = smul.addr %s635, 4
      %s637 = scalar_lea.vmem %s0, %s636
      %s638 = smul.u32 %s27, 2
      %s639 = sadd.s32 %s638, %s28
      %s640 = smul.u32 8, %s639
      %s641 = smul.u32 %s27, 16
      %s642 = smul.u32 %s28, 8
      %s643 = ssub.s32 %s642, 1
      %p644 = scmp.gt.s32.totalorder %s643, 0
      %s645 = scalar_select %p644, %s643, 0
      %s646 = sadd.s32 %s641, %s645
      %p647 = scmp.lt.s32.totalorder %s646, 31
      %s648 = scalar_select %p647, %s646, 31
      %s649 = smul.addr %s648, 2
      %s650 = smul.addr %s649, 4
      %s651 = scalar_lea.vmem %s1, %s650
      %s652 = smul.u32 %s27, 16
      %s653 = smul.u32 %s28, 8
      %s654 = ssub.s32 %s653, 1
      %p655 = scmp.gt.s32.totalorder %s654, 0
      %s656 = scalar_select %p655, %s654, 0
      %s657 = sadd.s32 %s652, %s656
      %s658 = smul.u32 %s27, 16
      %s659 = sadd.s32 %s28, 1
      %s660 = smul.u32 %s659, 8
      %p661 = scmp.lt.s32.totalorder %s660, 15
      %s662 = scalar_select %p661, %s660, 15
      %s663 = sadd.s32 %s658, %s662
      %p664 = scmp.lt.s32.totalorder %s663, 31
      %s665 = scalar_select %p664, %s663, 31
      %s666 = smul.addr %s665, 2
      %s667 = smul.addr %s666, 4
      %s668 = scalar_lea.vmem %s2, %s667
      %s669 = smul.u32 %s27, 16
      %s670 = sadd.s32 %s28, 1
      %s671 = smul.u32 %s670, 8
      %p672 = scmp.lt.s32.totalorder %s671, 15
      %s673 = scalar_select %p672, %s671, 15
      %s674 = sadd.s32 %s669, %s673
      %s675 = smul.u32 %s27, 2
      %s676 = sadd.s32 %s675, %s28
      %s677 = smul.u32 8, %s676
      %p678 = scmp.lt.s32.totalorder %s677, 31
      %s679 = scalar_select %p678, %s677, 31
      %s680 = smul.addr %s679, 2
      %s681 = smul.addr %s680, 4
      %s682 = scalar_lea.vmem %s3, %s681
      %s683 = smul.u32 %s27, 2
      %s684 = sadd.s32 %s683, %s28
      %s685 = smul.u32 8, %s684
      %s686 = smul.u32 %s27, 16
      %s687 = smul.u32 %s28, 8
      %s688 = ssub.s32 %s687, 1
      %p689 = scmp.gt.s32.totalorder %s688, 0
      %s690 = scalar_select %p689, %s688, 0
      %s691 = sadd.s32 %s686, %s690
      %p692 = scmp.lt.s32.totalorder %s691, 31
      %s693 = scalar_select %p692, %s691, 31
      %s694 = smul.addr %s693, 2
      %s695 = smul.addr %s694, 4
      %s696 = scalar_lea.vmem %s4, %s695
      %s697 = smul.u32 %s27, 16
      %s698 = smul.u32 %s28, 8
      %s699 = ssub.s32 %s698, 1
      %p700 = scmp.gt.s32.totalorder %s699, 0
      %s701 = scalar_select %p700, %s699, 0
      %s702 = sadd.s32 %s697, %s701
      %s703 = smul.u32 %s27, 16
      %s704 = sadd.s32 %s28, 1
      %s705 = smul.u32 %s704, 8
      %p706 = scmp.lt.s32.totalorder %s705, 15
      %s707 = scalar_select %p706, %s705, 15
      %s708 = sadd.s32 %s703, %s707
      %p709 = scmp.lt.s32.totalorder %s708, 31
      %s710 = scalar_select %p709, %s708, 31
      %s711 = smul.addr %s710, 2
      %s712 = smul.addr %s711, 4
      %s713 = scalar_lea.vmem %s5, %s712
      %s714 = smul.u32 %s27, 16
      %s715 = sadd.s32 %s28, 1
      %s716 = smul.u32 %s715, 8
      %p717 = scmp.lt.s32.totalorder %s716, 15
      %s718 = scalar_select %p717, %s716, 15
      %s719 = sadd.s32 %s714, %s718
      %s720 = smul.u32 %s27, 2
      %s721 = sadd.s32 %s720, %s28
      %s722 = smul.u32 8, %s721
      %p723 = scmp.lt.s32.totalorder %s722, 31
      %s724 = scalar_select %p723, %s722, 31
      %s725 = smul.addr %s724, 2
      %s726 = smul.addr %s725, 4
      %s727 = scalar_lea.vmem %s10, %s726
      %s728 = smul.u32 %s27, 2
      %s729 = sadd.s32 %s728, %s28
      %s730 = smul.u32 8, %s729
      %s731 = smul.u32 %s27, 2
      %s732 = sadd.s32 %s731, %s28
      %p733 = scmp.lt.s32.totalorder %s732, 3
      %s734 = scalar_select %p733, %s732, 3
      %s735 = smul.addr %s734, 2
      %s736 = scalar_lea.vmem %s11, %s735
      %s737 = smul.u32 %s27, 2
      %s738 = sadd.s32 %s737, %s28
      %v742 = vlaneseq
      %v743 = vshrl.u32 %v742, 7
      %v744 = vadd.s32 %v743, 8
      %v745 = vadd.s32 %v743, 16
      %v746 = vadd.s32 %v743, 24
      %v747 = vadd.s32 %v743, 32
      %v748 = vadd.s32 %v743, 40
      %v749 = vadd.s32 %v743, 48
      %v750 = vadd.s32 %v743, 56
      %v751 = vadd.s32 %v743, 64
      %v752 = vadd.s32 %v743, 72
      %v753 = vadd.s32 %v743, 80
      %v754 = vadd.s32 %v743, 88
      %v755 = vadd.s32 %v743, 96
      %v756 = vadd.s32 %v743, 104
      %v757 = vadd.s32 %v743, 112
      %v758 = vadd.s32 %v743, 120
      %vm759 = vcmp.lt.s32.totalorder %v743, 0
      %v760 = vsub.s32 0, %v743
      %v761 = vsel %vm759, %v760, %v743
      %v762 = vshrl.u32 %v761, 4
      %v763 = vand.u32 %v761, 15
      %v764 = vsub.s32 0, %v763
      %v765 = vsel %vm759, %v764, %v763
      %vm766 = vcmp.lt.s32.totalorder %v744, 0
      %v767 = vsub.s32 0, %v744
      %v768 = vsel %vm766, %v767, %v744
      %v769 = vshrl.u32 %v768, 4
      %v770 = vand.u32 %v768, 15
      %v771 = vsub.s32 0, %v770
      %v772 = vsel %vm766, %v771, %v770
      %vm773 = vcmp.lt.s32.totalorder %v745, 0
      %v774 = vsub.s32 0, %v745
      %v775 = vsel %vm773, %v774, %v745
      %v776 = vshrl.u32 %v775, 4
      %v777 = vand.u32 %v775, 15
      %v778 = vsub.s32 0, %v777
      %v779 = vsel %vm773, %v778, %v777
      %vm780 = vcmp.lt.s32.totalorder %v746, 0
      %v781 = vsub.s32 0, %v746
      %v782 = vsel %vm780, %v781, %v746
      %v783 = vshrl.u32 %v782, 4
      %v784 = vand.u32 %v782, 15
      %v785 = vsub.s32 0, %v784
      %v786 = vsel %vm780, %v785, %v784
      %vm787 = vcmp.lt.s32.totalorder %v747, 0
      %v788 = vsub.s32 0, %v747
      %v789 = vsel %vm787, %v788, %v747
      %v790 = vshrl.u32 %v789, 4
      %v791 = vand.u32 %v789, 15
      %v792 = vsub.s32 0, %v791
      %v793 = vsel %vm787, %v792, %v791
      %vm794 = vcmp.lt.s32.totalorder %v748, 0
      %v795 = vsub.s32 0, %v748
      %v796 = vsel %vm794, %v795, %v748
      %v797 = vshrl.u32 %v796, 4
      %v798 = vand.u32 %v796, 15
      %v799 = vsub.s32 0, %v798
      %v800 = vsel %vm794, %v799, %v798
      %vm801 = vcmp.lt.s32.totalorder %v749, 0
      %v802 = vsub.s32 0, %v749
      %v803 = vsel %vm801, %v802, %v749
      %v804 = vshrl.u32 %v803, 4
      %v805 = vand.u32 %v803, 15
      %v806 = vsub.s32 0, %v805
      %v807 = vsel %vm801, %v806, %v805
      %vm808 = vcmp.lt.s32.totalorder %v750, 0
      %v809 = vsub.s32 0, %v750
      %v810 = vsel %vm808, %v809, %v750
      %v811 = vshrl.u32 %v810, 4
      %v812 = vand.u32 %v810, 15
      %v813 = vsub.s32 0, %v812
      %v814 = vsel %vm808, %v813, %v812
      %vm815 = vcmp.lt.s32.totalorder %v751, 0
      %v816 = vsub.s32 0, %v751
      %v817 = vsel %vm815, %v816, %v751
      %v818 = vshrl.u32 %v817, 4
      %v819 = vand.u32 %v817, 15
      %v820 = vsub.s32 0, %v819
      %v821 = vsel %vm815, %v820, %v819
      %vm822 = vcmp.lt.s32.totalorder %v752, 0
      %v823 = vsub.s32 0, %v752
      %v824 = vsel %vm822, %v823, %v752
      %v825 = vshrl.u32 %v824, 4
      %v826 = vand.u32 %v824, 15
      %v827 = vsub.s32 0, %v826
      %v828 = vsel %vm822, %v827, %v826
      %vm829 = vcmp.lt.s32.totalorder %v753, 0
      %v830 = vsub.s32 0, %v753
      %v831 = vsel %vm829, %v830, %v753
      %v832 = vshrl.u32 %v831, 4
      %v833 = vand.u32 %v831, 15
      %v834 = vsub.s32 0, %v833
      %v835 = vsel %vm829, %v834, %v833
      %vm836 = vcmp.lt.s32.totalorder %v754, 0
      %v837 = vsub.s32 0, %v754
      %v838 = vsel %vm836, %v837, %v754
      %v839 = vshrl.u32 %v838, 4
      %v840 = vand.u32 %v838, 15
      %v841 = vsub.s32 0, %v840
      %v842 = vsel %vm836, %v841, %v840
      %vm843 = vcmp.lt.s32.totalorder %v755, 0
      %v844 = vsub.s32 0, %v755
      %v845 = vsel %vm843, %v844, %v755
      %v846 = vshrl.u32 %v845, 4
      %v847 = vand.u32 %v845, 15
      %v848 = vsub.s32 0, %v847
      %v849 = vsel %vm843, %v848, %v847
      %vm850 = vcmp.lt.s32.totalorder %v756, 0
      %v851 = vsub.s32 0, %v756
      %v852 = vsel %vm850, %v851, %v756
      %v853 = vshrl.u32 %v852, 4
      %v854 = vand.u32 %v852, 15
      %v855 = vsub.s32 0, %v854
      %v856 = vsel %vm850, %v855, %v854
      %vm857 = vcmp.lt.s32.totalorder %v757, 0
      %v858 = vsub.s32 0, %v757
      %v859 = vsel %vm857, %v858, %v757
      %v860 = vshrl.u32 %v859, 4
      %v861 = vand.u32 %v859, 15
      %v862 = vsub.s32 0, %v861
      %v863 = vsel %vm857, %v862, %v861
      %vm864 = vcmp.lt.s32.totalorder %v758, 0
      %v865 = vsub.s32 0, %v758
      %v866 = vsel %vm864, %v865, %v758
      %v867 = vshrl.u32 %v866, 4
      %v868 = vand.u32 %v866, 15
      %v869 = vsub.s32 0, %v868
      %v870 = vsel %vm864, %v869, %v868
      %vm871 = vcmp.ne.s32.totalorder %v765, 0
      %vm872 = vcmp.ne.s32.totalorder %v772, 0
      %vm873 = vcmp.ne.s32.totalorder %v779, 0
      %vm874 = vcmp.ne.s32.totalorder %v786, 0
      %vm875 = vcmp.ne.s32.totalorder %v793, 0
      %vm876 = vcmp.ne.s32.totalorder %v800, 0
      %vm877 = vcmp.ne.s32.totalorder %v807, 0
      %vm878 = vcmp.ne.s32.totalorder %v814, 0
      %vm879 = vcmp.ne.s32.totalorder %v821, 0
      %vm880 = vcmp.ne.s32.totalorder %v828, 0
      %vm881 = vcmp.ne.s32.totalorder %v835, 0
      %vm882 = vcmp.ne.s32.totalorder %v842, 0
      %vm883 = vcmp.ne.s32.totalorder %v849, 0
      %vm884 = vcmp.ne.s32.totalorder %v856, 0
      %vm885 = vcmp.ne.s32.totalorder %v863, 0
      %vm886 = vcmp.ne.s32.totalorder %v870, 0
      %vm887 = vcmp.lt.s32.totalorder %v765, 0
      %vm888 = vcmp.lt.s32.totalorder %v772, 0
      %vm889 = vcmp.lt.s32.totalorder %v779, 0
      %vm890 = vcmp.lt.s32.totalorder %v786, 0
      %vm891 = vcmp.lt.s32.totalorder %v793, 0
      %vm892 = vcmp.lt.s32.totalorder %v800, 0
      %vm893 = vcmp.lt.s32.totalorder %v807, 0
      %vm894 = vcmp.lt.s32.totalorder %v814, 0
      %vm895 = vcmp.lt.s32.totalorder %v821, 0
      %vm896 = vcmp.lt.s32.totalorder %v828, 0
      %vm897 = vcmp.lt.s32.totalorder %v835, 0
      %vm898 = vcmp.lt.s32.totalorder %v842, 0
      %vm899 = vcmp.lt.s32.totalorder %v849, 0
      %vm900 = vcmp.lt.s32.totalorder %v856, 0
      %vm901 = vcmp.lt.s32.totalorder %v863, 0
      %vm902 = vcmp.lt.s32.totalorder %v870, 0
      %vm903 = vmand %vm887, %vm871
      %vm904 = vmand %vm888, %vm872
      %vm905 = vmand %vm889, %vm873
      %vm906 = vmand %vm890, %vm874
      %vm907 = vmand %vm891, %vm875
      %vm908 = vmand %vm892, %vm876
      %vm909 = vmand %vm893, %vm877
      %vm910 = vmand %vm894, %vm878
      %vm911 = vmand %vm895, %vm879
      %vm912 = vmand %vm896, %vm880
      %vm913 = vmand %vm897, %vm881
      %vm914 = vmand %vm898, %vm882
      %vm915 = vmand %vm899, %vm883
      %vm916 = vmand %vm900, %vm884
      %vm917 = vmand %vm901, %vm885
      %vm918 = vmand %vm902, %vm886
      %v919 = vadd.s32 %v765, 16
      %v920 = vadd.s32 %v772, 16
      %v921 = vadd.s32 %v779, 16
      %v922 = vadd.s32 %v786, 16
      %v923 = vadd.s32 %v793, 16
      %v924 = vadd.s32 %v800, 16
      %v925 = vadd.s32 %v807, 16
      %v926 = vadd.s32 %v814, 16
      %v927 = vadd.s32 %v821, 16
      %v928 = vadd.s32 %v828, 16
      %v929 = vadd.s32 %v835, 16
      %v930 = vadd.s32 %v842, 16
      %v931 = vadd.s32 %v849, 16
      %v932 = vadd.s32 %v856, 16
      %v933 = vadd.s32 %v863, 16
      %v934 = vadd.s32 %v870, 16
      %v935 = vsel %vm903, %v919, %v765
      %v936 = vsel %vm904, %v920, %v772
      %v937 = vsel %vm905, %v921, %v779
      %v938 = vsel %vm906, %v922, %v786
      %v939 = vsel %vm907, %v923, %v793
      %v940 = vsel %vm908, %v924, %v800
      %v941 = vsel %vm909, %v925, %v807
      %v942 = vsel %vm910, %v926, %v814
      %v943 = vsel %vm911, %v927, %v821
      %v944 = vsel %vm912, %v928, %v828
      %v945 = vsel %vm913, %v929, %v835
      %v946 = vsel %vm914, %v930, %v842
      %v947 = vsel %vm915, %v931, %v849
      %v948 = vsel %vm916, %v932, %v856
      %v949 = vsel %vm917, %v933, %v863
      %v950 = vsel %vm918, %v934, %v870
      %vm951 = vcmp.ne.s32.totalorder %v935, 15
      %vm952 = vcmp.ne.s32.totalorder %v936, 15
      %vm953 = vcmp.ne.s32.totalorder %v937, 15
      %vm954 = vcmp.ne.s32.totalorder %v938, 15
      %vm955 = vcmp.ne.s32.totalorder %v939, 15
      %vm956 = vcmp.ne.s32.totalorder %v940, 15
      %vm957 = vcmp.ne.s32.totalorder %v941, 15
      %vm958 = vcmp.ne.s32.totalorder %v942, 15
      %vm959 = vcmp.ne.s32.totalorder %v943, 15
      %vm960 = vcmp.ne.s32.totalorder %v944, 15
      %vm961 = vcmp.ne.s32.totalorder %v945, 15
      %vm962 = vcmp.ne.s32.totalorder %v946, 15
      %vm963 = vcmp.ne.s32.totalorder %v947, 15
      %vm964 = vcmp.ne.s32.totalorder %v948, 15
      %vm965 = vcmp.ne.s32.totalorder %v949, 15
      %vm966 = vcmp.ne.s32.totalorder %v950, 15
      %vm967 = vcmp.ne.s32.totalorder %v935, 0
      %vm968 = vcmp.ne.s32.totalorder %v936, 0
      %vm969 = vcmp.ne.s32.totalorder %v937, 0
      %vm970 = vcmp.ne.s32.totalorder %v938, 0
      %vm971 = vcmp.ne.s32.totalorder %v939, 0
      %vm972 = vcmp.ne.s32.totalorder %v940, 0
      %vm973 = vcmp.ne.s32.totalorder %v941, 0
      %vm974 = vcmp.ne.s32.totalorder %v942, 0
      %vm975 = vcmp.ne.s32.totalorder %v943, 0
      %vm976 = vcmp.ne.s32.totalorder %v944, 0
      %vm977 = vcmp.ne.s32.totalorder %v945, 0
      %vm978 = vcmp.ne.s32.totalorder %v946, 0
      %vm979 = vcmp.ne.s32.totalorder %v947, 0
      %vm980 = vcmp.ne.s32.totalorder %v948, 0
      %vm981 = vcmp.ne.s32.totalorder %v949, 0
      %vm982 = vcmp.ne.s32.totalorder %v950, 0
      %v983 = vld [vmem:[%s637] sm:$0xf]
      %v984 = vld [vmem:[%s637 + $0x4] sm:$0xf]
      %v985 = vld [vmem:[%s637 + $0x8] sm:$0xf]
      %v986 = vld [vmem:[%s637 + $0xc] sm:$0xf]
      %v987 = vld [vmem:[%s637 + $0x10] sm:$0xf]
      %v988 = vld [vmem:[%s637 + $0x14] sm:$0xf]
      %v989 = vld [vmem:[%s637 + $0x18] sm:$0xf]
      %v990 = vld [vmem:[%s637 + $0x1c] sm:$0xf]
      %v991 = vld [vmem:[%s637 + $0x20] sm:$0xf]
      %v992 = vld [vmem:[%s637 + $0x24] sm:$0xf]
      %v993 = vld [vmem:[%s637 + $0x28] sm:$0xf]
      %v994 = vld [vmem:[%s637 + $0x2c] sm:$0xf]
      %v995 = vld [vmem:[%s637 + $0x30] sm:$0xf]
      %v996 = vld [vmem:[%s637 + $0x34] sm:$0xf]
      %v997 = vld [vmem:[%s637 + $0x38] sm:$0xf]
      %v998 = vld [vmem:[%s637 + $0x3c] sm:$0xf]
      %v999 = vld [vmem:[%s651] sm:$0xf]
      %v1000 = vld [vmem:[%s651 + $0x4] sm:$0xf]
      %v1001 = vld [vmem:[%s668] sm:$0xf]
      %v1002 = vld [vmem:[%s668 + $0x4] sm:$0xf]
      %p1003 = scmp.eq.s32.totalorder %s28, 0
      %s1004 = scalar_select %p1003, 1, 0
      %v1005 = vstv %s1004
      %vm1006 = vcmp.eq.s32.totalorder %v1005, 1
      %v1007 = vsel %vm1006, 0, %v999
      %v1008 = vsel %vm1006, 0, %v1000
      %p1009 = scmp.eq.s32.totalorder %s28, 1
      %s1010 = scalar_select %p1009, 1, 0
      %v1011 = vstv %s1010
      %vm1012 = vcmp.eq.s32.totalorder %v1011, 1
      %v1013 = vsel %vm1012, 0, %v1001
      %v1014 = vsel %vm1012, 0, %v1002
      %vm1015 = vcmask 519168
      %1016 = vst.msk [vmem:[#allocation2] sm:$0xf] %vm1015, 0
      %v1019 = vunpack.c.l.b16 %v1007
      %v1020 = vunpack.c.l.b16 %v1008
      %v1021 = vpack.c.b16 %v1019, %v1019
      %v1022 = vpack.c.b16 %v1020, %v1020
      %vm1025 = vcmask 523268
      %1026 = vst.msk [vmem:[#allocation2] sm:$0xf0] %vm1025, %v1021
      %1027 = vst.msk [vmem:[#allocation2 + $0x8] sm:$0xf] %vm1015, %v1022
      %v1044 = vunpack.c.l.b16 %v983
      %v1045 = vunpack.c.l.b16 %v984
      %v1046 = vunpack.c.l.b16 %v985
      %v1047 = vunpack.c.l.b16 %v986
      %v1048 = vunpack.c.l.b16 %v987
      %v1049 = vunpack.c.l.b16 %v988
      %v1050 = vunpack.c.l.b16 %v989
      %v1051 = vunpack.c.l.b16 %v990
      %v1052 = vunpack.c.l.b16 %v991
      %v1053 = vunpack.c.l.b16 %v992
      %v1054 = vunpack.c.l.b16 %v993
      %v1055 = vunpack.c.l.b16 %v994
      %v1056 = vunpack.c.l.b16 %v995
      %v1057 = vunpack.c.l.b16 %v996
      %v1058 = vunpack.c.l.b16 %v997
      %v1059 = vunpack.c.l.b16 %v998
      %v1060 = vpack.c.b16 %v1044, %v1044
      %v1061 = vpack.c.b16 %v1046, %v1045
      %v1062 = vpack.c.b16 %v1048, %v1047
      %v1063 = vpack.c.b16 %v1050, %v1049
      %v1064 = vpack.c.b16 %v1052, %v1051
      %v1065 = vpack.c.b16 %v1054, %v1053
      %v1066 = vpack.c.b16 %v1056, %v1055
      %v1067 = vpack.c.b16 %v1058, %v1057
      %v1068 = vpack.c.b16 %v1059, %v1059
      %1078 = vst.msk [vmem:[#allocation2 + $0x8] sm:$0xf0] %vm1025, %v1060
      %vm1079 = vcmask 523264
      %1080 = vst.msk [vmem:[#allocation2 + $0x10] sm:$0xff] %vm1079, %v1061
      %1081 = vst.msk [vmem:[#allocation2 + $0x18] sm:$0xff] %vm1079, %v1062
      %1082 = vst.msk [vmem:[#allocation2 + $0x20] sm:$0xff] %vm1079, %v1063
      %1083 = vst.msk [vmem:[#allocation2 + $0x28] sm:$0xff] %vm1079, %v1064
      %1084 = vst.msk [vmem:[#allocation2 + $0x30] sm:$0xff] %vm1079, %v1065
      %1085 = vst.msk [vmem:[#allocation2 + $0x38] sm:$0xff] %vm1079, %v1066
      %1086 = vst.msk [vmem:[#allocation2 + $0x40] sm:$0xff] %vm1079, %v1067
      %1087 = vst.msk [vmem:[#allocation2 + $0x48] sm:$0xf] %vm1015, %v1068
      %v1090 = vunpack.c.l.b16 %v1013
      %v1091 = vunpack.c.l.b16 %v1014
      %v1092 = vpack.c.b16 %v1090, %v1090
      %v1093 = vpack.c.b16 %v1091, %v1091
      %1096 = vst.msk [vmem:[#allocation2 + $0x48] sm:$0xf0] %vm1025, %v1092
      %1097 = vst.msk [vmem:[#allocation2 + $0x50] sm:$0xf] %vm1015, %v1093
      %1098 = vst.msk [vmem:[#allocation2 + $0x50] sm:$0xf0] %vm1025, 0
      %v1099 = vld [vmem:[#allocation2] sm:$0xf8]
      %v1100 = vld [vmem:[#allocation2 + $0x8] sm:$0xff]
      %v1101 = vld [vmem:[#allocation2 + $0x10] sm:$0xff]
      %v1102 = vld [vmem:[#allocation2 + $0x18] sm:$0xff]
      %v1103 = vld [vmem:[#allocation2 + $0x20] sm:$0xff]
      %v1104 = vld [vmem:[#allocation2 + $0x28] sm:$0xff]
      %v1105 = vld [vmem:[#allocation2 + $0x30] sm:$0xff]
      %v1106 = vld [vmem:[#allocation2 + $0x38] sm:$0xff]
      %v1107 = vld [vmem:[#allocation2 + $0x40] sm:$0xf]
      %v1108 = vsel %vm967, 1, 0
      %v1109 = vsel %vm968, 1, 0
      %v1110 = vsel %vm969, 1, 0
      %v1111 = vsel %vm970, 1, 0
      %v1112 = vsel %vm971, 1, 0
      %v1113 = vsel %vm972, 1, 0
      %v1114 = vsel %vm973, 1, 0
      %v1115 = vsel %vm974, 1, 0
      %v1116 = vsel %vm975, 1, 0
      %v1117 = vsel %vm976, 1, 0
      %v1118 = vsel %vm977, 1, 0
      %v1119 = vsel %vm978, 1, 0
      %v1120 = vsel %vm979, 1, 0
      %v1121 = vsel %vm980, 1, 0
      %v1122 = vsel %vm981, 1, 0
      %v1123 = vsel %vm982, 1, 0
      %vm1124 = vcmp.eq.s32.totalorder %v1108, 1
      %vm1125 = vcmp.eq.s32.totalorder %v1109, 1
      %vm1126 = vcmp.eq.s32.totalorder %v1110, 1
      %vm1127 = vcmp.eq.s32.totalorder %v1111, 1
      %vm1128 = vcmp.eq.s32.totalorder %v1112, 1
      %vm1129 = vcmp.eq.s32.totalorder %v1113, 1
      %vm1130 = vcmp.eq.s32.totalorder %v1114, 1
      %vm1131 = vcmp.eq.s32.totalorder %v1115, 1
      %vm1132 = vcmp.eq.s32.totalorder %v1116, 1
      %vm1133 = vcmp.eq.s32.totalorder %v1117, 1
      %vm1134 = vcmp.eq.s32.totalorder %v1118, 1
      %vm1135 = vcmp.eq.s32.totalorder %v1119, 1
      %vm1136 = vcmp.eq.s32.totalorder %v1120, 1
      %vm1137 = vcmp.eq.s32.totalorder %v1121, 1
      %vm1138 = vcmp.eq.s32.totalorder %v1122, 1
      %vm1139 = vcmp.eq.s32.totalorder %v1123, 1
      %vm1140 = vmpackc.low %vm1124, %vm1124
      %vm1141 = vmpackc.low %vm1125, %vm1125
      %vm1142 = vmpackc.low %vm1126, %vm1126
      %vm1143 = vmpackc.low %vm1127, %vm1127
      %vm1144 = vmpackc.low %vm1128, %vm1128
      %vm1145 = vmpackc.low %vm1129, %vm1129
      %vm1146 = vmpackc.low %vm1130, %vm1130
      %vm1147 = vmpackc.low %vm1131, %vm1131
      %vm1148 = vmpackc.low %vm1132, %vm1132
      %vm1149 = vmpackc.low %vm1133, %vm1133
      %vm1150 = vmpackc.low %vm1134, %vm1134
      %vm1151 = vmpackc.low %vm1135, %vm1135
      %vm1152 = vmpackc.low %vm1136, %vm1136
      %vm1153 = vmpackc.low %vm1137, %vm1137
      %vm1154 = vmpackc.low %vm1138, %vm1138
      %vm1155 = vmpackc.low %vm1139, %vm1139
      %v1156 = vsel %vm1140, 65537, 0
      %v1157 = vsel %vm1141, 65537, 0
      %v1158 = vsel %vm1142, 65537, 0
      %v1159 = vsel %vm1143, 65537, 0
      %v1160 = vsel %vm1144, 65537, 0
      %v1161 = vsel %vm1145, 65537, 0
      %v1162 = vsel %vm1146, 65537, 0
      %v1163 = vsel %vm1147, 65537, 0
      %v1164 = vsel %vm1148, 65537, 0
      %v1165 = vsel %vm1149, 65537, 0
      %v1166 = vsel %vm1150, 65537, 0
      %v1167 = vsel %vm1151, 65537, 0
      %v1168 = vsel %vm1152, 65537, 0
      %v1169 = vsel %vm1153, 65537, 0
      %v1170 = vsel %vm1154, 65537, 0
      %v1171 = vsel %vm1155, 65537, 0
      %v1172 = vunpack.c.l.b16 %v1156
      %v1173 = vunpack.c.l.b16 %v1157
      %v1174 = vunpack.c.l.b16 %v1158
      %v1175 = vunpack.c.l.b16 %v1159
      %v1176 = vunpack.c.l.b16 %v1160
      %v1177 = vunpack.c.l.b16 %v1161
      %v1178 = vunpack.c.l.b16 %v1162
      %v1179 = vunpack.c.l.b16 %v1163
      %v1180 = vunpack.c.l.b16 %v1164
      %v1181 = vunpack.c.l.b16 %v1165
      %v1182 = vunpack.c.l.b16 %v1166
      %v1183 = vunpack.c.l.b16 %v1167
      %v1184 = vunpack.c.l.b16 %v1168
      %v1185 = vunpack.c.l.b16 %v1169
      %v1186 = vunpack.c.l.b16 %v1170
      %v1187 = vunpack.c.l.b16 %v1171
      %v1188 = vpack.c.b16 %v1173, %v1172
      %v1189 = vpack.c.b16 %v1175, %v1174
      %v1190 = vpack.c.b16 %v1177, %v1176
      %v1191 = vpack.c.b16 %v1179, %v1178
      %v1192 = vpack.c.b16 %v1181, %v1180
      %v1193 = vpack.c.b16 %v1183, %v1182
      %v1194 = vpack.c.b16 %v1185, %v1184
      %v1195 = vpack.c.b16 %v1187, %v1186
      %vm1196 = vsmask.f32 3328
      %v1198 = vshrl.u32 %v1188, 16
      %v1200 = vrot.slane %v1198, 4
      %v1201 = vshll.u32 %v1188, 16
      %v1203 = vrot.slane %v1201, 5
      %v1204 = vor.u32 %v1200, %v1203
      %v1206 = vshrl.u32 %v1189, 16
      %v1208 = vrot.slane %v1206, 4
      %v1209 = vshll.u32 %v1189, 16
      %v1211 = vrot.slane %v1209, 5
      %v1212 = vor.u32 %v1208, %v1211
      %v1213 = vsel %vm1196, %v1204, %v1212
      %v1215 = vshrl.u32 %v1190, 16
      %v1217 = vrot.slane %v1215, 4
      %v1218 = vshll.u32 %v1190, 16
      %v1220 = vrot.slane %v1218, 5
      %v1221 = vor.u32 %v1217, %v1220
      %v1222 = vsel %vm1196, %v1212, %v1221
      %v1224 = vshrl.u32 %v1191, 16
      %v1226 = vrot.slane %v1224, 4
      %v1227 = vshll.u32 %v1191, 16
      %v1229 = vrot.slane %v1227, 5
      %v1230 = vor.u32 %v1226, %v1229
      %v1231 = vsel %vm1196, %v1221, %v1230
      %v1233 = vshrl.u32 %v1192, 16
      %v1235 = vrot.slane %v1233, 4
      %v1236 = vshll.u32 %v1192, 16
      %v1238 = vrot.slane %v1236, 5
      %v1239 = vor.u32 %v1235, %v1238
      %v1240 = vsel %vm1196, %v1230, %v1239
      %v1242 = vshrl.u32 %v1193, 16
      %v1244 = vrot.slane %v1242, 4
      %v1245 = vshll.u32 %v1193, 16
      %v1247 = vrot.slane %v1245, 5
      %v1248 = vor.u32 %v1244, %v1247
      %v1249 = vsel %vm1196, %v1239, %v1248
      %v1251 = vshrl.u32 %v1194, 16
      %v1253 = vrot.slane %v1251, 4
      %v1254 = vshll.u32 %v1194, 16
      %v1256 = vrot.slane %v1254, 5
      %v1257 = vor.u32 %v1253, %v1256
      %v1258 = vsel %vm1196, %v1248, %v1257
      %v1260 = vshrl.u32 %v1195, 16
      %v1262 = vrot.slane %v1260, 4
      %v1263 = vshll.u32 %v1195, 16
      %v1265 = vrot.slane %v1263, 5
      %v1266 = vor.u32 %v1262, %v1265
      %v1267 = vsel %vm1196, %v1257, %v1266
      %vm1268 = vcmp.ne.s16.totalorder %v1204, 0
      %vm1269 = vcmp.ne.s16.totalorder %v1213, 0
      %vm1270 = vcmp.ne.s16.totalorder %v1222, 0
      %vm1271 = vcmp.ne.s16.totalorder %v1231, 0
      %vm1272 = vcmp.ne.s16.totalorder %v1240, 0
      %vm1273 = vcmp.ne.s16.totalorder %v1249, 0
      %vm1274 = vcmp.ne.s16.totalorder %v1258, 0
      %vm1275 = vcmp.ne.s16.totalorder %v1267, 0
      %vm1276 = vcmp.ne.s16.totalorder %v1266, 0
      %v1277 = vsel %vm1268, %v1099, 0
      %v1278 = vsel %vm1269, %v1100, 0
      %v1279 = vsel %vm1270, %v1101, 0
      %v1280 = vsel %vm1271, %v1102, 0
      %v1281 = vsel %vm1272, %v1103, 0
      %v1282 = vsel %vm1273, %v1104, 0
      %v1283 = vsel %vm1274, %v1105, 0
      %v1284 = vsel %vm1275, %v1106, 0
      %v1285 = vsel %vm1276, %v1107, 0
      %vm1286 = vsmask.f32 4352
      %v1288 = vshrl.u32 %v1277, 16
      %v1290 = vrot.slane %v1288, 3
      %v1291 = vshll.u32 %v1277, 16
      %v1293 = vrot.slane %v1291, 4
      %v1294 = vor.u32 %v1290, %v1293
      %v1296 = vshrl.u32 %v1278, 16
      %v1298 = vrot.slane %v1296, 3
      %v1299 = vshll.u32 %v1278, 16
      %v1301 = vrot.slane %v1299, 4
      %v1302 = vor.u32 %v1298, %v1301
      %v1303 = vsel %vm1286, %v1294, %v1302
      %v1305 = vshrl.u32 %v1279, 16
      %v1307 = vrot.slane %v1305, 3
      %v1308 = vshll.u32 %v1279, 16
      %v1310 = vrot.slane %v1308, 4
      %v1311 = vor.u32 %v1307, %v1310
      %v1312 = vsel %vm1286, %v1302, %v1311
      %v1314 = vshrl.u32 %v1280, 16
      %v1316 = vrot.slane %v1314, 3
      %v1317 = vshll.u32 %v1280, 16
      %v1319 = vrot.slane %v1317, 4
      %v1320 = vor.u32 %v1316, %v1319
      %v1321 = vsel %vm1286, %v1311, %v1320
      %v1323 = vshrl.u32 %v1281, 16
      %v1325 = vrot.slane %v1323, 3
      %v1326 = vshll.u32 %v1281, 16
      %v1328 = vrot.slane %v1326, 4
      %v1329 = vor.u32 %v1325, %v1328
      %v1330 = vsel %vm1286, %v1320, %v1329
      %v1332 = vshrl.u32 %v1282, 16
      %v1334 = vrot.slane %v1332, 3
      %v1335 = vshll.u32 %v1282, 16
      %v1337 = vrot.slane %v1335, 4
      %v1338 = vor.u32 %v1334, %v1337
      %v1339 = vsel %vm1286, %v1329, %v1338
      %v1341 = vshrl.u32 %v1283, 16
      %v1343 = vrot.slane %v1341, 3
      %v1344 = vshll.u32 %v1283, 16
      %v1346 = vrot.slane %v1344, 4
      %v1347 = vor.u32 %v1343, %v1346
      %v1348 = vsel %vm1286, %v1338, %v1347
      %v1350 = vshrl.u32 %v1284, 16
      %v1352 = vrot.slane %v1350, 3
      %v1353 = vshll.u32 %v1284, 16
      %v1355 = vrot.slane %v1353, 4
      %v1356 = vor.u32 %v1352, %v1355
      %v1357 = vsel %vm1286, %v1347, %v1356
      %v1359 = vshrl.u32 %v1285, 16
      %v1361 = vrot.slane %v1359, 3
      %v1362 = vshll.u32 %v1285, 16
      %v1364 = vrot.slane %v1362, 4
      %v1365 = vor.u32 %v1361, %v1364
      %v1366 = vsel %vm1286, %v1356, %v1365
      %1375 = vst.msk [vmem:[#allocation4] sm:$0xff] %vm1079, %v1303
      %1376 = vst.msk [vmem:[#allocation4 + $0x48] sm:$0xff] %vm1079, %v1312
      %1377 = vst.msk [vmem:[#allocation4 + $0x90] sm:$0xff] %vm1079, %v1321
      %1378 = vst.msk [vmem:[#allocation4 + $0xd8] sm:$0xff] %vm1079, %v1330
      %1379 = vst.msk [vmem:[#allocation4 + $0x120] sm:$0xff] %vm1079, %v1339
      %1380 = vst.msk [vmem:[#allocation4 + $0x168] sm:$0xff] %vm1079, %v1348
      %1381 = vst.msk [vmem:[#allocation4 + $0x1b0] sm:$0xff] %vm1079, %v1357
      %1382 = vst.msk [vmem:[#allocation4 + $0x1f8] sm:$0xff] %vm1079, %v1366
      %v1383 = vld [vmem:[#allocation2] sm:$0xf0]
      %v1384 = vld [vmem:[#allocation2 + $0x8] sm:$0xff]
      %v1385 = vld [vmem:[#allocation2 + $0x10] sm:$0xff]
      %v1386 = vld [vmem:[#allocation2 + $0x18] sm:$0xff]
      %v1387 = vld [vmem:[#allocation2 + $0x20] sm:$0xff]
      %v1388 = vld [vmem:[#allocation2 + $0x28] sm:$0xff]
      %v1389 = vld [vmem:[#allocation2 + $0x30] sm:$0xff]
      %v1390 = vld [vmem:[#allocation2 + $0x38] sm:$0xff]
      %v1391 = vld [vmem:[#allocation2 + $0x40] sm:$0xf]
      %vm1401 = vcmask 1043456
      %v1402 = vrot.slane %v1383, 4
      %v1403 = vrot.slane %v1384, 4
      %v1404 = vsel %vm1401, %v1402, %v1403
      %v1405 = vrot.slane %v1385, 4
      %v1406 = vsel %vm1401, %v1403, %v1405
      %v1407 = vrot.slane %v1386, 4
      %v1408 = vsel %vm1401, %v1405, %v1407
      %v1409 = vrot.slane %v1387, 4
      %v1410 = vsel %vm1401, %v1407, %v1409
      %v1411 = vrot.slane %v1388, 4
      %v1412 = vsel %vm1401, %v1409, %v1411
      %v1413 = vrot.slane %v1389, 4
      %v1414 = vsel %vm1401, %v1411, %v1413
      %v1415 = vrot.slane %v1390, 4
      %v1416 = vsel %vm1401, %v1413, %v1415
      %v1417 = vrot.slane %v1391, 4
      %v1418 = vsel %vm1401, %v1415, %v1417
      %1419 = vrot.lane.b32.xlu0 %v1404, 64
      %v1420 = vpop.permute.xlu0 %1419
      %1421 = vrot.lane.b32.xlu0 %v1406, 64
      %v1422 = vpop.permute.xlu0 %1421
      %1423 = vrot.lane.b32.xlu0 %v1408, 64
      %v1424 = vpop.permute.xlu0 %1423
      %1425 = vrot.lane.b32.xlu0 %v1410, 64
      %v1426 = vpop.permute.xlu0 %1425
      %1427 = vrot.lane.b32.xlu0 %v1412, 64
      %v1428 = vpop.permute.xlu0 %1427
      %1429 = vrot.lane.b32.xlu0 %v1414, 64
      %v1430 = vpop.permute.xlu0 %1429
      %1431 = vrot.lane.b32.xlu0 %v1416, 64
      %v1432 = vpop.permute.xlu0 %1431
      %1433 = vrot.lane.b32.xlu0 %v1418, 64
      %v1434 = vpop.permute.xlu0 %1433
      %vm1443 = vcmask 1048064
      %1444 = vst.msk [vmem:[#allocation4] sm:$0xff] %vm1443, %v1420
      %1445 = vst.msk [vmem:[#allocation4 + $0x48] sm:$0xff] %vm1443, %v1422
      %1446 = vst.msk [vmem:[#allocation4 + $0x90] sm:$0xff] %vm1443, %v1424
      %1447 = vst.msk [vmem:[#allocation4 + $0xd8] sm:$0xff] %vm1443, %v1426
      %1448 = vst.msk [vmem:[#allocation4 + $0x120] sm:$0xff] %vm1443, %v1428
      %1449 = vst.msk [vmem:[#allocation4 + $0x168] sm:$0xff] %vm1443, %v1430
      %1450 = vst.msk [vmem:[#allocation4 + $0x1b0] sm:$0xff] %vm1443, %v1432
      %1451 = vst.msk [vmem:[#allocation4 + $0x1f8] sm:$0xff] %vm1443, %v1434
      %v1452 = vld [vmem:[#allocation2] sm:$0xf0]
      %v1453 = vld [vmem:[#allocation2 + $0x8] sm:$0xff]
      %v1454 = vld [vmem:[#allocation2 + $0x10] sm:$0xff]
      %v1455 = vld [vmem:[#allocation2 + $0x18] sm:$0xff]
      %v1456 = vld [vmem:[#allocation2 + $0x20] sm:$0xff]
      %v1457 = vld [vmem:[#allocation2 + $0x28] sm:$0xff]
      %v1458 = vld [vmem:[#allocation2 + $0x30] sm:$0xff]
      %v1459 = vld [vmem:[#allocation2 + $0x38] sm:$0xff]
      %v1460 = vld [vmem:[#allocation2 + $0x40] sm:$0x1f]
      %v1461 = vsel %vm951, 1, 0
      %v1462 = vsel %vm952, 1, 0
      %v1463 = vsel %vm953, 1, 0
      %v1464 = vsel %vm954, 1, 0
      %v1465 = vsel %vm955, 1, 0
      %v1466 = vsel %vm956, 1, 0
      %v1467 = vsel %vm957, 1, 0
      %v1468 = vsel %vm958, 1, 0
      %v1469 = vsel %vm959, 1, 0
      %v1470 = vsel %vm960, 1, 0
      %v1471 = vsel %vm961, 1, 0
      %v1472 = vsel %vm962, 1, 0
      %v1473 = vsel %vm963, 1, 0
      %v1474 = vsel %vm964, 1, 0
      %v1475 = vsel %vm965, 1, 0
      %v1476 = vsel %vm966, 1, 0
      %vm1477 = vcmp.eq.s32.totalorder %v1461, 1
      %vm1478 = vcmp.eq.s32.totalorder %v1462, 1
      %vm1479 = vcmp.eq.s32.totalorder %v1463, 1
      %vm1480 = vcmp.eq.s32.totalorder %v1464, 1
      %vm1481 = vcmp.eq.s32.totalorder %v1465, 1
      %vm1482 = vcmp.eq.s32.totalorder %v1466, 1
      %vm1483 = vcmp.eq.s32.totalorder %v1467, 1
      %vm1484 = vcmp.eq.s32.totalorder %v1468, 1
      %vm1485 = vcmp.eq.s32.totalorder %v1469, 1
      %vm1486 = vcmp.eq.s32.totalorder %v1470, 1
      %vm1487 = vcmp.eq.s32.totalorder %v1471, 1
      %vm1488 = vcmp.eq.s32.totalorder %v1472, 1
      %vm1489 = vcmp.eq.s32.totalorder %v1473, 1
      %vm1490 = vcmp.eq.s32.totalorder %v1474, 1
      %vm1491 = vcmp.eq.s32.totalorder %v1475, 1
      %vm1492 = vcmp.eq.s32.totalorder %v1476, 1
      %vm1493 = vmpackc.low %vm1477, %vm1477
      %vm1494 = vmpackc.low %vm1478, %vm1478
      %vm1495 = vmpackc.low %vm1479, %vm1479
      %vm1496 = vmpackc.low %vm1480, %vm1480
      %vm1497 = vmpackc.low %vm1481, %vm1481
      %vm1498 = vmpackc.low %vm1482, %vm1482
      %vm1499 = vmpackc.low %vm1483, %vm1483
      %vm1500 = vmpackc.low %vm1484, %vm1484
      %vm1501 = vmpackc.low %vm1485, %vm1485
      %vm1502 = vmpackc.low %vm1486, %vm1486
      %vm1503 = vmpackc.low %vm1487, %vm1487
      %vm1504 = vmpackc.low %vm1488, %vm1488
      %vm1505 = vmpackc.low %vm1489, %vm1489
      %vm1506 = vmpackc.low %vm1490, %vm1490
      %vm1507 = vmpackc.low %vm1491, %vm1491
      %vm1508 = vmpackc.low %vm1492, %vm1492
      %v1509 = vsel %vm1493, 65537, 0
      %v1510 = vsel %vm1494, 65537, 0
      %v1511 = vsel %vm1495, 65537, 0
      %v1512 = vsel %vm1496, 65537, 0
      %v1513 = vsel %vm1497, 65537, 0
      %v1514 = vsel %vm1498, 65537, 0
      %v1515 = vsel %vm1499, 65537, 0
      %v1516 = vsel %vm1500, 65537, 0
      %v1517 = vsel %vm1501, 65537, 0
      %v1518 = vsel %vm1502, 65537, 0
      %v1519 = vsel %vm1503, 65537, 0
      %v1520 = vsel %vm1504, 65537, 0
      %v1521 = vsel %vm1505, 65537, 0
      %v1522 = vsel %vm1506, 65537, 0
      %v1523 = vsel %vm1507, 65537, 0
      %v1524 = vsel %vm1508, 65537, 0
      %v1525 = vunpack.c.l.b16 %v1509
      %v1526 = vunpack.c.l.b16 %v1510
      %v1527 = vunpack.c.l.b16 %v1511
      %v1528 = vunpack.c.l.b16 %v1512
      %v1529 = vunpack.c.l.b16 %v1513
      %v1530 = vunpack.c.l.b16 %v1514
      %v1531 = vunpack.c.l.b16 %v1515
      %v1532 = vunpack.c.l.b16 %v1516
      %v1533 = vunpack.c.l.b16 %v1517
      %v1534 = vunpack.c.l.b16 %v1518
      %v1535 = vunpack.c.l.b16 %v1519
      %v1536 = vunpack.c.l.b16 %v1520
      %v1537 = vunpack.c.l.b16 %v1521
      %v1538 = vunpack.c.l.b16 %v1522
      %v1539 = vunpack.c.l.b16 %v1523
      %v1540 = vunpack.c.l.b16 %v1524
      %v1541 = vpack.c.b16 %v1526, %v1525
      %v1542 = vpack.c.b16 %v1528, %v1527
      %v1543 = vpack.c.b16 %v1530, %v1529
      %v1544 = vpack.c.b16 %v1532, %v1531
      %v1545 = vpack.c.b16 %v1534, %v1533
      %v1546 = vpack.c.b16 %v1536, %v1535
      %v1547 = vpack.c.b16 %v1538, %v1537
      %v1548 = vpack.c.b16 %v1540, %v1539
      %v1550 = vshrl.u32 %v1541, 16
      %v1552 = vrot.slane %v1550, 3
      %v1553 = vshll.u32 %v1541, 16
      %v1555 = vrot.slane %v1553, 4
      %v1556 = vor.u32 %v1552, %v1555
      %v1558 = vshrl.u32 %v1542, 16
      %v1560 = vrot.slane %v1558, 3
      %v1561 = vshll.u32 %v1542, 16
      %v1563 = vrot.slane %v1561, 4
      %v1564 = vor.u32 %v1560, %v1563
      %v1565 = vsel %vm1286, %v1556, %v1564
      %v1567 = vshrl.u32 %v1543, 16
      %v1569 = vrot.slane %v1567, 3
      %v1570 = vshll.u32 %v1543, 16
      %v1572 = vrot.slane %v1570, 4
      %v1573 = vor.u32 %v1569, %v1572
      %v1574 = vsel %vm1286, %v1564, %v1573
      %v1576 = vshrl.u32 %v1544, 16
      %v1578 = vrot.slane %v1576, 3
      %v1579 = vshll.u32 %v1544, 16
      %v1581 = vrot.slane %v1579, 4
      %v1582 = vor.u32 %v1578, %v1581
      %v1583 = vsel %vm1286, %v1573, %v1582
      %v1585 = vshrl.u32 %v1545, 16
      %v1587 = vrot.slane %v1585, 3
      %v1588 = vshll.u32 %v1545, 16
      %v1590 = vrot.slane %v1588, 4
      %v1591 = vor.u32 %v1587, %v1590
      %v1592 = vsel %vm1286, %v1582, %v1591
      %v1594 = vshrl.u32 %v1546, 16
      %v1596 = vrot.slane %v1594, 3
      %v1597 = vshll.u32 %v1546, 16
      %v1599 = vrot.slane %v1597, 4
      %v1600 = vor.u32 %v1596, %v1599
      %v1601 = vsel %vm1286, %v1591, %v1600
      %v1603 = vshrl.u32 %v1547, 16
      %v1605 = vrot.slane %v1603, 3
      %v1606 = vshll.u32 %v1547, 16
      %v1608 = vrot.slane %v1606, 4
      %v1609 = vor.u32 %v1605, %v1608
      %v1610 = vsel %vm1286, %v1600, %v1609
      %v1612 = vshrl.u32 %v1548, 16
      %v1614 = vrot.slane %v1612, 3
      %v1615 = vshll.u32 %v1548, 16
      %v1617 = vrot.slane %v1615, 4
      %v1618 = vor.u32 %v1614, %v1617
      %v1619 = vsel %vm1286, %v1609, %v1618
      %vm1620 = vcmp.ne.s16.totalorder %v1556, 0
      %vm1621 = vcmp.ne.s16.totalorder %v1565, 0
      %vm1622 = vcmp.ne.s16.totalorder %v1574, 0
      %vm1623 = vcmp.ne.s16.totalorder %v1583, 0
      %vm1624 = vcmp.ne.s16.totalorder %v1592, 0
      %vm1625 = vcmp.ne.s16.totalorder %v1601, 0
      %vm1626 = vcmp.ne.s16.totalorder %v1610, 0
      %vm1627 = vcmp.ne.s16.totalorder %v1619, 0
      %vm1628 = vcmp.ne.s16.totalorder %v1618, 0
      %v1629 = vsel %vm1620, %v1452, 0
      %v1630 = vsel %vm1621, %v1453, 0
      %v1631 = vsel %vm1622, %v1454, 0
      %v1632 = vsel %vm1623, %v1455, 0
      %v1633 = vsel %vm1624, %v1456, 0
      %v1634 = vsel %vm1625, %v1457, 0
      %v1635 = vsel %vm1626, %v1458, 0
      %v1636 = vsel %vm1627, %v1459, 0
      %v1637 = vsel %vm1628, %v1460, 0
      %v1639 = vshrl.u32 %v1629, 16
      %v1641 = vrot.slane %v1639, 4
      %v1642 = vshll.u32 %v1629, 16
      %v1644 = vrot.slane %v1642, 5
      %v1645 = vor.u32 %v1641, %v1644
      %v1647 = vshrl.u32 %v1630, 16
      %v1649 = vrot.slane %v1647, 4
      %v1650 = vshll.u32 %v1630, 16
      %v1652 = vrot.slane %v1650, 5
      %v1653 = vor.u32 %v1649, %v1652
      %v1654 = vsel %vm1196, %v1645, %v1653
      %v1656 = vshrl.u32 %v1631, 16
      %v1658 = vrot.slane %v1656, 4
      %v1659 = vshll.u32 %v1631, 16
      %v1661 = vrot.slane %v1659, 5
      %v1662 = vor.u32 %v1658, %v1661
      %v1663 = vsel %vm1196, %v1653, %v1662
      %v1665 = vshrl.u32 %v1632, 16
      %v1667 = vrot.slane %v1665, 4
      %v1668 = vshll.u32 %v1632, 16
      %v1670 = vrot.slane %v1668, 5
      %v1671 = vor.u32 %v1667, %v1670
      %v1672 = vsel %vm1196, %v1662, %v1671
      %v1674 = vshrl.u32 %v1633, 16
      %v1676 = vrot.slane %v1674, 4
      %v1677 = vshll.u32 %v1633, 16
      %v1679 = vrot.slane %v1677, 5
      %v1680 = vor.u32 %v1676, %v1679
      %v1681 = vsel %vm1196, %v1671, %v1680
      %v1683 = vshrl.u32 %v1634, 16
      %v1685 = vrot.slane %v1683, 4
      %v1686 = vshll.u32 %v1634, 16
      %v1688 = vrot.slane %v1686, 5
      %v1689 = vor.u32 %v1685, %v1688
      %v1690 = vsel %vm1196, %v1680, %v1689
      %v1692 = vshrl.u32 %v1635, 16
      %v1694 = vrot.slane %v1692, 4
      %v1695 = vshll.u32 %v1635, 16
      %v1697 = vrot.slane %v1695, 5
      %v1698 = vor.u32 %v1694, %v1697
      %v1699 = vsel %vm1196, %v1689, %v1698
      %v1701 = vshrl.u32 %v1636, 16
      %v1703 = vrot.slane %v1701, 4
      %v1704 = vshll.u32 %v1636, 16
      %v1706 = vrot.slane %v1704, 5
      %v1707 = vor.u32 %v1703, %v1706
      %v1708 = vsel %vm1196, %v1698, %v1707
      %v1710 = vshrl.u32 %v1637, 16
      %v1712 = vrot.slane %v1710, 4
      %v1713 = vshll.u32 %v1637, 16
      %v1715 = vrot.slane %v1713, 5
      %v1716 = vor.u32 %v1712, %v1715
      %v1717 = vsel %vm1196, %v1707, %v1716
      %1726 = vst.msk [vmem:[#allocation4 + $0x8] sm:$0xff] %vm1079, %v1654
      %1727 = vst.msk [vmem:[#allocation4 + $0x50] sm:$0xff] %vm1079, %v1663
      %1728 = vst.msk [vmem:[#allocation4 + $0x98] sm:$0xff] %vm1079, %v1672
      %1729 = vst.msk [vmem:[#allocation4 + $0xe0] sm:$0xff] %vm1079, %v1681
      %1730 = vst.msk [vmem:[#allocation4 + $0x128] sm:$0xff] %vm1079, %v1690
      %1731 = vst.msk [vmem:[#allocation4 + $0x170] sm:$0xff] %vm1079, %v1699
      %1732 = vst.msk [vmem:[#allocation4 + $0x1b8] sm:$0xff] %vm1079, %v1708
      %1733 = vst.msk [vmem:[#allocation4 + $0x200] sm:$0xff] %vm1079, %v1717
      %v1734 = vld [vmem:[#allocation2 + $0x8] sm:$0xf8]
      %v1735 = vld [vmem:[#allocation2 + $0x10] sm:$0xff]
      %v1736 = vld [vmem:[#allocation2 + $0x18] sm:$0xff]
      %v1737 = vld [vmem:[#allocation2 + $0x20] sm:$0xff]
      %v1738 = vld [vmem:[#allocation2 + $0x28] sm:$0xff]
      %v1739 = vld [vmem:[#allocation2 + $0x30] sm:$0xff]
      %v1740 = vld [vmem:[#allocation2 + $0x38] sm:$0xff]
      %v1741 = vld [vmem:[#allocation2 + $0x40] sm:$0xff]
      %v1742 = vld [vmem:[#allocation2 + $0x48] sm:$0xf]
      %v1743 = vsel %vm1268, %v1734, 0
      %v1744 = vsel %vm1269, %v1735, 0
      %v1745 = vsel %vm1270, %v1736, 0
      %v1746 = vsel %vm1271, %v1737, 0
      %v1747 = vsel %vm1272, %v1738, 0
      %v1748 = vsel %vm1273, %v1739, 0
      %v1749 = vsel %vm1274, %v1740, 0
      %v1750 = vsel %vm1275, %v1741, 0
      %v1751 = vsel %vm1276, %v1742, 0
      %v1753 = vshrl.u32 %v1743, 16
      %v1755 = vrot.slane %v1753, 3
      %v1756 = vshll.u32 %v1743, 16
      %v1758 = vrot.slane %v1756, 4
      %v1759 = vor.u32 %v1755, %v1758
      %v1761 = vshrl.u32 %v1744, 16
      %v1763 = vrot.slane %v1761, 3
      %v1764 = vshll.u32 %v1744, 16
      %v1766 = vrot.slane %v1764, 4
      %v1767 = vor.u32 %v1763, %v1766
      %v1768 = vsel %vm1286, %v1759, %v1767
      %v1770 = vshrl.u32 %v1745, 16
      %v1772 = vrot.slane %v1770, 3
      %v1773 = vshll.u32 %v1745, 16
      %v1775 = vrot.slane %v1773, 4
      %v1776 = vor.u32 %v1772, %v1775
      %v1777 = vsel %vm1286, %v1767, %v1776
      %v1779 = vshrl.u32 %v1746, 16
      %v1781 = vrot.slane %v1779, 3
      %v1782 = vshll.u32 %v1746, 16
      %v1784 = vrot.slane %v1782, 4
      %v1785 = vor.u32 %v1781, %v1784
      %v1786 = vsel %vm1286, %v1776, %v1785
      %v1788 = vshrl.u32 %v1747, 16
      %v1790 = vrot.slane %v1788, 3
      %v1791 = vshll.u32 %v1747, 16
      %v1793 = vrot.slane %v1791, 4
      %v1794 = vor.u32 %v1790, %v1793
      %v1795 = vsel %vm1286, %v1785, %v1794
      %v1797 = vshrl.u32 %v1748, 16
      %v1799 = vrot.slane %v1797, 3
      %v1800 = vshll.u32 %v1748, 16
      %v1802 = vrot.slane %v1800, 4
      %v1803 = vor.u32 %v1799, %v1802
      %v1804 = vsel %vm1286, %v1794, %v1803
      %v1806 = vshrl.u32 %v1749, 16
      %v1808 = vrot.slane %v1806, 3
      %v1809 = vshll.u32 %v1749, 16
      %v1811 = vrot.slane %v1809, 4
      %v1812 = vor.u32 %v1808, %v1811
      %v1813 = vsel %vm1286, %v1803, %v1812
      %v1815 = vshrl.u32 %v1750, 16
      %v1817 = vrot.slane %v1815, 3
      %v1818 = vshll.u32 %v1750, 16
      %v1820 = vrot.slane %v1818, 4
      %v1821 = vor.u32 %v1817, %v1820
      %v1822 = vsel %vm1286, %v1812, %v1821
      %v1824 = vshrl.u32 %v1751, 16
      %v1826 = vrot.slane %v1824, 3
      %v1827 = vshll.u32 %v1751, 16
      %v1829 = vrot.slane %v1827, 4
      %v1830 = vor.u32 %v1826, %v1829
      %v1831 = vsel %vm1286, %v1821, %v1830
      %1832 = vrot.lane.b32.xlu0 %v1768, 64
      %v1833 = vpop.permute.xlu0 %1832
      %1834 = vrot.lane.b32.xlu0 %v1777, 64
      %v1835 = vpop.permute.xlu0 %1834
      %1836 = vrot.lane.b32.xlu0 %v1786, 64
      %v1837 = vpop.permute.xlu0 %1836
      %1838 = vrot.lane.b32.xlu0 %v1795, 64
      %v1839 = vpop.permute.xlu0 %1838
      %1840 = vrot.lane.b32.xlu0 %v1804, 64
      %v1841 = vpop.permute.xlu0 %1840
      %1842 = vrot.lane.b32.xlu0 %v1813, 64
      %v1843 = vpop.permute.xlu0 %1842
      %1844 = vrot.lane.b32.xlu0 %v1822, 64
      %v1845 = vpop.permute.xlu0 %1844
      %1846 = vrot.lane.b32.xlu0 %v1831, 64
      %v1847 = vpop.permute.xlu0 %1846
      %1856 = vst.msk [vmem:[#allocation4 + $0x8] sm:$0xff] %vm1443, %v1833
      %1857 = vst.msk [vmem:[#allocation4 + $0x50] sm:$0xff] %vm1443, %v1835
      %1858 = vst.msk [vmem:[#allocation4 + $0x98] sm:$0xff] %vm1443, %v1837
      %1859 = vst.msk [vmem:[#allocation4 + $0xe0] sm:$0xff] %vm1443, %v1839
      %1860 = vst.msk [vmem:[#allocation4 + $0x128] sm:$0xff] %vm1443, %v1841
      %1861 = vst.msk [vmem:[#allocation4 + $0x170] sm:$0xff] %vm1443, %v1843
      %1862 = vst.msk [vmem:[#allocation4 + $0x1b8] sm:$0xff] %vm1443, %v1845
      %1863 = vst.msk [vmem:[#allocation4 + $0x200] sm:$0xff] %vm1443, %v1847
      %v1864 = vld [vmem:[#allocation2 + $0x8] sm:$0xf0]
      %v1865 = vld [vmem:[#allocation2 + $0x10] sm:$0xff]
      %v1866 = vld [vmem:[#allocation2 + $0x18] sm:$0xff]
      %v1867 = vld [vmem:[#allocation2 + $0x20] sm:$0xff]
      %v1868 = vld [vmem:[#allocation2 + $0x28] sm:$0xff]
      %v1869 = vld [vmem:[#allocation2 + $0x30] sm:$0xff]
      %v1870 = vld [vmem:[#allocation2 + $0x38] sm:$0xff]
      %v1871 = vld [vmem:[#allocation2 + $0x40] sm:$0xff]
      %v1872 = vld [vmem:[#allocation2 + $0x48] sm:$0xf]
      %v1882 = vrot.slane %v1864, 4
      %v1883 = vrot.slane %v1865, 4
      %v1884 = vsel %vm1401, %v1882, %v1883
      %v1885 = vrot.slane %v1866, 4
      %v1886 = vsel %vm1401, %v1883, %v1885
      %v1887 = vrot.slane %v1867, 4
      %v1888 = vsel %vm1401, %v1885, %v1887
      %v1889 = vrot.slane %v1868, 4
      %v1890 = vsel %vm1401, %v1887, %v1889
      %v1891 = vrot.slane %v1869, 4
      %v1892 = vsel %vm1401, %v1889, %v1891
      %v1893 = vrot.slane %v1870, 4
      %v1894 = vsel %vm1401, %v1891, %v1893
      %v1895 = vrot.slane %v1871, 4
      %v1896 = vsel %vm1401, %v1893, %v1895
      %v1897 = vrot.slane %v1872, 4
      %v1898 = vsel %vm1401, %v1895, %v1897
      %1907 = vst.msk [vmem:[#allocation4 + $0x10] sm:$0xff] %vm1079, %v1884
      %1908 = vst.msk [vmem:[#allocation4 + $0x58] sm:$0xff] %vm1079, %v1886
      %1909 = vst.msk [vmem:[#allocation4 + $0xa0] sm:$0xff] %vm1079, %v1888
      %1910 = vst.msk [vmem:[#allocation4 + $0xe8] sm:$0xff] %vm1079, %v1890
      %1911 = vst.msk [vmem:[#allocation4 + $0x130] sm:$0xff] %vm1079, %v1892
      %1912 = vst.msk [vmem:[#allocation4 + $0x178] sm:$0xff] %vm1079, %v1894
      %1913 = vst.msk [vmem:[#allocation4 + $0x1c0] sm:$0xff] %vm1079, %v1896
      %1914 = vst.msk [vmem:[#allocation4 + $0x208] sm:$0xff] %vm1079, %v1898
      %v1915 = vld [vmem:[#allocation2 + $0x8] sm:$0xf0]
      %v1916 = vld [vmem:[#allocation2 + $0x10] sm:$0xff]
      %v1917 = vld [vmem:[#allocation2 + $0x18] sm:$0xff]
      %v1918 = vld [vmem:[#allocation2 + $0x20] sm:$0xff]
      %v1919 = vld [vmem:[#allocation2 + $0x28] sm:$0xff]
      %v1920 = vld [vmem:[#allocation2 + $0x30] sm:$0xff]
      %v1921 = vld [vmem:[#allocation2 + $0x38] sm:$0xff]
      %v1922 = vld [vmem:[#allocation2 + $0x40] sm:$0xff]
      %v1923 = vld [vmem:[#allocation2 + $0x48] sm:$0x1f]
      %v1924 = vsel %vm1620, %v1915, 0
      %v1925 = vsel %vm1621, %v1916, 0
      %v1926 = vsel %vm1622, %v1917, 0
      %v1927 = vsel %vm1623, %v1918, 0
      %v1928 = vsel %vm1624, %v1919, 0
      %v1929 = vsel %vm1625, %v1920, 0
      %v1930 = vsel %vm1626, %v1921, 0
      %v1931 = vsel %vm1627, %v1922, 0
      %v1932 = vsel %vm1628, %v1923, 0
      %v1934 = vshrl.u32 %v1924, 16
      %v1936 = vrot.slane %v1934, 4
      %v1937 = vshll.u32 %v1924, 16
      %v1939 = vrot.slane %v1937, 5
      %v1940 = vor.u32 %v1936, %v1939
      %v1942 = vshrl.u32 %v1925, 16
      %v1944 = vrot.slane %v1942, 4
      %v1945 = vshll.u32 %v1925, 16
      %v1947 = vrot.slane %v1945, 5
      %v1948 = vor.u32 %v1944, %v1947
      %v1949 = vsel %vm1196, %v1940, %v1948
      %v1951 = vshrl.u32 %v1926, 16
      %v1953 = vrot.slane %v1951, 4
      %v1954 = vshll.u32 %v1926, 16
      %v1956 = vrot.slane %v1954, 5
      %v1957 = vor.u32 %v1953, %v1956
      %v1958 = vsel %vm1196, %v1948, %v1957
      %v1960 = vshrl.u32 %v1927, 16
      %v1962 = vrot.slane %v1960, 4
      %v1963 = vshll.u32 %v1927, 16
      %v1965 = vrot.slane %v1963, 5
      %v1966 = vor.u32 %v1962, %v1965
      %v1967 = vsel %vm1196, %v1957, %v1966
      %v1969 = vshrl.u32 %v1928, 16
      %v1971 = vrot.slane %v1969, 4
      %v1972 = vshll.u32 %v1928, 16
      %v1974 = vrot.slane %v1972, 5
      %v1975 = vor.u32 %v1971, %v1974
      %v1976 = vsel %vm1196, %v1966, %v1975
      %v1978 = vshrl.u32 %v1929, 16
      %v1980 = vrot.slane %v1978, 4
      %v1981 = vshll.u32 %v1929, 16
      %v1983 = vrot.slane %v1981, 5
      %v1984 = vor.u32 %v1980, %v1983
      %v1985 = vsel %vm1196, %v1975, %v1984
      %v1987 = vshrl.u32 %v1930, 16
      %v1989 = vrot.slane %v1987, 4
      %v1990 = vshll.u32 %v1930, 16
      %v1992 = vrot.slane %v1990, 5
      %v1993 = vor.u32 %v1989, %v1992
      %v1994 = vsel %vm1196, %v1984, %v1993
      %v1996 = vshrl.u32 %v1931, 16
      %v1998 = vrot.slane %v1996, 4
      %v1999 = vshll.u32 %v1931, 16
      %v2001 = vrot.slane %v1999, 5
      %v2002 = vor.u32 %v1998, %v2001
      %v2003 = vsel %vm1196, %v1993, %v2002
      %v2005 = vshrl.u32 %v1932, 16
      %v2007 = vrot.slane %v2005, 4
      %v2008 = vshll.u32 %v1932, 16
      %v2010 = vrot.slane %v2008, 5
      %v2011 = vor.u32 %v2007, %v2010
      %v2012 = vsel %vm1196, %v2002, %v2011
      %2013 = vrot.lane.b32.xlu0 %v1949, 64
      %v2014 = vpop.permute.xlu0 %2013
      %2015 = vrot.lane.b32.xlu0 %v1958, 64
      %v2016 = vpop.permute.xlu0 %2015
      %2017 = vrot.lane.b32.xlu0 %v1967, 64
      %v2018 = vpop.permute.xlu0 %2017
      %2019 = vrot.lane.b32.xlu0 %v1976, 64
      %v2020 = vpop.permute.xlu0 %2019
      %2021 = vrot.lane.b32.xlu0 %v1985, 64
      %v2022 = vpop.permute.xlu0 %2021
      %2023 = vrot.lane.b32.xlu0 %v1994, 64
      %v2024 = vpop.permute.xlu0 %2023
      %2025 = vrot.lane.b32.xlu0 %v2003, 64
      %v2026 = vpop.permute.xlu0 %2025
      %2027 = vrot.lane.b32.xlu0 %v2012, 64
      %v2028 = vpop.permute.xlu0 %2027
      %2037 = vst.msk [vmem:[#allocation4 + $0x10] sm:$0xff] %vm1443, %v2014
      %2038 = vst.msk [vmem:[#allocation4 + $0x58] sm:$0xff] %vm1443, %v2016
      %2039 = vst.msk [vmem:[#allocation4 + $0xa0] sm:$0xff] %vm1443, %v2018
      %2040 = vst.msk [vmem:[#allocation4 + $0xe8] sm:$0xff] %vm1443, %v2020
      %2041 = vst.msk [vmem:[#allocation4 + $0x130] sm:$0xff] %vm1443, %v2022
      %2042 = vst.msk [vmem:[#allocation4 + $0x178] sm:$0xff] %vm1443, %v2024
      %2043 = vst.msk [vmem:[#allocation4 + $0x1c0] sm:$0xff] %vm1443, %v2026
      %2044 = vst.msk [vmem:[#allocation4 + $0x208] sm:$0xff] %vm1443, %v2028
      %v2045 = vld [vmem:[#allocation2 + $0x10] sm:$0xf8]
      %v2046 = vld [vmem:[#allocation2 + $0x18] sm:$0xff]
      %v2047 = vld [vmem:[#allocation2 + $0x20] sm:$0xff]
      %v2048 = vld [vmem:[#allocation2 + $0x28] sm:$0xff]
      %v2049 = vld [vmem:[#allocation2 + $0x30] sm:$0xff]
      %v2050 = vld [vmem:[#allocation2 + $0x38] sm:$0xff]
      %v2051 = vld [vmem:[#allocation2 + $0x40] sm:$0xff]
      %v2052 = vld [vmem:[#allocation2 + $0x48] sm:$0xff]
      %v2053 = vld [vmem:[#allocation2 + $0x50] sm:$0xf]
      %v2054 = vsel %vm1268, %v2045, 0
      %v2055 = vsel %vm1269, %v2046, 0
      %v2056 = vsel %vm1270, %v2047, 0
      %v2057 = vsel %vm1271, %v2048, 0
      %v2058 = vsel %vm1272, %v2049, 0
      %v2059 = vsel %vm1273, %v2050, 0
      %v2060 = vsel %vm1274, %v2051, 0
      %v2061 = vsel %vm1275, %v2052, 0
      %v2062 = vsel %vm1276, %v2053, 0
      %v2064 = vshrl.u32 %v2054, 16
      %v2066 = vrot.slane %v2064, 3
      %v2067 = vshll.u32 %v2054, 16
      %v2069 = vrot.slane %v2067, 4
      %v2070 = vor.u32 %v2066, %v2069
      %v2072 = vshrl.u32 %v2055, 16
      %v2074 = vrot.slane %v2072, 3
      %v2075 = vshll.u32 %v2055, 16
      %v2077 = vrot.slane %v2075, 4
      %v2078 = vor.u32 %v2074, %v2077
      %v2079 = vsel %vm1286, %v2070, %v2078
      %v2081 = vshrl.u32 %v2056, 16
      %v2083 = vrot.slane %v2081, 3
      %v2084 = vshll.u32 %v2056, 16
      %v2086 = vrot.slane %v2084, 4
      %v2087 = vor.u32 %v2083, %v2086
      %v2088 = vsel %vm1286, %v2078, %v2087
      %v2090 = vshrl.u32 %v2057, 16
      %v2092 = vrot.slane %v2090, 3
      %v2093 = vshll.u32 %v2057, 16
      %v2095 = vrot.slane %v2093, 4
      %v2096 = vor.u32 %v2092, %v2095
      %v2097 = vsel %vm1286, %v2087, %v2096
      %v2099 = vshrl.u32 %v2058, 16
      %v2101 = vrot.slane %v2099, 3
      %v2102 = vshll.u32 %v2058, 16
      %v2104 = vrot.slane %v2102, 4
      %v2105 = vor.u32 %v2101, %v2104
      %v2106 = vsel %vm1286, %v2096, %v2105
      %v2108 = vshrl.u32 %v2059, 16
      %v2110 = vrot.slane %v2108, 3
      %v2111 = vshll.u32 %v2059, 16
      %v2113 = vrot.slane %v2111, 4
      %v2114 = vor.u32 %v2110, %v2113
      %v2115 = vsel %vm1286, %v2105, %v2114
      %v2117 = vshrl.u32 %v2060, 16
      %v2119 = vrot.slane %v2117, 3
      %v2120 = vshll.u32 %v2060, 16
      %v2122 = vrot.slane %v2120, 4
      %v2123 = vor.u32 %v2119, %v2122
      %v2124 = vsel %vm1286, %v2114, %v2123
      %v2126 = vshrl.u32 %v2061, 16
      %v2128 = vrot.slane %v2126, 3
      %v2129 = vshll.u32 %v2061, 16
      %v2131 = vrot.slane %v2129, 4
      %v2132 = vor.u32 %v2128, %v2131
      %v2133 = vsel %vm1286, %v2123, %v2132
      %v2135 = vshrl.u32 %v2062, 16
      %v2137 = vrot.slane %v2135, 3
      %v2138 = vshll.u32 %v2062, 16
      %v2140 = vrot.slane %v2138, 4
      %v2141 = vor.u32 %v2137, %v2140
      %v2142 = vsel %vm1286, %v2132, %v2141
      %2151 = vst.msk [vmem:[#allocation4 + $0x18] sm:$0xff] %vm1079, %v2079
      %2152 = vst.msk [vmem:[#allocation4 + $0x60] sm:$0xff] %vm1079, %v2088
      %2153 = vst.msk [vmem:[#allocation4 + $0xa8] sm:$0xff] %vm1079, %v2097
      %2154 = vst.msk [vmem:[#allocation4 + $0xf0] sm:$0xff] %vm1079, %v2106
      %2155 = vst.msk [vmem:[#allocation4 + $0x138] sm:$0xff] %vm1079, %v2115
      %2156 = vst.msk [vmem:[#allocation4 + $0x180] sm:$0xff] %vm1079, %v2124
      %2157 = vst.msk [vmem:[#allocation4 + $0x1c8] sm:$0xff] %vm1079, %v2133
      %2158 = vst.msk [vmem:[#allocation4 + $0x210] sm:$0xff] %vm1079, %v2142
      %v2159 = vld [vmem:[#allocation2 + $0x10] sm:$0xf0]
      %v2160 = vld [vmem:[#allocation2 + $0x18] sm:$0xff]
      %v2161 = vld [vmem:[#allocation2 + $0x20] sm:$0xff]
      %v2162 = vld [vmem:[#allocation2 + $0x28] sm:$0xff]
      %v2163 = vld [vmem:[#allocation2 + $0x30] sm:$0xff]
      %v2164 = vld [vmem:[#allocation2 + $0x38] sm:$0xff]
      %v2165 = vld [vmem:[#allocation2 + $0x40] sm:$0xff]
      %v2166 = vld [vmem:[#allocation2 + $0x48] sm:$0xff]
      %v2167 = vld [vmem:[#allocation2 + $0x50] sm:$0xf]
      %v2177 = vrot.slane %v2159, 4
      %v2178 = vrot.slane %v2160, 4
      %v2179 = vsel %vm1401, %v2177, %v2178
      %v2180 = vrot.slane %v2161, 4
      %v2181 = vsel %vm1401, %v2178, %v2180
      %v2182 = vrot.slane %v2162, 4
      %v2183 = vsel %vm1401, %v2180, %v2182
      %v2184 = vrot.slane %v2163, 4
      %v2185 = vsel %vm1401, %v2182, %v2184
      %v2186 = vrot.slane %v2164, 4
      %v2187 = vsel %vm1401, %v2184, %v2186
      %v2188 = vrot.slane %v2165, 4
      %v2189 = vsel %vm1401, %v2186, %v2188
      %v2190 = vrot.slane %v2166, 4
      %v2191 = vsel %vm1401, %v2188, %v2190
      %v2192 = vrot.slane %v2167, 4
      %v2193 = vsel %vm1401, %v2190, %v2192
      %2194 = vrot.lane.b32.xlu0 %v2179, 64
      %v2195 = vpop.permute.xlu0 %2194
      %2196 = vrot.lane.b32.xlu0 %v2181, 64
      %v2197 = vpop.permute.xlu0 %2196
      %2198 = vrot.lane.b32.xlu0 %v2183, 64
      %v2199 = vpop.permute.xlu0 %2198
      %2200 = vrot.lane.b32.xlu0 %v2185, 64
      %v2201 = vpop.permute.xlu0 %2200
      %2202 = vrot.lane.b32.xlu0 %v2187, 64
      %v2203 = vpop.permute.xlu0 %2202
      %2204 = vrot.lane.b32.xlu0 %v2189, 64
      %v2205 = vpop.permute.xlu0 %2204
      %2206 = vrot.lane.b32.xlu0 %v2191, 64
      %v2207 = vpop.permute.xlu0 %2206
      %2208 = vrot.lane.b32.xlu0 %v2193, 64
      %v2209 = vpop.permute.xlu0 %2208
      %2218 = vst.msk [vmem:[#allocation4 + $0x18] sm:$0xff] %vm1443, %v2195
      %2219 = vst.msk [vmem:[#allocation4 + $0x60] sm:$0xff] %vm1443, %v2197
      %2220 = vst.msk [vmem:[#allocation4 + $0xa8] sm:$0xff] %vm1443, %v2199
      %2221 = vst.msk [vmem:[#allocation4 + $0xf0] sm:$0xff] %vm1443, %v2201
      %2222 = vst.msk [vmem:[#allocation4 + $0x138] sm:$0xff] %vm1443, %v2203
      %2223 = vst.msk [vmem:[#allocation4 + $0x180] sm:$0xff] %vm1443, %v2205
      %2224 = vst.msk [vmem:[#allocation4 + $0x1c8] sm:$0xff] %vm1443, %v2207
      %2225 = vst.msk [vmem:[#allocation4 + $0x210] sm:$0xff] %vm1443, %v2209
      %v2226 = vld [vmem:[#allocation2 + $0x10] sm:$0xf0]
      %v2227 = vld [vmem:[#allocation2 + $0x18] sm:$0xff]
      %v2228 = vld [vmem:[#allocation2 + $0x20] sm:$0xff]
      %v2229 = vld [vmem:[#allocation2 + $0x28] sm:$0xff]
      %v2230 = vld [vmem:[#allocation2 + $0x30] sm:$0xff]
      %v2231 = vld [vmem:[#allocation2 + $0x38] sm:$0xff]
      %v2232 = vld [vmem:[#allocation2 + $0x40] sm:$0xff]
      %v2233 = vld [vmem:[#allocation2 + $0x48] sm:$0xff]
      %v2234 = vld [vmem:[#allocation2 + $0x50] sm:$0x1f]
      %v2235 = vsel %vm1620, %v2226, 0
      %v2236 = vsel %vm1621, %v2227, 0
      %v2237 = vsel %vm1622, %v2228, 0
      %v2238 = vsel %vm1623, %v2229, 0
      %v2239 = vsel %vm1624, %v2230, 0
      %v2240 = vsel %vm1625, %v2231, 0
      %v2241 = vsel %vm1626, %v2232, 0
      %v2242 = vsel %vm1627, %v2233, 0
      %v2243 = vsel %vm1628, %v2234, 0
      %v2245 = vshrl.u32 %v2235, 16
      %v2247 = vrot.slane %v2245, 4
      %v2248 = vshll.u32 %v2235, 16
      %v2250 = vrot.slane %v2248, 5
      %v2251 = vor.u32 %v2247, %v2250
      %v2253 = vshrl.u32 %v2236, 16
      %v2255 = vrot.slane %v2253, 4
      %v2256 = vshll.u32 %v2236, 16
      %v2258 = vrot.slane %v2256, 5
      %v2259 = vor.u32 %v2255, %v2258
      %v2260 = vsel %vm1196, %v2251, %v2259
      %v2262 = vshrl.u32 %v2237, 16
      %v2264 = vrot.slane %v2262, 4
      %v2265 = vshll.u32 %v2237, 16
      %v2267 = vrot.slane %v2265, 5
      %v2268 = vor.u32 %v2264, %v2267
      %v2269 = vsel %vm1196, %v2259, %v2268
      %v2271 = vshrl.u32 %v2238, 16
      %v2273 = vrot.slane %v2271, 4
      %v2274 = vshll.u32 %v2238, 16
      %v2276 = vrot.slane %v2274, 5
      %v2277 = vor.u32 %v2273, %v2276
      %v2278 = vsel %vm1196, %v2268, %v2277
      %v2280 = vshrl.u32 %v2239, 16
      %v2282 = vrot.slane %v2280, 4
      %v2283 = vshll.u32 %v2239, 16
      %v2285 = vrot.slane %v2283, 5
      %v2286 = vor.u32 %v2282, %v2285
      %v2287 = vsel %vm1196, %v2277, %v2286
      %v2289 = vshrl.u32 %v2240, 16
      %v2291 = vrot.slane %v2289, 4
      %v2292 = vshll.u32 %v2240, 16
      %v2294 = vrot.slane %v2292, 5
      %v2295 = vor.u32 %v2291, %v2294
      %v2296 = vsel %vm1196, %v2286, %v2295
      %v2298 = vshrl.u32 %v2241, 16
      %v2300 = vrot.slane %v2298, 4
      %v2301 = vshll.u32 %v2241, 16
      %v2303 = vrot.slane %v2301, 5
      %v2304 = vor.u32 %v2300, %v2303
      %v2305 = vsel %vm1196, %v2295, %v2304
      %v2307 = vshrl.u32 %v2242, 16
      %v2309 = vrot.slane %v2307, 4
      %v2310 = vshll.u32 %v2242, 16
      %v2312 = vrot.slane %v2310, 5
      %v2313 = vor.u32 %v2309, %v2312
      %v2314 = vsel %vm1196, %v2304, %v2313
      %v2316 = vshrl.u32 %v2243, 16
      %v2318 = vrot.slane %v2316, 4
      %v2319 = vshll.u32 %v2243, 16
      %v2321 = vrot.slane %v2319, 5
      %v2322 = vor.u32 %v2318, %v2321
      %v2323 = vsel %vm1196, %v2313, %v2322
      %2332 = vst.msk [vmem:[#allocation4 + $0x20] sm:$0xff] %vm1079, %v2260
      %2333 = vst.msk [vmem:[#allocation4 + $0x68] sm:$0xff] %vm1079, %v2269
      %2334 = vst.msk [vmem:[#allocation4 + $0xb0] sm:$0xff] %vm1079, %v2278
      %2335 = vst.msk [vmem:[#allocation4 + $0xf8] sm:$0xff] %vm1079, %v2287
      %2336 = vst.msk [vmem:[#allocation4 + $0x140] sm:$0xff] %vm1079, %v2296
      %2337 = vst.msk [vmem:[#allocation4 + $0x188] sm:$0xff] %vm1079, %v2305
      %2338 = vst.msk [vmem:[#allocation4 + $0x1d0] sm:$0xff] %vm1079, %v2314
      %2339 = vst.msk [vmem:[#allocation4 + $0x218] sm:$0xff] %vm1079, %v2323
      %v2340 = vld [vmem:[%s6] sm:$0x1]
      %v2341 = vld [vmem:[%s7] sm:$0x1]
      %v2342 = vld [vmem:[%s682] sm:$0xf]
      %v2343 = vld [vmem:[%s682 + $0x4] sm:$0xf]
      %v2344 = vld [vmem:[%s682 + $0x8] sm:$0xf]
      %v2345 = vld [vmem:[%s682 + $0xc] sm:$0xf]
      %v2346 = vld [vmem:[%s682 + $0x10] sm:$0xf]
      %v2347 = vld [vmem:[%s682 + $0x14] sm:$0xf]
      %v2348 = vld [vmem:[%s682 + $0x18] sm:$0xf]
      %v2349 = vld [vmem:[%s682 + $0x1c] sm:$0xf]
      %v2350 = vld [vmem:[%s682 + $0x20] sm:$0xf]
      %v2351 = vld [vmem:[%s682 + $0x24] sm:$0xf]
      %v2352 = vld [vmem:[%s682 + $0x28] sm:$0xf]
      %v2353 = vld [vmem:[%s682 + $0x2c] sm:$0xf]
      %v2354 = vld [vmem:[%s682 + $0x30] sm:$0xf]
      %v2355 = vld [vmem:[%s682 + $0x34] sm:$0xf]
      %v2356 = vld [vmem:[%s682 + $0x38] sm:$0xf]
      %v2357 = vld [vmem:[%s682 + $0x3c] sm:$0xf]
      %v2358 = vunpack.c.l.bf16 %v2342
      %v2359 = vunpack.c.l.bf16 %v2343
      %v2360 = vunpack.c.l.bf16 %v2344
      %v2361 = vunpack.c.l.bf16 %v2345
      %v2362 = vunpack.c.l.bf16 %v2346
      %v2363 = vunpack.c.l.bf16 %v2347
      %v2364 = vunpack.c.l.bf16 %v2348
      %v2365 = vunpack.c.l.bf16 %v2349
      %v2366 = vunpack.c.l.bf16 %v2350
      %v2367 = vunpack.c.l.bf16 %v2351
      %v2368 = vunpack.c.l.bf16 %v2352
      %v2369 = vunpack.c.l.bf16 %v2353
      %v2370 = vunpack.c.l.bf16 %v2354
      %v2371 = vunpack.c.l.bf16 %v2355
      %v2372 = vunpack.c.l.bf16 %v2356
      %v2373 = vunpack.c.l.bf16 %v2357
      %v2375 = vlaneseq
      %v2376 = vshrl.u32 %v2375, 7
      %v2377 = vsub.s32 0, %v2376
      %v2378 = vrot.slane %v2340, %v2377
      %v2380 = vmul.f32 %v2358, %v2378
      %v2381 = vmul.f32 %v2359, %v2378
      %v2382 = vmul.f32 %v2360, %v2378
      %v2383 = vmul.f32 %v2361, %v2378
      %v2384 = vmul.f32 %v2362, %v2378
      %v2385 = vmul.f32 %v2363, %v2378
      %v2386 = vmul.f32 %v2364, %v2378
      %v2387 = vmul.f32 %v2365, %v2378
      %v2388 = vmul.f32 %v2366, %v2378
      %v2389 = vmul.f32 %v2367, %v2378
      %v2390 = vmul.f32 %v2368, %v2378
      %v2391 = vmul.f32 %v2369, %v2378
      %v2392 = vmul.f32 %v2370, %v2378
      %v2393 = vmul.f32 %v2371, %v2378
      %v2394 = vmul.f32 %v2372, %v2378
      %v2395 = vmul.f32 %v2373, %v2378
      %v2397 = vlaneseq
      %v2398 = vshrl.u32 %v2397, 7
      %v2399 = vsub.s32 0, %v2398
      %v2400 = vrot.slane %v2341, %v2399
      %v2402 = vadd.f32 %v2380, %v2400
      %v2403 = vadd.f32 %v2381, %v2400
      %v2404 = vadd.f32 %v2382, %v2400
      %v2405 = vadd.f32 %v2383, %v2400
      %v2406 = vadd.f32 %v2384, %v2400
      %v2407 = vadd.f32 %v2385, %v2400
      %v2408 = vadd.f32 %v2386, %v2400
      %v2409 = vadd.f32 %v2387, %v2400
      %v2410 = vadd.f32 %v2388, %v2400
      %v2411 = vadd.f32 %v2389, %v2400
      %v2412 = vadd.f32 %v2390, %v2400
      %v2413 = vadd.f32 %v2391, %v2400
      %v2414 = vadd.f32 %v2392, %v2400
      %v2415 = vadd.f32 %v2393, %v2400
      %v2416 = vadd.f32 %v2394, %v2400
      %v2417 = vadd.f32 %v2395, %v2400
      %v2418 = vmax.f32 %v2402, 0.0
      %v2419 = vmax.f32 %v2403, 0.0
      %v2420 = vmax.f32 %v2404, 0.0
      %v2421 = vmax.f32 %v2405, 0.0
      %v2422 = vmax.f32 %v2406, 0.0
      %v2423 = vmax.f32 %v2407, 0.0
      %v2424 = vmax.f32 %v2408, 0.0
      %v2425 = vmax.f32 %v2409, 0.0
      %v2426 = vmax.f32 %v2410, 0.0
      %v2427 = vmax.f32 %v2411, 0.0
      %v2428 = vmax.f32 %v2412, 0.0
      %v2429 = vmax.f32 %v2413, 0.0
      %v2430 = vmax.f32 %v2414, 0.0
      %v2431 = vmax.f32 %v2415, 0.0
      %v2432 = vmax.f32 %v2416, 0.0
      %v2433 = vmax.f32 %v2417, 0.0
      %v2434 = vpack.c.bf16 %v2419, %v2418
      %v2435 = vpack.c.bf16 %v2421, %v2420
      %v2436 = vpack.c.bf16 %v2423, %v2422
      %v2437 = vpack.c.bf16 %v2425, %v2424
      %v2438 = vpack.c.bf16 %v2427, %v2426
      %v2439 = vpack.c.bf16 %v2429, %v2428
      %v2440 = vpack.c.bf16 %v2431, %v2430
      %v2441 = vpack.c.bf16 %v2433, %v2432
      %v2442 = vld [vmem:[%s696] sm:$0xf]
      %v2443 = vld [vmem:[%s696 + $0x4] sm:$0xf]
      %v2444 = vunpack.c.l.bf16 %v2442
      %v2445 = vunpack.c.l.bf16 %v2443
      %v2446 = vmul.f32 %v2444, %v2378
      %v2447 = vmul.f32 %v2445, %v2378
      %v2448 = vadd.f32 %v2446, %v2400
      %v2449 = vadd.f32 %v2447, %v2400
      %v2450 = vmax.f32 %v2448, 0.0
      %v2451 = vmax.f32 %v2449, 0.0
      %v2452 = vpack.c.bf16 %v2451, %v2450
      %v2453 = vld [vmem:[%s713] sm:$0xf]
      %v2454 = vld [vmem:[%s713 + $0x4] sm:$0xf]
      %v2455 = vunpack.c.l.bf16 %v2453
      %v2456 = vunpack.c.l.bf16 %v2454
      %v2457 = vmul.f32 %v2455, %v2378
      %v2458 = vmul.f32 %v2456, %v2378
      %v2459 = vadd.f32 %v2457, %v2400
      %v2460 = vadd.f32 %v2458, %v2400
      %v2461 = vmax.f32 %v2459, 0.0
      %v2462 = vmax.f32 %v2460, 0.0
      %v2463 = vpack.c.bf16 %v2462, %v2461
      %v2464 = vsel %vm1006, 0, %v2452
      %v2465 = vsel %vm1012, 0, %v2463
      %2466 = vst.msk [vmem:[#allocation3] sm:$0xf] %vm1015, 0
      %v2468 = vrot.slane %v2464, 4
      %2470 = vst.msk [vmem:[#allocation3] sm:$0xf0] %vm1025, %v2468
      %2471 = vst.msk [vmem:[#allocation3 + $0x8] sm:$0xf] %vm1015, %v2468
      %v2480 = vrot.slane %v2434, 4
      %v2481 = vrot.slane %v2435, 4
      %v2482 = vsel %vm1401, %v2480, %v2481
      %v2483 = vrot.slane %v2436, 4
      %v2484 = vsel %vm1401, %v2481, %v2483
      %v2485 = vrot.slane %v2437, 4
      %v2486 = vsel %vm1401, %v2483, %v2485
      %v2487 = vrot.slane %v2438, 4
      %v2488 = vsel %vm1401, %v2485, %v2487
      %v2489 = vrot.slane %v2439, 4
      %v2490 = vsel %vm1401, %v2487, %v2489
      %v2491 = vrot.slane %v2440, 4
      %v2492 = vsel %vm1401, %v2489, %v2491
      %v2493 = vrot.slane %v2441, 4
      %v2494 = vsel %vm1401, %v2491, %v2493
      %2504 = vst.msk [vmem:[#allocation3 + $0x8] sm:$0xf0] %vm1025, %v2480
      %2505 = vst.msk [vmem:[#allocation3 + $0x10] sm:$0xff] %vm1079, %v2482
      %2506 = vst.msk [vmem:[#allocation3 + $0x18] sm:$0xff] %vm1079, %v2484
      %2507 = vst.msk [vmem:[#allocation3 + $0x20] sm:$0xff] %vm1079, %v2486
      %2508 = vst.msk [vmem:[#allocation3 + $0x28] sm:$0xff] %vm1079, %v2488
      %2509 = vst.msk [vmem:[#allocation3 + $0x30] sm:$0xff] %vm1079, %v2490
      %2510 = vst.msk [vmem:[#allocation3 + $0x38] sm:$0xff] %vm1079, %v2492
      %2511 = vst.msk [vmem:[#allocation3 + $0x40] sm:$0xff] %vm1079, %v2494
      %2512 = vst.msk [vmem:[#allocation3 + $0x48] sm:$0xf] %vm1015, %v2493
      %v2514 = vrot.slane %v2465, 4
      %2516 = vst.msk [vmem:[#allocation3 + $0x48] sm:$0xf0] %vm1025, %v2514
      %2517 = vst.msk [vmem:[#allocation3 + $0x50] sm:$0xf] %vm1015, %v2514
      %2518 = vst.msk [vmem:[#allocation3 + $0x50] sm:$0xf0] %vm1025, 0
      %v2519 = vld [vmem:[#allocation3] sm:$0xf8]
      %v2520 = vld [vmem:[#allocation3 + $0x8] sm:$0xff]
      %v2521 = vld [vmem:[#allocation3 + $0x10] sm:$0xff]
      %v2522 = vld [vmem:[#allocation3 + $0x18] sm:$0xff]
      %v2523 = vld [vmem:[#allocation3 + $0x20] sm:$0xff]
      %v2524 = vld [vmem:[#allocation3 + $0x28] sm:$0xff]
      %v2525 = vld [vmem:[#allocation3 + $0x30] sm:$0xff]
      %v2526 = vld [vmem:[#allocation3 + $0x38] sm:$0xff]
      %v2527 = vld [vmem:[#allocation3 + $0x40] sm:$0xf]
      %v2528 = vsel %vm1268, %v2519, 0
      %v2529 = vsel %vm1269, %v2520, 0
      %v2530 = vsel %vm1270, %v2521, 0
      %v2531 = vsel %vm1271, %v2522, 0
      %v2532 = vsel %vm1272, %v2523, 0
      %v2533 = vsel %vm1273, %v2524, 0
      %v2534 = vsel %vm1274, %v2525, 0
      %v2535 = vsel %vm1275, %v2526, 0
      %v2536 = vsel %vm1276, %v2527, 0
      %v2538 = vshrl.u32 %v2528, 16
      %v2540 = vrot.slane %v2538, 3
      %v2541 = vshll.u32 %v2528, 16
      %v2543 = vrot.slane %v2541, 4
      %v2544 = vor.u32 %v2540, %v2543
      %v2546 = vshrl.u32 %v2529, 16
      %v2548 = vrot.slane %v2546, 3
      %v2549 = vshll.u32 %v2529, 16
      %v2551 = vrot.slane %v2549, 4
      %v2552 = vor.u32 %v2548, %v2551
      %v2553 = vsel %vm1286, %v2544, %v2552
      %v2555 = vshrl.u32 %v2530, 16
      %v2557 = vrot.slane %v2555, 3
      %v2558 = vshll.u32 %v2530, 16
      %v2560 = vrot.slane %v2558, 4
      %v2561 = vor.u32 %v2557, %v2560
      %v2562 = vsel %vm1286, %v2552, %v2561
      %v2564 = vshrl.u32 %v2531, 16
      %v2566 = vrot.slane %v2564, 3
      %v2567 = vshll.u32 %v2531, 16
      %v2569 = vrot.slane %v2567, 4
      %v2570 = vor.u32 %v2566, %v2569
      %v2571 = vsel %vm1286, %v2561, %v2570
      %v2573 = vshrl.u32 %v2532, 16
      %v2575 = vrot.slane %v2573, 3
      %v2576 = vshll.u32 %v2532, 16
      %v2578 = vrot.slane %v2576, 4
      %v2579 = vor.u32 %v2575, %v2578
      %v2580 = vsel %vm1286, %v2570, %v2579
      %v2582 = vshrl.u32 %v2533, 16
      %v2584 = vrot.slane %v2582, 3
      %v2585 = vshll.u32 %v2533, 16
      %v2587 = vrot.slane %v2585, 4
      %v2588 = vor.u32 %v2584, %v2587
      %v2589 = vsel %vm1286, %v2579, %v2588
      %v2591 = vshrl.u32 %v2534, 16
      %v2593 = vrot.slane %v2591, 3
      %v2594 = vshll.u32 %v2534, 16
      %v2596 = vrot.slane %v2594, 4
      %v2597 = vor.u32 %v2593, %v2596
      %v2598 = vsel %vm1286, %v2588, %v2597
      %v2600 = vshrl.u32 %v2535, 16
      %v2602 = vrot.slane %v2600, 3
      %v2603 = vshll.u32 %v2535, 16
      %v2605 = vrot.slane %v2603, 4
      %v2606 = vor.u32 %v2602, %v2605
      %v2607 = vsel %vm1286, %v2597, %v2606
      %v2609 = vshrl.u32 %v2536, 16
      %v2611 = vrot.slane %v2609, 3
      %v2612 = vshll.u32 %v2536, 16
      %v2614 = vrot.slane %v2612, 4
      %v2615 = vor.u32 %v2611, %v2614
      %v2616 = vsel %vm1286, %v2606, %v2615
      %2617 = vrot.lane.b32.xlu0 %v2553, 64
      %v2618 = vpop.permute.xlu0 %2617
      %2619 = vrot.lane.b32.xlu0 %v2562, 64
      %v2620 = vpop.permute.xlu0 %2619
      %2621 = vrot.lane.b32.xlu0 %v2571, 64
      %v2622 = vpop.permute.xlu0 %2621
      %2623 = vrot.lane.b32.xlu0 %v2580, 64
      %v2624 = vpop.permute.xlu0 %2623
      %2625 = vrot.lane.b32.xlu0 %v2589, 64
      %v2626 = vpop.permute.xlu0 %2625
      %2627 = vrot.lane.b32.xlu0 %v2598, 64
      %v2628 = vpop.permute.xlu0 %2627
      %2629 = vrot.lane.b32.xlu0 %v2607, 64
      %v2630 = vpop.permute.xlu0 %2629
      %2631 = vrot.lane.b32.xlu0 %v2616, 64
      %v2632 = vpop.permute.xlu0 %2631
      %2641 = vst.msk [vmem:[#allocation4 + $0x20] sm:$0xff] %vm1443, %v2618
      %2642 = vst.msk [vmem:[#allocation4 + $0x68] sm:$0xff] %vm1443, %v2620
      %2643 = vst.msk [vmem:[#allocation4 + $0xb0] sm:$0xff] %vm1443, %v2622
      %2644 = vst.msk [vmem:[#allocation4 + $0xf8] sm:$0xff] %vm1443, %v2624
      %2645 = vst.msk [vmem:[#allocation4 + $0x140] sm:$0xff] %vm1443, %v2626
      %2646 = vst.msk [vmem:[#allocation4 + $0x188] sm:$0xff] %vm1443, %v2628
      %2647 = vst.msk [vmem:[#allocation4 + $0x1d0] sm:$0xff] %vm1443, %v2630
      %2648 = vst.msk [vmem:[#allocation4 + $0x218] sm:$0xff] %vm1443, %v2632
      %v2649 = vld [vmem:[#allocation3] sm:$0xf0]
      %v2650 = vld [vmem:[#allocation3 + $0x8] sm:$0xff]
      %v2651 = vld [vmem:[#allocation3 + $0x10] sm:$0xff]
      %v2652 = vld [vmem:[#allocation3 + $0x18] sm:$0xff]
      %v2653 = vld [vmem:[#allocation3 + $0x20] sm:$0xff]
      %v2654 = vld [vmem:[#allocation3 + $0x28] sm:$0xff]
      %v2655 = vld [vmem:[#allocation3 + $0x30] sm:$0xff]
      %v2656 = vld [vmem:[#allocation3 + $0x38] sm:$0xff]
      %v2657 = vld [vmem:[#allocation3 + $0x40] sm:$0xf]
      %v2667 = vrot.slane %v2649, 4
      %v2668 = vrot.slane %v2650, 4
      %v2669 = vsel %vm1401, %v2667, %v2668
      %v2670 = vrot.slane %v2651, 4
      %v2671 = vsel %vm1401, %v2668, %v2670
      %v2672 = vrot.slane %v2652, 4
      %v2673 = vsel %vm1401, %v2670, %v2672
      %v2674 = vrot.slane %v2653, 4
      %v2675 = vsel %vm1401, %v2672, %v2674
      %v2676 = vrot.slane %v2654, 4
      %v2677 = vsel %vm1401, %v2674, %v2676
      %v2678 = vrot.slane %v2655, 4
      %v2679 = vsel %vm1401, %v2676, %v2678
      %v2680 = vrot.slane %v2656, 4
      %v2681 = vsel %vm1401, %v2678, %v2680
      %v2682 = vrot.slane %v2657, 4
      %v2683 = vsel %vm1401, %v2680, %v2682
      %2692 = vst.msk [vmem:[#allocation4 + $0x28] sm:$0xff] %vm1079, %v2669
      %2693 = vst.msk [vmem:[#allocation4 + $0x70] sm:$0xff] %vm1079, %v2671
      %2694 = vst.msk [vmem:[#allocation4 + $0xb8] sm:$0xff] %vm1079, %v2673
      %2695 = vst.msk [vmem:[#allocation4 + $0x100] sm:$0xff] %vm1079, %v2675
      %2696 = vst.msk [vmem:[#allocation4 + $0x148] sm:$0xff] %vm1079, %v2677
      %2697 = vst.msk [vmem:[#allocation4 + $0x190] sm:$0xff] %vm1079, %v2679
      %2698 = vst.msk [vmem:[#allocation4 + $0x1d8] sm:$0xff] %vm1079, %v2681
      %2699 = vst.msk [vmem:[#allocation4 + $0x220] sm:$0xff] %vm1079, %v2683
      %v2700 = vld [vmem:[#allocation3] sm:$0xf0]
      %v2701 = vld [vmem:[#allocation3 + $0x8] sm:$0xff]
      %v2702 = vld [vmem:[#allocation3 + $0x10] sm:$0xff]
      %v2703 = vld [vmem:[#allocation3 + $0x18] sm:$0xff]
      %v2704 = vld [vmem:[#allocation3 + $0x20] sm:$0xff]
      %v2705 = vld [vmem:[#allocation3 + $0x28] sm:$0xff]
      %v2706 = vld [vmem:[#allocation3 + $0x30] sm:$0xff]
      %v2707 = vld [vmem:[#allocation3 + $0x38] sm:$0xff]
      %v2708 = vld [vmem:[#allocation3 + $0x40] sm:$0x1f]
      %v2709 = vsel %vm1620, %v2700, 0
      %v2710 = vsel %vm1621, %v2701, 0
      %v2711 = vsel %vm1622, %v2702, 0
      %v2712 = vsel %vm1623, %v2703, 0
      %v2713 = vsel %vm1624, %v2704, 0
      %v2714 = vsel %vm1625, %v2705, 0
      %v2715 = vsel %vm1626, %v2706, 0
      %v2716 = vsel %vm1627, %v2707, 0
      %v2717 = vsel %vm1628, %v2708, 0
      %v2719 = vshrl.u32 %v2709, 16
      %v2721 = vrot.slane %v2719, 4
      %v2722 = vshll.u32 %v2709, 16
      %v2724 = vrot.slane %v2722, 5
      %v2725 = vor.u32 %v2721, %v2724
      %v2727 = vshrl.u32 %v2710, 16
      %v2729 = vrot.slane %v2727, 4
      %v2730 = vshll.u32 %v2710, 16
      %v2732 = vrot.slane %v2730, 5
      %v2733 = vor.u32 %v2729, %v2732
      %v2734 = vsel %vm1196, %v2725, %v2733
      %v2736 = vshrl.u32 %v2711, 16
      %v2738 = vrot.slane %v2736, 4
      %v2739 = vshll.u32 %v2711, 16
      %v2741 = vrot.slane %v2739, 5
      %v2742 = vor.u32 %v2738, %v2741
      %v2743 = vsel %vm1196, %v2733, %v2742
      %v2745 = vshrl.u32 %v2712, 16
      %v2747 = vrot.slane %v2745, 4
      %v2748 = vshll.u32 %v2712, 16
      %v2750 = vrot.slane %v2748, 5
      %v2751 = vor.u32 %v2747, %v2750
      %v2752 = vsel %vm1196, %v2742, %v2751
      %v2754 = vshrl.u32 %v2713, 16
      %v2756 = vrot.slane %v2754, 4
      %v2757 = vshll.u32 %v2713, 16
      %v2759 = vrot.slane %v2757, 5
      %v2760 = vor.u32 %v2756, %v2759
      %v2761 = vsel %vm1196, %v2751, %v2760
      %v2763 = vshrl.u32 %v2714, 16
      %v2765 = vrot.slane %v2763, 4
      %v2766 = vshll.u32 %v2714, 16
      %v2768 = vrot.slane %v2766, 5
      %v2769 = vor.u32 %v2765, %v2768
      %v2770 = vsel %vm1196, %v2760, %v2769
      %v2772 = vshrl.u32 %v2715, 16
      %v2774 = vrot.slane %v2772, 4
      %v2775 = vshll.u32 %v2715, 16
      %v2777 = vrot.slane %v2775, 5
      %v2778 = vor.u32 %v2774, %v2777
      %v2779 = vsel %vm1196, %v2769, %v2778
      %v2781 = vshrl.u32 %v2716, 16
      %v2783 = vrot.slane %v2781, 4
      %v2784 = vshll.u32 %v2716, 16
      %v2786 = vrot.slane %v2784, 5
      %v2787 = vor.u32 %v2783, %v2786
      %v2788 = vsel %vm1196, %v2778, %v2787
      %v2790 = vshrl.u32 %v2717, 16
      %v2792 = vrot.slane %v2790, 4
      %v2793 = vshll.u32 %v2717, 16
      %v2795 = vrot.slane %v2793, 5
      %v2796 = vor.u32 %v2792, %v2795
      %v2797 = vsel %vm1196, %v2787, %v2796
      %2798 = vrot.lane.b32.xlu0 %v2734, 64
      %v2799 = vpop.permute.xlu0 %2798
      %2800 = vrot.lane.b32.xlu0 %v2743, 64
      %v2801 = vpop.permute.xlu0 %2800
      %2802 = vrot.lane.b32.xlu0 %v2752, 64
      %v2803 = vpop.permute.xlu0 %2802
      %2804 = vrot.lane.b32.xlu0 %v2761, 64
      %v2805 = vpop.permute.xlu0 %2804
      %2806 = vrot.lane.b32.xlu0 %v2770, 64
      %v2807 = vpop.permute.xlu0 %2806
      %2808 = vrot.lane.b32.xlu0 %v2779, 64
      %v2809 = vpop.permute.xlu0 %2808
      %2810 = vrot.lane.b32.xlu0 %v2788, 64
      %v2811 = vpop.permute.xlu0 %2810
      %2812 = vrot.lane.b32.xlu0 %v2797, 64
      %v2813 = vpop.permute.xlu0 %2812
      %2822 = vst.msk [vmem:[#allocation4 + $0x28] sm:$0xff] %vm1443, %v2799
      %2823 = vst.msk [vmem:[#allocation4 + $0x70] sm:$0xff] %vm1443, %v2801
      %2824 = vst.msk [vmem:[#allocation4 + $0xb8] sm:$0xff] %vm1443, %v2803
      %2825 = vst.msk [vmem:[#allocation4 + $0x100] sm:$0xff] %vm1443, %v2805
      %2826 = vst.msk [vmem:[#allocation4 + $0x148] sm:$0xff] %vm1443, %v2807
      %2827 = vst.msk [vmem:[#allocation4 + $0x190] sm:$0xff] %vm1443, %v2809
      %2828 = vst.msk [vmem:[#allocation4 + $0x1d8] sm:$0xff] %vm1443, %v2811
      %2829 = vst.msk [vmem:[#allocation4 + $0x220] sm:$0xff] %vm1443, %v2813
      %v2830 = vld [vmem:[#allocation3 + $0x8] sm:$0xf8]
      %v2831 = vld [vmem:[#allocation3 + $0x10] sm:$0xff]
      %v2832 = vld [vmem:[#allocation3 + $0x18] sm:$0xff]
      %v2833 = vld [vmem:[#allocation3 + $0x20] sm:$0xff]
      %v2834 = vld [vmem:[#allocation3 + $0x28] sm:$0xff]
      %v2835 = vld [vmem:[#allocation3 + $0x30] sm:$0xff]
      %v2836 = vld [vmem:[#allocation3 + $0x38] sm:$0xff]
      %v2837 = vld [vmem:[#allocation3 + $0x40] sm:$0xff]
      %v2838 = vld [vmem:[#allocation3 + $0x48] sm:$0xf]
      %v2839 = vsel %vm1268, %v2830, 0
      %v2840 = vsel %vm1269, %v2831, 0
      %v2841 = vsel %vm1270, %v2832, 0
      %v2842 = vsel %vm1271, %v2833, 0
      %v2843 = vsel %vm1272, %v2834, 0
      %v2844 = vsel %vm1273, %v2835, 0
      %v2845 = vsel %vm1274, %v2836, 0
      %v2846 = vsel %vm1275, %v2837, 0
      %v2847 = vsel %vm1276, %v2838, 0
      %v2849 = vshrl.u32 %v2839, 16
      %v2851 = vrot.slane %v2849, 3
      %v2852 = vshll.u32 %v2839, 16
      %v2854 = vrot.slane %v2852, 4
      %v2855 = vor.u32 %v2851, %v2854
      %v2857 = vshrl.u32 %v2840, 16
      %v2859 = vrot.slane %v2857, 3
      %v2860 = vshll.u32 %v2840, 16
      %v2862 = vrot.slane %v2860, 4
      %v2863 = vor.u32 %v2859, %v2862
      %v2864 = vsel %vm1286, %v2855, %v2863
      %v2866 = vshrl.u32 %v2841, 16
      %v2868 = vrot.slane %v2866, 3
      %v2869 = vshll.u32 %v2841, 16
      %v2871 = vrot.slane %v2869, 4
      %v2872 = vor.u32 %v2868, %v2871
      %v2873 = vsel %vm1286, %v2863, %v2872
      %v2875 = vshrl.u32 %v2842, 16
      %v2877 = vrot.slane %v2875, 3
      %v2878 = vshll.u32 %v2842, 16
      %v2880 = vrot.slane %v2878, 4
      %v2881 = vor.u32 %v2877, %v2880
      %v2882 = vsel %vm1286, %v2872, %v2881
      %v2884 = vshrl.u32 %v2843, 16
      %v2886 = vrot.slane %v2884, 3
      %v2887 = vshll.u32 %v2843, 16
      %v2889 = vrot.slane %v2887, 4
      %v2890 = vor.u32 %v2886, %v2889
      %v2891 = vsel %vm1286, %v2881, %v2890
      %v2893 = vshrl.u32 %v2844, 16
      %v2895 = vrot.slane %v2893, 3
      %v2896 = vshll.u32 %v2844, 16
      %v2898 = vrot.slane %v2896, 4
      %v2899 = vor.u32 %v2895, %v2898
      %v2900 = vsel %vm1286, %v2890, %v2899
      %v2902 = vshrl.u32 %v2845, 16
      %v2904 = vrot.slane %v2902, 3
      %v2905 = vshll.u32 %v2845, 16
      %v2907 = vrot.slane %v2905, 4
      %v2908 = vor.u32 %v2904, %v2907
      %v2909 = vsel %vm1286, %v2899, %v2908
      %v2911 = vshrl.u32 %v2846, 16
      %v2913 = vrot.slane %v2911, 3
      %v2914 = vshll.u32 %v2846, 16
      %v2916 = vrot.slane %v2914, 4
      %v2917 = vor.u32 %v2913, %v2916
      %v2918 = vsel %vm1286, %v2908, %v2917
      %v2920 = vshrl.u32 %v2847, 16
      %v2922 = vrot.slane %v2920, 3
      %v2923 = vshll.u32 %v2847, 16
      %v2925 = vrot.slane %v2923, 4
      %v2926 = vor.u32 %v2922, %v2925
      %v2927 = vsel %vm1286, %v2917, %v2926
      %2936 = vst.msk [vmem:[#allocation4 + $0x30] sm:$0xff] %vm1079, %v2864
      %2937 = vst.msk [vmem:[#allocation4 + $0x78] sm:$0xff] %vm1079, %v2873
      %2938 = vst.msk [vmem:[#allocation4 + $0xc0] sm:$0xff] %vm1079, %v2882
      %2939 = vst.msk [vmem:[#allocation4 + $0x108] sm:$0xff] %vm1079, %v2891
      %2940 = vst.msk [vmem:[#allocation4 + $0x150] sm:$0xff] %vm1079, %v2900
      %2941 = vst.msk [vmem:[#allocation4 + $0x198] sm:$0xff] %vm1079, %v2909
      %2942 = vst.msk [vmem:[#allocation4 + $0x1e0] sm:$0xff] %vm1079, %v2918
      %2943 = vst.msk [vmem:[#allocation4 + $0x228] sm:$0xff] %vm1079, %v2927
      %v2944 = vld [vmem:[#allocation3 + $0x8] sm:$0xf0]
      %v2945 = vld [vmem:[#allocation3 + $0x10] sm:$0xff]
      %v2946 = vld [vmem:[#allocation3 + $0x18] sm:$0xff]
      %v2947 = vld [vmem:[#allocation3 + $0x20] sm:$0xff]
      %v2948 = vld [vmem:[#allocation3 + $0x28] sm:$0xff]
      %v2949 = vld [vmem:[#allocation3 + $0x30] sm:$0xff]
      %v2950 = vld [vmem:[#allocation3 + $0x38] sm:$0xff]
      %v2951 = vld [vmem:[#allocation3 + $0x40] sm:$0xff]
      %v2952 = vld [vmem:[#allocation3 + $0x48] sm:$0xf]
      %v2962 = vrot.slane %v2944, 4
      %v2963 = vrot.slane %v2945, 4
      %v2964 = vsel %vm1401, %v2962, %v2963
      %v2965 = vrot.slane %v2946, 4
      %v2966 = vsel %vm1401, %v2963, %v2965
      %v2967 = vrot.slane %v2947, 4
      %v2968 = vsel %vm1401, %v2965, %v2967
      %v2969 = vrot.slane %v2948, 4
      %v2970 = vsel %vm1401, %v2967, %v2969
      %v2971 = vrot.slane %v2949, 4
      %v2972 = vsel %vm1401, %v2969, %v2971
      %v2973 = vrot.slane %v2950, 4
      %v2974 = vsel %vm1401, %v2971, %v2973
      %v2975 = vrot.slane %v2951, 4
      %v2976 = vsel %vm1401, %v2973, %v2975
      %v2977 = vrot.slane %v2952, 4
      %v2978 = vsel %vm1401, %v2975, %v2977
      %2979 = vrot.lane.b32.xlu0 %v2964, 64
      %v2980 = vpop.permute.xlu0 %2979
      %2981 = vrot.lane.b32.xlu0 %v2966, 64
      %v2982 = vpop.permute.xlu0 %2981
      %2983 = vrot.lane.b32.xlu0 %v2968, 64
      %v2984 = vpop.permute.xlu0 %2983
      %2985 = vrot.lane.b32.xlu0 %v2970, 64
      %v2986 = vpop.permute.xlu0 %2985
      %2987 = vrot.lane.b32.xlu0 %v2972, 64
      %v2988 = vpop.permute.xlu0 %2987
      %2989 = vrot.lane.b32.xlu0 %v2974, 64
      %v2990 = vpop.permute.xlu0 %2989
      %2991 = vrot.lane.b32.xlu0 %v2976, 64
      %v2992 = vpop.permute.xlu0 %2991
      %2993 = vrot.lane.b32.xlu0 %v2978, 64
      %v2994 = vpop.permute.xlu0 %2993
      %3003 = vst.msk [vmem:[#allocation4 + $0x30] sm:$0xff] %vm1443, %v2980
      %3004 = vst.msk [vmem:[#allocation4 + $0x78] sm:$0xff] %vm1443, %v2982
      %3005 = vst.msk [vmem:[#allocation4 + $0xc0] sm:$0xff] %vm1443, %v2984
      %3006 = vst.msk [vmem:[#allocation4 + $0x108] sm:$0xff] %vm1443, %v2986
      %3007 = vst.msk [vmem:[#allocation4 + $0x150] sm:$0xff] %vm1443, %v2988
      %3008 = vst.msk [vmem:[#allocation4 + $0x198] sm:$0xff] %vm1443, %v2990
      %3009 = vst.msk [vmem:[#allocation4 + $0x1e0] sm:$0xff] %vm1443, %v2992
      %3010 = vst.msk [vmem:[#allocation4 + $0x228] sm:$0xff] %vm1443, %v2994
      %v3011 = vld [vmem:[#allocation3 + $0x8] sm:$0xf0]
      %v3012 = vld [vmem:[#allocation3 + $0x10] sm:$0xff]
      %v3013 = vld [vmem:[#allocation3 + $0x18] sm:$0xff]
      %v3014 = vld [vmem:[#allocation3 + $0x20] sm:$0xff]
      %v3015 = vld [vmem:[#allocation3 + $0x28] sm:$0xff]
      %v3016 = vld [vmem:[#allocation3 + $0x30] sm:$0xff]
      %v3017 = vld [vmem:[#allocation3 + $0x38] sm:$0xff]
      %v3018 = vld [vmem:[#allocation3 + $0x40] sm:$0xff]
      %v3019 = vld [vmem:[#allocation3 + $0x48] sm:$0x1f]
      %v3020 = vsel %vm1620, %v3011, 0
      %v3021 = vsel %vm1621, %v3012, 0
      %v3022 = vsel %vm1622, %v3013, 0
      %v3023 = vsel %vm1623, %v3014, 0
      %v3024 = vsel %vm1624, %v3015, 0
      %v3025 = vsel %vm1625, %v3016, 0
      %v3026 = vsel %vm1626, %v3017, 0
      %v3027 = vsel %vm1627, %v3018, 0
      %v3028 = vsel %vm1628, %v3019, 0
      %v3030 = vshrl.u32 %v3020, 16
      %v3032 = vrot.slane %v3030, 4
      %v3033 = vshll.u32 %v3020, 16
      %v3035 = vrot.slane %v3033, 5
      %v3036 = vor.u32 %v3032, %v3035
      %v3038 = vshrl.u32 %v3021, 16
      %v3040 = vrot.slane %v3038, 4
      %v3041 = vshll.u32 %v3021, 16
      %v3043 = vrot.slane %v3041, 5
      %v3044 = vor.u32 %v3040, %v3043
      %v3045 = vsel %vm1196, %v3036, %v3044
      %v3047 = vshrl.u32 %v3022, 16
      %v3049 = vrot.slane %v3047, 4
      %v3050 = vshll.u32 %v3022, 16
      %v3052 = vrot.slane %v3050, 5
      %v3053 = vor.u32 %v3049, %v3052
      %v3054 = vsel %vm1196, %v3044, %v3053
      %v3056 = vshrl.u32 %v3023, 16
      %v3058 = vrot.slane %v3056, 4
      %v3059 = vshll.u32 %v3023, 16
      %v3061 = vrot.slane %v3059, 5
      %v3062 = vor.u32 %v3058, %v3061
      %v3063 = vsel %vm1196, %v3053, %v3062
      %v3065 = vshrl.u32 %v3024, 16
      %v3067 = vrot.slane %v3065, 4
      %v3068 = vshll.u32 %v3024, 16
      %v3070 = vrot.slane %v3068, 5
      %v3071 = vor.u32 %v3067, %v3070
      %v3072 = vsel %vm1196, %v3062, %v3071
      %v3074 = vshrl.u32 %v3025, 16
      %v3076 = vrot.slane %v3074, 4
      %v3077 = vshll.u32 %v3025, 16
      %v3079 = vrot.slane %v3077, 5
      %v3080 = vor.u32 %v3076, %v3079
      %v3081 = vsel %vm1196, %v3071, %v3080
      %v3083 = vshrl.u32 %v3026, 16
      %v3085 = vrot.slane %v3083, 4
      %v3086 = vshll.u32 %v3026, 16
      %v3088 = vrot.slane %v3086, 5
      %v3089 = vor.u32 %v3085, %v3088
      %v3090 = vsel %vm1196, %v3080, %v3089
      %v3092 = vshrl.u32 %v3027, 16
      %v3094 = vrot.slane %v3092, 4
      %v3095 = vshll.u32 %v3027, 16
      %v3097 = vrot.slane %v3095, 5
      %v3098 = vor.u32 %v3094, %v3097
      %v3099 = vsel %vm1196, %v3089, %v3098
      %v3101 = vshrl.u32 %v3028, 16
      %v3103 = vrot.slane %v3101, 4
      %v3104 = vshll.u32 %v3028, 16
      %v3106 = vrot.slane %v3104, 5
      %v3107 = vor.u32 %v3103, %v3106
      %v3108 = vsel %vm1196, %v3098, %v3107
      %3117 = vst.msk [vmem:[#allocation4 + $0x38] sm:$0xff] %vm1079, %v3045
      %3118 = vst.msk [vmem:[#allocation4 + $0x80] sm:$0xff] %vm1079, %v3054
      %3119 = vst.msk [vmem:[#allocation4 + $0xc8] sm:$0xff] %vm1079, %v3063
      %3120 = vst.msk [vmem:[#allocation4 + $0x110] sm:$0xff] %vm1079, %v3072
      %3121 = vst.msk [vmem:[#allocation4 + $0x158] sm:$0xff] %vm1079, %v3081
      %3122 = vst.msk [vmem:[#allocation4 + $0x1a0] sm:$0xff] %vm1079, %v3090
      %3123 = vst.msk [vmem:[#allocation4 + $0x1e8] sm:$0xff] %vm1079, %v3099
      %3124 = vst.msk [vmem:[#allocation4 + $0x230] sm:$0xff] %vm1079, %v3108
      %v3125 = vld [vmem:[#allocation3 + $0x10] sm:$0xf8]
      %v3126 = vld [vmem:[#allocation3 + $0x18] sm:$0xff]
      %v3127 = vld [vmem:[#allocation3 + $0x20] sm:$0xff]
      %v3128 = vld [vmem:[#allocation3 + $0x28] sm:$0xff]
      %v3129 = vld [vmem:[#allocation3 + $0x30] sm:$0xff]
      %v3130 = vld [vmem:[#allocation3 + $0x38] sm:$0xff]
      %v3131 = vld [vmem:[#allocation3 + $0x40] sm:$0xff]
      %v3132 = vld [vmem:[#allocation3 + $0x48] sm:$0xff]
      %v3133 = vld [vmem:[#allocation3 + $0x50] sm:$0xf]
      %v3134 = vsel %vm1268, %v3125, 0
      %v3135 = vsel %vm1269, %v3126, 0
      %v3136 = vsel %vm1270, %v3127, 0
      %v3137 = vsel %vm1271, %v3128, 0
      %v3138 = vsel %vm1272, %v3129, 0
      %v3139 = vsel %vm1273, %v3130, 0
      %v3140 = vsel %vm1274, %v3131, 0
      %v3141 = vsel %vm1275, %v3132, 0
      %v3142 = vsel %vm1276, %v3133, 0
      %v3144 = vshrl.u32 %v3134, 16
      %v3146 = vrot.slane %v3144, 3
      %v3147 = vshll.u32 %v3134, 16
      %v3149 = vrot.slane %v3147, 4
      %v3150 = vor.u32 %v3146, %v3149
      %v3152 = vshrl.u32 %v3135, 16
      %v3154 = vrot.slane %v3152, 3
      %v3155 = vshll.u32 %v3135, 16
      %v3157 = vrot.slane %v3155, 4
      %v3158 = vor.u32 %v3154, %v3157
      %v3159 = vsel %vm1286, %v3150, %v3158
      %v3161 = vshrl.u32 %v3136, 16
      %v3163 = vrot.slane %v3161, 3
      %v3164 = vshll.u32 %v3136, 16
      %v3166 = vrot.slane %v3164, 4
      %v3167 = vor.u32 %v3163, %v3166
      %v3168 = vsel %vm1286, %v3158, %v3167
      %v3170 = vshrl.u32 %v3137, 16
      %v3172 = vrot.slane %v3170, 3
      %v3173 = vshll.u32 %v3137, 16
      %v3175 = vrot.slane %v3173, 4
      %v3176 = vor.u32 %v3172, %v3175
      %v3177 = vsel %vm1286, %v3167, %v3176
      %v3179 = vshrl.u32 %v3138, 16
      %v3181 = vrot.slane %v3179, 3
      %v3182 = vshll.u32 %v3138, 16
      %v3184 = vrot.slane %v3182, 4
      %v3185 = vor.u32 %v3181, %v3184
      %v3186 = vsel %vm1286, %v3176, %v3185
      %v3188 = vshrl.u32 %v3139, 16
      %v3190 = vrot.slane %v3188, 3
      %v3191 = vshll.u32 %v3139, 16
      %v3193 = vrot.slane %v3191, 4
      %v3194 = vor.u32 %v3190, %v3193
      %v3195 = vsel %vm1286, %v3185, %v3194
      %v3197 = vshrl.u32 %v3140, 16
      %v3199 = vrot.slane %v3197, 3
      %v3200 = vshll.u32 %v3140, 16
      %v3202 = vrot.slane %v3200, 4
      %v3203 = vor.u32 %v3199, %v3202
      %v3204 = vsel %vm1286, %v3194, %v3203
      %v3206 = vshrl.u32 %v3141, 16
      %v3208 = vrot.slane %v3206, 3
      %v3209 = vshll.u32 %v3141, 16
      %v3211 = vrot.slane %v3209, 4
      %v3212 = vor.u32 %v3208, %v3211
      %v3213 = vsel %vm1286, %v3203, %v3212
      %v3215 = vshrl.u32 %v3142, 16
      %v3217 = vrot.slane %v3215, 3
      %v3218 = vshll.u32 %v3142, 16
      %v3220 = vrot.slane %v3218, 4
      %v3221 = vor.u32 %v3217, %v3220
      %v3222 = vsel %vm1286, %v3212, %v3221
      %3223 = vrot.lane.b32.xlu0 %v3159, 64
      %v3224 = vpop.permute.xlu0 %3223
      %3225 = vrot.lane.b32.xlu0 %v3168, 64
      %v3226 = vpop.permute.xlu0 %3225
      %3227 = vrot.lane.b32.xlu0 %v3177, 64
      %v3228 = vpop.permute.xlu0 %3227
      %3229 = vrot.lane.b32.xlu0 %v3186, 64
      %v3230 = vpop.permute.xlu0 %3229
      %3231 = vrot.lane.b32.xlu0 %v3195, 64
      %v3232 = vpop.permute.xlu0 %3231
      %3233 = vrot.lane.b32.xlu0 %v3204, 64
      %v3234 = vpop.permute.xlu0 %3233
      %3235 = vrot.lane.b32.xlu0 %v3213, 64
      %v3236 = vpop.permute.xlu0 %3235
      %3237 = vrot.lane.b32.xlu0 %v3222, 64
      %v3238 = vpop.permute.xlu0 %3237
      %3247 = vst.msk [vmem:[#allocation4 + $0x38] sm:$0xff] %vm1443, %v3224
      %3248 = vst.msk [vmem:[#allocation4 + $0x80] sm:$0xff] %vm1443, %v3226
      %3249 = vst.msk [vmem:[#allocation4 + $0xc8] sm:$0xff] %vm1443, %v3228
      %3250 = vst.msk [vmem:[#allocation4 + $0x110] sm:$0xff] %vm1443, %v3230
      %3251 = vst.msk [vmem:[#allocation4 + $0x158] sm:$0xff] %vm1443, %v3232
      %3252 = vst.msk [vmem:[#allocation4 + $0x1a0] sm:$0xff] %vm1443, %v3234
      %3253 = vst.msk [vmem:[#allocation4 + $0x1e8] sm:$0xff] %vm1443, %v3236
      %3254 = vst.msk [vmem:[#allocation4 + $0x230] sm:$0xff] %vm1443, %v3238
      %v3255 = vld [vmem:[#allocation3 + $0x10] sm:$0xf0]
      %v3256 = vld [vmem:[#allocation3 + $0x18] sm:$0xff]
      %v3257 = vld [vmem:[#allocation3 + $0x20] sm:$0xff]
      %v3258 = vld [vmem:[#allocation3 + $0x28] sm:$0xff]
      %v3259 = vld [vmem:[#allocation3 + $0x30] sm:$0xff]
      %v3260 = vld [vmem:[#allocation3 + $0x38] sm:$0xff]
      %v3261 = vld [vmem:[#allocation3 + $0x40] sm:$0xff]
      %v3262 = vld [vmem:[#allocation3 + $0x48] sm:$0xff]
      %v3263 = vld [vmem:[#allocation3 + $0x50] sm:$0xf]
      %v3273 = vrot.slane %v3255, 4
      %v3274 = vrot.slane %v3256, 4
      %v3275 = vsel %vm1401, %v3273, %v3274
      %v3276 = vrot.slane %v3257, 4
      %v3277 = vsel %vm1401, %v3274, %v3276
      %v3278 = vrot.slane %v3258, 4
      %v3279 = vsel %vm1401, %v3276, %v3278
      %v3280 = vrot.slane %v3259, 4
      %v3281 = vsel %vm1401, %v3278, %v3280
      %v3282 = vrot.slane %v3260, 4
      %v3283 = vsel %vm1401, %v3280, %v3282
      %v3284 = vrot.slane %v3261, 4
      %v3285 = vsel %vm1401, %v3282, %v3284
      %v3286 = vrot.slane %v3262, 4
      %v3287 = vsel %vm1401, %v3284, %v3286
      %v3288 = vrot.slane %v3263, 4
      %v3289 = vsel %vm1401, %v3286, %v3288
      %3298 = vst.msk [vmem:[#allocation4 + $0x40] sm:$0xff] %vm1079, %v3275
      %3299 = vst.msk [vmem:[#allocation4 + $0x88] sm:$0xff] %vm1079, %v3277
      %3300 = vst.msk [vmem:[#allocation4 + $0xd0] sm:$0xff] %vm1079, %v3279
      %3301 = vst.msk [vmem:[#allocation4 + $0x118] sm:$0xff] %vm1079, %v3281
      %3302 = vst.msk [vmem:[#allocation4 + $0x160] sm:$0xff] %vm1079, %v3283
      %3303 = vst.msk [vmem:[#allocation4 + $0x1a8] sm:$0xff] %vm1079, %v3285
      %3304 = vst.msk [vmem:[#allocation4 + $0x1f0] sm:$0xff] %vm1079, %v3287
      %3305 = vst.msk [vmem:[#allocation4 + $0x238] sm:$0xff] %vm1079, %v3289
      %v3306 = vld [vmem:[#allocation3 + $0x10] sm:$0xf0]
      %v3307 = vld [vmem:[#allocation3 + $0x18] sm:$0xff]
      %v3308 = vld [vmem:[#allocation3 + $0x20] sm:$0xff]
      %v3309 = vld [vmem:[#allocation3 + $0x28] sm:$0xff]
      %v3310 = vld [vmem:[#allocation3 + $0x30] sm:$0xff]
      %v3311 = vld [vmem:[#allocation3 + $0x38] sm:$0xff]
      %v3312 = vld [vmem:[#allocation3 + $0x40] sm:$0xff]
      %v3313 = vld [vmem:[#allocation3 + $0x48] sm:$0xff]
      %v3314 = vld [vmem:[#allocation3 + $0x50] sm:$0x1f]
      %v3315 = vsel %vm1620, %v3306, 0
      %v3316 = vsel %vm1621, %v3307, 0
      %v3317 = vsel %vm1622, %v3308, 0
      %v3318 = vsel %vm1623, %v3309, 0
      %v3319 = vsel %vm1624, %v3310, 0
      %v3320 = vsel %vm1625, %v3311, 0
      %v3321 = vsel %vm1626, %v3312, 0
      %v3322 = vsel %vm1627, %v3313, 0
      %v3323 = vsel %vm1628, %v3314, 0
      %v3325 = vshrl.u32 %v3315, 16
      %v3327 = vrot.slane %v3325, 4
      %v3328 = vshll.u32 %v3315, 16
      %v3330 = vrot.slane %v3328, 5
      %v3331 = vor.u32 %v3327, %v3330
      %v3333 = vshrl.u32 %v3316, 16
      %v3335 = vrot.slane %v3333, 4
      %v3336 = vshll.u32 %v3316, 16
      %v3338 = vrot.slane %v3336, 5
      %v3339 = vor.u32 %v3335, %v3338
      %v3340 = vsel %vm1196, %v3331, %v3339
      %v3342 = vshrl.u32 %v3317, 16
      %v3344 = vrot.slane %v3342, 4
      %v3345 = vshll.u32 %v3317, 16
      %v3347 = vrot.slane %v3345, 5
      %v3348 = vor.u32 %v3344, %v3347
      %v3349 = vsel %vm1196, %v3339, %v3348
      %v3351 = vshrl.u32 %v3318, 16
      %v3353 = vrot.slane %v3351, 4
      %v3354 = vshll.u32 %v3318, 16
      %v3356 = vrot.slane %v3354, 5
      %v3357 = vor.u32 %v3353, %v3356
      %v3358 = vsel %vm1196, %v3348, %v3357
      %v3360 = vshrl.u32 %v3319, 16
      %v3362 = vrot.slane %v3360, 4
      %v3363 = vshll.u32 %v3319, 16
      %v3365 = vrot.slane %v3363, 5
      %v3366 = vor.u32 %v3362, %v3365
      %v3367 = vsel %vm1196, %v3357, %v3366
      %v3369 = vshrl.u32 %v3320, 16
      %v3371 = vrot.slane %v3369, 4
      %v3372 = vshll.u32 %v3320, 16
      %v3374 = vrot.slane %v3372, 5
      %v3375 = vor.u32 %v3371, %v3374
      %v3376 = vsel %vm1196, %v3366, %v3375
      %v3378 = vshrl.u32 %v3321, 16
      %v3380 = vrot.slane %v3378, 4
      %v3381 = vshll.u32 %v3321, 16
      %v3383 = vrot.slane %v3381, 5
      %v3384 = vor.u32 %v3380, %v3383
      %v3385 = vsel %vm1196, %v3375, %v3384
      %v3387 = vshrl.u32 %v3322, 16
      %v3389 = vrot.slane %v3387, 4
      %v3390 = vshll.u32 %v3322, 16
      %v3392 = vrot.slane %v3390, 5
      %v3393 = vor.u32 %v3389, %v3392
      %v3394 = vsel %vm1196, %v3384, %v3393
      %v3396 = vshrl.u32 %v3323, 16
      %v3398 = vrot.slane %v3396, 4
      %v3399 = vshll.u32 %v3323, 16
      %v3401 = vrot.slane %v3399, 5
      %v3402 = vor.u32 %v3398, %v3401
      %v3403 = vsel %vm1196, %v3393, %v3402
      %3404 = vrot.lane.b32.xlu0 %v3340, 64
      %v3405 = vpop.permute.xlu0 %3404
      %3406 = vrot.lane.b32.xlu0 %v3349, 64
      %v3407 = vpop.permute.xlu0 %3406
      %3408 = vrot.lane.b32.xlu0 %v3358, 64
      %v3409 = vpop.permute.xlu0 %3408
      %3410 = vrot.lane.b32.xlu0 %v3367, 64
      %v3411 = vpop.permute.xlu0 %3410
      %3412 = vrot.lane.b32.xlu0 %v3376, 64
      %v3413 = vpop.permute.xlu0 %3412
      %3414 = vrot.lane.b32.xlu0 %v3385, 64
      %v3415 = vpop.permute.xlu0 %3414
      %3416 = vrot.lane.b32.xlu0 %v3394, 64
      %v3417 = vpop.permute.xlu0 %3416
      %3418 = vrot.lane.b32.xlu0 %v3403, 64
      %v3419 = vpop.permute.xlu0 %3418
      %3428 = vst.msk [vmem:[#allocation4 + $0x40] sm:$0xff] %vm1443, %v3405
      %3429 = vst.msk [vmem:[#allocation4 + $0x88] sm:$0xff] %vm1443, %v3407
      %3430 = vst.msk [vmem:[#allocation4 + $0xd0] sm:$0xff] %vm1443, %v3409
      %3431 = vst.msk [vmem:[#allocation4 + $0x118] sm:$0xff] %vm1443, %v3411
      %3432 = vst.msk [vmem:[#allocation4 + $0x160] sm:$0xff] %vm1443, %v3413
      %3433 = vst.msk [vmem:[#allocation4 + $0x1a8] sm:$0xff] %vm1443, %v3415
      %3434 = vst.msk [vmem:[#allocation4 + $0x1f0] sm:$0xff] %vm1443, %v3417
      %3435 = vst.msk [vmem:[#allocation4 + $0x238] sm:$0xff] %vm1443, %v3419
      %v3436 = vld [vmem:[#allocation4] sm:$0xff]
      %v3437 = vld [vmem:[#allocation4 + $0x8] sm:$0xff]
      %v3438 = vld [vmem:[#allocation4 + $0x10] sm:$0xff]
      %v3439 = vld [vmem:[#allocation4 + $0x18] sm:$0xff]
      %v3440 = vld [vmem:[#allocation4 + $0x20] sm:$0xff]
      %v3441 = vld [vmem:[#allocation4 + $0x28] sm:$0xff]
      %v3442 = vld [vmem:[#allocation4 + $0x30] sm:$0xff]
      %v3443 = vld [vmem:[#allocation4 + $0x38] sm:$0xff]
      %v3444 = vld [vmem:[#allocation4 + $0x40] sm:$0xff]
      %v3445 = vld [vmem:[#allocation4 + $0x48] sm:$0xff]
      %v3446 = vld [vmem:[#allocation4 + $0x50] sm:$0xff]
      %v3447 = vld [vmem:[#allocation4 + $0x58] sm:$0xff]
      %v3448 = vld [vmem:[#allocation4 + $0x60] sm:$0xff]
      %v3449 = vld [vmem:[#allocation4 + $0x68] sm:$0xff]
      %v3450 = vld [vmem:[#allocation4 + $0x70] sm:$0xff]
      %v3451 = vld [vmem:[#allocation4 + $0x78] sm:$0xff]
      %v3452 = vld [vmem:[#allocation4 + $0x80] sm:$0xff]
      %v3453 = vld [vmem:[#allocation4 + $0x88] sm:$0xff]
      %v3454 = vld [vmem:[#allocation4 + $0x90] sm:$0xff]
      %v3455 = vld [vmem:[#allocation4 + $0x98] sm:$0xff]
      %v3456 = vld [vmem:[#allocation4 + $0xa0] sm:$0xff]
      %v3457 = vld [vmem:[#allocation4 + $0xa8] sm:$0xff]
      %v3458 = vld [vmem:[#allocation4 + $0xb0] sm:$0xff]
      %v3459 = vld [vmem:[#allocation4 + $0xb8] sm:$0xff]
      %v3460 = vld [vmem:[#allocation4 + $0xc0] sm:$0xff]
      %v3461 = vld [vmem:[#allocation4 + $0xc8] sm:$0xff]
      %v3462 = vld [vmem:[#allocation4 + $0xd0] sm:$0xff]
      %v3463 = vld [vmem:[#allocation4 + $0xd8] sm:$0xff]
      %v3464 = vld [vmem:[#allocation4 + $0xe0] sm:$0xff]
      %v3465 = vld [vmem:[#allocation4 + $0xe8] sm:$0xff]
      %v3466 = vld [vmem:[#allocation4 + $0xf0] sm:$0xff]
      %v3467 = vld [vmem:[#allocation4 + $0xf8] sm:$0xff]
      %v3468 = vld [vmem:[#allocation4 + $0x100] sm:$0xff]
      %v3469 = vld [vmem:[#allocation4 + $0x108] sm:$0xff]
      %v3470 = vld [vmem:[#allocation4 + $0x110] sm:$0xff]
      %v3471 = vld [vmem:[#allocation4 + $0x118] sm:$0xff]
      %v3472 = vld [vmem:[#allocation4 + $0x120] sm:$0xff]
      %v3473 = vld [vmem:[#allocation4 + $0x128] sm:$0xff]
      %v3474 = vld [vmem:[#allocation4 + $0x130] sm:$0xff]
      %v3475 = vld [vmem:[#allocation4 + $0x138] sm:$0xff]
      %v3476 = vld [vmem:[#allocation4 + $0x140] sm:$0xff]
      %v3477 = vld [vmem:[#allocation4 + $0x148] sm:$0xff]
      %v3478 = vld [vmem:[#allocation4 + $0x150] sm:$0xff]
      %v3479 = vld [vmem:[#allocation4 + $0x158] sm:$0xff]
      %v3480 = vld [vmem:[#allocation4 + $0x160] sm:$0xff]
      %v3481 = vld [vmem:[#allocation4 + $0x168] sm:$0xff]
      %v3482 = vld [vmem:[#allocation4 + $0x170] sm:$0xff]
      %v3483 = vld [vmem:[#allocation4 + $0x178] sm:$0xff]
      %v3484 = vld [vmem:[#allocation4 + $0x180] sm:$0xff]
      %v3485 = vld [vmem:[#allocation4 + $0x188] sm:$0xff]
      %v3486 = vld [vmem:[#allocation4 + $0x190] sm:$0xff]
      %v3487 = vld [vmem:[#allocation4 + $0x198] sm:$0xff]
      %v3488 = vld [vmem:[#allocation4 + $0x1a0] sm:$0xff]
      %v3489 = vld [vmem:[#allocation4 + $0x1a8] sm:$0xff]
      %v3490 = vld [vmem:[#allocation4 + $0x1b0] sm:$0xff]
      %v3491 = vld [vmem:[#allocation4 + $0x1b8] sm:$0xff]
      %v3492 = vld [vmem:[#allocation4 + $0x1c0] sm:$0xff]
      %v3493 = vld [vmem:[#allocation4 + $0x1c8] sm:$0xff]
      %v3494 = vld [vmem:[#allocation4 + $0x1d0] sm:$0xff]
      %v3495 = vld [vmem:[#allocation4 + $0x1d8] sm:$0xff]
      %v3496 = vld [vmem:[#allocation4 + $0x1e0] sm:$0xff]
      %v3497 = vld [vmem:[#allocation4 + $0x1e8] sm:$0xff]
      %v3498 = vld [vmem:[#allocation4 + $0x1f0] sm:$0xff]
      %v3499 = vld [vmem:[#allocation4 + $0x1f8] sm:$0xff]
      %v3500 = vld [vmem:[#allocation4 + $0x200] sm:$0xff]
      %v3501 = vld [vmem:[#allocation4 + $0x208] sm:$0xff]
      %v3502 = vld [vmem:[#allocation4 + $0x210] sm:$0xff]
      %v3503 = vld [vmem:[#allocation4 + $0x218] sm:$0xff]
      %v3504 = vld [vmem:[#allocation4 + $0x220] sm:$0xff]
      %v3505 = vld [vmem:[#allocation4 + $0x228] sm:$0xff]
      %v3506 = vld [vmem:[#allocation4 + $0x230] sm:$0xff]
      %v3507 = vld [vmem:[#allocation4 + $0x238] sm:$0xff]
      %v3508 = vld [vmem:[%s8] sm:$0xf]
      %v3509 = vld [vmem:[%s8 + $0x4] sm:$0xf]
      %v3510 = vld [vmem:[%s8 + $0x8] sm:$0xf]
      %v3511 = vld [vmem:[%s8 + $0xc] sm:$0xf]
      %v3512 = vld [vmem:[%s8 + $0x10] sm:$0xf]
      %v3513 = vld [vmem:[%s8 + $0x14] sm:$0xf]
      %v3514 = vld [vmem:[%s8 + $0x18] sm:$0xf]
      %v3515 = vld [vmem:[%s8 + $0x1c] sm:$0xf]
      %v3516 = vld [vmem:[%s8 + $0x20] sm:$0xf]
      %v3517 = vld [vmem:[%s8 + $0x24] sm:$0xf]
      %v3518 = vld [vmem:[%s8 + $0x28] sm:$0xf]
      %v3519 = vld [vmem:[%s8 + $0x2c] sm:$0xf]
      %v3520 = vld [vmem:[%s8 + $0x30] sm:$0xf]
      %v3521 = vld [vmem:[%s8 + $0x34] sm:$0xf]
      %v3522 = vld [vmem:[%s8 + $0x38] sm:$0xf]
      %v3523 = vld [vmem:[%s8 + $0x3c] sm:$0xf]
      %v3524 = vld [vmem:[%s8 + $0x40] sm:$0xf]
      %v3525 = vld [vmem:[%s8 + $0x44] sm:$0xf]
      %v3526 = vld [vmem:[%s8 + $0x48] sm:$0xf]
      %v3527 = vld [vmem:[%s8 + $0x4c] sm:$0xf]
      %v3528 = vld [vmem:[%s8 + $0x50] sm:$0xf]
      %v3529 = vld [vmem:[%s8 + $0x54] sm:$0xf]
      %v3530 = vld [vmem:[%s8 + $0x58] sm:$0xf]
      %v3531 = vld [vmem:[%s8 + $0x5c] sm:$0xf]
      %v3532 = vld [vmem:[%s8 + $0x60] sm:$0xf]
      %v3533 = vld [vmem:[%s8 + $0x64] sm:$0xf]
      %v3534 = vld [vmem:[%s8 + $0x68] sm:$0xf]
      %v3535 = vld [vmem:[%s8 + $0x6c] sm:$0xf]
      %v3536 = vld [vmem:[%s8 + $0x70] sm:$0xf]
      %v3537 = vld [vmem:[%s8 + $0x74] sm:$0xf]
      %v3538 = vld [vmem:[%s8 + $0x78] sm:$0xf]
      %v3539 = vld [vmem:[%s8 + $0x7c] sm:$0xf]
      %v3540 = vld [vmem:[%s8 + $0x80] sm:$0xf]
      %v3541 = vld [vmem:[%s8 + $0x84] sm:$0xf]
      %v3542 = vld [vmem:[%s8 + $0x88] sm:$0xf]
      %v3543 = vld [vmem:[%s8 + $0x8c] sm:$0xf]
      %v3544 = vld [vmem:[%s8 + $0x90] sm:$0xf]
      %v3545 = vld [vmem:[%s8 + $0x94] sm:$0xf]
      %v3546 = vld [vmem:[%s8 + $0x98] sm:$0xf]
      %v3547 = vld [vmem:[%s8 + $0x9c] sm:$0xf]
      %v3548 = vld [vmem:[%s8 + $0xa0] sm:$0xf]
      %v3549 = vld [vmem:[%s8 + $0xa4] sm:$0xf]
      %v3550 = vld [vmem:[%s8 + $0xa8] sm:$0xf]
      %v3551 = vld [vmem:[%s8 + $0xac] sm:$0xf]
      %v3552 = vld [vmem:[%s8 + $0xb0] sm:$0xf]
      %v3553 = vld [vmem:[%s8 + $0xb4] sm:$0xf]
      %v3554 = vld [vmem:[%s8 + $0xb8] sm:$0xf]
      %v3555 = vld [vmem:[%s8 + $0xbc] sm:$0xf]
      %v3556 = vld [vmem:[%s8 + $0xc0] sm:$0xf]
      %v3557 = vld [vmem:[%s8 + $0xc4] sm:$0xf]
      %v3558 = vld [vmem:[%s8 + $0xc8] sm:$0xf]
      %v3559 = vld [vmem:[%s8 + $0xcc] sm:$0xf]
      %v3560 = vld [vmem:[%s8 + $0xd0] sm:$0xf]
      %v3561 = vld [vmem:[%s8 + $0xd4] sm:$0xf]
      %v3562 = vld [vmem:[%s8 + $0xd8] sm:$0xf]
      %v3563 = vld [vmem:[%s8 + $0xdc] sm:$0xf]
      %v3564 = vld [vmem:[%s8 + $0xe0] sm:$0xf]
      %v3565 = vld [vmem:[%s8 + $0xe4] sm:$0xf]
      %v3566 = vld [vmem:[%s8 + $0xe8] sm:$0xf]
      %v3567 = vld [vmem:[%s8 + $0xec] sm:$0xf]
      %v3568 = vld [vmem:[%s8 + $0xf0] sm:$0xf]
      %v3569 = vld [vmem:[%s8 + $0xf4] sm:$0xf]
      %v3570 = vld [vmem:[%s8 + $0xf8] sm:$0xf]
      %v3571 = vld [vmem:[%s8 + $0xfc] sm:$0xf]
      %v3572 = vld [vmem:[%s8 + $0x100] sm:$0xf]
      %v3573 = vld [vmem:[%s8 + $0x104] sm:$0xf]
      %v3574 = vld [vmem:[%s8 + $0x108] sm:$0xf]
      %v3575 = vld [vmem:[%s8 + $0x10c] sm:$0xf]
      %v3576 = vld [vmem:[%s8 + $0x110] sm:$0xf]
      %v3577 = vld [vmem:[%s8 + $0x114] sm:$0xf]
      %v3578 = vld [vmem:[%s8 + $0x118] sm:$0xf]
      %v3579 = vld [vmem:[%s8 + $0x11c] sm:$0xf]
      %v3580 = vld [vmem:[%s8 + $0x120] sm:$0xf]
      %v3581 = vld [vmem:[%s8 + $0x124] sm:$0xf]
      %v3582 = vld [vmem:[%s8 + $0x128] sm:$0xf]
      %v3583 = vld [vmem:[%s8 + $0x12c] sm:$0xf]
      %v3584 = vld [vmem:[%s8 + $0x130] sm:$0xf]
      %v3585 = vld [vmem:[%s8 + $0x134] sm:$0xf]
      %v3586 = vld [vmem:[%s8 + $0x138] sm:$0xf]
      %v3587 = vld [vmem:[%s8 + $0x13c] sm:$0xf]
      %v3588 = vld [vmem:[%s8 + $0x140] sm:$0xf]
      %v3589 = vld [vmem:[%s8 + $0x144] sm:$0xf]
      %v3590 = vld [vmem:[%s8 + $0x148] sm:$0xf]
      %v3591 = vld [vmem:[%s8 + $0x14c] sm:$0xf]
      %v3592 = vld [vmem:[%s8 + $0x150] sm:$0xf]
      %v3593 = vld [vmem:[%s8 + $0x154] sm:$0xf]
      %v3594 = vld [vmem:[%s8 + $0x158] sm:$0xf]
      %v3595 = vld [vmem:[%s8 + $0x15c] sm:$0xf]
      %v3596 = vld [vmem:[%s8 + $0x160] sm:$0xf]
      %v3597 = vld [vmem:[%s8 + $0x164] sm:$0xf]
      %v3598 = vld [vmem:[%s8 + $0x168] sm:$0xf]
      %v3599 = vld [vmem:[%s8 + $0x16c] sm:$0xf]
      %v3600 = vld [vmem:[%s8 + $0x170] sm:$0xf]
      %v3601 = vld [vmem:[%s8 + $0x174] sm:$0xf]
      %v3602 = vld [vmem:[%s8 + $0x178] sm:$0xf]
      %v3603 = vld [vmem:[%s8 + $0x17c] sm:$0xf]
      %v3604 = vld [vmem:[%s8 + $0x180] sm:$0xf]
      %v3605 = vld [vmem:[%s8 + $0x184] sm:$0xf]
      %v3606 = vld [vmem:[%s8 + $0x188] sm:$0xf]
      %v3607 = vld [vmem:[%s8 + $0x18c] sm:$0xf]
      %v3608 = vld [vmem:[%s8 + $0x190] sm:$0xf]
      %v3609 = vld [vmem:[%s8 + $0x194] sm:$0xf]
      %v3610 = vld [vmem:[%s8 + $0x198] sm:$0xf]
      %v3611 = vld [vmem:[%s8 + $0x19c] sm:$0xf]
      %v3612 = vld [vmem:[%s8 + $0x1a0] sm:$0xf]
      %v3613 = vld [vmem:[%s8 + $0x1a4] sm:$0xf]
      %v3614 = vld [vmem:[%s8 + $0x1a8] sm:$0xf]
      %v3615 = vld [vmem:[%s8 + $0x1ac] sm:$0xf]
      %v3616 = vld [vmem:[%s8 + $0x1b0] sm:$0xf]
      %v3617 = vld [vmem:[%s8 + $0x1b4] sm:$0xf]
      %v3618 = vld [vmem:[%s8 + $0x1b8] sm:$0xf]
      %v3619 = vld [vmem:[%s8 + $0x1bc] sm:$0xf]
      %v3620 = vld [vmem:[%s8 + $0x1c0] sm:$0xf]
      %v3621 = vld [vmem:[%s8 + $0x1c4] sm:$0xf]
      %v3622 = vld [vmem:[%s8 + $0x1c8] sm:$0xf]
      %v3623 = vld [vmem:[%s8 + $0x1cc] sm:$0xf]
      %v3624 = vld [vmem:[%s8 + $0x1d0] sm:$0xf]
      %v3625 = vld [vmem:[%s8 + $0x1d4] sm:$0xf]
      %v3626 = vld [vmem:[%s8 + $0x1d8] sm:$0xf]
      %v3627 = vld [vmem:[%s8 + $0x1dc] sm:$0xf]
      %v3628 = vld [vmem:[%s8 + $0x1e0] sm:$0xf]
      %v3629 = vld [vmem:[%s8 + $0x1e4] sm:$0xf]
      %v3630 = vld [vmem:[%s8 + $0x1e8] sm:$0xf]
      %v3631 = vld [vmem:[%s8 + $0x1ec] sm:$0xf]
      %v3632 = vld [vmem:[%s8 + $0x1f0] sm:$0xf]
      %v3633 = vld [vmem:[%s8 + $0x1f4] sm:$0xf]
      %v3634 = vld [vmem:[%s8 + $0x1f8] sm:$0xf]
      %v3635 = vld [vmem:[%s8 + $0x1fc] sm:$0xf]
      %v3636 = vld [vmem:[%s8 + $0x200] sm:$0xf]
      %v3637 = vld [vmem:[%s8 + $0x204] sm:$0xf]
      %v3638 = vld [vmem:[%s8 + $0x208] sm:$0xf]
      %v3639 = vld [vmem:[%s8 + $0x20c] sm:$0xf]
      %v3640 = vld [vmem:[%s8 + $0x210] sm:$0xf]
      %v3641 = vld [vmem:[%s8 + $0x214] sm:$0xf]
      %v3642 = vld [vmem:[%s8 + $0x218] sm:$0xf]
      %v3643 = vld [vmem:[%s8 + $0x21c] sm:$0xf]
      %v3644 = vld [vmem:[%s8 + $0x220] sm:$0xf]
      %v3645 = vld [vmem:[%s8 + $0x224] sm:$0xf]
      %v3646 = vld [vmem:[%s8 + $0x228] sm:$0xf]
      %v3647 = vld [vmem:[%s8 + $0x22c] sm:$0xf]
      %v3648 = vld [vmem:[%s8 + $0x230] sm:$0xf]
      %v3649 = vld [vmem:[%s8 + $0x234] sm:$0xf]
      %v3650 = vld [vmem:[%s8 + $0x238] sm:$0xf]
      %v3651 = vld [vmem:[%s8 + $0x23c] sm:$0xf]
      %v3652 = vld [vmem:[%s9] sm:$0x1]
      %v3654 = vlaneseq
      %v3655 = vshrl.u32 %v3654, 7
      %v3656 = vsub.s32 0, %v3655
      %v3657 = vrot.slane %v3652, %v3656
      %v3803 = vunpack.c.l.b16 %v3508
      %v3804 = vunpack.c.l.b16 %v3509
      %v3805 = vunpack.c.l.b16 %v3510
      %v3806 = vunpack.c.l.b16 %v3511
      %v3807 = vunpack.c.l.b16 %v3512
      %v3808 = vunpack.c.l.b16 %v3513
      %v3809 = vunpack.c.l.b16 %v3514
      %v3810 = vunpack.c.l.b16 %v3515
      %v3811 = vunpack.c.l.b16 %v3516
      %v3812 = vunpack.c.l.b16 %v3517
      %v3813 = vunpack.c.l.b16 %v3518
      %v3814 = vunpack.c.l.b16 %v3519
      %v3815 = vunpack.c.l.b16 %v3520
      %v3816 = vunpack.c.l.b16 %v3521
      %v3817 = vunpack.c.l.b16 %v3522
      %v3818 = vunpack.c.l.b16 %v3523
      %v3819 = vunpack.c.l.b16 %v3524
      %v3820 = vunpack.c.l.b16 %v3525
      %v3821 = vunpack.c.l.b16 %v3526
      %v3822 = vunpack.c.l.b16 %v3527
      %v3823 = vunpack.c.l.b16 %v3528
      %v3824 = vunpack.c.l.b16 %v3529
      %v3825 = vunpack.c.l.b16 %v3530
      %v3826 = vunpack.c.l.b16 %v3531
      %v3827 = vunpack.c.l.b16 %v3532
      %v3828 = vunpack.c.l.b16 %v3533
      %v3829 = vunpack.c.l.b16 %v3534
      %v3830 = vunpack.c.l.b16 %v3535
      %v3831 = vunpack.c.l.b16 %v3536
      %v3832 = vunpack.c.l.b16 %v3537
      %v3833 = vunpack.c.l.b16 %v3538
      %v3834 = vunpack.c.l.b16 %v3539
      %v3835 = vunpack.c.l.b16 %v3540
      %v3836 = vunpack.c.l.b16 %v3541
      %v3837 = vunpack.c.l.b16 %v3542
      %v3838 = vunpack.c.l.b16 %v3543
      %v3839 = vunpack.c.l.b16 %v3544
      %v3840 = vunpack.c.l.b16 %v3545
      %v3841 = vunpack.c.l.b16 %v3546
      %v3842 = vunpack.c.l.b16 %v3547
      %v3843 = vunpack.c.l.b16 %v3548
      %v3844 = vunpack.c.l.b16 %v3549
      %v3845 = vunpack.c.l.b16 %v3550
      %v3846 = vunpack.c.l.b16 %v3551
      %v3847 = vunpack.c.l.b16 %v3552
      %v3848 = vunpack.c.l.b16 %v3553
      %v3849 = vunpack.c.l.b16 %v3554
      %v3850 = vunpack.c.l.b16 %v3555
      %v3851 = vunpack.c.l.b16 %v3556
      %v3852 = vunpack.c.l.b16 %v3557
      %v3853 = vunpack.c.l.b16 %v3558
      %v3854 = vunpack.c.l.b16 %v3559
      %v3855 = vunpack.c.l.b16 %v3560
      %v3856 = vunpack.c.l.b16 %v3561
      %v3857 = vunpack.c.l.b16 %v3562
      %v3858 = vunpack.c.l.b16 %v3563
      %v3859 = vunpack.c.l.b16 %v3564
      %v3860 = vunpack.c.l.b16 %v3565
      %v3861 = vunpack.c.l.b16 %v3566
      %v3862 = vunpack.c.l.b16 %v3567
      %v3863 = vunpack.c.l.b16 %v3568
      %v3864 = vunpack.c.l.b16 %v3569
      %v3865 = vunpack.c.l.b16 %v3570
      %v3866 = vunpack.c.l.b16 %v3571
      %v3867 = vunpack.c.l.b16 %v3572
      %v3868 = vunpack.c.l.b16 %v3573
      %v3869 = vunpack.c.l.b16 %v3574
      %v3870 = vunpack.c.l.b16 %v3575
      %v3871 = vunpack.c.l.b16 %v3576
      %v3872 = vunpack.c.l.b16 %v3577
      %v3873 = vunpack.c.l.b16 %v3578
      %v3874 = vunpack.c.l.b16 %v3579
      %v3875 = vunpack.c.l.b16 %v3580
      %v3876 = vunpack.c.l.b16 %v3581
      %v3877 = vunpack.c.l.b16 %v3582
      %v3878 = vunpack.c.l.b16 %v3583
      %v3879 = vunpack.c.l.b16 %v3584
      %v3880 = vunpack.c.l.b16 %v3585
      %v3881 = vunpack.c.l.b16 %v3586
      %v3882 = vunpack.c.l.b16 %v3587
      %v3883 = vunpack.c.l.b16 %v3588
      %v3884 = vunpack.c.l.b16 %v3589
      %v3885 = vunpack.c.l.b16 %v3590
      %v3886 = vunpack.c.l.b16 %v3591
      %v3887 = vunpack.c.l.b16 %v3592
      %v3888 = vunpack.c.l.b16 %v3593
      %v3889 = vunpack.c.l.b16 %v3594
      %v3890 = vunpack.c.l.b16 %v3595
      %v3891 = vunpack.c.l.b16 %v3596
      %v3892 = vunpack.c.l.b16 %v3597
      %v3893 = vunpack.c.l.b16 %v3598
      %v3894 = vunpack.c.l.b16 %v3599
      %v3895 = vunpack.c.l.b16 %v3600
      %v3896 = vunpack.c.l.b16 %v3601
      %v3897 = vunpack.c.l.b16 %v3602
      %v3898 = vunpack.c.l.b16 %v3603
      %v3899 = vunpack.c.l.b16 %v3604
      %v3900 = vunpack.c.l.b16 %v3605
      %v3901 = vunpack.c.l.b16 %v3606
      %v3902 = vunpack.c.l.b16 %v3607
      %v3903 = vunpack.c.l.b16 %v3608
      %v3904 = vunpack.c.l.b16 %v3609
      %v3905 = vunpack.c.l.b16 %v3610
      %v3906 = vunpack.c.l.b16 %v3611
      %v3907 = vunpack.c.l.b16 %v3612
      %v3908 = vunpack.c.l.b16 %v3613
      %v3909 = vunpack.c.l.b16 %v3614
      %v3910 = vunpack.c.l.b16 %v3615
      %v3911 = vunpack.c.l.b16 %v3616
      %v3912 = vunpack.c.l.b16 %v3617
      %v3913 = vunpack.c.l.b16 %v3618
      %v3914 = vunpack.c.l.b16 %v3619
      %v3915 = vunpack.c.l.b16 %v3620
      %v3916 = vunpack.c.l.b16 %v3621
      %v3917 = vunpack.c.l.b16 %v3622
      %v3918 = vunpack.c.l.b16 %v3623
      %v3919 = vunpack.c.l.b16 %v3624
      %v3920 = vunpack.c.l.b16 %v3625
      %v3921 = vunpack.c.l.b16 %v3626
      %v3922 = vunpack.c.l.b16 %v3627
      %v3923 = vunpack.c.l.b16 %v3628
      %v3924 = vunpack.c.l.b16 %v3629
      %v3925 = vunpack.c.l.b16 %v3630
      %v3926 = vunpack.c.l.b16 %v3631
      %v3927 = vunpack.c.l.b16 %v3632
      %v3928 = vunpack.c.l.b16 %v3633
      %v3929 = vunpack.c.l.b16 %v3634
      %v3930 = vunpack.c.l.b16 %v3635
      %v3931 = vunpack.c.l.b16 %v3636
      %v3932 = vunpack.c.l.b16 %v3637
      %v3933 = vunpack.c.l.b16 %v3638
      %v3934 = vunpack.c.l.b16 %v3639
      %v3935 = vunpack.c.l.b16 %v3640
      %v3936 = vunpack.c.l.b16 %v3641
      %v3937 = vunpack.c.l.b16 %v3642
      %v3938 = vunpack.c.l.b16 %v3643
      %v3939 = vunpack.c.l.b16 %v3644
      %v3940 = vunpack.c.l.b16 %v3645
      %v3941 = vunpack.c.l.b16 %v3646
      %v3942 = vunpack.c.l.b16 %v3647
      %v3943 = vunpack.c.l.b16 %v3648
      %v3944 = vunpack.c.l.b16 %v3649
      %v3945 = vunpack.c.l.b16 %v3650
      %v3946 = vunpack.c.l.b16 %v3651
      %v3947 = vpack.c.b16 %v3804, %v3803
      %v3948 = vpack.c.b16 %v3806, %v3805
      %v3949 = vpack.c.b16 %v3808, %v3807
      %v3950 = vpack.c.b16 %v3810, %v3809
      %v3951 = vpack.c.b16 %v3812, %v3811
      %v3952 = vpack.c.b16 %v3814, %v3813
      %v3953 = vpack.c.b16 %v3816, %v3815
      %v3954 = vpack.c.b16 %v3818, %v3817
      %v3955 = vpack.c.b16 %v3820, %v3819
      %v3956 = vpack.c.b16 %v3822, %v3821
      %v3957 = vpack.c.b16 %v3824, %v3823
      %v3958 = vpack.c.b16 %v3826, %v3825
      %v3959 = vpack.c.b16 %v3828, %v3827
      %v3960 = vpack.c.b16 %v3830, %v3829
      %v3961 = vpack.c.b16 %v3832, %v3831
      %v3962 = vpack.c.b16 %v3834, %v3833
      %v3963 = vpack.c.b16 %v3836, %v3835
      %v3964 = vpack.c.b16 %v3838, %v3837
      %v3965 = vpack.c.b16 %v3840, %v3839
      %v3966 = vpack.c.b16 %v3842, %v3841
      %v3967 = vpack.c.b16 %v3844, %v3843
      %v3968 = vpack.c.b16 %v3846, %v3845
      %v3969 = vpack.c.b16 %v3848, %v3847
      %v3970 = vpack.c.b16 %v3850, %v3849
      %v3971 = vpack.c.b16 %v3852, %v3851
      %v3972 = vpack.c.b16 %v3854, %v3853
      %v3973 = vpack.c.b16 %v3856, %v3855
      %v3974 = vpack.c.b16 %v3858, %v3857
      %v3975 = vpack.c.b16 %v3860, %v3859
      %v3976 = vpack.c.b16 %v3862, %v3861
      %v3977 = vpack.c.b16 %v3864, %v3863
      %v3978 = vpack.c.b16 %v3866, %v3865
      %v3979 = vpack.c.b16 %v3868, %v3867
      %v3980 = vpack.c.b16 %v3870, %v3869
      %v3981 = vpack.c.b16 %v3872, %v3871
      %v3982 = vpack.c.b16 %v3874, %v3873
      %v3983 = vpack.c.b16 %v3876, %v3875
      %v3984 = vpack.c.b16 %v3878, %v3877
      %v3985 = vpack.c.b16 %v3880, %v3879
      %v3986 = vpack.c.b16 %v3882, %v3881
      %v3987 = vpack.c.b16 %v3884, %v3883
      %v3988 = vpack.c.b16 %v3886, %v3885
      %v3989 = vpack.c.b16 %v3888, %v3887
      %v3990 = vpack.c.b16 %v3890, %v3889
      %v3991 = vpack.c.b16 %v3892, %v3891
      %v3992 = vpack.c.b16 %v3894, %v3893
      %v3993 = vpack.c.b16 %v3896, %v3895
      %v3994 = vpack.c.b16 %v3898, %v3897
      %v3995 = vpack.c.b16 %v3900, %v3899
      %v3996 = vpack.c.b16 %v3902, %v3901
      %v3997 = vpack.c.b16 %v3904, %v3903
      %v3998 = vpack.c.b16 %v3906, %v3905
      %v3999 = vpack.c.b16 %v3908, %v3907
      %v4000 = vpack.c.b16 %v3910, %v3909
      %v4001 = vpack.c.b16 %v3912, %v3911
      %v4002 = vpack.c.b16 %v3914, %v3913
      %v4003 = vpack.c.b16 %v3916, %v3915
      %v4004 = vpack.c.b16 %v3918, %v3917
      %v4005 = vpack.c.b16 %v3920, %v3919
      %v4006 = vpack.c.b16 %v3922, %v3921
      %v4007 = vpack.c.b16 %v3924, %v3923
      %v4008 = vpack.c.b16 %v3926, %v3925
      %v4009 = vpack.c.b16 %v3928, %v3927
      %v4010 = vpack.c.b16 %v3930, %v3929
      %v4011 = vpack.c.b16 %v3932, %v3931
      %v4012 = vpack.c.b16 %v3934, %v3933
      %v4013 = vpack.c.b16 %v3936, %v3935
      %v4014 = vpack.c.b16 %v3938, %v3937
      %v4015 = vpack.c.b16 %v3940, %v3939
      %v4016 = vpack.c.b16 %v3942, %v3941
      %v4017 = vpack.c.b16 %v3944, %v3943
      %v4018 = vpack.c.b16 %v3946, %v3945
      %4091 = vmatprep.subr.bf16.mxu0 0
      %4092 = vmatpush1.bf16.msra.mxu0 %v3947
      %4093 = vmatprep.subr.bf16.mxu0 0
      %4094 = vmatpush1.bf16.msra.mxu0 %v3948
      %4095 = vmatprep.subr.bf16.mxu0 0
      %4096 = vmatpush1.bf16.msra.mxu0 %v3949
      %4097 = vmatprep.subr.bf16.mxu0 0
      %4098 = vmatpush1.bf16.msra.mxu0 %v3950
      %4099 = vmatprep.subr.bf16.mxu0 0
      %4100 = vmatpush1.bf16.msra.mxu0 %v3951
      %4101 = vmatprep.subr.bf16.mxu0 0
      %4102 = vmatpush1.bf16.msra.mxu0 %v3952
      %4103 = vmatprep.subr.bf16.mxu0 0
      %4104 = vmatpush1.bf16.msra.mxu0 %v3953
      %4105 = vmatprep.subr.bf16.mxu0 0
      %4106 = vmatpush1.bf16.msra.mxu0 %v3954
      %4107 = vmatprep.subr.bf16.mxu0 0
      %4108 = vmatpush1.bf16.msra.mxu0 %v3955
      %4109 = vmatprep.subr.bf16.mxu0 0
      %4110 = vmatpush1.bf16.msra.mxu0 %v3956
      %4111 = vmatprep.subr.bf16.mxu0 0
      %4112 = vmatpush1.bf16.msra.mxu0 %v3957
      %4113 = vmatprep.subr.bf16.mxu0 0
      %4114 = vmatpush1.bf16.msra.mxu0 %v3958
      %4115 = vmatprep.subr.bf16.mxu0 0
      %4116 = vmatpush1.bf16.msra.mxu0 %v3959
      %4117 = vmatprep.subr.bf16.mxu0 0
      %4118 = vmatpush1.bf16.msra.mxu0 %v3960
      %4119 = vmatprep.subr.bf16.mxu0 0
      %4120 = vmatpush1.bf16.msra.mxu0 %v3961
      %4121 = vmatprep.subr.bf16.mxu0 0
      %4122 = vmatpush1.bf16.msra.mxu0 %v3962
      %4123 = vmatprep.mubr.bf16.mxu0 %v3437
      %4124 = vmatmul.mubr.bf16.gmra.mrb[0].mxu0 %v3436
      %v4125 = vpop.f32.mrb[0].mxu0
      %v4126 = vadd.f32 %v3657, %v4125
      %v4127 = vpop.f32.mrb[0].mxu0
      %v4128 = vpop.f32.mrb[0].mxu0
      %v4129 = vadd.f32 %v3657, %v4128
      %v4130 = vpop.f32.mrb[0].mxu0
      %4131 = vmatprep.mubr.bf16.mxu0 %v3446
      %4132 = vmatmul.mubr.bf16.gmra.mrb[0].mxu0 %v3445
      %v4133 = vpop.f32.mrb[0].mxu0
      %v4134 = vadd.f32 %v3657, %v4133
      %v4135 = vpop.f32.mrb[0].mxu0
      %v4136 = vpop.f32.mrb[0].mxu0
      %v4137 = vadd.f32 %v3657, %v4136
      %v4138 = vpop.f32.mrb[0].mxu0
      %4139 = vmatprep.mubr.bf16.mxu0 %v3455
      %4140 = vmatmul.mubr.bf16.gmra.mrb[0].mxu0 %v3454
      %v4141 = vpop.f32.mrb[0].mxu0
      %v4142 = vadd.f32 %v3657, %v4141
      %v4143 = vpop.f32.mrb[0].mxu0
      %v4144 = vpop.f32.mrb[0].mxu0
      %v4145 = vadd.f32 %v3657, %v4144
      %v4146 = vpop.f32.mrb[0].mxu0
      %4147 = vmatprep.mubr.bf16.mxu0 %v3464
      %4148 = vmatmul.mubr.bf16.gmra.mrb[0].mxu0 %v3463
      %v4149 = vpop.f32.mrb[0].mxu0
      %v4150 = vadd.f32 %v3657, %v4149
      %v4151 = vpop.f32.mrb[0].mxu0
      %v4152 = vpop.f32.mrb[0].mxu0
      %v4153 = vadd.f32 %v3657, %v4152
      %v4154 = vpop.f32.mrb[0].mxu0
      %4155 = vmatprep.mubr.bf16.mxu0 %v3473
      %4156 = vmatmul.mubr.bf16.gmra.mrb[0].mxu0 %v3472
      %v4157 = vpop.f32.mrb[0].mxu0
      %v4158 = vadd.f32 %v3657, %v4157
      %v4159 = vpop.f32.mrb[0].mxu0
      %v4160 = vpop.f32.mrb[0].mxu0
      %v4161 = vadd.f32 %v3657, %v4160
      %v4162 = vpop.f32.mrb[0].mxu0
      %4163 = vmatprep.mubr.bf16.mxu0 %v3482
      %4164 = vmatmul.mubr.bf16.gmra.mrb[0].mxu0 %v3481
      %v4165 = vpop.f32.mrb[0].mxu0
      %v4166 = vadd.f32 %v3657, %v4165
      %v4167 = vpop.f32.mrb[0].mxu0
      %v4168 = vpop.f32.mrb[0].mxu0
      %v4169 = vadd.f32 %v3657, %v4168
      %v4170 = vpop.f32.mrb[0].mxu0
      %4171 = vmatprep.mubr.bf16.mxu0 %v3491
      %4172 = vmatmul.mubr.bf16.gmra.mrb[0].mxu0 %v3490
      %v4173 = vpop.f32.mrb[0].mxu0
      %v4174 = vadd.f32 %v3657, %v4173
      %v4175 = vpop.f32.mrb[0].mxu0
      %v4176 = vpop.f32.mrb[0].mxu0
      %v4177 = vadd.f32 %v3657, %v4176
      %v4178 = vpop.f32.mrb[0].mxu0
      %4179 = vmatprep.mubr.bf16.mxu0 %v3500
      %4180 = vmatmul.mubr.bf16.gmra.mrb[0].mxu0 %v3499
      %v4181 = vpop.f32.mrb[0].mxu0
      %v4182 = vadd.f32 %v3657, %v4181
      %v4183 = vpop.f32.mrb[0].mxu0
      %v4184 = vpop.f32.mrb[0].mxu0
      %v4185 = vadd.f32 %v3657, %v4184
      %v4186 = vpop.f32.mrb[0].mxu0
      %4187 = vdwg.mxu0
      %4188 = vmatprep.subr.bf16.mxu0 0
      %4189 = vmatpush1.bf16.msra.mxu0 %v3963
      %4190 = vmatprep.subr.bf16.mxu0 0
      %4191 = vmatpush1.bf16.msra.mxu0 %v3964
      %4192 = vmatprep.subr.bf16.mxu0 0
      %4193 = vmatpush1.bf16.msra.mxu0 %v3965
      %4194 = vmatprep.subr.bf16.mxu0 0
      %4195 = vmatpush1.bf16.msra.mxu0 %v3966
      %4196 = vmatprep.subr.bf16.mxu0 0
      %4197 = vmatpush1.bf16.msra.mxu0 %v3967
      %4198 = vmatprep.subr.bf16.mxu0 0
      %4199 = vmatpush1.bf16.msra.mxu0 %v3968
      %4200 = vmatprep.subr.bf16.mxu0 0
      %4201 = vmatpush1.bf16.msra.mxu0 %v3969
      %4202 = vmatprep.subr.bf16.mxu0 0
      %4203 = vmatpush1.bf16.msra.mxu0 %v3970
      %4204 = vmatprep.subr.bf16.mxu0 0
      %4205 = vmatpush1.bf16.msra.mxu0 %v3971
      %4206 = vmatprep.subr.bf16.mxu0 0
      %4207 = vmatpush1.bf16.msra.mxu0 %v3972
      %4208 = vmatprep.subr.bf16.mxu0 0
      %4209 = vmatpush1.bf16.msra.mxu0 %v3973
      %4210 = vmatprep.subr.bf16.mxu0 0
      %4211 = vmatpush1.bf16.msra.mxu0 %v3974
      %4212 = vmatprep.subr.bf16.mxu0 0
      %4213 = vmatpush1.bf16.msra.mxu0 %v3975
      %4214 = vmatprep.subr.bf16.mxu0 0
      %4215 = vmatpush1.bf16.msra.mxu0 %v3976
      %4216 = vmatprep.subr.bf16.mxu0 0
      %4217 = vmatpush1.bf16.msra.mxu0 %v3977
      %4218 = vmatprep.subr.bf16.mxu0 0
      %4219 = vmatpush1.bf16.msra.mxu0 %v3978
      %4220 = vmatprep.mubr.bf16.mxu0 %v3439
      %4221 = vmatmul.mubr.bf16.gmra.mrb[0].mxu0 %v3438
      %v4222 = vpop.f32.mrb[0].mxu0
      %v4223 = vadd.f32 %v4126, %v4222
      %v4224 = vpop.f32.mrb[0].mxu0
      %v4225 = vpop.f32.mrb[0].mxu0
      %v4226 = vadd.f32 %v4129, %v4225
      %v4227 = vpop.f32.mrb[0].mxu0
      %4228 = vmatprep.mubr.bf16.mxu0 %v3448
      %4229 = vmatmul.mubr.bf16.gmra.mrb[0].mxu0 %v3447
      %v4230 = vpop.f32.mrb[0].mxu0
      %v4231 = vadd.f32 %v4134, %v4230
      %v4232 = vpop.f32.mrb[0].mxu0
      %v4233 = vpop.f32.mrb[0].mxu0
      %v4234 = vadd.f32 %v4137, %v4233
      %v4235 = vpop.f32.mrb[0].mxu0
      %4236 = vmatprep.mubr.bf16.mxu0 %v3457
      %4237 = vmatmul.mubr.bf16.gmra.mrb[0].mxu0 %v3456
      %v4238 = vpop.f32.mrb[0].mxu0
      %v4239 = vadd.f32 %v4142, %v4238
      %v4240 = vpop.f32.mrb[0].mxu0
      %v4241 = vpop.f32.mrb[0].mxu0
      %v4242 = vadd.f32 %v4145, %v4241
      %v4243 = vpop.f32.mrb[0].mxu0
      %4244 = vmatprep.mubr.bf16.mxu0 %v3466
      %4245 = vmatmul.mubr.bf16.gmra.mrb[0].mxu0 %v3465
      %v4246 = vpop.f32.mrb[0].mxu0
      %v4247 = vadd.f32 %v4150, %v4246
      %v4248 = vpop.f32.mrb[0].mxu0
      %v4249 = vpop.f32.mrb[0].mxu0
      %v4250 = vadd.f32 %v4153, %v4249
      %v4251 = vpop.f32.mrb[0].mxu0
      %4252 = vmatprep.mubr.bf16.mxu0 %v3475
      %4253 = vmatmul.mubr.bf16.gmra.mrb[0].mxu0 %v3474
      %v4254 = vpop.f32.mrb[0].mxu0
      %v4255 = vadd.f32 %v4158, %v4254
      %v4256 = vpop.f32.mrb[0].mxu0
      %v4257 = vpop.f32.mrb[0].mxu0
      %v4258 = vadd.f32 %v4161, %v4257
      %v4259 = vpop.f32.mrb[0].mxu0
      %4260 = vmatprep.mubr.bf16.mxu0 %v3484
      %4261 = vmatmul.mubr.bf16.gmra.mrb[0].mxu0 %v3483
      %v4262 = vpop.f32.mrb[0].mxu0
      %v4263 = vadd.f32 %v4166, %v4262
      %v4264 = vpop.f32.mrb[0].mxu0
      %v4265 = vpop.f32.mrb[0].mxu0
      %v4266 = vadd.f32 %v4169, %v4265
      %v4267 = vpop.f32.mrb[0].mxu0
      %4268 = vmatprep.mubr.bf16.mxu0 %v3493
      %4269 = vmatmul.mubr.bf16.gmra.mrb[0].mxu0 %v3492
      %v4270 = vpop.f32.mrb[0].mxu0
      %v4271 = vadd.f32 %v4174, %v4270
      %v4272 = vpop.f32.mrb[0].mxu0
      %v4273 = vpop.f32.mrb[0].mxu0
      %v4274 = vadd.f32 %v4177, %v4273
      %v4275 = vpop.f32.mrb[0].mxu0
      %4276 = vmatprep.mubr.bf16.mxu0 %v3502
      %4277 = vmatmul.mubr.bf16.gmra.mrb[0].mxu0 %v3501
      %v4278 = vpop.f32.mrb[0].mxu0
      %v4279 = vadd.f32 %v4182, %v4278
      %v4280 = vpop.f32.mrb[0].mxu0
      %v4281 = vpop.f32.mrb[0].mxu0
      %v4282 = vadd.f32 %v4185, %v4281
      %v4283 = vpop.f32.mrb[0].mxu0
      %4284 = vdwg.mxu0
      %4285 = vmatprep.subr.bf16.mxu0 0
      %4286 = vmatpush1.bf16.msra.mxu0 %v3979
      %4287 = vmatprep.subr.bf16.mxu0 0
      %4288 = vmatpush1.bf16.msra.mxu0 %v3980
      %4289 = vmatprep.subr.bf16.mxu0 0
      %4290 = vmatpush1.bf16.msra.mxu0 %v3981
      %4291 = vmatprep.subr.bf16.mxu0 0
      %4292 = vmatpush1.bf16.msra.mxu0 %v3982
      %4293 = vmatprep.subr.bf16.mxu0 0
      %4294 = vmatpush1.bf16.msra.mxu0 %v3983
      %4295 = vmatprep.subr.bf16.mxu0 0
      %4296 = vmatpush1.bf16.msra.mxu0 %v3984
      %4297 = vmatprep.subr.bf16.mxu0 0
      %4298 = vmatpush1.bf16.msra.mxu0 %v3985
      %4299 = vmatprep.subr.bf16.mxu0 0
      %4300 = vmatpush1.bf16.msra.mxu0 %v3986
      %4301 = vmatprep.subr.bf16.mxu0 0
      %4302 = vmatpush1.bf16.msra.mxu0 %v3987
      %4303 = vmatprep.subr.bf16.mxu0 0
      %4304 = vmatpush1.bf16.msra.mxu0 %v3988
      %4305 = vmatprep.subr.bf16.mxu0 0
      %4306 = vmatpush1.bf16.msra.mxu0 %v3989
      %4307 = vmatprep.subr.bf16.mxu0 0
      %4308 = vmatpush1.bf16.msra.mxu0 %v3990
      %4309 = vmatprep.subr.bf16.mxu0 0
      %4310 = vmatpush1.bf16.msra.mxu0 %v3991
      %4311 = vmatprep.subr.bf16.mxu0 0
      %4312 = vmatpush1.bf16.msra.mxu0 %v3992
      %4313 = vmatprep.subr.bf16.mxu0 0
      %4314 = vmatpush1.bf16.msra.mxu0 %v3993
      %4315 = vmatprep.subr.bf16.mxu0 0
      %4316 = vmatpush1.bf16.msra.mxu0 %v3994
      %4317 = vmatprep.mubr.bf16.mxu0 %v3441
      %4318 = vmatmul.mubr.bf16.gmra.mrb[0].mxu0 %v3440
      %v4319 = vpop.f32.mrb[0].mxu0
      %v4320 = vadd.f32 %v4223, %v4319
      %v4321 = vpop.f32.mrb[0].mxu0
      %v4322 = vpop.f32.mrb[0].mxu0
      %v4323 = vadd.f32 %v4226, %v4322
      %v4324 = vpop.f32.mrb[0].mxu0
      %4325 = vmatprep.mubr.bf16.mxu0 %v3450
      %4326 = vmatmul.mubr.bf16.gmra.mrb[0].mxu0 %v3449
      %v4327 = vpop.f32.mrb[0].mxu0
      %v4328 = vadd.f32 %v4231, %v4327
      %v4329 = vpop.f32.mrb[0].mxu0
      %v4330 = vpop.f32.mrb[0].mxu0
      %v4331 = vadd.f32 %v4234, %v4330
      %v4332 = vpop.f32.mrb[0].mxu0
      %4333 = vmatprep.mubr.bf16.mxu0 %v3459
      %4334 = vmatmul.mubr.bf16.gmra.mrb[0].mxu0 %v3458
      %v4335 = vpop.f32.mrb[0].mxu0
      %v4336 = vadd.f32 %v4239, %v4335
      %v4337 = vpop.f32.mrb[0].mxu0
      %v4338 = vpop.f32.mrb[0].mxu0
      %v4339 = vadd.f32 %v4242, %v4338
      %v4340 = vpop.f32.mrb[0].mxu0
      %4341 = vmatprep.mubr.bf16.mxu0 %v3468
      %4342 = vmatmul.mubr.bf16.gmra.mrb[0].mxu0 %v3467
      %v4343 = vpop.f32.mrb[0].mxu0
      %v4344 = vadd.f32 %v4247, %v4343
      %v4345 = vpop.f32.mrb[0].mxu0
      %v4346 = vpop.f32.mrb[0].mxu0
      %v4347 = vadd.f32 %v4250, %v4346
      %v4348 = vpop.f32.mrb[0].mxu0
      %4349 = vmatprep.mubr.bf16.mxu0 %v3477
      %4350 = vmatmul.mubr.bf16.gmra.mrb[0].mxu0 %v3476
      %v4351 = vpop.f32.mrb[0].mxu0
      %v4352 = vadd.f32 %v4255, %v4351
      %v4353 = vpop.f32.mrb[0].mxu0
      %v4354 = vpop.f32.mrb[0].mxu0
      %v4355 = vadd.f32 %v4258, %v4354
      %v4356 = vpop.f32.mrb[0].mxu0
      %4357 = vmatprep.mubr.bf16.mxu0 %v3486
      %4358 = vmatmul.mubr.bf16.gmra.mrb[0].mxu0 %v3485
      %v4359 = vpop.f32.mrb[0].mxu0
      %v4360 = vadd.f32 %v4263, %v4359
      %v4361 = vpop.f32.mrb[0].mxu0
      %v4362 = vpop.f32.mrb[0].mxu0
      %v4363 = vadd.f32 %v4266, %v4362
      %v4364 = vpop.f32.mrb[0].mxu0
      %4365 = vmatprep.mubr.bf16.mxu0 %v3495
      %4366 = vmatmul.mubr.bf16.gmra.mrb[0].mxu0 %v3494
      %v4367 = vpop.f32.mrb[0].mxu0
      %v4368 = vadd.f32 %v4271, %v4367
      %v4369 = vpop.f32.mrb[0].mxu0
      %v4370 = vpop.f32.mrb[0].mxu0
      %v4371 = vadd.f32 %v4274, %v4370
      %v4372 = vpop.f32.mrb[0].mxu0
      %4373 = vmatprep.mubr.bf16.mxu0 %v3504
      %4374 = vmatmul.mubr.bf16.gmra.mrb[0].mxu0 %v3503
      %v4375 = vpop.f32.mrb[0].mxu0
      %v4376 = vadd.f32 %v4279, %v4375
      %v4377 = vpop.f32.mrb[0].mxu0
      %v4378 = vpop.f32.mrb[0].mxu0
      %v4379 = vadd.f32 %v4282, %v4378
      %v4380 = vpop.f32.mrb[0].mxu0
      %4381 = vdwg.mxu0
      %4382 = vmatprep.subr.bf16.mxu0 0
      %4383 = vmatpush1.bf16.msra.mxu0 %v3995
      %4384 = vmatprep.subr.bf16.mxu0 0
      %4385 = vmatpush1.bf16.msra.mxu0 %v3996
      %4386 = vmatprep.subr.bf16.mxu0 0
      %4387 = vmatpush1.bf16.msra.mxu0 %v3997
      %4388 = vmatprep.subr.bf16.mxu0 0
      %4389 = vmatpush1.bf16.msra.mxu0 %v3998
      %4390 = vmatprep.subr.bf16.mxu0 0
      %4391 = vmatpush1.bf16.msra.mxu0 %v3999
      %4392 = vmatprep.subr.bf16.mxu0 0
      %4393 = vmatpush1.bf16.msra.mxu0 %v4000
      %4394 = vmatprep.subr.bf16.mxu0 0
      %4395 = vmatpush1.bf16.msra.mxu0 %v4001
      %4396 = vmatprep.subr.bf16.mxu0 0
      %4397 = vmatpush1.bf16.msra.mxu0 %v4002
      %4398 = vmatprep.subr.bf16.mxu0 0
      %4399 = vmatpush1.bf16.msra.mxu0 %v4003
      %4400 = vmatprep.subr.bf16.mxu0 0
      %4401 = vmatpush1.bf16.msra.mxu0 %v4004
      %4402 = vmatprep.subr.bf16.mxu0 0
      %4403 = vmatpush1.bf16.msra.mxu0 %v4005
      %4404 = vmatprep.subr.bf16.mxu0 0
      %4405 = vmatpush1.bf16.msra.mxu0 %v4006
      %4406 = vmatprep.subr.bf16.mxu0 0
      %4407 = vmatpush1.bf16.msra.mxu0 %v4007
      %4408 = vmatprep.subr.bf16.mxu0 0
      %4409 = vmatpush1.bf16.msra.mxu0 %v4008
      %4410 = vmatprep.subr.bf16.mxu0 0
      %4411 = vmatpush1.bf16.msra.mxu0 %v4009
      %4412 = vmatprep.subr.bf16.mxu0 0
      %4413 = vmatpush1.bf16.msra.mxu0 %v4010
      %4414 = vmatprep.mubr.bf16.mxu0 %v3443
      %4415 = vmatmul.mubr.bf16.gmra.mrb[0].mxu0 %v3442
      %v4416 = vpop.f32.mrb[0].mxu0
      %v4417 = vadd.f32 %v4320, %v4416
      %v4418 = vpop.f32.mrb[0].mxu0
      %v4419 = vpop.f32.mrb[0].mxu0
      %v4420 = vadd.f32 %v4323, %v4419
      %v4421 = vpop.f32.mrb[0].mxu0
      %4422 = vmatprep.mubr.bf16.mxu0 %v3452
      %4423 = vmatmul.mubr.bf16.gmra.mrb[0].mxu0 %v3451
      %v4424 = vpop.f32.mrb[0].mxu0
      %v4425 = vadd.f32 %v4328, %v4424
      %v4426 = vpop.f32.mrb[0].mxu0
      %v4427 = vpop.f32.mrb[0].mxu0
      %v4428 = vadd.f32 %v4331, %v4427
      %v4429 = vpop.f32.mrb[0].mxu0
      %4430 = vmatprep.mubr.bf16.mxu0 %v3461
      %4431 = vmatmul.mubr.bf16.gmra.mrb[0].mxu0 %v3460
      %v4432 = vpop.f32.mrb[0].mxu0
      %v4433 = vadd.f32 %v4336, %v4432
      %v4434 = vpop.f32.mrb[0].mxu0
      %v4435 = vpop.f32.mrb[0].mxu0
      %v4436 = vadd.f32 %v4339, %v4435
      %v4437 = vpop.f32.mrb[0].mxu0
      %4438 = vmatprep.mubr.bf16.mxu0 %v3470
      %4439 = vmatmul.mubr.bf16.gmra.mrb[0].mxu0 %v3469
      %v4440 = vpop.f32.mrb[0].mxu0
      %v4441 = vadd.f32 %v4344, %v4440
      %v4442 = vpop.f32.mrb[0].mxu0
      %v4443 = vpop.f32.mrb[0].mxu0
      %v4444 = vadd.f32 %v4347, %v4443
      %v4445 = vpop.f32.mrb[0].mxu0
      %4446 = vmatprep.mubr.bf16.mxu0 %v3479
      %4447 = vmatmul.mubr.bf16.gmra.mrb[0].mxu0 %v3478
      %v4448 = vpop.f32.mrb[0].mxu0
      %v4449 = vadd.f32 %v4352, %v4448
      %v4450 = vpop.f32.mrb[0].mxu0
      %v4451 = vpop.f32.mrb[0].mxu0
      %v4452 = vadd.f32 %v4355, %v4451
      %v4453 = vpop.f32.mrb[0].mxu0
      %4454 = vmatprep.mubr.bf16.mxu0 %v3488
      %4455 = vmatmul.mubr.bf16.gmra.mrb[0].mxu0 %v3487
      %v4456 = vpop.f32.mrb[0].mxu0
      %v4457 = vadd.f32 %v4360, %v4456
      %v4458 = vpop.f32.mrb[0].mxu0
      %v4459 = vpop.f32.mrb[0].mxu0
      %v4460 = vadd.f32 %v4363, %v4459
      %v4461 = vpop.f32.mrb[0].mxu0
      %4462 = vmatprep.mubr.bf16.mxu0 %v3497
      %4463 = vmatmul.mubr.bf16.gmra.mrb[0].mxu0 %v3496
      %v4464 = vpop.f32.mrb[0].mxu0
      %v4465 = vadd.f32 %v4368, %v4464
      %v4466 = vpop.f32.mrb[0].mxu0
      %v4467 = vpop.f32.mrb[0].mxu0
      %v4468 = vadd.f32 %v4371, %v4467
      %v4469 = vpop.f32.mrb[0].mxu0
      %4470 = vmatprep.mubr.bf16.mxu0 %v3506
      %4471 = vmatmul.mubr.bf16.gmra.mrb[0].mxu0 %v3505
      %v4472 = vpop.f32.mrb[0].mxu0
      %v4473 = vadd.f32 %v4376, %v4472
      %v4474 = vpop.f32.mrb[0].mxu0
      %v4475 = vpop.f32.mrb[0].mxu0
      %v4476 = vadd.f32 %v4379, %v4475
      %v4477 = vpop.f32.mrb[0].mxu0
      %4478 = vdwg.mxu0
      %4479 = vmatprep.subr.bf16.mxu0 0
      %4480 = vmatpush1.bf16.msra.mxu0 %v4011
      %4481 = vmatprep.subr.bf16.mxu0 0
      %4482 = vmatpush1.bf16.msra.mxu0 %v4012
      %4483 = vmatprep.subr.bf16.mxu0 0
      %4484 = vmatpush1.bf16.msra.mxu0 %v4013
      %4485 = vmatprep.subr.bf16.mxu0 0
      %4486 = vmatpush1.bf16.msra.mxu0 %v4014
      %4487 = vmatprep.subr.bf16.mxu0 0
      %4488 = vmatpush1.bf16.msra.mxu0 %v4015
      %4489 = vmatprep.subr.bf16.mxu0 0
      %4490 = vmatpush1.bf16.msra.mxu0 %v4016
      %4491 = vmatprep.subr.bf16.mxu0 0
      %4492 = vmatpush1.bf16.msra.mxu0 %v4017
      %4493 = vmatprep.subr.bf16.mxu0 0
      %4494 = vmatpush1.bf16.msra.mxu0 %v4018
      %4495 = vmatprep.subr.bf16.mxu0 0
      %4496 = vmatpush1.bf16.msra.mxu0 0
      %4497 = vmatprep.subr.bf16.mxu0 0
      %4498 = vmatpush1.bf16.msra.mxu0 0
      %4499 = vmatprep.subr.bf16.mxu0 0
      %4500 = vmatpush1.bf16.msra.mxu0 0
      %4501 = vmatprep.subr.bf16.mxu0 0
      %4502 = vmatpush1.bf16.msra.mxu0 0
      %4503 = vmatprep.subr.bf16.mxu0 0
      %4504 = vmatpush1.bf16.msra.mxu0 0
      %4505 = vmatprep.subr.bf16.mxu0 0
      %4506 = vmatpush1.bf16.msra.mxu0 0
      %4507 = vmatprep.subr.bf16.mxu0 0
      %4508 = vmatpush1.bf16.msra.mxu0 0
      %4509 = vmatprep.subr.bf16.mxu0 0
      %4510 = vmatpush1.bf16.msra.mxu0 0
      %4511 = vmatprep.mubr.bf16.mxu0 0
      %4512 = vmatmul.mubr.bf16.gmra.mrb[0].mxu0 %v3444
      %v4513 = vpop.f32.mrb[0].mxu0
      %v4514 = vadd.f32 %v4417, %v4513
      %v4515 = vpop.f32.mrb[0].mxu0
      %v4516 = vpop.f32.mrb[0].mxu0
      %v4517 = vadd.f32 %v4420, %v4516
      %v4518 = vpop.f32.mrb[0].mxu0
      %4519 = vmatprep.mubr.bf16.mxu0 0
      %4520 = vmatmul.mubr.bf16.gmra.mrb[0].mxu0 %v3453
      %v4521 = vpop.f32.mrb[0].mxu0
      %v4522 = vadd.f32 %v4425, %v4521
      %v4523 = vpop.f32.mrb[0].mxu0
      %v4524 = vpop.f32.mrb[0].mxu0
      %v4525 = vadd.f32 %v4428, %v4524
      %v4526 = vpop.f32.mrb[0].mxu0
      %4527 = vmatprep.mubr.bf16.mxu0 0
      %4528 = vmatmul.mubr.bf16.gmra.mrb[0].mxu0 %v3462
      %v4529 = vpop.f32.mrb[0].mxu0
      %v4530 = vadd.f32 %v4433, %v4529
      %v4531 = vpop.f32.mrb[0].mxu0
      %v4532 = vpop.f32.mrb[0].mxu0
      %v4533 = vadd.f32 %v4436, %v4532
      %v4534 = vpop.f32.mrb[0].mxu0
      %4535 = vmatprep.mubr.bf16.mxu0 0
      %4536 = vmatmul.mubr.bf16.gmra.mrb[0].mxu0 %v3471
      %v4537 = vpop.f32.mrb[0].mxu0
      %v4538 = vadd.f32 %v4441, %v4537
      %v4539 = vpop.f32.mrb[0].mxu0
      %v4540 = vpop.f32.mrb[0].mxu0
      %v4541 = vadd.f32 %v4444, %v4540
      %v4542 = vpop.f32.mrb[0].mxu0
      %4543 = vmatprep.mubr.bf16.mxu0 0
      %4544 = vmatmul.mubr.bf16.gmra.mrb[0].mxu0 %v3480
      %v4545 = vpop.f32.mrb[0].mxu0
      %v4546 = vadd.f32 %v4449, %v4545
      %v4547 = vpop.f32.mrb[0].mxu0
      %v4548 = vpop.f32.mrb[0].mxu0
      %v4549 = vadd.f32 %v4452, %v4548
      %v4550 = vpop.f32.mrb[0].mxu0
      %4551 = vmatprep.mubr.bf16.mxu0 0
      %4552 = vmatmul.mubr.bf16.gmra.mrb[0].mxu0 %v3489
      %v4553 = vpop.f32.mrb[0].mxu0
      %v4554 = vadd.f32 %v4457, %v4553
      %v4555 = vpop.f32.mrb[0].mxu0
      %v4556 = vpop.f32.mrb[0].mxu0
      %v4557 = vadd.f32 %v4460, %v4556
      %v4558 = vpop.f32.mrb[0].mxu0
      %4559 = vmatprep.mubr.bf16.mxu0 0
      %4560 = vmatmul.mubr.bf16.gmra.mrb[0].mxu0 %v3498
      %v4561 = vpop.f32.mrb[0].mxu0
      %v4562 = vadd.f32 %v4465, %v4561
      %v4563 = vpop.f32.mrb[0].mxu0
      %v4564 = vpop.f32.mrb[0].mxu0
      %v4565 = vadd.f32 %v4468, %v4564
      %v4566 = vpop.f32.mrb[0].mxu0
      %4567 = vmatprep.mubr.bf16.mxu0 0
      %4568 = vmatmul.mubr.bf16.gmra.mrb[0].mxu0 %v3507
      %v4569 = vpop.f32.mrb[0].mxu0
      %v4570 = vadd.f32 %v4473, %v4569
      %v4571 = vpop.f32.mrb[0].mxu0
      %v4572 = vpop.f32.mrb[0].mxu0
      %v4573 = vadd.f32 %v4476, %v4572
      %v4574 = vpop.f32.mrb[0].mxu0
      %4575 = vdwg.mxu0
      %v4576 = vpack.c.bf16 %v4517, %v4514
      %v4577 = vpack.c.bf16 %v4525, %v4522
      %v4578 = vpack.c.bf16 %v4533, %v4530
      %v4579 = vpack.c.bf16 %v4541, %v4538
      %v4580 = vpack.c.bf16 %v4549, %v4546
      %v4581 = vpack.c.bf16 %v4557, %v4554
      %v4582 = vpack.c.bf16 %v4565, %v4562
      %v4583 = vpack.c.bf16 %v4573, %v4570
      %v4592 = vunpack.c.l.b16 %v4576
      %v4593 = vunpack.c.h.b16 %v4576
      %v4594 = vunpack.c.l.b16 %v4577
      %v4595 = vunpack.c.h.b16 %v4577
      %v4596 = vunpack.c.l.b16 %v4578
      %v4597 = vunpack.c.h.b16 %v4578
      %v4598 = vunpack.c.l.b16 %v4579
      %v4599 = vunpack.c.h.b16 %v4579
      %v4600 = vunpack.c.l.b16 %v4580
      %v4601 = vunpack.c.h.b16 %v4580
      %v4602 = vunpack.c.l.b16 %v4581
      %v4603 = vunpack.c.h.b16 %v4581
      %v4604 = vunpack.c.l.b16 %v4582
      %v4605 = vunpack.c.h.b16 %v4582
      %v4606 = vunpack.c.l.b16 %v4583
      %v4607 = vunpack.c.h.b16 %v4583
      %v4608 = vpack.c.b16 %v4592, %v4592
      %v4609 = vpack.c.b16 %v4593, %v4593
      %v4610 = vpack.c.b16 %v4594, %v4594
      %v4611 = vpack.c.b16 %v4595, %v4595
      %v4612 = vpack.c.b16 %v4596, %v4596
      %v4613 = vpack.c.b16 %v4597, %v4597
      %v4614 = vpack.c.b16 %v4598, %v4598
      %v4615 = vpack.c.b16 %v4599, %v4599
      %v4616 = vpack.c.b16 %v4600, %v4600
      %v4617 = vpack.c.b16 %v4601, %v4601
      %v4618 = vpack.c.b16 %v4602, %v4602
      %v4619 = vpack.c.b16 %v4603, %v4603
      %v4620 = vpack.c.b16 %v4604, %v4604
      %v4621 = vpack.c.b16 %v4605, %v4605
      %v4622 = vpack.c.b16 %v4606, %v4606
      %v4623 = vpack.c.b16 %v4607, %v4607
      %4640 = vst.msk [vmem:[%s727] sm:$0xf] %vm1015, %v4608
      %4641 = vst.msk [vmem:[%s727 + $0x4] sm:$0xf] %vm1015, %v4609
      %4642 = vst.msk [vmem:[%s727 + $0x8] sm:$0xf] %vm1015, %v4610
      %4643 = vst.msk [vmem:[%s727 + $0xc] sm:$0xf] %vm1015, %v4611
      %4644 = vst.msk [vmem:[%s727 + $0x10] sm:$0xf] %vm1015, %v4612
      %4645 = vst.msk [vmem:[%s727 + $0x14] sm:$0xf] %vm1015, %v4613
      %4646 = vst.msk [vmem:[%s727 + $0x18] sm:$0xf] %vm1015, %v4614
      %4647 = vst.msk [vmem:[%s727 + $0x1c] sm:$0xf] %vm1015, %v4615
      %4648 = vst.msk [vmem:[%s727 + $0x20] sm:$0xf] %vm1015, %v4616
      %4649 = vst.msk [vmem:[%s727 + $0x24] sm:$0xf] %vm1015, %v4617
      %4650 = vst.msk [vmem:[%s727 + $0x28] sm:$0xf] %vm1015, %v4618
      %4651 = vst.msk [vmem:[%s727 + $0x2c] sm:$0xf] %vm1015, %v4619
      %4652 = vst.msk [vmem:[%s727 + $0x30] sm:$0xf] %vm1015, %v4620
      %4653 = vst.msk [vmem:[%s727 + $0x34] sm:$0xf] %vm1015, %v4621
      %4654 = vst.msk [vmem:[%s727 + $0x38] sm:$0xf] %vm1015, %v4622
      %4655 = vst.msk [vmem:[%s727 + $0x3c] sm:$0xf] %vm1015, %v4623
      %v4656 = vsel %vm1079, %v4514, 0.0
      %v4657 = vsel %vm1079, %v4517, 0.0
      %v4658 = vadd.f32 %v4656, %v4657
      %v4659 = vsel %vm1079, %v4522, 0.0
      %v4660 = vadd.f32 %v4658, %v4659
      %v4661 = vsel %vm1079, %v4525, 0.0
      %v4662 = vadd.f32 %v4660, %v4661
      %v4663 = vsel %vm1079, %v4530, 0.0
      %v4664 = vadd.f32 %v4662, %v4663
      %v4665 = vsel %vm1079, %v4533, 0.0
      %v4666 = vadd.f32 %v4664, %v4665
      %v4667 = vsel %vm1079, %v4538, 0.0
      %v4668 = vadd.f32 %v4666, %v4667
      %v4669 = vsel %vm1079, %v4541, 0.0
      %v4670 = vadd.f32 %v4668, %v4669
      %v4671 = vsel %vm1079, %v4546, 0.0
      %v4672 = vadd.f32 %v4670, %v4671
      %v4673 = vsel %vm1079, %v4549, 0.0
      %v4674 = vadd.f32 %v4672, %v4673
      %v4675 = vsel %vm1079, %v4554, 0.0
      %v4676 = vadd.f32 %v4674, %v4675
      %v4677 = vsel %vm1079, %v4557, 0.0
      %v4678 = vadd.f32 %v4676, %v4677
      %v4679 = vsel %vm1079, %v4562, 0.0
      %v4680 = vadd.f32 %v4678, %v4679
      %v4681 = vsel %vm1079, %v4565, 0.0
      %v4682 = vadd.f32 %v4680, %v4681
      %v4683 = vsel %vm1079, %v4570, 0.0
      %v4684 = vadd.f32 %v4682, %v4683
      %v4685 = vsel %vm1079, %v4573, 0.0
      %v4686 = vadd.f32 %v4684, %v4685
      %v4687 = vrot.slane %v4686, 4
      %v4688 = vadd.f32 %v4686, %v4687
      %v4689 = vrot.slane %v4688, 2
      %v4690 = vadd.f32 %v4688, %v4689
      %v4691 = vrot.slane %v4690, 1
      %v4692 = vadd.f32 %v4690, %v4691
      %vm4693 = vcmask 516096
      %4694 = vst.msk [vmem:[%s736] sm:$0x1] %vm4693, %v4692
      %v4695 = vmul.f32 %v4514, %v4514
      %v4696 = vmul.f32 %v4517, %v4517
      %v4697 = vmul.f32 %v4522, %v4522
      %v4698 = vmul.f32 %v4525, %v4525
      %v4699 = vmul.f32 %v4530, %v4530
      %v4700 = vmul.f32 %v4533, %v4533
      %v4701 = vmul.f32 %v4538, %v4538
      %v4702 = vmul.f32 %v4541, %v4541
      %v4703 = vmul.f32 %v4546, %v4546
      %v4704 = vmul.f32 %v4549, %v4549
      %v4705 = vmul.f32 %v4554, %v4554
      %v4706 = vmul.f32 %v4557, %v4557
      %v4707 = vmul.f32 %v4562, %v4562
      %v4708 = vmul.f32 %v4565, %v4565
      %v4709 = vmul.f32 %v4570, %v4570
      %v4710 = vmul.f32 %v4573, %v4573
      %v4711 = vsel %vm1079, %v4695, 0.0
      %v4712 = vsel %vm1079, %v4696, 0.0
      %v4713 = vadd.f32 %v4711, %v4712
      %v4714 = vsel %vm1079, %v4697, 0.0
      %v4715 = vadd.f32 %v4713, %v4714
      %v4716 = vsel %vm1079, %v4698, 0.0
      %v4717 = vadd.f32 %v4715, %v4716
      %v4718 = vsel %vm1079, %v4699, 0.0
      %v4719 = vadd.f32 %v4717, %v4718
      %v4720 = vsel %vm1079, %v4700, 0.0
      %v4721 = vadd.f32 %v4719, %v4720
      %v4722 = vsel %vm1079, %v4701, 0.0
      %v4723 = vadd.f32 %v4721, %v4722
      %v4724 = vsel %vm1079, %v4702, 0.0
      %v4725 = vadd.f32 %v4723, %v4724
      %v4726 = vsel %vm1079, %v4703, 0.0
      %v4727 = vadd.f32 %v4725, %v4726
      %v4728 = vsel %vm1079, %v4704, 0.0
      %v4729 = vadd.f32 %v4727, %v4728
      %v4730 = vsel %vm1079, %v4705, 0.0
      %v4731 = vadd.f32 %v4729, %v4730
      %v4732 = vsel %vm1079, %v4706, 0.0
      %v4733 = vadd.f32 %v4731, %v4732
      %v4734 = vsel %vm1079, %v4707, 0.0
      %v4735 = vadd.f32 %v4733, %v4734
      %v4736 = vsel %vm1079, %v4708, 0.0
      %v4737 = vadd.f32 %v4735, %v4736
      %v4738 = vsel %vm1079, %v4709, 0.0
      %v4739 = vadd.f32 %v4737, %v4738
      %v4740 = vsel %vm1079, %v4710, 0.0
      %v4741 = vadd.f32 %v4739, %v4740
      %v4742 = vrot.slane %v4741, 4
      %v4743 = vadd.f32 %v4741, %v4742
      %v4744 = vrot.slane %v4743, 2
      %v4745 = vadd.f32 %v4743, %v4744
      %v4746 = vrot.slane %v4745, 1
      %v4747 = vadd.f32 %v4745, %v4746
      %4748 = vst.msk [vmem:[%s736 + $0x1] sm:$0x1] %vm4693, %v4747
      %s4749 = smul.u32 %s27, 2
      %s4750 = sadd.s32 %s4749, %s28
      %s4751 = smul.u32 8, %s4750
      %p4752 = scmp.lt.s32.totalorder %s4751, 31
      %s4753 = scalar_select %p4752, %s4751, 31
      %s4754 = smul.addr %s4753, 2
      %s4755 = smul.addr %s4754, 4
      %s4756 = scalar_lea.vmem %s10, %s4755
      %s4757 = smul.u32 %s27, 2
      %s4758 = sadd.s32 %s4757, %s28
      %p4759 = scmp.lt.s32.totalorder %s4758, 3
      %s4760 = scalar_select %p4759, %s4758, 3
      %s4761 = smul.addr %s4760, 2
      %s4762 = scalar_lea.vmem %s11, %s4761
      // Predicated region
      $region61: #{shallow_unet_forward.8} parent=59 // pred_check
        %p4763 = pneg %p353
      $region62: #{shallow_unet_forward.8} parent=59 // pred_check_branch
        %4765 = sbr.rel (%p4763) target = $region64
      $region63: #{shallow_unet_forward.8} parent=59 // pred_region
        %s4766 = smul.u32 %s27, 2
        %s4767 = sadd.s32 %s4766, %s28
        %s4768 = smul.u32 8, %s4767
      $region64: #{shallow_unet_forward.8} parent=59 // pred_fallthru
        _
      // Predicated region
      $region65: #{shallow_unet_forward.8} parent=59 // pred_check
        %p4769 = pneg %p383
      $region66: #{shallow_unet_forward.8} parent=59 // pred_check_branch
        %4771 = sbr.rel (%p4769) target = $region68
      $region67: #{shallow_unet_forward.8} parent=59 // pred_region
        %s4772 = smul.u32 %s27, 2
        %s4773 = sadd.s32 %s4772, %s28
      $region68: #{shallow_unet_forward.8} parent=59 // pred_fallthru
        _
    $region60: #{shallow_unet_forward.8} parent=5 // pred_fallthru
      _
    %p4774 = scmp.le.s32.totalorder 2, %s18
    // Predicated region
    $region69: #{shallow_unet_forward.8} parent=5 // pred_check
      %p4775 = pneg %p4774
    $region70: #{shallow_unet_forward.8} parent=5 // pred_check_branch
      %4777 = sbr.rel (%p4775) target = $region72
    $region71: #{shallow_unet_forward.8} parent=5 // pred_region
      %s4778 = ssub.s32 %s18, 2
      // Predicated region
      $region73: #{shallow_unet_forward.8} parent=71 // pred_check
        %p4779 = pneg %p359
      $region74: #{shallow_unet_forward.8} parent=71 // pred_check_branch
        %4781 = sbr.rel (%p4779) target = $region76
      $region75: #{shallow_unet_forward.8} parent=71 // pred_region
        %s4782 = smul.u32 %s29, 2
        %s4783 = sadd.s32 %s4782, %s30
        %s4784 = smul.u32 8, %s4783
        %p4785 = scmp.lt.s32.totalorder %s4784, 31
        %s4786 = scalar_select %p4785, %s4784, 31
        %s4787 = smul.addr %s4786, 2
        %s4788 = smul.addr %s4787, 4
        %s4789 = scalar_lea.vmem %s10, %s4788
      $region76: #{shallow_unet_forward.8} parent=71 // pred_fallthru
        _
      // Predicated region
      $region77: #{shallow_unet_forward.8} parent=71 // pred_check
        %p4790 = pneg %p389
      $region78: #{shallow_unet_forward.8} parent=71 // pred_check_branch
        %4792 = sbr.rel (%p4790) target = $region80
      $region79: #{shallow_unet_forward.8} parent=71 // pred_region
        %s4793 = smul.u32 %s29, 2
        %s4794 = sadd.s32 %s4793, %s30
        %p4795 = scmp.lt.s32.totalorder %s4794, 3
        %s4796 = scalar_select %p4795, %s4794, 3
        %s4797 = smul.addr %s4796, 2
        %s4798 = scalar_lea.vmem %s11, %s4797
      $region80: #{shallow_unet_forward.8} parent=71 // pred_fallthru
        _
    $region72: #{shallow_unet_forward.8} parent=5 // pred_fallthru
      _
  $region6: #{shallow_unet_forward.8} parent=0 // loop_footer
    %s22 = sadd.s32 1, %s18
  $region7: #{shallow_unet_forward.8} parent=0 // loop_footer_branch
    %17 = sbr.rel target = $region3
  $region8: #{shallow_unet_forward.8} parent=0 // loop_exit
    _

</llo_original>
